<compile_context>
chip_gen: v7x
topology: tpu7x:2x2x1
jax: 0.10.0
libtpu: 0.0.40
codegen_flags: <defaults>
</compile_context>

<pallas_src>
import math
from functools import partial

import jax
import jax.numpy as jnp
from jax.experimental import pallas as pl
from jax.experimental.pallas import tpu as pltpu


_VMEM_LIMIT = 64 * 1024 * 1024   # fits v7x (64 MiB physical); well under v5e/v6e 128 MiB
_EPS = 1e-5


def _cparams():
    return pltpu.CompilerParams(
        dimension_semantics=("parallel",),
        vmem_limit_bytes=_VMEM_LIMIT)


def _choose_tile_m(M, max_tm=512):
    """Largest M tile (<=512, mult of 8); keep >=2 grid steps when M > 8 (v7x megacore)."""
    if M <= 8:
        return M
    tm = min(max_tm, M)
    if tm == M:
        tm = max(8, ((M // 2) + 7) // 8 * 8)
    return tm


# ----------------------------- fused MHA residual block -----------------------------

def _fused_mha_kernel(*refs, H, d_model, scale, eps, self_attn, use_mask):
    """x + Wo( MultiHeadAttention( LN(x), kv_src, kv_src ) ), one batch element per step."""
    i = 0
    xq_ref = refs[i]; i += 1
    if not self_attn:
        xkv_ref = refs[i]; i += 1
    if use_mask:
        m_ref = refs[i]; i += 1
    g_ref = refs[i]; i += 1
    be_ref = refs[i]; i += 1
    if self_attn:
        wqkv_ref = refs[i]; i += 1
        bqkv_ref = refs[i]; i += 1
    else:
        wq_ref = refs[i]; i += 1
        bq_ref = refs[i]; i += 1
        wkv_ref = refs[i]; i += 1
        bkv_ref = refs[i]; i += 1
    wo_ref = refs[i]; i += 1
    bo_ref = refs[i]; i += 1
    o_ref = refs[i]

    x = xq_ref[0]                                           # (Sq, Dq) f32
    mu = jnp.mean(x, axis=-1, keepdims=True)
    var = jnp.mean((x - mu) ** 2, axis=-1, keepdims=True)
    xn = ((x - mu) * jax.lax.rsqrt(var + eps) * g_ref[...] + be_ref[...]).astype(jnp.bfloat16)

    if self_attn:
        qkv = jnp.dot(xn, wqkv_ref[...], preferred_element_type=jnp.float32) + bqkv_ref[...]
        q = qkv[:, :d_model]
        k = qkv[:, d_model:2 * d_model]
        v = qkv[:, 2 * d_model:]
    else:
        q = jnp.dot(xn, wq_ref[...], preferred_element_type=jnp.float32) + bq_ref[...]
        xkv = xkv_ref[0].astype(jnp.bfloat16)               # K/V come from the raw M2
        kv = jnp.dot(xkv, wkv_ref[...], preferred_element_type=jnp.float32) + bkv_ref[...]
        k = kv[:, :d_model]
        v = kv[:, d_model:]

    dk = d_model // H
    if use_mask:
        keep = m_ref[0] != 0.0                              # (1, Sk) bool, broadcasts over Sq

    heads = []
    for h in range(H):                                      # static unroll over heads
        qh = q[:, h * dk:(h + 1) * dk].astype(jnp.bfloat16)
        kh = k[:, h * dk:(h + 1) * dk].astype(jnp.bfloat16)
        vh = v[:, h * dk:(h + 1) * dk].astype(jnp.bfloat16)
        s = jnp.einsum('qd,kd->qk', qh, kh,
                       preferred_element_type=jnp.float32) * scale
        if use_mask:
            s = jnp.where(keep, s, -1e9)
        s = s - jnp.max(s, axis=-1, keepdims=True)
        p = jnp.exp(s)
        inv = pl.reciprocal(jnp.sum(p, axis=-1, keepdims=True), approx=True)  # EUP
        oh = jnp.einsum('qk,kd->qd', p.astype(jnp.bfloat16), vh,
                        preferred_element_type=jnp.float32)
        heads.append(oh * inv)                              # normalize (Sq,dk), not (Sq,Sk)

    att = jnp.concatenate(heads, axis=-1).astype(jnp.bfloat16)   # (Sq, d_model)
    y = jnp.dot(att, wo_ref[...], preferred_element_type=jnp.float32) + bo_ref[...] + x
    o_ref[0] = y


def fused_mha_residual(att_p, ln_p, xq, xkv, mask, *, H, d_model, self_attn):
    """Returns xq + Wo(MHA(LN(xq), kv, kv)); xkv=None for self-attention, mask=None -> no mask."""
    B, Sq, Dq = xq.shape
    Sk = Sq if self_attn else xkv.shape[1]
    scale = 1.0 / math.sqrt(d_model // H)
    use_mask = mask is not None

    args = [xq]
    in_specs = [pl.BlockSpec((1, Sq, Dq), lambda b: (b, 0, 0))]
    if not self_attn:
        Dkv = xkv.shape[2]
        args.append(xkv)
        in_specs.append(pl.BlockSpec((1, Sk, Dkv), lambda b: (b, 0, 0)))
    if use_mask:
        args.append(mask)
        in_specs.append(pl.BlockSpec((1, 1, Sk), lambda b: (b, 0, 0)))

    def add_const(a):   # grid-invariant operand (weights / biases / LN params)
        args.append(a)
        in_specs.append(pl.BlockSpec(a.shape, lambda b: (0, 0)))

    add_const(ln_p["g"]); add_const(ln_p["b"])
    if self_attn:
        add_const(att_p["Wqkv"]); add_const(att_p["bqkv"])
    else:
        add_const(att_p["Wq"]); add_const(att_p["bq"])
        add_const(att_p["Wkv"]); add_const(att_p["bkv"])
    add_const(att_p["Wo"]); add_const(att_p["bo"])

    return pl.pallas_call(
        partial(_fused_mha_kernel, H=H, d_model=d_model, scale=scale,
                eps=_EPS, self_attn=self_attn, use_mask=use_mask),
        out_shape=jax.ShapeDtypeStruct((B, Sq, Dq), jnp.float32),
        grid=(B,),
        in_specs=in_specs,
        out_specs=pl.BlockSpec((1, Sq, Dq), lambda b: (b, 0, 0)),
        compiler_params=_cparams(),
    )(*args)


# ----------------------------- fused FFN residual block -----------------------------

def _fused_ffn_kernel(x_ref, g_ref, be_ref, w1_ref, b1_ref, w2_ref, b2_ref, o_ref, *, eps):
    x = x_ref[...]                                          # (tm, D) f32
    mu = jnp.mean(x, axis=-1, keepdims=True)
    var = jnp.mean((x - mu) ** 2, axis=-1, keepdims=True)
    xn = ((x - mu) * jax.lax.rsqrt(var + eps) * g_ref[...] + be_ref[...]).astype(jnp.bfloat16)
    h = jnp.dot(xn, w1_ref[...], preferred_element_type=jnp.float32) + b1_ref[...]
    h = jnp.maximum(h, 0.0).astype(jnp.bfloat16)
    y = jnp.dot(h, w2_ref[...], preferred_element_type=jnp.float32) + b2_ref[...] + x
    o_ref[...] = y


def fused_ffn_residual(ff_p, ln_p, x):
    B, S, D = x.shape
    M = B * S
    d_ff = ff_p["W1"].shape[1]
    x2 = x.reshape(M, D)
    tm = _choose_tile_m(M)
    out = pl.pallas_call(
        partial(_fused_ffn_kernel, eps=_EPS),
        out_shape=jax.ShapeDtypeStruct((M, D), jnp.float32),
        grid=(pl.cdiv(M, tm),),
        in_specs=[
            pl.BlockSpec((tm, D), lambda i: (i, 0)),
            pl.BlockSpec((1, D), lambda i: (0, 0)),
            pl.BlockSpec((1, D), lambda i: (0, 0)),
            pl.BlockSpec((D, d_ff), lambda i: (0, 0)),
            pl.BlockSpec((1, d_ff), lambda i: (0, 0)),
            pl.BlockSpec((d_ff, D), lambda i: (0, 0)),
            pl.BlockSpec((1, D), lambda i: (0, 0)),
        ],
        out_specs=pl.BlockSpec((tm, D), lambda i: (i, 0)),
        compiler_params=_cparams(),
    )(x2, ln_p["g"], ln_p["b"], ff_p["W1"], ff_p["b1"], ff_p["W2"], ff_p["b2"])
    return out.reshape(B, S, D)


# ----------------------------- linear / conv kernels -----------------------------

def _linear_kernel(x_ref, w_ref, b_ref, o_ref):
    o_ref[...] = (jnp.dot(x_ref[...].astype(jnp.bfloat16), w_ref[...],
                          preferred_element_type=jnp.float32) + b_ref[...])


def pallas_linear(x2d, w_bf16, b):
    M, K = x2d.shape
    N = w_bf16.shape[1]
    tm = _choose_tile_m(M)
    return pl.pallas_call(
        _linear_kernel,
        out_shape=jax.ShapeDtypeStruct((M, N), jnp.float32),
        grid=(pl.cdiv(M, tm),),
        in_specs=[
            pl.BlockSpec((tm, K), lambda i: (i, 0)),
            pl.BlockSpec((K, N), lambda i: (0, 0)),
            pl.BlockSpec((1, N), lambda i: (0, 0)),
        ],
        out_specs=pl.BlockSpec((tm, N), lambda i: (i, 0)),
        compiler_params=_cparams(),
    )(x2d, w_bf16, b)


def conv1x1(x, w_bf16, b):
    # PyTorch Conv1d(Cin, Cout, k=1) on NCW == channels-last matmul here.
    B, S, Cin = x.shape
    y = pallas_linear(x.reshape(B * S, Cin), w_bf16, b)
    return y.reshape(B, S, -1)


def _conv3_kernel(x0_ref, x1_ref, x2_ref, w0_ref, w1_ref, w2_ref, b_ref, o_ref):
    y = jnp.dot(x0_ref[...].astype(jnp.bfloat16), w0_ref[...],
                preferred_element_type=jnp.float32)
    y = y + jnp.dot(x1_ref[...].astype(jnp.bfloat16), w1_ref[...],
                    preferred_element_type=jnp.float32)
    y = y + jnp.dot(x2_ref[...].astype(jnp.bfloat16), w2_ref[...],
                    preferred_element_type=jnp.float32)
    o_ref[...] = y + b_ref[...]


def conv1d_k3s2p1(x, conv_p):
    # PyTorch Conv1d(C, C, k=3, stride=2, padding=1); x channels-last (B, S, C).
    # 3 strided taps -> 3 fused dots in one kernel (no (B,S_out,3C) im2col tensor).
    B, S, Cin = x.shape
    Cout = conv_p["w0"].shape[1]
    S_out = (S + 2 - 3) // 2 + 1
    xp = jnp.pad(x, ((0, 0), (1, 1), (0, 0)))
    taps = [jax.lax.slice(xp, (0, k, 0), (B, k + 2 * (S_out - 1) + 1, Cin), (1, 2, 1))
            .reshape(B * S_out, Cin) for k in range(3)]
    M = B * S_out
    tm = _choose_tile_m(M)
    y = pl.pallas_call(
        _conv3_kernel,
        out_shape=jax.ShapeDtypeStruct((M, Cout), jnp.float32),
        grid=(pl.cdiv(M, tm),),
        in_specs=[pl.BlockSpec((tm, Cin), lambda i: (i, 0))] * 3
                 + [pl.BlockSpec((Cin, Cout), lambda i: (0, 0))] * 3
                 + [pl.BlockSpec((1, Cout), lambda i: (0, 0))],
        out_specs=pl.BlockSpec((tm, Cout), lambda i: (i, 0)),
        compiler_params=_cparams(),
    )(*taps, conv_p["w0"], conv_p["w1"], conv_p["w2"], conv_p["b"])
    return y.reshape(B, S_out, Cout)


# ----------------------------- glue (plain JAX) -----------------------------

def bimodal_layer(p, M1, M2, M1_mask, M2_mask, H, d_model):
    # Matches PyTorch late-binding closures: cross attention uses the *updated*
    # M1 / M2 from the self-attention residual blocks.
    M1 = fused_mha_residual(p["self_att_M1"], p["res_M1_0"], M1, None, M1_mask,
                            H=H, d_model=d_model, self_attn=True)
    M2 = fused_mha_residual(p["self_att_M2"], p["res_M2_0"], M2, None, M2_mask,
                            H=H, d_model=d_model, self_attn=True)
    M1m2 = fused_mha_residual(p["cross_att_M1"], p["res_M1_1"], M1, M2, M2_mask,
                              H=H, d_model=d_model, self_attn=False)
    M2m1 = fused_mha_residual(p["cross_att_M2"], p["res_M2_1"], M2, M1, M1_mask,
                              H=H, d_model=d_model, self_attn=False)
    M1m2 = fused_ffn_residual(p["ff_M1"], p["res_M1_2"], M1m2)
    M2m1 = fused_ffn_residual(p["ff_M2"], p["res_M2_2"], M2m1)
    return M1m2, M2m1


def positional_encoding(S, d):
    pos = jnp.arange(S, dtype=jnp.float32)[:, None]
    div = jnp.exp(jnp.arange(0, d, 2, dtype=jnp.float32) * (-math.log(10000.0) / d))
    pe = jnp.zeros((S, d), jnp.float32)
    pe = pe.at[:, 0::2].set(jnp.sin(pos * div))
    pe = pe.at[:, 1::2].set(jnp.cos(pos * div))
    return pe


def upsample(x, scale):
    # nearest-neighbour upsample along the sequence axis
    if scale == 1:
        return x
    return jnp.repeat(x, scale, axis=1)


# ----------------------------- parameters -----------------------------

def _init_linear(key, d_in, d_out):
    k1, k2 = jax.random.split(key)
    bound = 1.0 / math.sqrt(d_in)
    W = jax.random.uniform(k1, (d_in, d_out), jnp.float32, -bound, bound)
    b = jax.random.uniform(k2, (d_out,), jnp.float32, -bound, bound)
    return W, b


def _init_conv1d(key, cin, cout, k):
    k1, k2 = jax.random.split(key)
    bound = 1.0 / math.sqrt(cin * k)
    w = jax.random.uniform(k1, (cout, cin, k), jnp.float32, -bound, bound)
    b = jax.random.uniform(k2, (cout,), jnp.float32, -bound, bound)
    return w, b


def make_params(key, cfg, d_model_A, d_model_V, d_model_T,
                d_ff_A, d_ff_V, d_ff_T, S_max):
    keys = iter(jax.random.split(key, 512))
    nk = lambda: next(keys)
    bf = jnp.bfloat16

    def mha_params(d_q, d_kv, d_model, fuse_qkv):
        Wq, bq = _init_linear(nk(), d_q, d_model)
        Wk, bk = _init_linear(nk(), d_kv, d_model)
        Wv, bv = _init_linear(nk(), d_kv, d_model)
        Wo, bo = _init_linear(nk(), d_model, d_q)
        if fuse_qkv:   # self-attention: fully fused QKV projection
            return dict(Wqkv=jnp.concatenate([Wq, Wk, Wv], axis=1).astype(bf),
                        bqkv=jnp.concatenate([bq, bk, bv]).reshape(1, -1),
                        Wo=Wo.astype(bf), bo=bo.reshape(1, -1))
        return dict(Wq=Wq.astype(bf), bq=bq.reshape(1, -1),
                    Wkv=jnp.concatenate([Wk, Wv], axis=1).astype(bf),
                    bkv=jnp.concatenate([bk, bv]).reshape(1, -1),
                    Wo=Wo.astype(bf), bo=bo.reshape(1, -1))

    def ff_params(d, d_ff):
        W1, b1 = _init_linear(nk(), d, d_ff)
        W2, b2 = _init_linear(nk(), d_ff, d)
        return dict(W1=W1.astype(bf), b1=b1.reshape(1, -1),
                    W2=W2.astype(bf), b2=b2.reshape(1, -1))

    def ln_params(d):
        return dict(g=jnp.ones((1, d), jnp.float32), b=jnp.zeros((1, d), jnp.float32))

    def conv1x1_params(cin, cout):
        w, b = _init_conv1d(nk(), cin, cout, 1)
        return dict(w=w[:, :, 0].T.astype(bf), b=b.reshape(1, -1))

    def conv3_params(cin, cout):
        w, b = _init_conv1d(nk(), cin, cout, 3)
        return dict(w0=w[:, :, 0].T.astype(bf), w1=w[:, :, 1].T.astype(bf),
                    w2=w[:, :, 2].T.astype(bf), b=b.reshape(1, -1))

    def bimodal_layer_params(d1, d2, d_model, d_ff1, d_ff2):
        return dict(
            self_att_M1=mha_params(d1, d1, d_model, True),
            self_att_M2=mha_params(d2, d2, d_model, True),
            cross_att_M1=mha_params(d1, d2, d_model, False),
            cross_att_M2=mha_params(d2, d1, d_model, False),
            ff_M1=ff_params(d1, d_ff1),
            ff_M2=ff_params(d2, d_ff2),
            res_M1_0=ln_params(d1), res_M1_1=ln_params(d1), res_M1_2=ln_params(d1),
            res_M2_0=ln_params(d2), res_M2_1=ln_params(d2), res_M2_2=ln_params(d2),
        )

    d_model = cfg["d_model"]
    d_model_mid = d_model // 4 if cfg["AV_fusion_mode"] == "add" else d_model // 2
    d_raw_caps = d_model // 4 if cfg["AVT_fusion_mode"] == "add" else d_model // 2

    return dict(
        enc_one_layers=[bimodal_layer_params(d_model_A, d_model_V, d_model,
                                             d_ff_A, d_ff_V) for _ in range(cfg["N"])],
        enc_two_layers=[bimodal_layer_params(d_model_mid, d_model_T, d_model,
                                             d_model_mid * 4, d_ff_T) for _ in range(cfg["N"])],
        convd_A=conv1x1_params(d_model_A, d_model // 4),
        convd_V=conv1x1_params(d_model_V, d_model // 4),
        convd_AV=conv1x1_params(d_model_mid, d_model // 4),
        convd_T=conv1x1_params(d_model_T, d_model // 4),
        conv_enc_av_1=conv3_params(d_model_mid, d_model_mid),
        conv_enc_av_2=conv3_params(d_model_mid, d_model_mid),
        conv_enc_two=conv3_params(d_raw_caps, d_raw_caps),
        pe_mid=positional_encoding(S_max, d_model_mid),
        learn_param=jnp.array([1.0], jnp.float32),
    )


# ----------------------------- TriModalEncoder forward -----------------------------

def tri_modal_encoder_forward(params, cfg, A, V, T, masks):
    H = cfg["H"]
    d_model = cfg["d_model"]

    # ---- encoder_one (BiModalEncoderOne: A <-> V) ----
    M1, M2 = A, V
    for lp in params["enc_one_layers"]:
        M1, M2 = bimodal_layer(lp, M1, M2, masks["A_mask"], masks["V_mask"], H, d_model)
    Av, Va = M1, M2

    # ---- uni-dim 1x1 convs ----
    Av_uni = conv1x1(Av, params["convd_A"]["w"], params["convd_A"]["b"])
    Va_uni = conv1x1(Va, params["convd_V"]["w"], params["convd_V"]["b"])

    Av_up = upsample(Av_uni, cfg["scale_audio"])
    Va_up = upsample(Va_uni, cfg["scale_video"])

    if cfg["procedure"] == "train_cap":
        Sa, Sv = Av_up.shape[1], Va_up.shape[1]
        if Sa < Sv:
            Av_up = jnp.pad(Av_up, ((0, 0), (0, Sv - Sa), (0, 0)))
        elif Sa > Sv:
            Va_up = jnp.pad(Va_up, ((0, 0), (0, Sa - Sv), (0, 0)))

    if cfg["AV_fusion_mode"] == "add":
        AV_fus = Av_up + Va_up
    else:
        AV_fus = jnp.concatenate([Av_up, Va_up], axis=-1)

    if cfg["procedure"] == "train_prop":
        AV_fus = conv1d_k3s2p1(AV_fus, params["conv_enc_av_1"])
        AV_fus = conv1d_k3s2p1(AV_fus, params["conv_enc_av_2"])

    # positional encoding (dropout = identity)
    AV_fus = AV_fus + params["pe_mid"][None, :AV_fus.shape[1], :]

    # ---- encoder_tow (BiModalEncoderTow: AV <-> T, AV mask is None) ----
    M1, M2 = AV_fus, T
    for lp in params["enc_two_layers"]:
        M1, M2 = bimodal_layer(lp, M1, M2, None, masks["T_mask"], H, d_model)
    AVt, Tav = M1, M2

    AVt_uni = conv1x1(AVt, params["convd_AV"]["w"], params["convd_AV"]["b"])
    Tav_uni = conv1x1(Tav, params["convd_T"]["w"], params["convd_T"]["b"])
    Tav_uni = Tav_uni * params["learn_param"]     # Tav_uni * learn_param (as in PyTorch)

    if cfg["procedure"] == "train_cap":
        S1, S2 = AVt_uni.shape[1], Tav_uni.shape[1]
        if S1 < S2:
            AVt_uni = jnp.pad(AVt_uni, ((0, 0), (0, S2 - S1), (0, 0)))
        elif S1 > S2:
            Tav_uni = jnp.pad(Tav_uni, ((0, 0), (0, S1 - S2), (0, 0)))
    else:
        AVt_uni = upsample(AVt_uni, 4)

    if cfg["AVT_fusion_mode"] == "add":
        AVT_fus = AVt_uni + Tav_uni
    else:
        AVT_fus = jnp.concatenate([AVt_uni, Tav_uni], axis=-1)

    if cfg["procedure"] == "train_cap":
        AVT_fus = conv1d_k3s2p1(AVT_fus, params["conv_enc_two"])

    return Av, Va, Av_up, Va_up, AVT_fus


# ----------------------------- main -----------------------------

if __name__ == "__main__":
    B, S = 2, 8
    d_model_A = d_model_V = d_model_T = 32
    d_ff_A = d_ff_V = d_ff_T = 64

    cfg = dict(
        procedure="train_cap",
        modality="audio_video_text",
        H=4,
        N=1,
        d_model=64,
        dout_p=0.1,
        AV_fusion_mode="cat",
        AVT_fusion_mode="cat",
        scale_audio=1,
        scale_video=1,
        dataset_type=1,
    )

    key = jax.random.PRNGKey(0)
    kp, ka, kv, kt = jax.random.split(key, 4)
    params = make_params(kp, cfg, d_model_A, d_model_V, d_model_T,
                         d_ff_A, d_ff_V, d_ff_T, S_max=4 * S)

    A = jax.random.normal(ka, (B, S, d_model_A), jnp.float32)
    V = jax.random.normal(kv, (B, S, d_model_V), jnp.float32)
    T = jax.random.normal(kt, (B, S, d_model_T), jnp.float32)
    masks = dict(
        A_mask=jnp.ones((B, 1, S), jnp.float32),
        V_mask=jnp.ones((B, 1, S), jnp.float32),
        T_mask=jnp.ones((B, 1, S), jnp.float32),
    )

    fwd = jax.jit(lambda p, a, v, t, m: tri_modal_encoder_forward(p, cfg, a, v, t, m))
    out = fwd(params, A, V, T, masks)
    out = jax.block_until_ready(out)

    Av, Va, Av_up, Va_up, AVT_fus = out
    assert Av.shape == (B, S, d_model_A)
    assert Va.shape == (B, S, d_model_V)
    assert Av_up.shape == (B, S, cfg["d_model"] // 4)
    assert Va_up.shape == (B, S, cfg["d_model"] // 4)
    assert AVT_fus.shape == (B, (S + 2 - 3) // 2 + 1, cfg["d_model"] // 2)
    print("KERNEL_OK")
</pallas_src>

<mosaic_0001>
module attributes {stable_mosaic.version = 11 : i64} {
  func.func @_fused_mha_kernel(%arg0: i32, %arg1: memref<1x8x32xf32, #tpu.memory_space<vmem>>, %arg2: memref<1x1x8xf32, #tpu.memory_space<vmem>>, %arg3: memref<1x32xf32, #tpu.memory_space<vmem>>, %arg4: memref<1x32xf32, #tpu.memory_space<vmem>>, %arg5: memref<32x192xbf16, #tpu.memory_space<vmem>>, %arg6: memref<1x192xf32, #tpu.memory_space<vmem>>, %arg7: memref<64x32xbf16, #tpu.memory_space<vmem>>, %arg8: memref<1x32xf32, #tpu.memory_space<vmem>>, %arg9: memref<1x8x32xf32, #tpu.memory_space<vmem>>) attributes {dimension_semantics = [#tpu.dimension_semantics<parallel>], iteration_bounds = array<i64: 2>, scalar_prefetch = 0 : i64, scratch_operands = 0 : i64, tpu.core_type = #tpu.core_type<tc>, window_params = [{transform_indices = @transform_0, window_bounds = array<i64: 1, 8, 32>}, {transform_indices = @transform_1, window_bounds = array<i64: 1, 1, 8>}, {pipeline_mode = #tpu.pipeline_mode<synchronous>, transform_indices = @transform_2, window_bounds = array<i64: 1, 32>}, {pipeline_mode = #tpu.pipeline_mode<synchronous>, transform_indices = @transform_3, window_bounds = array<i64: 1, 32>}, {pipeline_mode = #tpu.pipeline_mode<synchronous>, transform_indices = @transform_4, window_bounds = array<i64: 32, 192>}, {pipeline_mode = #tpu.pipeline_mode<synchronous>, transform_indices = @transform_5, window_bounds = array<i64: 1, 192>}, {pipeline_mode = #tpu.pipeline_mode<synchronous>, transform_indices = @transform_6, window_bounds = array<i64: 64, 32>}, {pipeline_mode = #tpu.pipeline_mode<synchronous>, transform_indices = @transform_7, window_bounds = array<i64: 1, 32>}, {transform_indices = @transform_8, window_bounds = array<i64: 1, 8, 32>}]} {
    %c0 = arith.constant 0 : index
    %c0_0 = arith.constant 0 : index
    %c0_1 = arith.constant 0 : index
    %0 = vector.load %arg1[%c0, %c0_0, %c0_1] : memref<1x8x32xf32, #tpu.memory_space<vmem>>, vector<1x8x32xf32>
    %1 = vector.shape_cast %0 : vector<1x8x32xf32> to vector<8x32xf32>
    %cst = arith.constant dense<0.000000e+00> : vector<8xf32>
    %2 = vector.multi_reduction <add>, %1, %cst [1] : vector<8x32xf32> to vector<8xf32>
    %3 = vector.shape_cast %2 : vector<8xf32> to vector<8x1xf32>
    %cst_2 = arith.constant 3.200000e+01 : f32
    %4 = vector.broadcast %cst_2 : f32 to vector<8x1xf32>
    %5 = arith.divf %3, %4 : vector<8x1xf32>
    %6 = vector.broadcast %5 : vector<8x1xf32> to vector<8x32xf32>
    %7 = arith.subf %1, %6 : vector<8x32xf32>
    %8 = arith.mulf %7, %7 : vector<8x32xf32>
    %cst_3 = arith.constant dense<0.000000e+00> : vector<8xf32>
    %9 = vector.multi_reduction <add>, %8, %cst_3 [1] : vector<8x32xf32> to vector<8xf32>
    %10 = vector.shape_cast %9 : vector<8xf32> to vector<8x1xf32>
    %cst_4 = arith.constant 3.200000e+01 : f32
    %11 = vector.broadcast %cst_4 : f32 to vector<8x1xf32>
    %12 = arith.divf %10, %11 : vector<8x1xf32>
    %13 = vector.broadcast %5 : vector<8x1xf32> to vector<8x32xf32>
    %14 = arith.subf %1, %13 : vector<8x32xf32>
    %cst_5 = arith.constant 9.99999974E-6 : f32
    %15 = vector.broadcast %cst_5 : f32 to vector<8x1xf32>
    %16 = arith.addf %12, %15 : vector<8x1xf32>
    %17 = math.rsqrt %16 : vector<8x1xf32>
    %18 = vector.broadcast %17 : vector<8x1xf32> to vector<8x32xf32>
    %19 = arith.mulf %14, %18 : vector<8x32xf32>
    %c0_6 = arith.constant 0 : index
    %c0_7 = arith.constant 0 : index
    %20 = vector.load %arg3[%c0_6, %c0_7] : memref<1x32xf32, #tpu.memory_space<vmem>>, vector<1x32xf32>
    %21 = vector.broadcast %20 : vector<1x32xf32> to vector<8x32xf32>
    %22 = arith.mulf %19, %21 : vector<8x32xf32>
    %c0_8 = arith.constant 0 : index
    %c0_9 = arith.constant 0 : index
    %23 = vector.load %arg4[%c0_8, %c0_9] : memref<1x32xf32, #tpu.memory_space<vmem>>, vector<1x32xf32>
    %24 = vector.broadcast %23 : vector<1x32xf32> to vector<8x32xf32>
    %25 = arith.addf %22, %24 : vector<8x32xf32>
    %26 = arith.truncf %25 : vector<8x32xf32> to vector<8x32xbf16>
    %c0_10 = arith.constant 0 : index
    %c0_11 = arith.constant 0 : index
    %27 = vector.load %arg5[%c0_10, %c0_11] : memref<32x192xbf16, #tpu.memory_space<vmem>>, vector<32x192xbf16>
    %cst_12 = arith.constant dense<0.000000e+00> : vector<8x192xf32>
    %28 = tpu.matmul %26, %27, %cst_12 {dimension_numbers = #tpu.dot_dimension_numbers<[1], [0], [0], [1], [0, 0, 1, 1], [], []>} : vector<8x32xbf16>, vector<32x192xbf16>, vector<8x192xf32> -> vector<8x192xf32>
    %c0_13 = arith.constant 0 : index
    %c0_14 = arith.constant 0 : index
    %29 = vector.load %arg6[%c0_13, %c0_14] : memref<1x192xf32, #tpu.memory_space<vmem>>, vector<1x192xf32>
    %30 = vector.broadcast %29 : vector<1x192xf32> to vector<8x192xf32>
    %31 = arith.addf %28, %30 : vector<8x192xf32>
    %32 = vector.extract_strided_slice %31 {offsets = [0, 0], sizes = [8, 64], strides = [1, 1]} : vector<8x192xf32> to vector<8x64xf32>
    %33 = vector.extract_strided_slice %31 {offsets = [0, 64], sizes = [8, 64], strides = [1, 1]} : vector<8x192xf32> to vector<8x64xf32>
    %34 = vector.extract_strided_slice %31 {offsets = [0, 128], sizes = [8, 64], strides = [1, 1]} : vector<8x192xf32> to vector<8x64xf32>
    %c0_15 = arith.constant 0 : index
    %c0_16 = arith.constant 0 : index
    %c0_17 = arith.constant 0 : index
    %35 = vector.load %arg2[%c0_15, %c0_16, %c0_17] : memref<1x1x8xf32, #tpu.memory_space<vmem>>, vector<1x1x8xf32>
    %36 = vector.shape_cast %35 : vector<1x1x8xf32> to vector<1x8xf32>
    %cst_18 = arith.constant 0.000000e+00 : f32
    %37 = vector.broadcast %cst_18 : f32 to vector<1x8xf32>
    %38 = arith.cmpf one, %36, %37 : vector<1x8xf32>
    %39 = vector.extract_strided_slice %32 {offsets = [0, 0], sizes = [8, 16], strides = [1, 1]} : vector<8x64xf32> to vector<8x16xf32>
    %40 = arith.truncf %39 : vector<8x16xf32> to vector<8x16xbf16>
    %41 = vector.extract_strided_slice %33 {offsets = [0, 0], sizes = [8, 16], strides = [1, 1]} : vector<8x64xf32> to vector<8x16xf32>
    %42 = arith.truncf %41 : vector<8x16xf32> to vector<8x16xbf16>
    %43 = vector.extract_strided_slice %34 {offsets = [0, 0], sizes = [8, 16], strides = [1, 1]} : vector<8x64xf32> to vector<8x16xf32>
    %44 = arith.truncf %43 : vector<8x16xf32> to vector<8x16xbf16>
    "tpu.trace_start"() <{level = 10 : i32, message = "qd,kd->qk"}> : () -> ()
    %cst_19 = arith.constant dense<0.000000e+00> : vector<8x8xf32>
    %45 = tpu.matmul %40, %42, %cst_19 {dimension_numbers = #tpu.dot_dimension_numbers<[1], [1], [0], [0], [0, 0, 1, 0], [], []>} : vector<8x16xbf16>, vector<8x16xbf16>, vector<8x8xf32> -> vector<8x8xf32>
    "tpu.trace_stop"() : () -> ()
    %cst_20 = arith.constant 2.500000e-01 : f32
    %46 = vector.broadcast %cst_20 : f32 to vector<8x8xf32>
    %47 = arith.mulf %45, %46 : vector<8x8xf32>
    %cst_21 = arith.constant -1.000000e+09 : f32
    %48 = vector.shape_cast %38 : vector<1x8xi1> to vector<1x8xi1>
    %49 = vector.broadcast %48 : vector<1x8xi1> to vector<8x8xi1>
    %50 = vector.broadcast %cst_21 : f32 to vector<8x8xf32>
    %51 = arith.select %49, %47, %50 : vector<8x8xi1>, vector<8x8xf32>
    %cst_22 = arith.constant dense<0xFF800000> : vector<8xf32>
    %52 = vector.multi_reduction <maximumf>, %51, %cst_22 [1] : vector<8x8xf32> to vector<8xf32>
    %53 = vector.shape_cast %52 : vector<8xf32> to vector<8x1xf32>
    %54 = vector.broadcast %53 : vector<8x1xf32> to vector<8x8xf32>
    %55 = arith.subf %51, %54 : vector<8x8xf32>
    %56 = math.exp %55 : vector<8x8xf32>
    %cst_23 = arith.constant dense<0.000000e+00> : vector<8xf32>
    %57 = vector.multi_reduction <add>, %56, %cst_23 [1] : vector<8x8xf32> to vector<8xf32>
    %58 = vector.shape_cast %57 : vector<8xf32> to vector<8x1xf32>
    %59 = tpu.reciprocal %58 {approx = true} : vector<8x1xf32> -> vector<8x1xf32>
    %60 = arith.truncf %56 : vector<8x8xf32> to vector<8x8xbf16>
    "tpu.trace_start"() <{level = 10 : i32, message = "qk,kd->qd"}> : () -> ()
    %cst_24 = arith.constant dense<0.000000e+00> : vector<8x16xf32>
    %61 = tpu.matmul %60, %44, %cst_24 {dimension_numbers = #tpu.dot_dimension_numbers<[1], [0], [0], [1], [0, 0, 1, 1], [], []>} : vector<8x8xbf16>, vector<8x16xbf16>, vector<8x16xf32> -> vector<8x16xf32>
    "tpu.trace_stop"() : () -> ()
    %62 = vector.broadcast %59 : vector<8x1xf32> to vector<8x16xf32>
    %63 = arith.mulf %61, %62 : vector<8x16xf32>
    %64 = vector.extract_strided_slice %32 {offsets = [0, 16], sizes = [8, 16], strides = [1, 1]} : vector<8x64xf32> to vector<8x16xf32>
    %65 = arith.truncf %64 : vector<8x16xf32> to vector<8x16xbf16>
    %66 = vector.extract_strided_slice %33 {offsets = [0, 16], sizes = [8, 16], strides = [1, 1]} : vector<8x64xf32> to vector<8x16xf32>
    %67 = arith.truncf %66 : vector<8x16xf32> to vector<8x16xbf16>
    %68 = vector.extract_strided_slice %34 {offsets = [0, 16], sizes = [8, 16], strides = [1, 1]} : vector<8x64xf32> to vector<8x16xf32>
    %69 = arith.truncf %68 : vector<8x16xf32> to vector<8x16xbf16>
    "tpu.trace_start"() <{level = 10 : i32, message = "qd,kd->qk"}> : () -> ()
    %cst_25 = arith.constant dense<0.000000e+00> : vector<8x8xf32>
    %70 = tpu.matmul %65, %67, %cst_25 {dimension_numbers = #tpu.dot_dimension_numbers<[1], [1], [0], [0], [0, 0, 1, 0], [], []>} : vector<8x16xbf16>, vector<8x16xbf16>, vector<8x8xf32> -> vector<8x8xf32>
    "tpu.trace_stop"() : () -> ()
    %cst_26 = arith.constant 2.500000e-01 : f32
    %71 = vector.broadcast %cst_26 : f32 to vector<8x8xf32>
    %72 = arith.mulf %70, %71 : vector<8x8xf32>
    %cst_27 = arith.constant -1.000000e+09 : f32
    %73 = vector.shape_cast %38 : vector<1x8xi1> to vector<1x8xi1>
    %74 = vector.broadcast %73 : vector<1x8xi1> to vector<8x8xi1>
    %75 = vector.broadcast %cst_27 : f32 to vector<8x8xf32>
    %76 = arith.select %74, %72, %75 : vector<8x8xi1>, vector<8x8xf32>
    %cst_28 = arith.constant dense<0xFF800000> : vector<8xf32>
    %77 = vector.multi_reduction <maximumf>, %76, %cst_28 [1] : vector<8x8xf32> to vector<8xf32>
    %78 = vector.shape_cast %77 : vector<8xf32> to vector<8x1xf32>
    %79 = vector.broadcast %78 : vector<8x1xf32> to vector<8x8xf32>
    %80 = arith.subf %76, %79 : vector<8x8xf32>
    %81 = math.exp %80 : vector<8x8xf32>
    %cst_29 = arith.constant dense<0.000000e+00> : vector<8xf32>
    %82 = vector.multi_reduction <add>, %81, %cst_29 [1] : vector<8x8xf32> to vector<8xf32>
    %83 = vector.shape_cast %82 : vector<8xf32> to vector<8x1xf32>
    %84 = tpu.reciprocal %83 {approx = true} : vector<8x1xf32> -> vector<8x1xf32>
    %85 = arith.truncf %81 : vector<8x8xf32> to vector<8x8xbf16>
    "tpu.trace_start"() <{level = 10 : i32, message = "qk,kd->qd"}> : () -> ()
    %cst_30 = arith.constant dense<0.000000e+00> : vector<8x16xf32>
    %86 = tpu.matmul %85, %69, %cst_30 {dimension_numbers = #tpu.dot_dimension_numbers<[1], [0], [0], [1], [0, 0, 1, 1], [], []>} : vector<8x8xbf16>, vector<8x16xbf16>, vector<8x16xf32> -> vector<8x16xf32>
    "tpu.trace_stop"() : () -> ()
    %87 = vector.broadcast %84 : vector<8x1xf32> to vector<8x16xf32>
    %88 = arith.mulf %86, %87 : vector<8x16xf32>
    %89 = vector.extract_strided_slice %32 {offsets = [0, 32], sizes = [8, 16], strides = [1, 1]} : vector<8x64xf32> to vector<8x16xf32>
    %90 = arith.truncf %89 : vector<8x16xf32> to vector<8x16xbf16>
    %91 = vector.extract_strided_slice %33 {offsets = [0, 32], sizes = [8, 16], strides = [1, 1]} : vector<8x64xf32> to vector<8x16xf32>
    %92 = arith.truncf %91 : vector<8x16xf32> to vector<8x16xbf16>
    %93 = vector.extract_strided_slice %34 {offsets = [0, 32], sizes = [8, 16], strides = [1, 1]} : vector<8x64xf32> to vector<8x16xf32>
    %94 = arith.truncf %93 : vector<8x16xf32> to vector<8x16xbf16>
    "tpu.trace_start"() <{level = 10 : i32, message = "qd,kd->qk"}> : () -> ()
    %cst_31 = arith.constant dense<0.000000e+00> : vector<8x8xf32>
    %95 = tpu.matmul %90, %92, %cst_31 {dimension_numbers = #tpu.dot_dimension_numbers<[1], [1], [0], [0], [0, 0, 1, 0], [], []>} : vector<8x16xbf16>, vector<8x16xbf16>, vector<8x8xf32> -> vector<8x8xf32>
    "tpu.trace_stop"() : () -> ()
    %cst_32 = arith.constant 2.500000e-01 : f32
    %96 = vector.broadcast %cst_32 : f32 to vector<8x8xf32>
    %97 = arith.mulf %95, %96 : vector<8x8xf32>
    %cst_33 = arith.constant -1.000000e+09 : f32
    %98 = vector.shape_cast %38 : vector<1x8xi1> to vector<1x8xi1>
    %99 = vector.broadcast %98 : vector<1x8xi1> to vector<8x8xi1>
    %100 = vector.broadcast %cst_33 : f32 to vector<8x8xf32>
    %101 = arith.select %99, %97, %100 : vector<8x8xi1>, vector<8x8xf32>
    %cst_34 = arith.constant dense<0xFF800000> : vector<8xf32>
    %102 = vector.multi_reduction <maximumf>, %101, %cst_34 [1] : vector<8x8xf32> to vector<8xf32>
    %103 = vector.shape_cast %102 : vector<8xf32> to vector<8x1xf32>
    %104 = vector.broadcast %103 : vector<8x1xf32> to vector<8x8xf32>
    %105 = arith.subf %101, %104 : vector<8x8xf32>
    %106 = math.exp %105 : vector<8x8xf32>
    %cst_35 = arith.constant dense<0.000000e+00> : vector<8xf32>
    %107 = vector.multi_reduction <add>, %106, %cst_35 [1] : vector<8x8xf32> to vector<8xf32>
    %108 = vector.shape_cast %107 : vector<8xf32> to vector<8x1xf32>
    %109 = tpu.reciprocal %108 {approx = true} : vector<8x1xf32> -> vector<8x1xf32>
    %110 = arith.truncf %106 : vector<8x8xf32> to vector<8x8xbf16>
    "tpu.trace_start"() <{level = 10 : i32, message = "qk,kd->qd"}> : () -> ()
    %cst_36 = arith.constant dense<0.000000e+00> : vector<8x16xf32>
    %111 = tpu.matmul %110, %94, %cst_36 {dimension_numbers = #tpu.dot_dimension_numbers<[1], [0], [0], [1], [0, 0, 1, 1], [], []>} : vector<8x8xbf16>, vector<8x16xbf16>, vector<8x16xf32> -> vector<8x16xf32>
    "tpu.trace_stop"() : () -> ()
    %112 = vector.broadcast %109 : vector<8x1xf32> to vector<8x16xf32>
    %113 = arith.mulf %111, %112 : vector<8x16xf32>
    %114 = vector.extract_strided_slice %32 {offsets = [0, 48], sizes = [8, 16], strides = [1, 1]} : vector<8x64xf32> to vector<8x16xf32>
    %115 = arith.truncf %114 : vector<8x16xf32> to vector<8x16xbf16>
    %116 = vector.extract_strided_slice %33 {offsets = [0, 48], sizes = [8, 16], strides = [1, 1]} : vector<8x64xf32> to vector<8x16xf32>
    %117 = arith.truncf %116 : vector<8x16xf32> to vector<8x16xbf16>
    %118 = vector.extract_strided_slice %34 {offsets = [0, 48], sizes = [8, 16], strides = [1, 1]} : vector<8x64xf32> to vector<8x16xf32>
    %119 = arith.truncf %118 : vector<8x16xf32> to vector<8x16xbf16>
    "tpu.trace_start"() <{level = 10 : i32, message = "qd,kd->qk"}> : () -> ()
    %cst_37 = arith.constant dense<0.000000e+00> : vector<8x8xf32>
    %120 = tpu.matmul %115, %117, %cst_37 {dimension_numbers = #tpu.dot_dimension_numbers<[1], [1], [0], [0], [0, 0, 1, 0], [], []>} : vector<8x16xbf16>, vector<8x16xbf16>, vector<8x8xf32> -> vector<8x8xf32>
    "tpu.trace_stop"() : () -> ()
    %cst_38 = arith.constant 2.500000e-01 : f32
    %121 = vector.broadcast %cst_38 : f32 to vector<8x8xf32>
    %122 = arith.mulf %120, %121 : vector<8x8xf32>
    %cst_39 = arith.constant -1.000000e+09 : f32
    %123 = vector.shape_cast %38 : vector<1x8xi1> to vector<1x8xi1>
    %124 = vector.broadcast %123 : vector<1x8xi1> to vector<8x8xi1>
    %125 = vector.broadcast %cst_39 : f32 to vector<8x8xf32>
    %126 = arith.select %124, %122, %125 : vector<8x8xi1>, vector<8x8xf32>
    %cst_40 = arith.constant dense<0xFF800000> : vector<8xf32>
    %127 = vector.multi_reduction <maximumf>, %126, %cst_40 [1] : vector<8x8xf32> to vector<8xf32>
    %128 = vector.shape_cast %127 : vector<8xf32> to vector<8x1xf32>
    %129 = vector.broadcast %128 : vector<8x1xf32> to vector<8x8xf32>
    %130 = arith.subf %126, %129 : vector<8x8xf32>
    %131 = math.exp %130 : vector<8x8xf32>
    %cst_41 = arith.constant dense<0.000000e+00> : vector<8xf32>
    %132 = vector.multi_reduction <add>, %131, %cst_41 [1] : vector<8x8xf32> to vector<8xf32>
    %133 = vector.shape_cast %132 : vector<8xf32> to vector<8x1xf32>
    %134 = tpu.reciprocal %133 {approx = true} : vector<8x1xf32> -> vector<8x1xf32>
    %135 = arith.truncf %131 : vector<8x8xf32> to vector<8x8xbf16>
    "tpu.trace_start"() <{level = 10 : i32, message = "qk,kd->qd"}> : () -> ()
    %cst_42 = arith.constant dense<0.000000e+00> : vector<8x16xf32>
    %136 = tpu.matmul %135, %119, %cst_42 {dimension_numbers = #tpu.dot_dimension_numbers<[1], [0], [0], [1], [0, 0, 1, 1], [], []>} : vector<8x8xbf16>, vector<8x16xbf16>, vector<8x16xf32> -> vector<8x16xf32>
    "tpu.trace_stop"() : () -> ()
    %137 = vector.broadcast %134 : vector<8x1xf32> to vector<8x16xf32>
    %138 = arith.mulf %136, %137 : vector<8x16xf32>
    %139 = tpu.concatenate %63, %88, %113, %138 in 1 : vector<8x16xf32>, vector<8x16xf32>, vector<8x16xf32>, vector<8x16xf32> -> vector<8x64xf32>
    %140 = arith.truncf %139 : vector<8x64xf32> to vector<8x64xbf16>
    %c0_43 = arith.constant 0 : index
    %c0_44 = arith.constant 0 : index
    %141 = vector.load %arg7[%c0_43, %c0_44] : memref<64x32xbf16, #tpu.memory_space<vmem>>, vector<64x32xbf16>
    %cst_45 = arith.constant dense<0.000000e+00> : vector<8x32xf32>
    %142 = tpu.matmul %140, %141, %cst_45 {dimension_numbers = #tpu.dot_dimension_numbers<[1], [0], [0], [1], [0, 0, 1, 1], [], []>} : vector<8x64xbf16>, vector<64x32xbf16>, vector<8x32xf32> -> vector<8x32xf32>
    %c0_46 = arith.constant 0 : index
    %c0_47 = arith.constant 0 : index
    %143 = vector.load %arg8[%c0_46, %c0_47] : memref<1x32xf32, #tpu.memory_space<vmem>>, vector<1x32xf32>
    %144 = vector.broadcast %143 : vector<1x32xf32> to vector<8x32xf32>
    %145 = arith.addf %142, %144 : vector<8x32xf32>
    %146 = arith.addf %145, %1 : vector<8x32xf32>
    %c0_48 = arith.constant 0 : index
    %c0_49 = arith.constant 0 : index
    %c0_50 = arith.constant 0 : index
    %147 = vector.load %arg9[%c0_48, %c0_49, %c0_50] : memref<1x8x32xf32, #tpu.memory_space<vmem>>, vector<1x8x32xf32>
    %148 = vector.shape_cast %147 : vector<1x8x32xf32> to vector<8x32xf32>
    %149 = vector.shape_cast %146 : vector<8x32xf32> to vector<1x8x32xf32>
    tpu.vector_store %arg9[%c0_48, %c0_49, %c0_50], %149 {strides = array<i32>} : memref<1x8x32xf32, #tpu.memory_space<vmem>>, vector<1x8x32xf32>,
    return
  }
  func.func @transform_0(%arg0: i32) -> (i32, i32, i32) {
    %c0_i32 = arith.constant 0 : i32
    %c0_i32_0 = arith.constant 0 : i32
    %c0_i32_1 = arith.constant 0 : i32
    return %arg0, %c0_i32, %c0_i32_0 : i32, i32, i32
  }
  func.func @transform_1(%arg0: i32) -> (i32, i32, i32) {
    %c0_i32 = arith.constant 0 : i32
    %c0_i32_0 = arith.constant 0 : i32
    %c0_i32_1 = arith.constant 0 : i32
    return %arg0, %c0_i32, %c0_i32_0 : i32, i32, i32
  }
  func.func @transform_2(%arg0: i32) -> (i32, i32) {
    %c0_i32 = arith.constant 0 : i32
    %c0_i32_0 = arith.constant 0 : i32
    %c0_i32_1 = arith.constant 0 : i32
    return %c0_i32, %c0_i32_0 : i32, i32
  }
  func.func @transform_3(%arg0: i32) -> (i32, i32) {
    %c0_i32 = arith.constant 0 : i32
    %c0_i32_0 = arith.constant 0 : i32
    %c0_i32_1 = arith.constant 0 : i32
    return %c0_i32, %c0_i32_0 : i32, i32
  }
  func.func @transform_4(%arg0: i32) -> (i32, i32) {
    %c0_i32 = arith.constant 0 : i32
    %c0_i32_0 = arith.constant 0 : i32
    %c0_i32_1 = arith.constant 0 : i32
    return %c0_i32, %c0_i32_0 : i32, i32
  }
  func.func @transform_5(%arg0: i32) -> (i32, i32) {
    %c0_i32 = arith.constant 0 : i32
    %c0_i32_0 = arith.constant 0 : i32
    %c0_i32_1 = arith.constant 0 : i32
    return %c0_i32, %c0_i32_0 : i32, i32
  }
  func.func @transform_6(%arg0: i32) -> (i32, i32) {
    %c0_i32 = arith.constant 0 : i32
    %c0_i32_0 = arith.constant 0 : i32
    %c0_i32_1 = arith.constant 0 : i32
    return %c0_i32, %c0_i32_0 : i32, i32
  }
  func.func @transform_7(%arg0: i32) -> (i32, i32) {
    %c0_i32 = arith.constant 0 : i32
    %c0_i32_0 = arith.constant 0 : i32
    %c0_i32_1 = arith.constant 0 : i32
    return %c0_i32, %c0_i32_0 : i32, i32
  }
  func.func @transform_8(%arg0: i32) -> (i32, i32, i32) {
    %c0_i32 = arith.constant 0 : i32
    %c0_i32_0 = arith.constant 0 : i32
    %c0_i32_1 = arith.constant 0 : i32
    return %arg0, %c0_i32, %c0_i32_0 : i32, i32, i32
  }
}

module attributes {stable_mosaic.version = 11 : i64} {
  func.func @_fused_mha_kernel(%arg0: i32, %arg1: memref<1x8x32xf32, #tpu.memory_space<vmem>>, %arg2: memref<1x8x32xf32, #tpu.memory_space<vmem>>, %arg3: memref<1x1x8xf32, #tpu.memory_space<vmem>>, %arg4: memref<1x32xf32, #tpu.memory_space<vmem>>, %arg5: memref<1x32xf32, #tpu.memory_space<vmem>>, %arg6: memref<32x64xbf16, #tpu.memory_space<vmem>>, %arg7: memref<1x64xf32, #tpu.memory_space<vmem>>, %arg8: memref<32x128xbf16, #tpu.memory_space<vmem>>, %arg9: memref<1x128xf32, #tpu.memory_space<vmem>>, %arg10: memref<64x32xbf16, #tpu.memory_space<vmem>>, %arg11: memref<1x32xf32, #tpu.memory_space<vmem>>, %arg12: memref<1x8x32xf32, #tpu.memory_space<vmem>>) attributes {dimension_semantics = [#tpu.dimension_semantics<parallel>], iteration_bounds = array<i64: 2>, scalar_prefetch = 0 : i64, scratch_operands = 0 : i64, tpu.core_type = #tpu.core_type<tc>, window_params = [{transform_indices = @transform_0, window_bounds = array<i64: 1, 8, 32>}, {transform_indices = @transform_1, window_bounds = array<i64: 1, 8, 32>}, {transform_indices = @transform_2, window_bounds = array<i64: 1, 1, 8>}, {pipeline_mode = #tpu.pipeline_mode<synchronous>, transform_indices = @transform_3, window_bounds = array<i64: 1, 32>}, {pipeline_mode = #tpu.pipeline_mode<synchronous>, transform_indices = @transform_4, window_bounds = array<i64: 1, 32>}, {pipeline_mode = #tpu.pipeline_mode<synchronous>, transform_indices = @transform_5, window_bounds = array<i64: 32, 64>}, {pipeline_mode = #tpu.pipeline_mode<synchronous>, transform_indices = @transform_6, window_bounds = array<i64: 1, 64>}, {pipeline_mode = #tpu.pipeline_mode<synchronous>, transform_indices = @transform_7, window_bounds = array<i64: 32, 128>}, {pipeline_mode = #tpu.pipeline_mode<synchronous>, transform_indices = @transform_8, window_bounds = array<i64: 1, 128>}, {pipeline_mode = #tpu.pipeline_mode<synchronous>, transform_indices = @transform_9, window_bounds = array<i64: 64, 32>}, {pipeline_mode = #tpu.pipeline_mode<synchronous>, transform_indices = @transform_10, window_bounds = array<i64: 1, 32>}, {transform_indices = @transform_11, window_bounds = array<i64: 1, 8, 32>}]} {
    %c0 = arith.constant 0 : index
    %c0_0 = arith.constant 0 : index
    %c0_1 = arith.constant 0 : index
    %0 = vector.load %arg1[%c0, %c0_0, %c0_1] : memref<1x8x32xf32, #tpu.memory_space<vmem>>, vector<1x8x32xf32>
    %1 = vector.shape_cast %0 : vector<1x8x32xf32> to vector<8x32xf32>
    %cst = arith.constant dense<0.000000e+00> : vector<8xf32>
    %2 = vector.multi_reduction <add>, %1, %cst [1] : vector<8x32xf32> to vector<8xf32>
    %3 = vector.shape_cast %2 : vector<8xf32> to vector<8x1xf32>
    %cst_2 = arith.constant 3.200000e+01 : f32
    %4 = vector.broadcast %cst_2 : f32 to vector<8x1xf32>
    %5 = arith.divf %3, %4 : vector<8x1xf32>
    %6 = vector.broadcast %5 : vector<8x1xf32> to vector<8x32xf32>
    %7 = arith.subf %1, %6 : vector<8x32xf32>
    %8 = arith.mulf %7, %7 : vector<8x32xf32>
    %cst_3 = arith.constant dense<0.000000e+00> : vector<8xf32>
    %9 = vector.multi_reduction <add>, %8, %cst_3 [1] : vector<8x32xf32> to vector<8xf32>
    %10 = vector.shape_cast %9 : vector<8xf32> to vector<8x1xf32>
    %cst_4 = arith.constant 3.200000e+01 : f32
    %11 = vector.broadcast %cst_4 : f32 to vector<8x1xf32>
    %12 = arith.divf %10, %11 : vector<8x1xf32>
    %13 = vector.broadcast %5 : vector<8x1xf32> to vector<8x32xf32>
    %14 = arith.subf %1, %13 : vector<8x32xf32>
    %cst_5 = arith.constant 9.99999974E-6 : f32
    %15 = vector.broadcast %cst_5 : f32 to vector<8x1xf32>
    %16 = arith.addf %12, %15 : vector<8x1xf32>
    %17 = math.rsqrt %16 : vector<8x1xf32>
    %18 = vector.broadcast %17 : vector<8x1xf32> to vector<8x32xf32>
    %19 = arith.mulf %14, %18 : vector<8x32xf32>
    %c0_6 = arith.constant 0 : index
    %c0_7 = arith.constant 0 : index
    %20 = vector.load %arg4[%c0_6, %c0_7] : memref<1x32xf32, #tpu.memory_space<vmem>>, vector<1x32xf32>
    %21 = vector.broadcast %20 : vector<1x32xf32> to vector<8x32xf32>
    %22 = arith.mulf %19, %21 : vector<8x32xf32>
    %c0_8 = arith.constant 0 : index
    %c0_9 = arith.constant 0 : index
    %23 = vector.load %arg5[%c0_8, %c0_9] : memref<1x32xf32, #tpu.memory_space<vmem>>, vector<1x32xf32>
    %24 = vector.broadcast %23 : vector<1x32xf32> to vector<8x32xf32>
    %25 = arith.addf %22, %24 : vector<8x32xf32>
    %26 = arith.truncf %25 : vector<8x32xf32> to vector<8x32xbf16>
    %c0_10 = arith.constant 0 : index
    %c0_11 = arith.constant 0 : index
    %27 = vector.load %arg6[%c0_10, %c0_11] : memref<32x64xbf16, #tpu.memory_space<vmem>>, vector<32x64xbf16>
    %cst_12 = arith.constant dense<0.000000e+00> : vector<8x64xf32>
    %28 = tpu.matmul %26, %27, %cst_12 {dimension_numbers = #tpu.dot_dimension_numbers<[1], [0], [0], [1], [0, 0, 1, 1], [], []>} : vector<8x32xbf16>, vector<32x64xbf16>, vector<8x64xf32> -> vector<8x64xf32>
    %c0_13 = arith.constant 0 : index
    %c0_14 = arith.constant 0 : index
    %29 = vector.load %arg7[%c0_13, %c0_14] : memref<1x64xf32, #tpu.memory_space<vmem>>, vector<1x64xf32>
    %30 = vector.broadcast %29 : vector<1x64xf32> to vector<8x64xf32>
    %31 = arith.addf %28, %30 : vector<8x64xf32>
    %c0_15 = arith.constant 0 : index
    %c0_16 = arith.constant 0 : index
    %c0_17 = arith.constant 0 : index
    %32 = vector.load %arg2[%c0_15, %c0_16, %c0_17] : memref<1x8x32xf32, #tpu.memory_space<vmem>>, vector<1x8x32xf32>
    %33 = vector.shape_cast %32 : vector<1x8x32xf32> to vector<8x32xf32>
    %34 = arith.truncf %33 : vector<8x32xf32> to vector<8x32xbf16>
    %c0_18 = arith.constant 0 : index
    %c0_19 = arith.constant 0 : index
    %35 = vector.load %arg8[%c0_18, %c0_19] : memref<32x128xbf16, #tpu.memory_space<vmem>>, vector<32x128xbf16>
    %cst_20 = arith.constant dense<0.000000e+00> : vector<8x128xf32>
    %36 = tpu.matmul %34, %35, %cst_20 {dimension_numbers = #tpu.dot_dimension_numbers<[1], [0], [0], [1], [0, 0, 1, 1], [], []>} : vector<8x32xbf16>, vector<32x128xbf16>, vector<8x128xf32> -> vector<8x128xf32>
    %c0_21 = arith.constant 0 : index
    %c0_22 = arith.constant 0 : index
    %37 = vector.load %arg9[%c0_21, %c0_22] : memref<1x128xf32, #tpu.memory_space<vmem>>, vector<1x128xf32>
    %38 = vector.broadcast %37 : vector<1x128xf32> to vector<8x128xf32>
    %39 = arith.addf %36, %38 : vector<8x128xf32>
    %40 = vector.extract_strided_slice %39 {offsets = [0, 0], sizes = [8, 64], strides = [1, 1]} : vector<8x128xf32> to vector<8x64xf32>
    %41 = vector.extract_strided_slice %39 {offsets = [0, 64], sizes = [8, 64], strides = [1, 1]} : vector<8x128xf32> to vector<8x64xf32>
    %c0_23 = arith.constant 0 : index
    %c0_24 = arith.constant 0 : index
    %c0_25 = arith.constant 0 : index
    %42 = vector.load %arg3[%c0_23, %c0_24, %c0_25] : memref<1x1x8xf32, #tpu.memory_space<vmem>>, vector<1x1x8xf32>
    %43 = vector.shape_cast %42 : vector<1x1x8xf32> to vector<1x8xf32>
    %cst_26 = arith.constant 0.000000e+00 : f32
    %44 = vector.broadcast %cst_26 : f32 to vector<1x8xf32>
    %45 = arith.cmpf one, %43, %44 : vector<1x8xf32>
    %46 = vector.extract_strided_slice %31 {offsets = [0, 0], sizes = [8, 16], strides = [1, 1]} : vector<8x64xf32> to vector<8x16xf32>
    %47 = arith.truncf %46 : vector<8x16xf32> to vector<8x16xbf16>
    %48 = vector.extract_strided_slice %40 {offsets = [0, 0], sizes = [8, 16], strides = [1, 1]} : vector<8x64xf32> to vector<8x16xf32>
    %49 = arith.truncf %48 : vector<8x16xf32> to vector<8x16xbf16>
    %50 = vector.extract_strided_slice %41 {offsets = [0, 0], sizes = [8, 16], strides = [1, 1]} : vector<8x64xf32> to vector<8x16xf32>
    %51 = arith.truncf %50 : vector<8x16xf32> to vector<8x16xbf16>
    "tpu.trace_start"() <{level = 10 : i32, message = "qd,kd->qk"}> : () -> ()
    %cst_27 = arith.constant dense<0.000000e+00> : vector<8x8xf32>
    %52 = tpu.matmul %47, %49, %cst_27 {dimension_numbers = #tpu.dot_dimension_numbers<[1], [1], [0], [0], [0, 0, 1, 0], [], []>} : vector<8x16xbf16>, vector<8x16xbf16>, vector<8x8xf32> -> vector<8x8xf32>
    "tpu.trace_stop"() : () -> ()
    %cst_28 = arith.constant 2.500000e-01 : f32
    %53 = vector.broadcast %cst_28 : f32 to vector<8x8xf32>
    %54 = arith.mulf %52, %53 : vector<8x8xf32>
    %cst_29 = arith.constant -1.000000e+09 : f32
    %55 = vector.shape_cast %45 : vector<1x8xi1> to vector<1x8xi1>
    %56 = vector.broadcast %55 : vector<1x8xi1> to vector<8x8xi1>
    %57 = vector.broadcast %cst_29 : f32 to vector<8x8xf32>
    %58 = arith.select %56, %54, %57 : vector<8x8xi1>, vector<8x8xf32>
    %cst_30 = arith.constant dense<0xFF800000> : vector<8xf32>
    %59 = vector.multi_reduction <maximumf>, %58, %cst_30 [1] : vector<8x8xf32> to vector<8xf32>
    %60 = vector.shape_cast %59 : vector<8xf32> to vector<8x1xf32>
    %61 = vector.broadcast %60 : vector<8x1xf32> to vector<8x8xf32>
    %62 = arith.subf %58, %61 : vector<8x8xf32>
    %63 = math.exp %62 : vector<8x8xf32>
    %cst_31 = arith.constant dense<0.000000e+00> : vector<8xf32>
    %64 = vector.multi_reduction <add>, %63, %cst_31 [1] : vector<8x8xf32> to vector<8xf32>
    %65 = vector.shape_cast %64 : vector<8xf32> to vector<8x1xf32>
    %66 = tpu.reciprocal %65 {approx = true} : vector<8x1xf32> -> vector<8x1xf32>
    %67 = arith.truncf %63 : vector<8x8xf32> to vector<8x8xbf16>
    "tpu.trace_start"() <{level = 10 : i32, message = "qk,kd->qd"}> : () -> ()
    %cst_32 = arith.constant dense<0.000000e+00> : vector<8x16xf32>
    %68 = tpu.matmul %67, %51, %cst_32 {dimension_numbers = #tpu.dot_dimension_numbers<[1], [0], [0], [1], [0, 0, 1, 1], [], []>} : vector<8x8xbf16>, vector<8x16xbf16>, vector<8x16xf32> -> vector<8x16xf32>
    "tpu.trace_stop"() : () -> ()
    %69 = vector.broadcast %66 : vector<8x1xf32> to vector<8x16xf32>
    %70 = arith.mulf %68, %69 : vector<8x16xf32>
    %71 = vector.extract_strided_slice %31 {offsets = [0, 16], sizes = [8, 16], strides = [1, 1]} : vector<8x64xf32> to vector<8x16xf32>
    %72 = arith.truncf %71 : vector<8x16xf32> to vector<8x16xbf16>
    %73 = vector.extract_strided_slice %40 {offsets = [0, 16], sizes = [8, 16], strides = [1, 1]} : vector<8x64xf32> to vector<8x16xf32>
    %74 = arith.truncf %73 : vector<8x16xf32> to vector<8x16xbf16>
    %75 = vector.extract_strided_slice %41 {offsets = [0, 16], sizes = [8, 16], strides = [1, 1]} : vector<8x64xf32> to vector<8x16xf32>
    %76 = arith.truncf %75 : vector<8x16xf32> to vector<8x16xbf16>
    "tpu.trace_start"() <{level = 10 : i32, message = "qd,kd->qk"}> : () -> ()
    %cst_33 = arith.constant dense<0.000000e+00> : vector<8x8xf32>
    %77 = tpu.matmul %72, %74, %cst_33 {dimension_numbers = #tpu.dot_dimension_numbers<[1], [1], [0], [0], [0, 0, 1, 0], [], []>} : vector<8x16xbf16>, vector<8x16xbf16>, vector<8x8xf32> -> vector<8x8xf32>
    "tpu.trace_stop"() : () -> ()
    %cst_34 = arith.constant 2.500000e-01 : f32
    %78 = vector.broadcast %cst_34 : f32 to vector<8x8xf32>
    %79 = arith.mulf %77, %78 : vector<8x8xf32>
    %cst_35 = arith.constant -1.000000e+09 : f32
    %80 = vector.shape_cast %45 : vector<1x8xi1> to vector<1x8xi1>
    %81 = vector.broadcast %80 : vector<1x8xi1> to vector<8x8xi1>
    %82 = vector.broadcast %cst_35 : f32 to vector<8x8xf32>
    %83 = arith.select %81, %79, %82 : vector<8x8xi1>, vector<8x8xf32>
    %cst_36 = arith.constant dense<0xFF800000> : vector<8xf32>
    %84 = vector.multi_reduction <maximumf>, %83, %cst_36 [1] : vector<8x8xf32> to vector<8xf32>
    %85 = vector.shape_cast %84 : vector<8xf32> to vector<8x1xf32>
    %86 = vector.broadcast %85 : vector<8x1xf32> to vector<8x8xf32>
    %87 = arith.subf %83, %86 : vector<8x8xf32>
    %88 = math.exp %87 : vector<8x8xf32>
    %cst_37 = arith.constant dense<0.000000e+00> : vector<8xf32>
    %89 = vector.multi_reduction <add>, %88, %cst_37 [1] : vector<8x8xf32> to vector<8xf32>
    %90 = vector.shape_cast %89 : vector<8xf32> to vector<8x1xf32>
    %91 = tpu.reciprocal %90 {approx = true} : vector<8x1xf32> -> vector<8x1xf32>
    %92 = arith.truncf %88 : vector<8x8xf32> to vector<8x8xbf16>
    "tpu.trace_start"() <{level = 10 : i32, message = "qk,kd->qd"}> : () -> ()
    %cst_38 = arith.constant dense<0.000000e+00> : vector<8x16xf32>
    %93 = tpu.matmul %92, %76, %cst_38 {dimension_numbers = #tpu.dot_dimension_numbers<[1], [0], [0], [1], [0, 0, 1, 1], [], []>} : vector<8x8xbf16>, vector<8x16xbf16>, vector<8x16xf32> -> vector<8x16xf32>
    "tpu.trace_stop"() : () -> ()
    %94 = vector.broadcast %91 : vector<8x1xf32> to vector<8x16xf32>
    %95 = arith.mulf %93, %94 : vector<8x16xf32>
    %96 = vector.extract_strided_slice %31 {offsets = [0, 32], sizes = [8, 16], strides = [1, 1]} : vector<8x64xf32> to vector<8x16xf32>
    %97 = arith.truncf %96 : vector<8x16xf32> to vector<8x16xbf16>
    %98 = vector.extract_strided_slice %40 {offsets = [0, 32], sizes = [8, 16], strides = [1, 1]} : vector<8x64xf32> to vector<8x16xf32>
    %99 = arith.truncf %98 : vector<8x16xf32> to vector<8x16xbf16>
    %100 = vector.extract_strided_slice %41 {offsets = [0, 32], sizes = [8, 16], strides = [1, 1]} : vector<8x64xf32> to vector<8x16xf32>
    %101 = arith.truncf %100 : vector<8x16xf32> to vector<8x16xbf16>
    "tpu.trace_start"() <{level = 10 : i32, message = "qd,kd->qk"}> : () -> ()
    %cst_39 = arith.constant dense<0.000000e+00> : vector<8x8xf32>
    %102 = tpu.matmul %97, %99, %cst_39 {dimension_numbers = #tpu.dot_dimension_numbers<[1], [1], [0], [0], [0, 0, 1, 0], [], []>} : vector<8x16xbf16>, vector<8x16xbf16>, vector<8x8xf32> -> vector<8x8xf32>
    "tpu.trace_stop"() : () -> ()
    %cst_40 = arith.constant 2.500000e-01 : f32
    %103 = vector.broadcast %cst_40 : f32 to vector<8x8xf32>
    %104 = arith.mulf %102, %103 : vector<8x8xf32>
    %cst_41 = arith.constant -1.000000e+09 : f32
    %105 = vector.shape_cast %45 : vector<1x8xi1> to vector<1x8xi1>
    %106 = vector.broadcast %105 : vector<1x8xi1> to vector<8x8xi1>
    %107 = vector.broadcast %cst_41 : f32 to vector<8x8xf32>
    %108 = arith.select %106, %104, %107 : vector<8x8xi1>, vector<8x8xf32>
    %cst_42 = arith.constant dense<0xFF800000> : vector<8xf32>
    %109 = vector.multi_reduction <maximumf>, %108, %cst_42 [1] : vector<8x8xf32> to vector<8xf32>
    %110 = vector.shape_cast %109 : vector<8xf32> to vector<8x1xf32>
    %111 = vector.broadcast %110 : vector<8x1xf32> to vector<8x8xf32>
    %112 = arith.subf %108, %111 : vector<8x8xf32>
    %113 = math.exp %112 : vector<8x8xf32>
    %cst_43 = arith.constant dense<0.000000e+00> : vector<8xf32>
    %114 = vector.multi_reduction <add>, %113, %cst_43 [1] : vector<8x8xf32> to vector<8xf32>
    %115 = vector.shape_cast %114 : vector<8xf32> to vector<8x1xf32>
    %116 = tpu.reciprocal %115 {approx = true} : vector<8x1xf32> -> vector<8x1xf32>
    %117 = arith.truncf %113 : vector<8x8xf32> to vector<8x8xbf16>
    "tpu.trace_start"() <{level = 10 : i32, message = "qk,kd->qd"}> : () -> ()
    %cst_44 = arith.constant dense<0.000000e+00> : vector<8x16xf32>
    %118 = tpu.matmul %117, %101, %cst_44 {dimension_numbers = #tpu.dot_dimension_numbers<[1], [0], [0], [1], [0, 0, 1, 1], [], []>} : vector<8x8xbf16>, vector<8x16xbf16>, vector<8x16xf32> -> vector<8x16xf32>
    "tpu.trace_stop"() : () -> ()
    %119 = vector.broadcast %116 : vector<8x1xf32> to vector<8x16xf32>
    %120 = arith.mulf %118, %119 : vector<8x16xf32>
    %121 = vector.extract_strided_slice %31 {offsets = [0, 48], sizes = [8, 16], strides = [1, 1]} : vector<8x64xf32> to vector<8x16xf32>
    %122 = arith.truncf %121 : vector<8x16xf32> to vector<8x16xbf16>
    %123 = vector.extract_strided_slice %40 {offsets = [0, 48], sizes = [8, 16], strides = [1, 1]} : vector<8x64xf32> to vector<8x16xf32>
    %124 = arith.truncf %123 : vector<8x16xf32> to vector<8x16xbf16>
    %125 = vector.extract_strided_slice %41 {offsets = [0, 48], sizes = [8, 16], strides = [1, 1]} : vector<8x64xf32> to vector<8x16xf32>
    %126 = arith.truncf %125 : vector<8x16xf32> to vector<8x16xbf16>
    "tpu.trace_start"() <{level = 10 : i32, message = "qd,kd->qk"}> : () -> ()
    %cst_45 = arith.constant dense<0.000000e+00> : vector<8x8xf32>
    %127 = tpu.matmul %122, %124, %cst_45 {dimension_numbers = #tpu.dot_dimension_numbers<[1], [1], [0], [0], [0, 0, 1, 0], [], []>} : vector<8x16xbf16>, vector<8x16xbf16>, vector<8x8xf32> -> vector<8x8xf32>
    "tpu.trace_stop"() : () -> ()
    %cst_46 = arith.constant 2.500000e-01 : f32
    %128 = vector.broadcast %cst_46 : f32 to vector<8x8xf32>
    %129 = arith.mulf %127, %128 : vector<8x8xf32>
    %cst_47 = arith.constant -1.000000e+09 : f32
    %130 = vector.shape_cast %45 : vector<1x8xi1> to vector<1x8xi1>
    %131 = vector.broadcast %130 : vector<1x8xi1> to vector<8x8xi1>
    %132 = vector.broadcast %cst_47 : f32 to vector<8x8xf32>
    %133 = arith.select %131, %129, %132 : vector<8x8xi1>, vector<8x8xf32>
    %cst_48 = arith.constant dense<0xFF800000> : vector<8xf32>
    %134 = vector.multi_reduction <maximumf>, %133, %cst_48 [1] : vector<8x8xf32> to vector<8xf32>
    %135 = vector.shape_cast %134 : vector<8xf32> to vector<8x1xf32>
    %136 = vector.broadcast %135 : vector<8x1xf32> to vector<8x8xf32>
    %137 = arith.subf %133, %136 : vector<8x8xf32>
    %138 = math.exp %137 : vector<8x8xf32>
    %cst_49 = arith.constant dense<0.000000e+00> : vector<8xf32>
    %139 = vector.multi_reduction <add>, %138, %cst_49 [1] : vector<8x8xf32> to vector<8xf32>
    %140 = vector.shape_cast %139 : vector<8xf32> to vector<8x1xf32>
    %141 = tpu.reciprocal %140 {approx = true} : vector<8x1xf32> -> vector<8x1xf32>
    %142 = arith.truncf %138 : vector<8x8xf32> to vector<8x8xbf16>
    "tpu.trace_start"() <{level = 10 : i32, message = "qk,kd->qd"}> : () -> ()
    %cst_50 = arith.constant dense<0.000000e+00> : vector<8x16xf32>
    %143 = tpu.matmul %142, %126, %cst_50 {dimension_numbers = #tpu.dot_dimension_numbers<[1], [0], [0], [1], [0, 0, 1, 1], [], []>} : vector<8x8xbf16>, vector<8x16xbf16>, vector<8x16xf32> -> vector<8x16xf32>
    "tpu.trace_stop"() : () -> ()
    %144 = vector.broadcast %141 : vector<8x1xf32> to vector<8x16xf32>
    %145 = arith.mulf %143, %144 : vector<8x16xf32>
    %146 = tpu.concatenate %70, %95, %120, %145 in 1 : vector<8x16xf32>, vector<8x16xf32>, vector<8x16xf32>, vector<8x16xf32> -> vector<8x64xf32>
    %147 = arith.truncf %146 : vector<8x64xf32> to vector<8x64xbf16>
    %c0_51 = arith.constant 0 : index
    %c0_52 = arith.constant 0 : index
    %148 = vector.load %arg10[%c0_51, %c0_52] : memref<64x32xbf16, #tpu.memory_space<vmem>>, vector<64x32xbf16>
    %cst_53 = arith.constant dense<0.000000e+00> : vector<8x32xf32>
    %149 = tpu.matmul %147, %148, %cst_53 {dimension_numbers = #tpu.dot_dimension_numbers<[1], [0], [0], [1], [0, 0, 1, 1], [], []>} : vector<8x64xbf16>, vector<64x32xbf16>, vector<8x32xf32> -> vector<8x32xf32>
    %c0_54 = arith.constant 0 : index
    %c0_55 = arith.constant 0 : index
    %150 = vector.load %arg11[%c0_54, %c0_55] : memref<1x32xf32, #tpu.memory_space<vmem>>, vector<1x32xf32>
    %151 = vector.broadcast %150 : vector<1x32xf32> to vector<8x32xf32>
    %152 = arith.addf %149, %151 : vector<8x32xf32>
    %153 = arith.addf %152, %1 : vector<8x32xf32>
    %c0_56 = arith.constant 0 : index
    %c0_57 = arith.constant 0 : index
    %c0_58 = arith.constant 0 : index
    %154 = vector.load %arg12[%c0_56, %c0_57, %c0_58] : memref<1x8x32xf32, #tpu.memory_space<vmem>>, vector<1x8x32xf32>
    %155 = vector.shape_cast %154 : vector<1x8x32xf32> to vector<8x32xf32>
    %156 = vector.shape_cast %153 : vector<8x32xf32> to vector<1x8x32xf32>
    tpu.vector_store %arg12[%c0_56, %c0_57, %c0_58], %156 {strides = array<i32>} : memref<1x8x32xf32, #tpu.memory_space<vmem>>, vector<1x8x32xf32>,
    return
  }
  func.func @transform_0(%arg0: i32) -> (i32, i32, i32) {
    %c0_i32 = arith.constant 0 : i32
    %c0_i32_0 = arith.constant 0 : i32
    %c0_i32_1 = arith.constant 0 : i32
    return %arg0, %c0_i32, %c0_i32_0 : i32, i32, i32
  }
  func.func @transform_1(%arg0: i32) -> (i32, i32, i32) {
    %c0_i32 = arith.constant 0 : i32
    %c0_i32_0 = arith.constant 0 : i32
    %c0_i32_1 = arith.constant 0 : i32
    return %arg0, %c0_i32, %c0_i32_0 : i32, i32, i32
  }
  func.func @transform_2(%arg0: i32) -> (i32, i32, i32) {
    %c0_i32 = arith.constant 0 : i32
    %c0_i32_0 = arith.constant 0 : i32
    %c0_i32_1 = arith.constant 0 : i32
    return %arg0, %c0_i32, %c0_i32_0 : i32, i32, i32
  }
  func.func @transform_3(%arg0: i32) -> (i32, i32) {
    %c0_i32 = arith.constant 0 : i32
    %c0_i32_0 = arith.constant 0 : i32
    %c0_i32_1 = arith.constant 0 : i32
    return %c0_i32, %c0_i32_0 : i32, i32
  }
  func.func @transform_4(%arg0: i32) -> (i32, i32) {
    %c0_i32 = arith.constant 0 : i32
    %c0_i32_0 = arith.constant 0 : i32
    %c0_i32_1 = arith.constant 0 : i32
    return %c0_i32, %c0_i32_0 : i32, i32
  }
  func.func @transform_5(%arg0: i32) -> (i32, i32) {
    %c0_i32 = arith.constant 0 : i32
    %c0_i32_0 = arith.constant 0 : i32
    %c0_i32_1 = arith.constant 0 : i32
    return %c0_i32, %c0_i32_0 : i32, i32
  }
  func.func @transform_6(%arg0: i32) -> (i32, i32) {
    %c0_i32 = arith.constant 0 : i32
    %c0_i32_0 = arith.constant 0 : i32
    %c0_i32_1 = arith.constant 0 : i32
    return %c0_i32, %c0_i32_0 : i32, i32
  }
  func.func @transform_7(%arg0: i32) -> (i32, i32) {
    %c0_i32 = arith.constant 0 : i32
    %c0_i32_0 = arith.constant 0 : i32
    %c0_i32_1 = arith.constant 0 : i32
    return %c0_i32, %c0_i32_0 : i32, i32
  }
  func.func @transform_8(%arg0: i32) -> (i32, i32) {
    %c0_i32 = arith.constant 0 : i32
    %c0_i32_0 = arith.constant 0 : i32
    %c0_i32_1 = arith.constant 0 : i32
    return %c0_i32, %c0_i32_0 : i32, i32
  }
  func.func @transform_9(%arg0: i32) -> (i32, i32) {
    %c0_i32 = arith.constant 0 : i32
    %c0_i32_0 = arith.constant 0 : i32
    %c0_i32_1 = arith.constant 0 : i32
    return %c0_i32, %c0_i32_0 : i32, i32
  }
  func.func @transform_10(%arg0: i32) -> (i32, i32) {
    %c0_i32 = arith.constant 0 : i32
    %c0_i32_0 = arith.constant 0 : i32
    %c0_i32_1 = arith.constant 0 : i32
    return %c0_i32, %c0_i32_0 : i32, i32
  }
  func.func @transform_11(%arg0: i32) -> (i32, i32, i32) {
    %c0_i32 = arith.constant 0 : i32
    %c0_i32_0 = arith.constant 0 : i32
    %c0_i32_1 = arith.constant 0 : i32
    return %arg0, %c0_i32, %c0_i32_0 : i32, i32, i32
  }
}

module attributes {stable_mosaic.version = 11 : i64} {
  func.func @_linear_kernel(%arg0: i32, %arg1: memref<8x32xf32, #tpu.memory_space<vmem>>, %arg2: memref<32x16xbf16, #tpu.memory_space<vmem>>, %arg3: memref<1x16xf32, #tpu.memory_space<vmem>>, %arg4: memref<8x16xf32, #tpu.memory_space<vmem>>) attributes {dimension_semantics = [#tpu.dimension_semantics<parallel>], iteration_bounds = array<i64: 2>, scalar_prefetch = 0 : i64, scratch_operands = 0 : i64, tpu.core_type = #tpu.core_type<tc>, window_params = [{transform_indices = @transform_0, window_bounds = array<i64: 8, 32>}, {pipeline_mode = #tpu.pipeline_mode<synchronous>, transform_indices = @transform_1, window_bounds = array<i64: 32, 16>}, {pipeline_mode = #tpu.pipeline_mode<synchronous>, transform_indices = @transform_2, window_bounds = array<i64: 1, 16>}, {transform_indices = @transform_3, window_bounds = array<i64: 8, 16>}]} {
    %c0 = arith.constant 0 : index
    %c0_0 = arith.constant 0 : index
    %0 = vector.load %arg1[%c0, %c0_0] : memref<8x32xf32, #tpu.memory_space<vmem>>, vector<8x32xf32>
    %1 = arith.truncf %0 : vector<8x32xf32> to vector<8x32xbf16>
    %c0_1 = arith.constant 0 : index
    %c0_2 = arith.constant 0 : index
    %2 = vector.load %arg2[%c0_1, %c0_2] : memref<32x16xbf16, #tpu.memory_space<vmem>>, vector<32x16xbf16>
    %cst = arith.constant dense<0.000000e+00> : vector<8x16xf32>
    %3 = tpu.matmul %1, %2, %cst {dimension_numbers = #tpu.dot_dimension_numbers<[1], [0], [0], [1], [0, 0, 1, 1], [], []>} : vector<8x32xbf16>, vector<32x16xbf16>, vector<8x16xf32> -> vector<8x16xf32>
    %c0_3 = arith.constant 0 : index
    %c0_4 = arith.constant 0 : index
    %4 = vector.load %arg3[%c0_3, %c0_4] : memref<1x16xf32, #tpu.memory_space<vmem>>, vector<1x16xf32>
    %5 = vector.broadcast %4 : vector<1x16xf32> to vector<8x16xf32>
    %6 = arith.addf %3, %5 : vector<8x16xf32>
    %c0_5 = arith.constant 0 : index
    %c0_6 = arith.constant 0 : index
    %7 = vector.load %arg4[%c0_5, %c0_6] : memref<8x16xf32, #tpu.memory_space<vmem>>, vector<8x16xf32>
    tpu.vector_store %arg4[%c0_5, %c0_6], %6 {strides = array<i32>} : memref<8x16xf32, #tpu.memory_space<vmem>>, vector<8x16xf32>,
    return
  }
  func.func @transform_0(%arg0: i32) -> (i32, i32) {
    %c0_i32 = arith.constant 0 : i32
    %c0_i32_0 = arith.constant 0 : i32
    return %arg0, %c0_i32 : i32, i32
  }
  func.func @transform_1(%arg0: i32) -> (i32, i32) {
    %c0_i32 = arith.constant 0 : i32
    %c0_i32_0 = arith.constant 0 : i32
    %c0_i32_1 = arith.constant 0 : i32
    return %c0_i32, %c0_i32_0 : i32, i32
  }
  func.func @transform_2(%arg0: i32) -> (i32, i32) {
    %c0_i32 = arith.constant 0 : i32
    %c0_i32_0 = arith.constant 0 : i32
    %c0_i32_1 = arith.constant 0 : i32
    return %c0_i32, %c0_i32_0 : i32, i32
  }
  func.func @transform_3(%arg0: i32) -> (i32, i32) {
    %c0_i32 = arith.constant 0 : i32
    %c0_i32_0 = arith.constant 0 : i32
    return %arg0, %c0_i32 : i32, i32
  }
}

module attributes {stable_mosaic.version = 11 : i64} {
  func.func @_fused_ffn_kernel(%arg0: i32, %arg1: memref<8x32xf32, #tpu.memory_space<vmem>>, %arg2: memref<1x32xf32, #tpu.memory_space<vmem>>, %arg3: memref<1x32xf32, #tpu.memory_space<vmem>>, %arg4: memref<32x64xbf16, #tpu.memory_space<vmem>>, %arg5: memref<1x64xf32, #tpu.memory_space<vmem>>, %arg6: memref<64x32xbf16, #tpu.memory_space<vmem>>, %arg7: memref<1x32xf32, #tpu.memory_space<vmem>>, %arg8: memref<8x32xf32, #tpu.memory_space<vmem>>) attributes {dimension_semantics = [#tpu.dimension_semantics<parallel>], iteration_bounds = array<i64: 2>, scalar_prefetch = 0 : i64, scratch_operands = 0 : i64, tpu.core_type = #tpu.core_type<tc>, window_params = [{transform_indices = @transform_0, window_bounds = array<i64: 8, 32>}, {pipeline_mode = #tpu.pipeline_mode<synchronous>, transform_indices = @transform_1, window_bounds = array<i64: 1, 32>}, {pipeline_mode = #tpu.pipeline_mode<synchronous>, transform_indices = @transform_2, window_bounds = array<i64: 1, 32>}, {pipeline_mode = #tpu.pipeline_mode<synchronous>, transform_indices = @transform_3, window_bounds = array<i64: 32, 64>}, {pipeline_mode = #tpu.pipeline_mode<synchronous>, transform_indices = @transform_4, window_bounds = array<i64: 1, 64>}, {pipeline_mode = #tpu.pipeline_mode<synchronous>, transform_indices = @transform_5, window_bounds = array<i64: 64, 32>}, {pipeline_mode = #tpu.pipeline_mode<synchronous>, transform_indices = @transform_6, window_bounds = array<i64: 1, 32>}, {transform_indices = @transform_7, window_bounds = array<i64: 8, 32>}]} {
    %c0 = arith.constant 0 : index
    %c0_0 = arith.constant 0 : index
    %0 = vector.load %arg1[%c0, %c0_0] : memref<8x32xf32, #tpu.memory_space<vmem>>, vector<8x32xf32>
    %cst = arith.constant dense<0.000000e+00> : vector<8xf32>
    %1 = vector.multi_reduction <add>, %0, %cst [1] : vector<8x32xf32> to vector<8xf32>
    %2 = vector.shape_cast %1 : vector<8xf32> to vector<8x1xf32>
    %cst_1 = arith.constant 3.200000e+01 : f32
    %3 = vector.broadcast %cst_1 : f32 to vector<8x1xf32>
    %4 = arith.divf %2, %3 : vector<8x1xf32>
    %5 = vector.broadcast %4 : vector<8x1xf32> to vector<8x32xf32>
    %6 = arith.subf %0, %5 : vector<8x32xf32>
    %7 = arith.mulf %6, %6 : vector<8x32xf32>
    %cst_2 = arith.constant dense<0.000000e+00> : vector<8xf32>
    %8 = vector.multi_reduction <add>, %7, %cst_2 [1] : vector<8x32xf32> to vector<8xf32>
    %9 = vector.shape_cast %8 : vector<8xf32> to vector<8x1xf32>
    %cst_3 = arith.constant 3.200000e+01 : f32
    %10 = vector.broadcast %cst_3 : f32 to vector<8x1xf32>
    %11 = arith.divf %9, %10 : vector<8x1xf32>
    %12 = vector.broadcast %4 : vector<8x1xf32> to vector<8x32xf32>
    %13 = arith.subf %0, %12 : vector<8x32xf32>
    %cst_4 = arith.constant 9.99999974E-6 : f32
    %14 = vector.broadcast %cst_4 : f32 to vector<8x1xf32>
    %15 = arith.addf %11, %14 : vector<8x1xf32>
    %16 = math.rsqrt %15 : vector<8x1xf32>
    %17 = vector.broadcast %16 : vector<8x1xf32> to vector<8x32xf32>
    %18 = arith.mulf %13, %17 : vector<8x32xf32>
    %c0_5 = arith.constant 0 : index
    %c0_6 = arith.constant 0 : index
    %19 = vector.load %arg2[%c0_5, %c0_6] : memref<1x32xf32, #tpu.memory_space<vmem>>, vector<1x32xf32>
    %20 = vector.broadcast %19 : vector<1x32xf32> to vector<8x32xf32>
    %21 = arith.mulf %18, %20 : vector<8x32xf32>
    %c0_7 = arith.constant 0 : index
    %c0_8 = arith.constant 0 : index
    %22 = vector.load %arg3[%c0_7, %c0_8] : memref<1x32xf32, #tpu.memory_space<vmem>>, vector<1x32xf32>
    %23 = vector.broadcast %22 : vector<1x32xf32> to vector<8x32xf32>
    %24 = arith.addf %21, %23 : vector<8x32xf32>
    %25 = arith.truncf %24 : vector<8x32xf32> to vector<8x32xbf16>
    %c0_9 = arith.constant 0 : index
    %c0_10 = arith.constant 0 : index
    %26 = vector.load %arg4[%c0_9, %c0_10] : memref<32x64xbf16, #tpu.memory_space<vmem>>, vector<32x64xbf16>
    %cst_11 = arith.constant dense<0.000000e+00> : vector<8x64xf32>
    %27 = tpu.matmul %25, %26, %cst_11 {dimension_numbers = #tpu.dot_dimension_numbers<[1], [0], [0], [1], [0, 0, 1, 1], [], []>} : vector<8x32xbf16>, vector<32x64xbf16>, vector<8x64xf32> -> vector<8x64xf32>
    %c0_12 = arith.constant 0 : index
    %c0_13 = arith.constant 0 : index
    %28 = vector.load %arg5[%c0_12, %c0_13] : memref<1x64xf32, #tpu.memory_space<vmem>>, vector<1x64xf32>
    %29 = vector.broadcast %28 : vector<1x64xf32> to vector<8x64xf32>
    %30 = arith.addf %27, %29 : vector<8x64xf32>
    %cst_14 = arith.constant 0.000000e+00 : f32
    %31 = vector.broadcast %cst_14 : f32 to vector<8x64xf32>
    %32 = arith.maximumf %30, %31 : vector<8x64xf32>
    %33 = arith.truncf %32 : vector<8x64xf32> to vector<8x64xbf16>
    %c0_15 = arith.constant 0 : index
    %c0_16 = arith.constant 0 : index
    %34 = vector.load %arg6[%c0_15, %c0_16] : memref<64x32xbf16, #tpu.memory_space<vmem>>, vector<64x32xbf16>
    %cst_17 = arith.constant dense<0.000000e+00> : vector<8x32xf32>
    %35 = tpu.matmul %33, %34, %cst_17 {dimension_numbers = #tpu.dot_dimension_numbers<[1], [0], [0], [1], [0, 0, 1, 1], [], []>} : vector<8x64xbf16>, vector<64x32xbf16>, vector<8x32xf32> -> vector<8x32xf32>
    %c0_18 = arith.constant 0 : index
    %c0_19 = arith.constant 0 : index
    %36 = vector.load %arg7[%c0_18, %c0_19] : memref<1x32xf32, #tpu.memory_space<vmem>>, vector<1x32xf32>
    %37 = vector.broadcast %36 : vector<1x32xf32> to vector<8x32xf32>
    %38 = arith.addf %35, %37 : vector<8x32xf32>
    %39 = arith.addf %38, %0 : vector<8x32xf32>
    %c0_20 = arith.constant 0 : index
    %c0_21 = arith.constant 0 : index
    %40 = vector.load %arg8[%c0_20, %c0_21] : memref<8x32xf32, #tpu.memory_space<vmem>>, vector<8x32xf32>
    tpu.vector_store %arg8[%c0_20, %c0_21], %39 {strides = array<i32>} : memref<8x32xf32, #tpu.memory_space<vmem>>, vector<8x32xf32>,
    return
  }
  func.func @transform_0(%arg0: i32) -> (i32, i32) {
    %c0_i32 = arith.constant 0 : i32
    %c0_i32_0 = arith.constant 0 : i32
    return %arg0, %c0_i32 : i32, i32
  }
  func.func @transform_1(%arg0: i32) -> (i32, i32) {
    %c0_i32 = arith.constant 0 : i32
    %c0_i32_0 = arith.constant 0 : i32
    %c0_i32_1 = arith.constant 0 : i32
    return %c0_i32, %c0_i32_0 : i32, i32
  }
  func.func @transform_2(%arg0: i32) -> (i32, i32) {
    %c0_i32 = arith.constant 0 : i32
    %c0_i32_0 = arith.constant 0 : i32
    %c0_i32_1 = arith.constant 0 : i32
    return %c0_i32, %c0_i32_0 : i32, i32
  }
  func.func @transform_3(%arg0: i32) -> (i32, i32) {
    %c0_i32 = arith.constant 0 : i32
    %c0_i32_0 = arith.constant 0 : i32
    %c0_i32_1 = arith.constant 0 : i32
    return %c0_i32, %c0_i32_0 : i32, i32
  }
  func.func @transform_4(%arg0: i32) -> (i32, i32) {
    %c0_i32 = arith.constant 0 : i32
    %c0_i32_0 = arith.constant 0 : i32
    %c0_i32_1 = arith.constant 0 : i32
    return %c0_i32, %c0_i32_0 : i32, i32
  }
  func.func @transform_5(%arg0: i32) -> (i32, i32) {
    %c0_i32 = arith.constant 0 : i32
    %c0_i32_0 = arith.constant 0 : i32
    %c0_i32_1 = arith.constant 0 : i32
    return %c0_i32, %c0_i32_0 : i32, i32
  }
  func.func @transform_6(%arg0: i32) -> (i32, i32) {
    %c0_i32 = arith.constant 0 : i32
    %c0_i32_0 = arith.constant 0 : i32
    %c0_i32_1 = arith.constant 0 : i32
    return %c0_i32, %c0_i32_0 : i32, i32
  }
  func.func @transform_7(%arg0: i32) -> (i32, i32) {
    %c0_i32 = arith.constant 0 : i32
    %c0_i32_0 = arith.constant 0 : i32
    return %arg0, %c0_i32 : i32, i32
  }
}

module attributes {stable_mosaic.version = 11 : i64} {
  func.func @_fused_mha_kernel(%arg0: i32, %arg1: memref<1x8x32xf32, #tpu.memory_space<vmem>>, %arg2: memref<1x32xf32, #tpu.memory_space<vmem>>, %arg3: memref<1x32xf32, #tpu.memory_space<vmem>>, %arg4: memref<32x192xbf16, #tpu.memory_space<vmem>>, %arg5: memref<1x192xf32, #tpu.memory_space<vmem>>, %arg6: memref<64x32xbf16, #tpu.memory_space<vmem>>, %arg7: memref<1x32xf32, #tpu.memory_space<vmem>>, %arg8: memref<1x8x32xf32, #tpu.memory_space<vmem>>) attributes {dimension_semantics = [#tpu.dimension_semantics<parallel>], iteration_bounds = array<i64: 2>, scalar_prefetch = 0 : i64, scratch_operands = 0 : i64, tpu.core_type = #tpu.core_type<tc>, window_params = [{transform_indices = @transform_0, window_bounds = array<i64: 1, 8, 32>}, {pipeline_mode = #tpu.pipeline_mode<synchronous>, transform_indices = @transform_1, window_bounds = array<i64: 1, 32>}, {pipeline_mode = #tpu.pipeline_mode<synchronous>, transform_indices = @transform_2, window_bounds = array<i64: 1, 32>}, {pipeline_mode = #tpu.pipeline_mode<synchronous>, transform_indices = @transform_3, window_bounds = array<i64: 32, 192>}, {pipeline_mode = #tpu.pipeline_mode<synchronous>, transform_indices = @transform_4, window_bounds = array<i64: 1, 192>}, {pipeline_mode = #tpu.pipeline_mode<synchronous>, transform_indices = @transform_5, window_bounds = array<i64: 64, 32>}, {pipeline_mode = #tpu.pipeline_mode<synchronous>, transform_indices = @transform_6, window_bounds = array<i64: 1, 32>}, {transform_indices = @transform_7, window_bounds = array<i64: 1, 8, 32>}]} {
    %c0 = arith.constant 0 : index
    %c0_0 = arith.constant 0 : index
    %c0_1 = arith.constant 0 : index
    %0 = vector.load %arg1[%c0, %c0_0, %c0_1] : memref<1x8x32xf32, #tpu.memory_space<vmem>>, vector<1x8x32xf32>
    %1 = vector.shape_cast %0 : vector<1x8x32xf32> to vector<8x32xf32>
    %cst = arith.constant dense<0.000000e+00> : vector<8xf32>
    %2 = vector.multi_reduction <add>, %1, %cst [1] : vector<8x32xf32> to vector<8xf32>
    %3 = vector.shape_cast %2 : vector<8xf32> to vector<8x1xf32>
    %cst_2 = arith.constant 3.200000e+01 : f32
    %4 = vector.broadcast %cst_2 : f32 to vector<8x1xf32>
    %5 = arith.divf %3, %4 : vector<8x1xf32>
    %6 = vector.broadcast %5 : vector<8x1xf32> to vector<8x32xf32>
    %7 = arith.subf %1, %6 : vector<8x32xf32>
    %8 = arith.mulf %7, %7 : vector<8x32xf32>
    %cst_3 = arith.constant dense<0.000000e+00> : vector<8xf32>
    %9 = vector.multi_reduction <add>, %8, %cst_3 [1] : vector<8x32xf32> to vector<8xf32>
    %10 = vector.shape_cast %9 : vector<8xf32> to vector<8x1xf32>
    %cst_4 = arith.constant 3.200000e+01 : f32
    %11 = vector.broadcast %cst_4 : f32 to vector<8x1xf32>
    %12 = arith.divf %10, %11 : vector<8x1xf32>
    %13 = vector.broadcast %5 : vector<8x1xf32> to vector<8x32xf32>
    %14 = arith.subf %1, %13 : vector<8x32xf32>
    %cst_5 = arith.constant 9.99999974E-6 : f32
    %15 = vector.broadcast %cst_5 : f32 to vector<8x1xf32>
    %16 = arith.addf %12, %15 : vector<8x1xf32>
    %17 = math.rsqrt %16 : vector<8x1xf32>
    %18 = vector.broadcast %17 : vector<8x1xf32> to vector<8x32xf32>
    %19 = arith.mulf %14, %18 : vector<8x32xf32>
    %c0_6 = arith.constant 0 : index
    %c0_7 = arith.constant 0 : index
    %20 = vector.load %arg2[%c0_6, %c0_7] : memref<1x32xf32, #tpu.memory_space<vmem>>, vector<1x32xf32>
    %21 = vector.broadcast %20 : vector<1x32xf32> to vector<8x32xf32>
    %22 = arith.mulf %19, %21 : vector<8x32xf32>
    %c0_8 = arith.constant 0 : index
    %c0_9 = arith.constant 0 : index
    %23 = vector.load %arg3[%c0_8, %c0_9] : memref<1x32xf32, #tpu.memory_space<vmem>>, vector<1x32xf32>
    %24 = vector.broadcast %23 : vector<1x32xf32> to vector<8x32xf32>
    %25 = arith.addf %22, %24 : vector<8x32xf32>
    %26 = arith.truncf %25 : vector<8x32xf32> to vector<8x32xbf16>
    %c0_10 = arith.constant 0 : index
    %c0_11 = arith.constant 0 : index
    %27 = vector.load %arg4[%c0_10, %c0_11] : memref<32x192xbf16, #tpu.memory_space<vmem>>, vector<32x192xbf16>
    %cst_12 = arith.constant dense<0.000000e+00> : vector<8x192xf32>
    %28 = tpu.matmul %26, %27, %cst_12 {dimension_numbers = #tpu.dot_dimension_numbers<[1], [0], [0], [1], [0, 0, 1, 1], [], []>} : vector<8x32xbf16>, vector<32x192xbf16>, vector<8x192xf32> -> vector<8x192xf32>
    %c0_13 = arith.constant 0 : index
    %c0_14 = arith.constant 0 : index
    %29 = vector.load %arg5[%c0_13, %c0_14] : memref<1x192xf32, #tpu.memory_space<vmem>>, vector<1x192xf32>
    %30 = vector.broadcast %29 : vector<1x192xf32> to vector<8x192xf32>
    %31 = arith.addf %28, %30 : vector<8x192xf32>
    %32 = vector.extract_strided_slice %31 {offsets = [0, 0], sizes = [8, 64], strides = [1, 1]} : vector<8x192xf32> to vector<8x64xf32>
    %33 = vector.extract_strided_slice %31 {offsets = [0, 64], sizes = [8, 64], strides = [1, 1]} : vector<8x192xf32> to vector<8x64xf32>
    %34 = vector.extract_strided_slice %31 {offsets = [0, 128], sizes = [8, 64], strides = [1, 1]} : vector<8x192xf32> to vector<8x64xf32>
    %35 = vector.extract_strided_slice %32 {offsets = [0, 0], sizes = [8, 16], strides = [1, 1]} : vector<8x64xf32> to vector<8x16xf32>
    %36 = arith.truncf %35 : vector<8x16xf32> to vector<8x16xbf16>
    %37 = vector.extract_strided_slice %33 {offsets = [0, 0], sizes = [8, 16], strides = [1, 1]} : vector<8x64xf32> to vector<8x16xf32>
    %38 = arith.truncf %37 : vector<8x16xf32> to vector<8x16xbf16>
    %39 = vector.extract_strided_slice %34 {offsets = [0, 0], sizes = [8, 16], strides = [1, 1]} : vector<8x64xf32> to vector<8x16xf32>
    %40 = arith.truncf %39 : vector<8x16xf32> to vector<8x16xbf16>
    "tpu.trace_start"() <{level = 10 : i32, message = "qd,kd->qk"}> : () -> ()
    %cst_15 = arith.constant dense<0.000000e+00> : vector<8x8xf32>
    %41 = tpu.matmul %36, %38, %cst_15 {dimension_numbers = #tpu.dot_dimension_numbers<[1], [1], [0], [0], [0, 0, 1, 0], [], []>} : vector<8x16xbf16>, vector<8x16xbf16>, vector<8x8xf32> -> vector<8x8xf32>
    "tpu.trace_stop"() : () -> ()
    %cst_16 = arith.constant 2.500000e-01 : f32
    %42 = vector.broadcast %cst_16 : f32 to vector<8x8xf32>
    %43 = arith.mulf %41, %42 : vector<8x8xf32>
    %cst_17 = arith.constant dense<0xFF800000> : vector<8xf32>
    %44 = vector.multi_reduction <maximumf>, %43, %cst_17 [1] : vector<8x8xf32> to vector<8xf32>
    %45 = vector.shape_cast %44 : vector<8xf32> to vector<8x1xf32>
    %46 = vector.broadcast %45 : vector<8x1xf32> to vector<8x8xf32>
    %47 = arith.subf %43, %46 : vector<8x8xf32>
    %48 = math.exp %47 : vector<8x8xf32>
    %cst_18 = arith.constant dense<0.000000e+00> : vector<8xf32>
    %49 = vector.multi_reduction <add>, %48, %cst_18 [1] : vector<8x8xf32> to vector<8xf32>
    %50 = vector.shape_cast %49 : vector<8xf32> to vector<8x1xf32>
    %51 = tpu.reciprocal %50 {approx = true} : vector<8x1xf32> -> vector<8x1xf32>
    %52 = arith.truncf %48 : vector<8x8xf32> to vector<8x8xbf16>
    "tpu.trace_start"() <{level = 10 : i32, message = "qk,kd->qd"}> : () -> ()
    %cst_19 = arith.constant dense<0.000000e+00> : vector<8x16xf32>
    %53 = tpu.matmul %52, %40, %cst_19 {dimension_numbers = #tpu.dot_dimension_numbers<[1], [0], [0], [1], [0, 0, 1, 1], [], []>} : vector<8x8xbf16>, vector<8x16xbf16>, vector<8x16xf32> -> vector<8x16xf32>
    "tpu.trace_stop"() : () -> ()
    %54 = vector.broadcast %51 : vector<8x1xf32> to vector<8x16xf32>
    %55 = arith.mulf %53, %54 : vector<8x16xf32>
    %56 = vector.extract_strided_slice %32 {offsets = [0, 16], sizes = [8, 16], strides = [1, 1]} : vector<8x64xf32> to vector<8x16xf32>
    %57 = arith.truncf %56 : vector<8x16xf32> to vector<8x16xbf16>
    %58 = vector.extract_strided_slice %33 {offsets = [0, 16], sizes = [8, 16], strides = [1, 1]} : vector<8x64xf32> to vector<8x16xf32>
    %59 = arith.truncf %58 : vector<8x16xf32> to vector<8x16xbf16>
    %60 = vector.extract_strided_slice %34 {offsets = [0, 16], sizes = [8, 16], strides = [1, 1]} : vector<8x64xf32> to vector<8x16xf32>
    %61 = arith.truncf %60 : vector<8x16xf32> to vector<8x16xbf16>
    "tpu.trace_start"() <{level = 10 : i32, message = "qd,kd->qk"}> : () -> ()
    %cst_20 = arith.constant dense<0.000000e+00> : vector<8x8xf32>
    %62 = tpu.matmul %57, %59, %cst_20 {dimension_numbers = #tpu.dot_dimension_numbers<[1], [1], [0], [0], [0, 0, 1, 0], [], []>} : vector<8x16xbf16>, vector<8x16xbf16>, vector<8x8xf32> -> vector<8x8xf32>
    "tpu.trace_stop"() : () -> ()
    %cst_21 = arith.constant 2.500000e-01 : f32
    %63 = vector.broadcast %cst_21 : f32 to vector<8x8xf32>
    %64 = arith.mulf %62, %63 : vector<8x8xf32>
    %cst_22 = arith.constant dense<0xFF800000> : vector<8xf32>
    %65 = vector.multi_reduction <maximumf>, %64, %cst_22 [1] : vector<8x8xf32> to vector<8xf32>
    %66 = vector.shape_cast %65 : vector<8xf32> to vector<8x1xf32>
    %67 = vector.broadcast %66 : vector<8x1xf32> to vector<8x8xf32>
    %68 = arith.subf %64, %67 : vector<8x8xf32>
    %69 = math.exp %68 : vector<8x8xf32>
    %cst_23 = arith.constant dense<0.000000e+00> : vector<8xf32>
    %70 = vector.multi_reduction <add>, %69, %cst_23 [1] : vector<8x8xf32> to vector<8xf32>
    %71 = vector.shape_cast %70 : vector<8xf32> to vector<8x1xf32>
    %72 = tpu.reciprocal %71 {approx = true} : vector<8x1xf32> -> vector<8x1xf32>
    %73 = arith.truncf %69 : vector<8x8xf32> to vector<8x8xbf16>
    "tpu.trace_start"() <{level = 10 : i32, message = "qk,kd->qd"}> : () -> ()
    %cst_24 = arith.constant dense<0.000000e+00> : vector<8x16xf32>
    %74 = tpu.matmul %73, %61, %cst_24 {dimension_numbers = #tpu.dot_dimension_numbers<[1], [0], [0], [1], [0, 0, 1, 1], [], []>} : vector<8x8xbf16>, vector<8x16xbf16>, vector<8x16xf32> -> vector<8x16xf32>
    "tpu.trace_stop"() : () -> ()
    %75 = vector.broadcast %72 : vector<8x1xf32> to vector<8x16xf32>
    %76 = arith.mulf %74, %75 : vector<8x16xf32>
    %77 = vector.extract_strided_slice %32 {offsets = [0, 32], sizes = [8, 16], strides = [1, 1]} : vector<8x64xf32> to vector<8x16xf32>
    %78 = arith.truncf %77 : vector<8x16xf32> to vector<8x16xbf16>
    %79 = vector.extract_strided_slice %33 {offsets = [0, 32], sizes = [8, 16], strides = [1, 1]} : vector<8x64xf32> to vector<8x16xf32>
    %80 = arith.truncf %79 : vector<8x16xf32> to vector<8x16xbf16>
    %81 = vector.extract_strided_slice %34 {offsets = [0, 32], sizes = [8, 16], strides = [1, 1]} : vector<8x64xf32> to vector<8x16xf32>
    %82 = arith.truncf %81 : vector<8x16xf32> to vector<8x16xbf16>
    "tpu.trace_start"() <{level = 10 : i32, message = "qd,kd->qk"}> : () -> ()
    %cst_25 = arith.constant dense<0.000000e+00> : vector<8x8xf32>
    %83 = tpu.matmul %78, %80, %cst_25 {dimension_numbers = #tpu.dot_dimension_numbers<[1], [1], [0], [0], [0, 0, 1, 0], [], []>} : vector<8x16xbf16>, vector<8x16xbf16>, vector<8x8xf32> -> vector<8x8xf32>
    "tpu.trace_stop"() : () -> ()
    %cst_26 = arith.constant 2.500000e-01 : f32
    %84 = vector.broadcast %cst_26 : f32 to vector<8x8xf32>
    %85 = arith.mulf %83, %84 : vector<8x8xf32>
    %cst_27 = arith.constant dense<0xFF800000> : vector<8xf32>
    %86 = vector.multi_reduction <maximumf>, %85, %cst_27 [1] : vector<8x8xf32> to vector<8xf32>
    %87 = vector.shape_cast %86 : vector<8xf32> to vector<8x1xf32>
    %88 = vector.broadcast %87 : vector<8x1xf32> to vector<8x8xf32>
    %89 = arith.subf %85, %88 : vector<8x8xf32>
    %90 = math.exp %89 : vector<8x8xf32>
    %cst_28 = arith.constant dense<0.000000e+00> : vector<8xf32>
    %91 = vector.multi_reduction <add>, %90, %cst_28 [1] : vector<8x8xf32> to vector<8xf32>
    %92 = vector.shape_cast %91 : vector<8xf32> to vector<8x1xf32>
    %93 = tpu.reciprocal %92 {approx = true} : vector<8x1xf32> -> vector<8x1xf32>
    %94 = arith.truncf %90 : vector<8x8xf32> to vector<8x8xbf16>
    "tpu.trace_start"() <{level = 10 : i32, message = "qk,kd->qd"}> : () -> ()
    %cst_29 = arith.constant dense<0.000000e+00> : vector<8x16xf32>
    %95 = tpu.matmul %94, %82, %cst_29 {dimension_numbers = #tpu.dot_dimension_numbers<[1], [0], [0], [1], [0, 0, 1, 1], [], []>} : vector<8x8xbf16>, vector<8x16xbf16>, vector<8x16xf32> -> vector<8x16xf32>
    "tpu.trace_stop"() : () -> ()
    %96 = vector.broadcast %93 : vector<8x1xf32> to vector<8x16xf32>
    %97 = arith.mulf %95, %96 : vector<8x16xf32>
    %98 = vector.extract_strided_slice %32 {offsets = [0, 48], sizes = [8, 16], strides = [1, 1]} : vector<8x64xf32> to vector<8x16xf32>
    %99 = arith.truncf %98 : vector<8x16xf32> to vector<8x16xbf16>
    %100 = vector.extract_strided_slice %33 {offsets = [0, 48], sizes = [8, 16], strides = [1, 1]} : vector<8x64xf32> to vector<8x16xf32>
    %101 = arith.truncf %100 : vector<8x16xf32> to vector<8x16xbf16>
    %102 = vector.extract_strided_slice %34 {offsets = [0, 48], sizes = [8, 16], strides = [1, 1]} : vector<8x64xf32> to vector<8x16xf32>
    %103 = arith.truncf %102 : vector<8x16xf32> to vector<8x16xbf16>
    "tpu.trace_start"() <{level = 10 : i32, message = "qd,kd->qk"}> : () -> ()
    %cst_30 = arith.constant dense<0.000000e+00> : vector<8x8xf32>
    %104 = tpu.matmul %99, %101, %cst_30 {dimension_numbers = #tpu.dot_dimension_numbers<[1], [1], [0], [0], [0, 0, 1, 0], [], []>} : vector<8x16xbf16>, vector<8x16xbf16>, vector<8x8xf32> -> vector<8x8xf32>
    "tpu.trace_stop"() : () -> ()
    %cst_31 = arith.constant 2.500000e-01 : f32
    %105 = vector.broadcast %cst_31 : f32 to vector<8x8xf32>
    %106 = arith.mulf %104, %105 : vector<8x8xf32>
    %cst_32 = arith.constant dense<0xFF800000> : vector<8xf32>
    %107 = vector.multi_reduction <maximumf>, %106, %cst_32 [1] : vector<8x8xf32> to vector<8xf32>
    %108 = vector.shape_cast %107 : vector<8xf32> to vector<8x1xf32>
    %109 = vector.broadcast %108 : vector<8x1xf32> to vector<8x8xf32>
    %110 = arith.subf %106, %109 : vector<8x8xf32>
    %111 = math.exp %110 : vector<8x8xf32>
    %cst_33 = arith.constant dense<0.000000e+00> : vector<8xf32>
    %112 = vector.multi_reduction <add>, %111, %cst_33 [1] : vector<8x8xf32> to vector<8xf32>
    %113 = vector.shape_cast %112 : vector<8xf32> to vector<8x1xf32>
    %114 = tpu.reciprocal %113 {approx = true} : vector<8x1xf32> -> vector<8x1xf32>
    %115 = arith.truncf %111 : vector<8x8xf32> to vector<8x8xbf16>
    "tpu.trace_start"() <{level = 10 : i32, message = "qk,kd->qd"}> : () -> ()
    %cst_34 = arith.constant dense<0.000000e+00> : vector<8x16xf32>
    %116 = tpu.matmul %115, %103, %cst_34 {dimension_numbers = #tpu.dot_dimension_numbers<[1], [0], [0], [1], [0, 0, 1, 1], [], []>} : vector<8x8xbf16>, vector<8x16xbf16>, vector<8x16xf32> -> vector<8x16xf32>
    "tpu.trace_stop"() : () -> ()
    %117 = vector.broadcast %114 : vector<8x1xf32> to vector<8x16xf32>
    %118 = arith.mulf %116, %117 : vector<8x16xf32>
    %119 = tpu.concatenate %55, %76, %97, %118 in 1 : vector<8x16xf32>, vector<8x16xf32>, vector<8x16xf32>, vector<8x16xf32> -> vector<8x64xf32>
    %120 = arith.truncf %119 : vector<8x64xf32> to vector<8x64xbf16>
    %c0_35 = arith.constant 0 : index
    %c0_36 = arith.constant 0 : index
    %121 = vector.load %arg6[%c0_35, %c0_36] : memref<64x32xbf16, #tpu.memory_space<vmem>>, vector<64x32xbf16>
    %cst_37 = arith.constant dense<0.000000e+00> : vector<8x32xf32>
    %122 = tpu.matmul %120, %121, %cst_37 {dimension_numbers = #tpu.dot_dimension_numbers<[1], [0], [0], [1], [0, 0, 1, 1], [], []>} : vector<8x64xbf16>, vector<64x32xbf16>, vector<8x32xf32> -> vector<8x32xf32>
    %c0_38 = arith.constant 0 : index
    %c0_39 = arith.constant 0 : index
    %123 = vector.load %arg7[%c0_38, %c0_39] : memref<1x32xf32, #tpu.memory_space<vmem>>, vector<1x32xf32>
    %124 = vector.broadcast %123 : vector<1x32xf32> to vector<8x32xf32>
    %125 = arith.addf %122, %124 : vector<8x32xf32>
    %126 = arith.addf %125, %1 : vector<8x32xf32>
    %c0_40 = arith.constant 0 : index
    %c0_41 = arith.constant 0 : index
    %c0_42 = arith.constant 0 : index
    %127 = vector.load %arg8[%c0_40, %c0_41, %c0_42] : memref<1x8x32xf32, #tpu.memory_space<vmem>>, vector<1x8x32xf32>
    %128 = vector.shape_cast %127 : vector<1x8x32xf32> to vector<8x32xf32>
    %129 = vector.shape_cast %126 : vector<8x32xf32> to vector<1x8x32xf32>
    tpu.vector_store %arg8[%c0_40, %c0_41, %c0_42], %129 {strides = array<i32>} : memref<1x8x32xf32, #tpu.memory_space<vmem>>, vector<1x8x32xf32>,
    return
  }
  func.func @transform_0(%arg0: i32) -> (i32, i32, i32) {
    %c0_i32 = arith.constant 0 : i32
    %c0_i32_0 = arith.constant 0 : i32
    %c0_i32_1 = arith.constant 0 : i32
    return %arg0, %c0_i32, %c0_i32_0 : i32, i32, i32
  }
  func.func @transform_1(%arg0: i32) -> (i32, i32) {
    %c0_i32 = arith.constant 0 : i32
    %c0_i32_0 = arith.constant 0 : i32
    %c0_i32_1 = arith.constant 0 : i32
    return %c0_i32, %c0_i32_0 : i32, i32
  }
  func.func @transform_2(%arg0: i32) -> (i32, i32) {
    %c0_i32 = arith.constant 0 : i32
    %c0_i32_0 = arith.constant 0 : i32
    %c0_i32_1 = arith.constant 0 : i32
    return %c0_i32, %c0_i32_0 : i32, i32
  }
  func.func @transform_3(%arg0: i32) -> (i32, i32) {
    %c0_i32 = arith.constant 0 : i32
    %c0_i32_0 = arith.constant 0 : i32
    %c0_i32_1 = arith.constant 0 : i32
    return %c0_i32, %c0_i32_0 : i32, i32
  }
  func.func @transform_4(%arg0: i32) -> (i32, i32) {
    %c0_i32 = arith.constant 0 : i32
    %c0_i32_0 = arith.constant 0 : i32
    %c0_i32_1 = arith.constant 0 : i32
    return %c0_i32, %c0_i32_0 : i32, i32
  }
  func.func @transform_5(%arg0: i32) -> (i32, i32) {
    %c0_i32 = arith.constant 0 : i32
    %c0_i32_0 = arith.constant 0 : i32
    %c0_i32_1 = arith.constant 0 : i32
    return %c0_i32, %c0_i32_0 : i32, i32
  }
  func.func @transform_6(%arg0: i32) -> (i32, i32) {
    %c0_i32 = arith.constant 0 : i32
    %c0_i32_0 = arith.constant 0 : i32
    %c0_i32_1 = arith.constant 0 : i32
    return %c0_i32, %c0_i32_0 : i32, i32
  }
  func.func @transform_7(%arg0: i32) -> (i32, i32, i32) {
    %c0_i32 = arith.constant 0 : i32
    %c0_i32_0 = arith.constant 0 : i32
    %c0_i32_1 = arith.constant 0 : i32
    return %arg0, %c0_i32, %c0_i32_0 : i32, i32, i32
  }
}

module attributes {stable_mosaic.version = 11 : i64} {
  func.func @_fused_ffn_kernel(%arg0: i32, %arg1: memref<8x32xf32, #tpu.memory_space<vmem>>, %arg2: memref<1x32xf32, #tpu.memory_space<vmem>>, %arg3: memref<1x32xf32, #tpu.memory_space<vmem>>, %arg4: memref<32x128xbf16, #tpu.memory_space<vmem>>, %arg5: memref<1x128xf32, #tpu.memory_space<vmem>>, %arg6: memref<128x32xbf16, #tpu.memory_space<vmem>>, %arg7: memref<1x32xf32, #tpu.memory_space<vmem>>, %arg8: memref<8x32xf32, #tpu.memory_space<vmem>>) attributes {dimension_semantics = [#tpu.dimension_semantics<parallel>], iteration_bounds = array<i64: 2>, scalar_prefetch = 0 : i64, scratch_operands = 0 : i64, tpu.core_type = #tpu.core_type<tc>, window_params = [{transform_indices = @transform_0, window_bounds = array<i64: 8, 32>}, {pipeline_mode = #tpu.pipeline_mode<synchronous>, transform_indices = @transform_1, window_bounds = array<i64: 1, 32>}, {pipeline_mode = #tpu.pipeline_mode<synchronous>, transform_indices = @transform_2, window_bounds = array<i64: 1, 32>}, {pipeline_mode = #tpu.pipeline_mode<synchronous>, transform_indices = @transform_3, window_bounds = array<i64: 32, 128>}, {pipeline_mode = #tpu.pipeline_mode<synchronous>, transform_indices = @transform_4, window_bounds = array<i64: 1, 128>}, {pipeline_mode = #tpu.pipeline_mode<synchronous>, transform_indices = @transform_5, window_bounds = array<i64: 128, 32>}, {pipeline_mode = #tpu.pipeline_mode<synchronous>, transform_indices = @transform_6, window_bounds = array<i64: 1, 32>}, {transform_indices = @transform_7, window_bounds = array<i64: 8, 32>}]} {
    %c0 = arith.constant 0 : index
    %c0_0 = arith.constant 0 : index
    %0 = vector.load %arg1[%c0, %c0_0] : memref<8x32xf32, #tpu.memory_space<vmem>>, vector<8x32xf32>
    %cst = arith.constant dense<0.000000e+00> : vector<8xf32>
    %1 = vector.multi_reduction <add>, %0, %cst [1] : vector<8x32xf32> to vector<8xf32>
    %2 = vector.shape_cast %1 : vector<8xf32> to vector<8x1xf32>
    %cst_1 = arith.constant 3.200000e+01 : f32
    %3 = vector.broadcast %cst_1 : f32 to vector<8x1xf32>
    %4 = arith.divf %2, %3 : vector<8x1xf32>
    %5 = vector.broadcast %4 : vector<8x1xf32> to vector<8x32xf32>
    %6 = arith.subf %0, %5 : vector<8x32xf32>
    %7 = arith.mulf %6, %6 : vector<8x32xf32>
    %cst_2 = arith.constant dense<0.000000e+00> : vector<8xf32>
    %8 = vector.multi_reduction <add>, %7, %cst_2 [1] : vector<8x32xf32> to vector<8xf32>
    %9 = vector.shape_cast %8 : vector<8xf32> to vector<8x1xf32>
    %cst_3 = arith.constant 3.200000e+01 : f32
    %10 = vector.broadcast %cst_3 : f32 to vector<8x1xf32>
    %11 = arith.divf %9, %10 : vector<8x1xf32>
    %12 = vector.broadcast %4 : vector<8x1xf32> to vector<8x32xf32>
    %13 = arith.subf %0, %12 : vector<8x32xf32>
    %cst_4 = arith.constant 9.99999974E-6 : f32
    %14 = vector.broadcast %cst_4 : f32 to vector<8x1xf32>
    %15 = arith.addf %11, %14 : vector<8x1xf32>
    %16 = math.rsqrt %15 : vector<8x1xf32>
    %17 = vector.broadcast %16 : vector<8x1xf32> to vector<8x32xf32>
    %18 = arith.mulf %13, %17 : vector<8x32xf32>
    %c0_5 = arith.constant 0 : index
    %c0_6 = arith.constant 0 : index
    %19 = vector.load %arg2[%c0_5, %c0_6] : memref<1x32xf32, #tpu.memory_space<vmem>>, vector<1x32xf32>
    %20 = vector.broadcast %19 : vector<1x32xf32> to vector<8x32xf32>
    %21 = arith.mulf %18, %20 : vector<8x32xf32>
    %c0_7 = arith.constant 0 : index
    %c0_8 = arith.constant 0 : index
    %22 = vector.load %arg3[%c0_7, %c0_8] : memref<1x32xf32, #tpu.memory_space<vmem>>, vector<1x32xf32>
    %23 = vector.broadcast %22 : vector<1x32xf32> to vector<8x32xf32>
    %24 = arith.addf %21, %23 : vector<8x32xf32>
    %25 = arith.truncf %24 : vector<8x32xf32> to vector<8x32xbf16>
    %c0_9 = arith.constant 0 : index
    %c0_10 = arith.constant 0 : index
    %26 = vector.load %arg4[%c0_9, %c0_10] : memref<32x128xbf16, #tpu.memory_space<vmem>>, vector<32x128xbf16>
    %cst_11 = arith.constant dense<0.000000e+00> : vector<8x128xf32>
    %27 = tpu.matmul %25, %26, %cst_11 {dimension_numbers = #tpu.dot_dimension_numbers<[1], [0], [0], [1], [0, 0, 1, 1], [], []>} : vector<8x32xbf16>, vector<32x128xbf16>, vector<8x128xf32> -> vector<8x128xf32>
    %c0_12 = arith.constant 0 : index
    %c0_13 = arith.constant 0 : index
    %28 = vector.load %arg5[%c0_12, %c0_13] : memref<1x128xf32, #tpu.memory_space<vmem>>, vector<1x128xf32>
    %29 = vector.broadcast %28 : vector<1x128xf32> to vector<8x128xf32>
    %30 = arith.addf %27, %29 : vector<8x128xf32>
    %cst_14 = arith.constant 0.000000e+00 : f32
    %31 = vector.broadcast %cst_14 : f32 to vector<8x128xf32>
    %32 = arith.maximumf %30, %31 : vector<8x128xf32>
    %33 = arith.truncf %32 : vector<8x128xf32> to vector<8x128xbf16>
    %c0_15 = arith.constant 0 : index
    %c0_16 = arith.constant 0 : index
    %34 = vector.load %arg6[%c0_15, %c0_16] : memref<128x32xbf16, #tpu.memory_space<vmem>>, vector<128x32xbf16>
    %cst_17 = arith.constant dense<0.000000e+00> : vector<8x32xf32>
    %35 = tpu.matmul %33, %34, %cst_17 {dimension_numbers = #tpu.dot_dimension_numbers<[1], [0], [0], [1], [0, 0, 1, 1], [], []>} : vector<8x128xbf16>, vector<128x32xbf16>, vector<8x32xf32> -> vector<8x32xf32>
    %c0_18 = arith.constant 0 : index
    %c0_19 = arith.constant 0 : index
    %36 = vector.load %arg7[%c0_18, %c0_19] : memref<1x32xf32, #tpu.memory_space<vmem>>, vector<1x32xf32>
    %37 = vector.broadcast %36 : vector<1x32xf32> to vector<8x32xf32>
    %38 = arith.addf %35, %37 : vector<8x32xf32>
    %39 = arith.addf %38, %0 : vector<8x32xf32>
    %c0_20 = arith.constant 0 : index
    %c0_21 = arith.constant 0 : index
    %40 = vector.load %arg8[%c0_20, %c0_21] : memref<8x32xf32, #tpu.memory_space<vmem>>, vector<8x32xf32>
    tpu.vector_store %arg8[%c0_20, %c0_21], %39 {strides = array<i32>} : memref<8x32xf32, #tpu.memory_space<vmem>>, vector<8x32xf32>,
    return
  }
  func.func @transform_0(%arg0: i32) -> (i32, i32) {
    %c0_i32 = arith.constant 0 : i32
    %c0_i32_0 = arith.constant 0 : i32
    return %arg0, %c0_i32 : i32, i32
  }
  func.func @transform_1(%arg0: i32) -> (i32, i32) {
    %c0_i32 = arith.constant 0 : i32
    %c0_i32_0 = arith.constant 0 : i32
    %c0_i32_1 = arith.constant 0 : i32
    return %c0_i32, %c0_i32_0 : i32, i32
  }
  func.func @transform_2(%arg0: i32) -> (i32, i32) {
    %c0_i32 = arith.constant 0 : i32
    %c0_i32_0 = arith.constant 0 : i32
    %c0_i32_1 = arith.constant 0 : i32
    return %c0_i32, %c0_i32_0 : i32, i32
  }
  func.func @transform_3(%arg0: i32) -> (i32, i32) {
    %c0_i32 = arith.constant 0 : i32
    %c0_i32_0 = arith.constant 0 : i32
    %c0_i32_1 = arith.constant 0 : i32
    return %c0_i32, %c0_i32_0 : i32, i32
  }
  func.func @transform_4(%arg0: i32) -> (i32, i32) {
    %c0_i32 = arith.constant 0 : i32
    %c0_i32_0 = arith.constant 0 : i32
    %c0_i32_1 = arith.constant 0 : i32
    return %c0_i32, %c0_i32_0 : i32, i32
  }
  func.func @transform_5(%arg0: i32) -> (i32, i32) {
    %c0_i32 = arith.constant 0 : i32
    %c0_i32_0 = arith.constant 0 : i32
    %c0_i32_1 = arith.constant 0 : i32
    return %c0_i32, %c0_i32_0 : i32, i32
  }
  func.func @transform_6(%arg0: i32) -> (i32, i32) {
    %c0_i32 = arith.constant 0 : i32
    %c0_i32_0 = arith.constant 0 : i32
    %c0_i32_1 = arith.constant 0 : i32
    return %c0_i32, %c0_i32_0 : i32, i32
  }
  func.func @transform_7(%arg0: i32) -> (i32, i32) {
    %c0_i32 = arith.constant 0 : i32
    %c0_i32_0 = arith.constant 0 : i32
    return %arg0, %c0_i32 : i32, i32
  }
}

module attributes {stable_mosaic.version = 11 : i64} {
  func.func @_fused_mha_kernel(%arg0: i32, %arg1: memref<1x8x32xf32, #tpu.memory_space<vmem>>, %arg2: memref<1x8x32xf32, #tpu.memory_space<vmem>>, %arg3: memref<1x32xf32, #tpu.memory_space<vmem>>, %arg4: memref<1x32xf32, #tpu.memory_space<vmem>>, %arg5: memref<32x64xbf16, #tpu.memory_space<vmem>>, %arg6: memref<1x64xf32, #tpu.memory_space<vmem>>, %arg7: memref<32x128xbf16, #tpu.memory_space<vmem>>, %arg8: memref<1x128xf32, #tpu.memory_space<vmem>>, %arg9: memref<64x32xbf16, #tpu.memory_space<vmem>>, %arg10: memref<1x32xf32, #tpu.memory_space<vmem>>, %arg11: memref<1x8x32xf32, #tpu.memory_space<vmem>>) attributes {dimension_semantics = [#tpu.dimension_semantics<parallel>], iteration_bounds = array<i64: 2>, scalar_prefetch = 0 : i64, scratch_operands = 0 : i64, tpu.core_type = #tpu.core_type<tc>, window_params = [{transform_indices = @transform_0, window_bounds = array<i64: 1, 8, 32>}, {transform_indices = @transform_1, window_bounds = array<i64: 1, 8, 32>}, {pipeline_mode = #tpu.pipeline_mode<synchronous>, transform_indices = @transform_2, window_bounds = array<i64: 1, 32>}, {pipeline_mode = #tpu.pipeline_mode<synchronous>, transform_indices = @transform_3, window_bounds = array<i64: 1, 32>}, {pipeline_mode = #tpu.pipeline_mode<synchronous>, transform_indices = @transform_4, window_bounds = array<i64: 32, 64>}, {pipeline_mode = #tpu.pipeline_mode<synchronous>, transform_indices = @transform_5, window_bounds = array<i64: 1, 64>}, {pipeline_mode = #tpu.pipeline_mode<synchronous>, transform_indices = @transform_6, window_bounds = array<i64: 32, 128>}, {pipeline_mode = #tpu.pipeline_mode<synchronous>, transform_indices = @transform_7, window_bounds = array<i64: 1, 128>}, {pipeline_mode = #tpu.pipeline_mode<synchronous>, transform_indices = @transform_8, window_bounds = array<i64: 64, 32>}, {pipeline_mode = #tpu.pipeline_mode<synchronous>, transform_indices = @transform_9, window_bounds = array<i64: 1, 32>}, {transform_indices = @transform_10, window_bounds = array<i64: 1, 8, 32>}]} {
    %c0 = arith.constant 0 : index
    %c0_0 = arith.constant 0 : index
    %c0_1 = arith.constant 0 : index
    %0 = vector.load %arg1[%c0, %c0_0, %c0_1] : memref<1x8x32xf32, #tpu.memory_space<vmem>>, vector<1x8x32xf32>
    %1 = vector.shape_cast %0 : vector<1x8x32xf32> to vector<8x32xf32>
    %cst = arith.constant dense<0.000000e+00> : vector<8xf32>
    %2 = vector.multi_reduction <add>, %1, %cst [1] : vector<8x32xf32> to vector<8xf32>
    %3 = vector.shape_cast %2 : vector<8xf32> to vector<8x1xf32>
    %cst_2 = arith.constant 3.200000e+01 : f32
    %4 = vector.broadcast %cst_2 : f32 to vector<8x1xf32>
    %5 = arith.divf %3, %4 : vector<8x1xf32>
    %6 = vector.broadcast %5 : vector<8x1xf32> to vector<8x32xf32>
    %7 = arith.subf %1, %6 : vector<8x32xf32>
    %8 = arith.mulf %7, %7 : vector<8x32xf32>
    %cst_3 = arith.constant dense<0.000000e+00> : vector<8xf32>
    %9 = vector.multi_reduction <add>, %8, %cst_3 [1] : vector<8x32xf32> to vector<8xf32>
    %10 = vector.shape_cast %9 : vector<8xf32> to vector<8x1xf32>
    %cst_4 = arith.constant 3.200000e+01 : f32
    %11 = vector.broadcast %cst_4 : f32 to vector<8x1xf32>
    %12 = arith.divf %10, %11 : vector<8x1xf32>
    %13 = vector.broadcast %5 : vector<8x1xf32> to vector<8x32xf32>
    %14 = arith.subf %1, %13 : vector<8x32xf32>
    %cst_5 = arith.constant 9.99999974E-6 : f32
    %15 = vector.broadcast %cst_5 : f32 to vector<8x1xf32>
    %16 = arith.addf %12, %15 : vector<8x1xf32>
    %17 = math.rsqrt %16 : vector<8x1xf32>
    %18 = vector.broadcast %17 : vector<8x1xf32> to vector<8x32xf32>
    %19 = arith.mulf %14, %18 : vector<8x32xf32>
    %c0_6 = arith.constant 0 : index
    %c0_7 = arith.constant 0 : index
    %20 = vector.load %arg3[%c0_6, %c0_7] : memref<1x32xf32, #tpu.memory_space<vmem>>, vector<1x32xf32>
    %21 = vector.broadcast %20 : vector<1x32xf32> to vector<8x32xf32>
    %22 = arith.mulf %19, %21 : vector<8x32xf32>
    %c0_8 = arith.constant 0 : index
    %c0_9 = arith.constant 0 : index
    %23 = vector.load %arg4[%c0_8, %c0_9] : memref<1x32xf32, #tpu.memory_space<vmem>>, vector<1x32xf32>
    %24 = vector.broadcast %23 : vector<1x32xf32> to vector<8x32xf32>
    %25 = arith.addf %22, %24 : vector<8x32xf32>
    %26 = arith.truncf %25 : vector<8x32xf32> to vector<8x32xbf16>
    %c0_10 = arith.constant 0 : index
    %c0_11 = arith.constant 0 : index
    %27 = vector.load %arg5[%c0_10, %c0_11] : memref<32x64xbf16, #tpu.memory_space<vmem>>, vector<32x64xbf16>
    %cst_12 = arith.constant dense<0.000000e+00> : vector<8x64xf32>
    %28 = tpu.matmul %26, %27, %cst_12 {dimension_numbers = #tpu.dot_dimension_numbers<[1], [0], [0], [1], [0, 0, 1, 1], [], []>} : vector<8x32xbf16>, vector<32x64xbf16>, vector<8x64xf32> -> vector<8x64xf32>
    %c0_13 = arith.constant 0 : index
    %c0_14 = arith.constant 0 : index
    %29 = vector.load %arg6[%c0_13, %c0_14] : memref<1x64xf32, #tpu.memory_space<vmem>>, vector<1x64xf32>
    %30 = vector.broadcast %29 : vector<1x64xf32> to vector<8x64xf32>
    %31 = arith.addf %28, %30 : vector<8x64xf32>
    %c0_15 = arith.constant 0 : index
    %c0_16 = arith.constant 0 : index
    %c0_17 = arith.constant 0 : index
    %32 = vector.load %arg2[%c0_15, %c0_16, %c0_17] : memref<1x8x32xf32, #tpu.memory_space<vmem>>, vector<1x8x32xf32>
    %33 = vector.shape_cast %32 : vector<1x8x32xf32> to vector<8x32xf32>
    %34 = arith.truncf %33 : vector<8x32xf32> to vector<8x32xbf16>
    %c0_18 = arith.constant 0 : index
    %c0_19 = arith.constant 0 : index
    %35 = vector.load %arg7[%c0_18, %c0_19] : memref<32x128xbf16, #tpu.memory_space<vmem>>, vector<32x128xbf16>
    %cst_20 = arith.constant dense<0.000000e+00> : vector<8x128xf32>
    %36 = tpu.matmul %34, %35, %cst_20 {dimension_numbers = #tpu.dot_dimension_numbers<[1], [0], [0], [1], [0, 0, 1, 1], [], []>} : vector<8x32xbf16>, vector<32x128xbf16>, vector<8x128xf32> -> vector<8x128xf32>
    %c0_21 = arith.constant 0 : index
    %c0_22 = arith.constant 0 : index
    %37 = vector.load %arg8[%c0_21, %c0_22] : memref<1x128xf32, #tpu.memory_space<vmem>>, vector<1x128xf32>
    %38 = vector.broadcast %37 : vector<1x128xf32> to vector<8x128xf32>
    %39 = arith.addf %36, %38 : vector<8x128xf32>
    %40 = vector.extract_strided_slice %39 {offsets = [0, 0], sizes = [8, 64], strides = [1, 1]} : vector<8x128xf32> to vector<8x64xf32>
    %41 = vector.extract_strided_slice %39 {offsets = [0, 64], sizes = [8, 64], strides = [1, 1]} : vector<8x128xf32> to vector<8x64xf32>
    %42 = vector.extract_strided_slice %31 {offsets = [0, 0], sizes = [8, 16], strides = [1, 1]} : vector<8x64xf32> to vector<8x16xf32>
    %43 = arith.truncf %42 : vector<8x16xf32> to vector<8x16xbf16>
    %44 = vector.extract_strided_slice %40 {offsets = [0, 0], sizes = [8, 16], strides = [1, 1]} : vector<8x64xf32> to vector<8x16xf32>
    %45 = arith.truncf %44 : vector<8x16xf32> to vector<8x16xbf16>
    %46 = vector.extract_strided_slice %41 {offsets = [0, 0], sizes = [8, 16], strides = [1, 1]} : vector<8x64xf32> to vector<8x16xf32>
    %47 = arith.truncf %46 : vector<8x16xf32> to vector<8x16xbf16>
    "tpu.trace_start"() <{level = 10 : i32, message = "qd,kd->qk"}> : () -> ()
    %cst_23 = arith.constant dense<0.000000e+00> : vector<8x8xf32>
    %48 = tpu.matmul %43, %45, %cst_23 {dimension_numbers = #tpu.dot_dimension_numbers<[1], [1], [0], [0], [0, 0, 1, 0], [], []>} : vector<8x16xbf16>, vector<8x16xbf16>, vector<8x8xf32> -> vector<8x8xf32>
    "tpu.trace_stop"() : () -> ()
    %cst_24 = arith.constant 2.500000e-01 : f32
    %49 = vector.broadcast %cst_24 : f32 to vector<8x8xf32>
    %50 = arith.mulf %48, %49 : vector<8x8xf32>
    %cst_25 = arith.constant dense<0xFF800000> : vector<8xf32>
    %51 = vector.multi_reduction <maximumf>, %50, %cst_25 [1] : vector<8x8xf32> to vector<8xf32>
    %52 = vector.shape_cast %51 : vector<8xf32> to vector<8x1xf32>
    %53 = vector.broadcast %52 : vector<8x1xf32> to vector<8x8xf32>
    %54 = arith.subf %50, %53 : vector<8x8xf32>
    %55 = math.exp %54 : vector<8x8xf32>
    %cst_26 = arith.constant dense<0.000000e+00> : vector<8xf32>
    %56 = vector.multi_reduction <add>, %55, %cst_26 [1] : vector<8x8xf32> to vector<8xf32>
    %57 = vector.shape_cast %56 : vector<8xf32> to vector<8x1xf32>
    %58 = tpu.reciprocal %57 {approx = true} : vector<8x1xf32> -> vector<8x1xf32>
    %59 = arith.truncf %55 : vector<8x8xf32> to vector<8x8xbf16>
    "tpu.trace_start"() <{level = 10 : i32, message = "qk,kd->qd"}> : () -> ()
    %cst_27 = arith.constant dense<0.000000e+00> : vector<8x16xf32>
    %60 = tpu.matmul %59, %47, %cst_27 {dimension_numbers = #tpu.dot_dimension_numbers<[1], [0], [0], [1], [0, 0, 1, 1], [], []>} : vector<8x8xbf16>, vector<8x16xbf16>, vector<8x16xf32> -> vector<8x16xf32>
    "tpu.trace_stop"() : () -> ()
    %61 = vector.broadcast %58 : vector<8x1xf32> to vector<8x16xf32>
    %62 = arith.mulf %60, %61 : vector<8x16xf32>
    %63 = vector.extract_strided_slice %31 {offsets = [0, 16], sizes = [8, 16], strides = [1, 1]} : vector<8x64xf32> to vector<8x16xf32>
    %64 = arith.truncf %63 : vector<8x16xf32> to vector<8x16xbf16>
    %65 = vector.extract_strided_slice %40 {offsets = [0, 16], sizes = [8, 16], strides = [1, 1]} : vector<8x64xf32> to vector<8x16xf32>
    %66 = arith.truncf %65 : vector<8x16xf32> to vector<8x16xbf16>
    %67 = vector.extract_strided_slice %41 {offsets = [0, 16], sizes = [8, 16], strides = [1, 1]} : vector<8x64xf32> to vector<8x16xf32>
    %68 = arith.truncf %67 : vector<8x16xf32> to vector<8x16xbf16>
    "tpu.trace_start"() <{level = 10 : i32, message = "qd,kd->qk"}> : () -> ()
    %cst_28 = arith.constant dense<0.000000e+00> : vector<8x8xf32>
    %69 = tpu.matmul %64, %66, %cst_28 {dimension_numbers = #tpu.dot_dimension_numbers<[1], [1], [0], [0], [0, 0, 1, 0], [], []>} : vector<8x16xbf16>, vector<8x16xbf16>, vector<8x8xf32> -> vector<8x8xf32>
    "tpu.trace_stop"() : () -> ()
    %cst_29 = arith.constant 2.500000e-01 : f32
    %70 = vector.broadcast %cst_29 : f32 to vector<8x8xf32>
    %71 = arith.mulf %69, %70 : vector<8x8xf32>
    %cst_30 = arith.constant dense<0xFF800000> : vector<8xf32>
    %72 = vector.multi_reduction <maximumf>, %71, %cst_30 [1] : vector<8x8xf32> to vector<8xf32>
    %73 = vector.shape_cast %72 : vector<8xf32> to vector<8x1xf32>
    %74 = vector.broadcast %73 : vector<8x1xf32> to vector<8x8xf32>
    %75 = arith.subf %71, %74 : vector<8x8xf32>
    %76 = math.exp %75 : vector<8x8xf32>
    %cst_31 = arith.constant dense<0.000000e+00> : vector<8xf32>
    %77 = vector.multi_reduction <add>, %76, %cst_31 [1] : vector<8x8xf32> to vector<8xf32>
    %78 = vector.shape_cast %77 : vector<8xf32> to vector<8x1xf32>
    %79 = tpu.reciprocal %78 {approx = true} : vector<8x1xf32> -> vector<8x1xf32>
    %80 = arith.truncf %76 : vector<8x8xf32> to vector<8x8xbf16>
    "tpu.trace_start"() <{level = 10 : i32, message = "qk,kd->qd"}> : () -> ()
    %cst_32 = arith.constant dense<0.000000e+00> : vector<8x16xf32>
    %81 = tpu.matmul %80, %68, %cst_32 {dimension_numbers = #tpu.dot_dimension_numbers<[1], [0], [0], [1], [0, 0, 1, 1], [], []>} : vector<8x8xbf16>, vector<8x16xbf16>, vector<8x16xf32> -> vector<8x16xf32>
    "tpu.trace_stop"() : () -> ()
    %82 = vector.broadcast %79 : vector<8x1xf32> to vector<8x16xf32>
    %83 = arith.mulf %81, %82 : vector<8x16xf32>
    %84 = vector.extract_strided_slice %31 {offsets = [0, 32], sizes = [8, 16], strides = [1, 1]} : vector<8x64xf32> to vector<8x16xf32>
    %85 = arith.truncf %84 : vector<8x16xf32> to vector<8x16xbf16>
    %86 = vector.extract_strided_slice %40 {offsets = [0, 32], sizes = [8, 16], strides = [1, 1]} : vector<8x64xf32> to vector<8x16xf32>
    %87 = arith.truncf %86 : vector<8x16xf32> to vector<8x16xbf16>
    %88 = vector.extract_strided_slice %41 {offsets = [0, 32], sizes = [8, 16], strides = [1, 1]} : vector<8x64xf32> to vector<8x16xf32>
    %89 = arith.truncf %88 : vector<8x16xf32> to vector<8x16xbf16>
    "tpu.trace_start"() <{level = 10 : i32, message = "qd,kd->qk"}> : () -> ()
    %cst_33 = arith.constant dense<0.000000e+00> : vector<8x8xf32>
    %90 = tpu.matmul %85, %87, %cst_33 {dimension_numbers = #tpu.dot_dimension_numbers<[1], [1], [0], [0], [0, 0, 1, 0], [], []>} : vector<8x16xbf16>, vector<8x16xbf16>, vector<8x8xf32> -> vector<8x8xf32>
    "tpu.trace_stop"() : () -> ()
    %cst_34 = arith.constant 2.500000e-01 : f32
    %91 = vector.broadcast %cst_34 : f32 to vector<8x8xf32>
    %92 = arith.mulf %90, %91 : vector<8x8xf32>
    %cst_35 = arith.constant dense<0xFF800000> : vector<8xf32>
    %93 = vector.multi_reduction <maximumf>, %92, %cst_35 [1] : vector<8x8xf32> to vector<8xf32>
    %94 = vector.shape_cast %93 : vector<8xf32> to vector<8x1xf32>
    %95 = vector.broadcast %94 : vector<8x1xf32> to vector<8x8xf32>
    %96 = arith.subf %92, %95 : vector<8x8xf32>
    %97 = math.exp %96 : vector<8x8xf32>
    %cst_36 = arith.constant dense<0.000000e+00> : vector<8xf32>
    %98 = vector.multi_reduction <add>, %97, %cst_36 [1] : vector<8x8xf32> to vector<8xf32>
    %99 = vector.shape_cast %98 : vector<8xf32> to vector<8x1xf32>
    %100 = tpu.reciprocal %99 {approx = true} : vector<8x1xf32> -> vector<8x1xf32>
    %101 = arith.truncf %97 : vector<8x8xf32> to vector<8x8xbf16>
    "tpu.trace_start"() <{level = 10 : i32, message = "qk,kd->qd"}> : () -> ()
    %cst_37 = arith.constant dense<0.000000e+00> : vector<8x16xf32>
    %102 = tpu.matmul %101, %89, %cst_37 {dimension_numbers = #tpu.dot_dimension_numbers<[1], [0], [0], [1], [0, 0, 1, 1], [], []>} : vector<8x8xbf16>, vector<8x16xbf16>, vector<8x16xf32> -> vector<8x16xf32>
    "tpu.trace_stop"() : () -> ()
    %103 = vector.broadcast %100 : vector<8x1xf32> to vector<8x16xf32>
    %104 = arith.mulf %102, %103 : vector<8x16xf32>
    %105 = vector.extract_strided_slice %31 {offsets = [0, 48], sizes = [8, 16], strides = [1, 1]} : vector<8x64xf32> to vector<8x16xf32>
    %106 = arith.truncf %105 : vector<8x16xf32> to vector<8x16xbf16>
    %107 = vector.extract_strided_slice %40 {offsets = [0, 48], sizes = [8, 16], strides = [1, 1]} : vector<8x64xf32> to vector<8x16xf32>
    %108 = arith.truncf %107 : vector<8x16xf32> to vector<8x16xbf16>
    %109 = vector.extract_strided_slice %41 {offsets = [0, 48], sizes = [8, 16], strides = [1, 1]} : vector<8x64xf32> to vector<8x16xf32>
    %110 = arith.truncf %109 : vector<8x16xf32> to vector<8x16xbf16>
    "tpu.trace_start"() <{level = 10 : i32, message = "qd,kd->qk"}> : () -> ()
    %cst_38 = arith.constant dense<0.000000e+00> : vector<8x8xf32>
    %111 = tpu.matmul %106, %108, %cst_38 {dimension_numbers = #tpu.dot_dimension_numbers<[1], [1], [0], [0], [0, 0, 1, 0], [], []>} : vector<8x16xbf16>, vector<8x16xbf16>, vector<8x8xf32> -> vector<8x8xf32>
    "tpu.trace_stop"() : () -> ()
    %cst_39 = arith.constant 2.500000e-01 : f32
    %112 = vector.broadcast %cst_39 : f32 to vector<8x8xf32>
    %113 = arith.mulf %111, %112 : vector<8x8xf32>
    %cst_40 = arith.constant dense<0xFF800000> : vector<8xf32>
    %114 = vector.multi_reduction <maximumf>, %113, %cst_40 [1] : vector<8x8xf32> to vector<8xf32>
    %115 = vector.shape_cast %114 : vector<8xf32> to vector<8x1xf32>
    %116 = vector.broadcast %115 : vector<8x1xf32> to vector<8x8xf32>
    %117 = arith.subf %113, %116 : vector<8x8xf32>
    %118 = math.exp %117 : vector<8x8xf32>
    %cst_41 = arith.constant dense<0.000000e+00> : vector<8xf32>
    %119 = vector.multi_reduction <add>, %118, %cst_41 [1] : vector<8x8xf32> to vector<8xf32>
    %120 = vector.shape_cast %119 : vector<8xf32> to vector<8x1xf32>
    %121 = tpu.reciprocal %120 {approx = true} : vector<8x1xf32> -> vector<8x1xf32>
    %122 = arith.truncf %118 : vector<8x8xf32> to vector<8x8xbf16>
    "tpu.trace_start"() <{level = 10 : i32, message = "qk,kd->qd"}> : () -> ()
    %cst_42 = arith.constant dense<0.000000e+00> : vector<8x16xf32>
    %123 = tpu.matmul %122, %110, %cst_42 {dimension_numbers = #tpu.dot_dimension_numbers<[1], [0], [0], [1], [0, 0, 1, 1], [], []>} : vector<8x8xbf16>, vector<8x16xbf16>, vector<8x16xf32> -> vector<8x16xf32>
    "tpu.trace_stop"() : () -> ()
    %124 = vector.broadcast %121 : vector<8x1xf32> to vector<8x16xf32>
    %125 = arith.mulf %123, %124 : vector<8x16xf32>
    %126 = tpu.concatenate %62, %83, %104, %125 in 1 : vector<8x16xf32>, vector<8x16xf32>, vector<8x16xf32>, vector<8x16xf32> -> vector<8x64xf32>
    %127 = arith.truncf %126 : vector<8x64xf32> to vector<8x64xbf16>
    %c0_43 = arith.constant 0 : index
    %c0_44 = arith.constant 0 : index
    %128 = vector.load %arg9[%c0_43, %c0_44] : memref<64x32xbf16, #tpu.memory_space<vmem>>, vector<64x32xbf16>
    %cst_45 = arith.constant dense<0.000000e+00> : vector<8x32xf32>
    %129 = tpu.matmul %127, %128, %cst_45 {dimension_numbers = #tpu.dot_dimension_numbers<[1], [0], [0], [1], [0, 0, 1, 1], [], []>} : vector<8x64xbf16>, vector<64x32xbf16>, vector<8x32xf32> -> vector<8x32xf32>
    %c0_46 = arith.constant 0 : index
    %c0_47 = arith.constant 0 : index
    %130 = vector.load %arg10[%c0_46, %c0_47] : memref<1x32xf32, #tpu.memory_space<vmem>>, vector<1x32xf32>
    %131 = vector.broadcast %130 : vector<1x32xf32> to vector<8x32xf32>
    %132 = arith.addf %129, %131 : vector<8x32xf32>
    %133 = arith.addf %132, %1 : vector<8x32xf32>
    %c0_48 = arith.constant 0 : index
    %c0_49 = arith.constant 0 : index
    %c0_50 = arith.constant 0 : index
    %134 = vector.load %arg11[%c0_48, %c0_49, %c0_50] : memref<1x8x32xf32, #tpu.memory_space<vmem>>, vector<1x8x32xf32>
    %135 = vector.shape_cast %134 : vector<1x8x32xf32> to vector<8x32xf32>
    %136 = vector.shape_cast %133 : vector<8x32xf32> to vector<1x8x32xf32>
    tpu.vector_store %arg11[%c0_48, %c0_49, %c0_50], %136 {strides = array<i32>} : memref<1x8x32xf32, #tpu.memory_space<vmem>>, vector<1x8x32xf32>,
    return
  }
  func.func @transform_0(%arg0: i32) -> (i32, i32, i32) {
    %c0_i32 = arith.constant 0 : i32
    %c0_i32_0 = arith.constant 0 : i32
    %c0_i32_1 = arith.constant 0 : i32
    return %arg0, %c0_i32, %c0_i32_0 : i32, i32, i32
  }
  func.func @transform_1(%arg0: i32) -> (i32, i32, i32) {
    %c0_i32 = arith.constant 0 : i32
    %c0_i32_0 = arith.constant 0 : i32
    %c0_i32_1 = arith.constant 0 : i32
    return %arg0, %c0_i32, %c0_i32_0 : i32, i32, i32
  }
  func.func @transform_2(%arg0: i32) -> (i32, i32) {
    %c0_i32 = arith.constant 0 : i32
    %c0_i32_0 = arith.constant 0 : i32
    %c0_i32_1 = arith.constant 0 : i32
    return %c0_i32, %c0_i32_0 : i32, i32
  }
  func.func @transform_3(%arg0: i32) -> (i32, i32) {
    %c0_i32 = arith.constant 0 : i32
    %c0_i32_0 = arith.constant 0 : i32
    %c0_i32_1 = arith.constant 0 : i32
    return %c0_i32, %c0_i32_0 : i32, i32
  }
  func.func @transform_4(%arg0: i32) -> (i32, i32) {
    %c0_i32 = arith.constant 0 : i32
    %c0_i32_0 = arith.constant 0 : i32
    %c0_i32_1 = arith.constant 0 : i32
    return %c0_i32, %c0_i32_0 : i32, i32
  }
  func.func @transform_5(%arg0: i32) -> (i32, i32) {
    %c0_i32 = arith.constant 0 : i32
    %c0_i32_0 = arith.constant 0 : i32
    %c0_i32_1 = arith.constant 0 : i32
    return %c0_i32, %c0_i32_0 : i32, i32
  }
  func.func @transform_6(%arg0: i32) -> (i32, i32) {
    %c0_i32 = arith.constant 0 : i32
    %c0_i32_0 = arith.constant 0 : i32
    %c0_i32_1 = arith.constant 0 : i32
    return %c0_i32, %c0_i32_0 : i32, i32
  }
  func.func @transform_7(%arg0: i32) -> (i32, i32) {
    %c0_i32 = arith.constant 0 : i32
    %c0_i32_0 = arith.constant 0 : i32
    %c0_i32_1 = arith.constant 0 : i32
    return %c0_i32, %c0_i32_0 : i32, i32
  }
  func.func @transform_8(%arg0: i32) -> (i32, i32) {
    %c0_i32 = arith.constant 0 : i32
    %c0_i32_0 = arith.constant 0 : i32
    %c0_i32_1 = arith.constant 0 : i32
    return %c0_i32, %c0_i32_0 : i32, i32
  }
  func.func @transform_9(%arg0: i32) -> (i32, i32) {
    %c0_i32 = arith.constant 0 : i32
    %c0_i32_0 = arith.constant 0 : i32
    %c0_i32_1 = arith.constant 0 : i32
    return %c0_i32, %c0_i32_0 : i32, i32
  }
  func.func @transform_10(%arg0: i32) -> (i32, i32, i32) {
    %c0_i32 = arith.constant 0 : i32
    %c0_i32_0 = arith.constant 0 : i32
    %c0_i32_1 = arith.constant 0 : i32
    return %arg0, %c0_i32, %c0_i32_0 : i32, i32, i32
  }
}

module attributes {stable_mosaic.version = 11 : i64} {
  func.func @_conv3_kernel(%arg0: i32, %arg1: memref<8x32xf32, #tpu.memory_space<vmem>>, %arg2: memref<8x32xf32, #tpu.memory_space<vmem>>, %arg3: memref<8x32xf32, #tpu.memory_space<vmem>>, %arg4: memref<32x32xbf16, #tpu.memory_space<vmem>>, %arg5: memref<32x32xbf16, #tpu.memory_space<vmem>>, %arg6: memref<32x32xbf16, #tpu.memory_space<vmem>>, %arg7: memref<1x32xf32, #tpu.memory_space<vmem>>, %arg8: memref<8x32xf32, #tpu.memory_space<vmem>>) attributes {dimension_semantics = [#tpu.dimension_semantics<parallel>], iteration_bounds = array<i64: 1>, scalar_prefetch = 0 : i64, scratch_operands = 0 : i64, tpu.core_type = #tpu.core_type<tc>, window_params = [{transform_indices = @transform_0, window_bounds = array<i64: 8, 32>}, {transform_indices = @transform_1, window_bounds = array<i64: 8, 32>}, {transform_indices = @transform_2, window_bounds = array<i64: 8, 32>}, {pipeline_mode = #tpu.pipeline_mode<synchronous>, transform_indices = @transform_3, window_bounds = array<i64: 32, 32>}, {pipeline_mode = #tpu.pipeline_mode<synchronous>, transform_indices = @transform_4, window_bounds = array<i64: 32, 32>}, {pipeline_mode = #tpu.pipeline_mode<synchronous>, transform_indices = @transform_5, window_bounds = array<i64: 32, 32>}, {pipeline_mode = #tpu.pipeline_mode<synchronous>, transform_indices = @transform_6, window_bounds = array<i64: 1, 32>}, {transform_indices = @transform_7, window_bounds = array<i64: 8, 32>}]} {
    %c0 = arith.constant 0 : index
    %c0_0 = arith.constant 0 : index
    %0 = vector.load %arg1[%c0, %c0_0] : memref<8x32xf32, #tpu.memory_space<vmem>>, vector<8x32xf32>
    %1 = arith.truncf %0 : vector<8x32xf32> to vector<8x32xbf16>
    %c0_1 = arith.constant 0 : index
    %c0_2 = arith.constant 0 : index
    %2 = vector.load %arg4[%c0_1, %c0_2] : memref<32x32xbf16, #tpu.memory_space<vmem>>, vector<32x32xbf16>
    %cst = arith.constant dense<0.000000e+00> : vector<8x32xf32>
    %3 = tpu.matmul %1, %2, %cst {dimension_numbers = #tpu.dot_dimension_numbers<[1], [0], [0], [1], [0, 0, 1, 1], [], []>} : vector<8x32xbf16>, vector<32x32xbf16>, vector<8x32xf32> -> vector<8x32xf32>
    %c0_3 = arith.constant 0 : index
    %c0_4 = arith.constant 0 : index
    %4 = vector.load %arg2[%c0_3, %c0_4] : memref<8x32xf32, #tpu.memory_space<vmem>>, vector<8x32xf32>
    %5 = arith.truncf %4 : vector<8x32xf32> to vector<8x32xbf16>
    %c0_5 = arith.constant 0 : index
    %c0_6 = arith.constant 0 : index
    %6 = vector.load %arg5[%c0_5, %c0_6] : memref<32x32xbf16, #tpu.memory_space<vmem>>, vector<32x32xbf16>
    %cst_7 = arith.constant dense<0.000000e+00> : vector<8x32xf32>
    %7 = tpu.matmul %5, %6, %cst_7 {dimension_numbers = #tpu.dot_dimension_numbers<[1], [0], [0], [1], [0, 0, 1, 1], [], []>} : vector<8x32xbf16>, vector<32x32xbf16>, vector<8x32xf32> -> vector<8x32xf32>
    %8 = arith.addf %3, %7 : vector<8x32xf32>
    %c0_8 = arith.constant 0 : index
    %c0_9 = arith.constant 0 : index
    %9 = vector.load %arg3[%c0_8, %c0_9] : memref<8x32xf32, #tpu.memory_space<vmem>>, vector<8x32xf32>
    %10 = arith.truncf %9 : vector<8x32xf32> to vector<8x32xbf16>
    %c0_10 = arith.constant 0 : index
    %c0_11 = arith.constant 0 : index
    %11 = vector.load %arg6[%c0_10, %c0_11] : memref<32x32xbf16, #tpu.memory_space<vmem>>, vector<32x32xbf16>
    %cst_12 = arith.constant dense<0.000000e+00> : vector<8x32xf32>
    %12 = tpu.matmul %10, %11, %cst_12 {dimension_numbers = #tpu.dot_dimension_numbers<[1], [0], [0], [1], [0, 0, 1, 1], [], []>} : vector<8x32xbf16>, vector<32x32xbf16>, vector<8x32xf32> -> vector<8x32xf32>
    %13 = arith.addf %8, %12 : vector<8x32xf32>
    %c0_13 = arith.constant 0 : index
    %c0_14 = arith.constant 0 : index
    %14 = vector.load %arg7[%c0_13, %c0_14] : memref<1x32xf32, #tpu.memory_space<vmem>>, vector<1x32xf32>
    %15 = vector.broadcast %14 : vector<1x32xf32> to vector<8x32xf32>
    %16 = arith.addf %13, %15 : vector<8x32xf32>
    %c0_15 = arith.constant 0 : index
    %c0_16 = arith.constant 0 : index
    %17 = vector.load %arg8[%c0_15, %c0_16] : memref<8x32xf32, #tpu.memory_space<vmem>>, vector<8x32xf32>
    tpu.vector_store %arg8[%c0_15, %c0_16], %16 {strides = array<i32>} : memref<8x32xf32, #tpu.memory_space<vmem>>, vector<8x32xf32>,
    return
  }
  func.func @transform_0(%arg0: i32) -> (i32, i32) {
    %c0_i32 = arith.constant 0 : i32
    %c0_i32_0 = arith.constant 0 : i32
    return %arg0, %c0_i32 : i32, i32
  }
  func.func @transform_1(%arg0: i32) -> (i32, i32) {
    %c0_i32 = arith.constant 0 : i32
    %c0_i32_0 = arith.constant 0 : i32
    return %arg0, %c0_i32 : i32, i32
  }
  func.func @transform_2(%arg0: i32) -> (i32, i32) {
    %c0_i32 = arith.constant 0 : i32
    %c0_i32_0 = arith.constant 0 : i32
    return %arg0, %c0_i32 : i32, i32
  }
  func.func @transform_3(%arg0: i32) -> (i32, i32) {
    %c0_i32 = arith.constant 0 : i32
    %c0_i32_0 = arith.constant 0 : i32
    %c0_i32_1 = arith.constant 0 : i32
    return %c0_i32, %c0_i32_0 : i32, i32
  }
  func.func @transform_4(%arg0: i32) -> (i32, i32) {
    %c0_i32 = arith.constant 0 : i32
    %c0_i32_0 = arith.constant 0 : i32
    %c0_i32_1 = arith.constant 0 : i32
    return %c0_i32, %c0_i32_0 : i32, i32
  }
  func.func @transform_5(%arg0: i32) -> (i32, i32) {
    %c0_i32 = arith.constant 0 : i32
    %c0_i32_0 = arith.constant 0 : i32
    %c0_i32_1 = arith.constant 0 : i32
    return %c0_i32, %c0_i32_0 : i32, i32
  }
  func.func @transform_6(%arg0: i32) -> (i32, i32) {
    %c0_i32 = arith.constant 0 : i32
    %c0_i32_0 = arith.constant 0 : i32
    %c0_i32_1 = arith.constant 0 : i32
    return %c0_i32, %c0_i32_0 : i32, i32
  }
  func.func @transform_7(%arg0: i32) -> (i32, i32) {
    %c0_i32 = arith.constant 0 : i32
    %c0_i32_0 = arith.constant 0 : i32
    return %arg0, %c0_i32 : i32, i32
  }
}

</mosaic_0001>

<llo_original>
// kernel: _lambda_.23
$region0: #{_lambda_.23}
  #allocation0 [shape = 'u32[]', space=smem, size = 0x4, offset = 0x4, fixed_abs, tag = 'smem constant byte address 0x4 - core index']
  #allocation1 [shape = 'u32[144,128]{1,0:T(1,128)}', space=vmem, size = 0x12000, scoped, tag = 'internal scratch']
  %s0 = inlined_call_operand.hbm [shape: f32[16,32], index: 0, kind: input, shape index: {}]
  %s1 = inlined_call_operand.hbm [shape: bf16[32,16], index: 1, kind: input, shape index: {}]
  %s2 = inlined_call_operand.hbm [shape: f32[1,16], index: 2, kind: input, shape index: {}]
  %s3 = inlined_call_operand.hbm [shape: f32[16,16], index: 3, kind: output, shape index: {}]
  %s4 = sld [smem:[#allocation0]]
  $region57: #{_lambda_.23} parent=0
    _
  %s6 = ssub.s32 1, %s4
  %s7 = scalar_select 0, %s6, %s4
  $region1: #{_lambda_.23} parent=0
    #allocation2 [shape = 'u8[8192]{0}', space=vmem, size = 0x2000, scoped, tag = 'input window, operand 0']
    #allocation3 [shape = 's32[2]{0}', space=sflag, size = 0x8, scoped, tag = 'scoped memory for _lambda_.23']
    #allocation4 [shape = 's32[2]{0}', space=sflag, size = 0x8, scoped, tag = 'scoped memory for _lambda_.23']
    #allocation5 [shape = 'u8[8192]{0}', space=vmem, size = 0x2000, scoped, tag = 'input window, operand 1, single buffered']
    #allocation6 [shape = 's32[1]{0}', space=sflag, size = 0x4, scoped, tag = 'scoped memory for _lambda_.23']
    #allocation7 [shape = 'u8[512]{0}', space=vmem, size = 0x400, scoped, tag = 'input window, operand 2, single buffered']
    #allocation8 [shape = 'u8[8192]{0}', space=vmem, size = 0x2000, scoped, tag = 'output window, operand 0']
    %8 = vsyncpa [#allocation3], 0
    %s9 = scalar_lea.sflag [#allocation3], 1
    %10 = vsyncpa %s9, 0
    %11 = vsyncpa [#allocation6], 0
    %12 = vsyncpa [#allocation4], 0
    %s13 = scalar_lea.sflag [#allocation4], 1
    %14 = vsyncpa %s13, 0
    loop: start=0, step=1, limit=4
    $region2: #{_lambda_.23} parent=1 // loop_pre_header
      _
    $region3: #{_lambda_.23} parent=1 // loop_header
      %s16 = sphi 0, %s20
      %p17 = scmp.ge.s32.totalorder %s16, 4
      %s26 = sphi 0, %s28
      %s29 = sphi 0, %s26
      %s30 = sphi 0, %s29
      %s46 = sphi 0, %s30
      %s50 = sphi 0, %s50
      %s52 = sphi 0, %s50
      %s53 = sphi 0, %s52
      %s67 = sphi 0, %s53
      %s71 = sphi 0, %s71
      %s73 = sphi 0, %s71
      %s74 = sphi 0, %s73
      %s88 = sphi 0, %s74
      %s94 = sphi 0, %s96
      %s97 = sphi 0, %s94
      %s98 = sphi 0, %s97
      %s114 = sphi 0, %s98
    $region4: #{_lambda_.23} parent=1 // loop_header_branch
      %19 = sbr.rel (%p17) target = $region8
    $region5: #{_lambda_.23} parent=1 // loop_body
      %s21 = ssub.s32 %s16, 1
      %s22 = ssub.s32 %s16, 2
      %s23 = sadd.s32 %s16, 1
      %s24 = ssub.s32 %s16, %s23
      %p25 = scmp.eq.s32.totalorder %s24, 0
      %s27 = sadd.s32 %s26, 1
      %s28 = scalar_select %p25, %s26, %s27
      %p31 = pneg %p25
      %p32 = scmp.eq.s32.totalorder %s16, 1
      %p33 = por %p31, %p32
      %p34 = scmp.ne.s32.totalorder %s26, %s29
      %p35 = scmp.eq.s32.totalorder %s16, 0
      %p36 = por %p34, %p35
      %p37 = scmp.ne.s32.totalorder %s26, %s29
      %p38 = scmp.eq.s32.totalorder %s21, 1
      %p39 = por %p37, %p38
      %p40 = scmp.ne.s32.totalorder %s29, %s30
      %p41 = scmp.eq.s32.totalorder %s21, 0
      %p42 = por %p40, %p41
      %p43 = scmp.ne.s32.totalorder %s29, %s30
      %p44 = scmp.eq.s32.totalorder %s22, 1
      %p45 = por %p43, %p44
      %p47 = scmp.ne.s32.totalorder %s30, %s46
      %p48 = scmp.eq.s32.totalorder %s22, 0
      %p49 = por %p47, %p48
      %s51 = sadd.s32 %s50, 1
      %p54 = scmp.eq.s32.totalorder %s16, 1
      %p55 = scmp.ne.s32.totalorder %s50, %s52
      %p56 = scmp.eq.s32.totalorder %s16, 0
      %p57 = por %p55, %p56
      %p58 = scmp.ne.s32.totalorder %s50, %s52
      %p59 = scmp.eq.s32.totalorder %s21, 1
      %p60 = por %p58, %p59
      %p61 = scmp.ne.s32.totalorder %s52, %s53
      %p62 = scmp.eq.s32.totalorder %s21, 0
      %p63 = por %p61, %p62
      %p64 = scmp.ne.s32.totalorder %s52, %s53
      %p65 = scmp.eq.s32.totalorder %s22, 1
      %p66 = por %p64, %p65
      %p68 = scmp.ne.s32.totalorder %s53, %s67
      %p69 = scmp.eq.s32.totalorder %s22, 0
      %p70 = por %p68, %p69
      %s72 = sadd.s32 %s71, 1
      %p75 = scmp.eq.s32.totalorder %s16, 1
      %p76 = scmp.ne.s32.totalorder %s71, %s73
      %p77 = scmp.eq.s32.totalorder %s16, 0
      %p78 = por %p76, %p77
      %p79 = scmp.ne.s32.totalorder %s71, %s73
      %p80 = scmp.eq.s32.totalorder %s21, 1
      %p81 = por %p79, %p80
      %p82 = scmp.ne.s32.totalorder %s73, %s74
      %p83 = scmp.eq.s32.totalorder %s21, 0
      %p84 = por %p82, %p83
      %p85 = scmp.ne.s32.totalorder %s73, %s74
      %p86 = scmp.eq.s32.totalorder %s22, 1
      %p87 = por %p85, %p86
      %p89 = scmp.ne.s32.totalorder %s74, %s88
      %p90 = scmp.eq.s32.totalorder %s22, 0
      %p91 = por %p89, %p90
      %s92 = ssub.s32 %s16, %s23
      %p93 = scmp.eq.s32.totalorder %s92, 0
      %s95 = sadd.s32 %s94, 1
      %s96 = scalar_select %p93, %s94, %s95
      %p99 = pneg %p93
      %p100 = scmp.eq.s32.totalorder %s16, 1
      %p101 = por %p99, %p100
      %p102 = scmp.ne.s32.totalorder %s94, %s97
      %p103 = scmp.eq.s32.totalorder %s16, 0
      %p104 = por %p102, %p103
      %p105 = scmp.ne.s32.totalorder %s94, %s97
      %p106 = scmp.eq.s32.totalorder %s21, 1
      %p107 = por %p105, %p106
      %p108 = scmp.ne.s32.totalorder %s97, %s98
      %p109 = scmp.eq.s32.totalorder %s21, 0
      %p110 = por %p108, %p109
      %p111 = scmp.ne.s32.totalorder %s97, %s98
      %p112 = scmp.eq.s32.totalorder %s22, 1
      %p113 = por %p111, %p112
      %p115 = scmp.ne.s32.totalorder %s98, %s114
      %p116 = scmp.eq.s32.totalorder %s22, 0
      %p117 = por %p115, %p116
      %p118 = scmp.le.s32.totalorder 1, %s16
      %p119 = scmp.lt.s32.totalorder %s16, 3
      %p120 = pnand %p118, %p119
      %p121 = pneg %p120
      // Predicated region
      $region9: #{_lambda_.23} parent=5 // pred_check
        _
      $region10: #{_lambda_.23} parent=5 // pred_check_branch
        %123 = sbr.rel (%p120) target = $region12
      $region11: #{_lambda_.23} parent=5 // pred_region
        %s124 = ssub.s32 %s16, 1
        // Predicated region
        $region13: #{_lambda_.23} parent=11 // pred_check
          %p125 = pneg %p63
        $region14: #{_lambda_.23} parent=11 // pred_check_branch
          %127 = sbr.rel (%p125) target = $region16
        $region15: #{_lambda_.23} parent=11 // pred_region
          %s129 = ssub.s32 256, 256
          %130 = vsyncadd [#allocation6], %s129
          %s131 = sshll.u32 [#allocation5], 4
          %s132 = int_to_ptr.vmem [resolvable:$true] %s131
          %137 = dma.hbm_to_vmem [thread:$0]  %s1, 256, %s132, [#allocation6], 64, 64, 4
        $region16: #{_lambda_.23} parent=11 // pred_fallthru
          _
        // Predicated region
        $region17: #{_lambda_.23} parent=11 // pred_check
          %p138 = pneg %p84
        $region18: #{_lambda_.23} parent=11 // pred_check_branch
          %140 = sbr.rel (%p138) target = $region20
        $region19: #{_lambda_.23} parent=11 // pred_region
          %s142 = ssub.s32 16, 16
          %143 = vsyncadd [#allocation6], %s142
          %s145 = sshll.u32 [#allocation7], 4
          %s146 = int_to_ptr.vmem [resolvable:$true] %s145
          %148 = dma.hbm_to_vmem [thread:$0]  %s2, 16, %s146, [#allocation6]
        $region20: #{_lambda_.23} parent=11 // pred_fallthru
          _
      $region12: #{_lambda_.23} parent=5 // pred_fallthru
        _
      %p149 = scmp.lt.s32.totalorder %s16, 2
      // Predicated region
      $region21: #{_lambda_.23} parent=5 // pred_check
        %p150 = pneg %p149
      $region22: #{_lambda_.23} parent=5 // pred_check_branch
        %152 = sbr.rel (%p150) target = $region24
      $region23: #{_lambda_.23} parent=5 // pred_region
        // Predicated region
        $region25: #{_lambda_.23} parent=23 // pred_check
          %p153 = pneg %p36
        $region26: #{_lambda_.23} parent=23 // pred_check_branch
          %155 = sbr.rel (%p153) target = $region28
        $region27: #{_lambda_.23} parent=23 // pred_region
          %s156 = sand.u32 %s26, 1
          %s157 = scalar_lea.sflag [#allocation3], %s156
          %s158 = sand.u32 %s26, 1
          %s159 = smul.addr %s158, 8
          %s160 = scalar_lea.vmem [#allocation2], %s159
          %s162 = ssub.s32 128, 128
          %163 = vsyncadd %s157, %s162
          %s164 = smul.addr %s16, 128
          %s165 = scalar_lea.hbm %s0, %s164
          %s167 = sshll.u32 %s160, 4
          %s168 = int_to_ptr.vmem [resolvable:$true] %s167
          %170 = dma.hbm_to_vmem [thread:$0]  %s165, 128, %s168, %s157
        $region28: #{_lambda_.23} parent=23 // pred_fallthru
          _
      $region24: #{_lambda_.23} parent=5 // pred_fallthru
        _
      %p171 = scmp.le.s32.totalorder 1, %s16
      %p172 = scmp.lt.s32.totalorder %s16, 3
      %p173 = pnand %p171, %p172
      %p174 = pneg %p173
      // Predicated region
      $region29: #{_lambda_.23} parent=5 // pred_check
        _
      $region30: #{_lambda_.23} parent=5 // pred_check_branch
        %176 = sbr.rel (%p173) target = $region32
      $region31: #{_lambda_.23} parent=5 // pred_region
        %s177 = ssub.s32 %s16, 1
        %s178 = sand.u32 %s29, 1
        %s179 = scalar_lea.sflag [#allocation3], %s178
        %s180 = sand.u32 %s29, 1
        %s181 = smul.addr %s180, 8
        %s182 = scalar_lea.vmem [#allocation2], %s181
        // Predicated region
        $region33: #{_lambda_.23} parent=31 // pred_check
          %p183 = pneg %p42
        $region34: #{_lambda_.23} parent=31 // pred_check_branch
          %185 = sbr.rel (%p183) target = $region36
        $region35: #{_lambda_.23} parent=31 // pred_region
          %186 = dma.done %s179, 128
        $region36: #{_lambda_.23} parent=31 // pred_fallthru
          _
        // Predicated region
        $region37: #{_lambda_.23} parent=31 // pred_check
          %p187 = pneg %p63
        $region38: #{_lambda_.23} parent=31 // pred_check_branch
          %189 = sbr.rel (%p187) target = $region40
        $region39: #{_lambda_.23} parent=31 // pred_region
          %190 = dma.done [#allocation6], 256
        $region40: #{_lambda_.23} parent=31 // pred_fallthru
          _
        // Predicated region
        $region41: #{_lambda_.23} parent=31 // pred_check
          %p191 = pneg %p84
        $region42: #{_lambda_.23} parent=31 // pred_check_branch
          %193 = sbr.rel (%p191) target = $region44
        $region43: #{_lambda_.23} parent=31 // pred_region
          %194 = dma.done [#allocation6], 16
        $region44: #{_lambda_.23} parent=31 // pred_fallthru
          _
        %s195 = sand.u32 %s29, 1
        %s196 = scalar_lea.sflag [#allocation3], %s195
        %s197 = sand.u32 %s29, 1
        %s198 = smul.addr %s197, 8
        %s199 = scalar_lea.vmem [#allocation2], %s198
        %p200 = pneg %p42
        %p201 = pneg %p39
        %p202 = pneg %p63
        %p203 = pneg %p60
        %p204 = pneg %p84
        %p205 = pneg %p81
        %p206 = pneg %p110
        %p207 = pneg %p107
        %s208 = sand.u32 %s97, 1
        %s209 = scalar_lea.sflag [#allocation4], %s208
        %s210 = sand.u32 %s97, 1
        %s211 = smul.addr %s210, 8
        %s212 = scalar_lea.vmem [#allocation8], %s211
        %v214 = vld [vmem:[%s182] sm:$0xff]
        %v215 = vpack.c.bf16 %v214, %v214
        %v216 = vld [vmem:[#allocation5] sm:$0xf]
        %v217 = vld [vmem:[#allocation5 + $0x4] sm:$0xf]
        %v218 = vld [vmem:[#allocation5 + $0x8] sm:$0xf]
        %v219 = vld [vmem:[#allocation5 + $0xc] sm:$0xf]
        %v220 = vld [vmem:[#allocation7] sm:$0x1]
        %v222 = vlaneseq
        %v223 = vshrl.u32 %v222, 7
        %v224 = vsub.s32 0, %v223
        %v225 = vrot.slane %v220, %v224
        %v231 = vunpack.c.l.b16 %v216
        %v232 = vunpack.c.l.b16 %v217
        %v233 = vunpack.c.l.b16 %v218
        %v234 = vunpack.c.l.b16 %v219
        %v235 = vpack.c.b16 %v232, %v231
        %v236 = vpack.c.b16 %v234, %v233
        %vm239 = vcmask 261120
        %v241 = vsel %vm239, %v215, 0
        %243 = vmatprep.subr.bf16.mxu0 0
        %244 = vmatpush1.bf16.msra.mxu0 %v235
        %245 = vmatprep.subr.bf16.mxu0 0
        %246 = vmatpush1.bf16.msra.mxu0 %v236
        %247 = vmatprep.subr.bf16.mxu0 0
        %248 = vmatpush1.bf16.msra.mxu0 0
        %249 = vmatprep.subr.bf16.mxu0 0
        %250 = vmatpush1.bf16.msra.mxu0 0
        %251 = vmatprep.subr.bf16.mxu0 0
        %252 = vmatpush1.bf16.msra.mxu0 0
        %253 = vmatprep.subr.bf16.mxu0 0
        %254 = vmatpush1.bf16.msra.mxu0 0
        %255 = vmatprep.subr.bf16.mxu0 0
        %256 = vmatpush1.bf16.msra.mxu0 0
        %257 = vmatprep.subr.bf16.mxu0 0
        %258 = vmatpush1.bf16.msra.mxu0 0
        %259 = vmatprep.subr.bf16.mxu0 0
        %260 = vmatpush1.bf16.msra.mxu0 0
        %261 = vmatprep.subr.bf16.mxu0 0
        %262 = vmatpush1.bf16.msra.mxu0 0
        %263 = vmatprep.subr.bf16.mxu0 0
        %264 = vmatpush1.bf16.msra.mxu0 0
        %265 = vmatprep.subr.bf16.mxu0 0
        %266 = vmatpush1.bf16.msra.mxu0 0
        %267 = vmatprep.subr.bf16.mxu0 0
        %268 = vmatpush1.bf16.msra.mxu0 0
        %269 = vmatprep.subr.bf16.mxu0 0
        %270 = vmatpush1.bf16.msra.mxu0 0
        %271 = vmatprep.subr.bf16.mxu0 0
        %272 = vmatpush1.bf16.msra.mxu0 0
        %273 = vmatprep.subr.bf16.mxu0 0
        %274 = vmatpush1.bf16.msra.mxu0 0
        %275 = vmatprep.mubr.bf16.mxu0 0
        %276 = vmatmul.mubr.bf16.gmra.mrb[0].mxu0 %v241
        %v277 = vpop.f32.mrb[0].mxu0
        %v278 = vadd.f32 %v225, %v277
        %v279 = vpop.f32.mrb[0].mxu0
        %v280 = vpop.f32.mrb[0].mxu0
        %v281 = vpop.f32.mrb[0].mxu0
        %282 = vdwg.mxu0
        %vm283 = vcmask 130048
        %284 = vst.msk [vmem:[%s212] sm:$0xff] %vm283, %v278
        %s285 = sand.u32 %s97, 1
        %s286 = scalar_lea.sflag [#allocation4], %s285
        %s287 = sand.u32 %s97, 1
        %s288 = smul.addr %s287, 8
        %s289 = scalar_lea.vmem [#allocation8], %s288
        // Predicated region
        $region45: #{_lambda_.23} parent=31 // pred_check
          %p290 = pneg %p107
        $region46: #{_lambda_.23} parent=31 // pred_check_branch
          %292 = sbr.rel (%p290) target = $region48
        $region47: #{_lambda_.23} parent=31 // pred_region
          %s294 = ssub.s32 128, 128
          %295 = vsyncadd %s286, %s294
          %s296 = smul.addr %s21, 128
          %s297 = scalar_lea.hbm %s3, %s296
          %s299 = sshll.u32 %s289, 4
          %s300 = int_to_ptr.vmem [resolvable:$true] %s299
          %302 = dma.vmem_to_hbm [thread:$0]  %s300, 128, %s297, %s286
        $region48: #{_lambda_.23} parent=31 // pred_fallthru
          _
      $region32: #{_lambda_.23} parent=5 // pred_fallthru
        _
      %p303 = scmp.le.s32.totalorder 2, %s16
      // Predicated region
      $region49: #{_lambda_.23} parent=5 // pred_check
        %p304 = pneg %p303
      $region50: #{_lambda_.23} parent=5 // pred_check_branch
        %306 = sbr.rel (%p304) target = $region52
      $region51: #{_lambda_.23} parent=5 // pred_region
        %s307 = ssub.s32 %s16, 2
        // Predicated region
        $region53: #{_lambda_.23} parent=51 // pred_check
          %p308 = pneg %p113
        $region54: #{_lambda_.23} parent=51 // pred_check_branch
          %310 = sbr.rel (%p308) target = $region56
        $region55: #{_lambda_.23} parent=51 // pred_region
          %s311 = sand.u32 %s98, 1
          %s312 = scalar_lea.sflag [#allocation4], %s311
          %s313 = sand.u32 %s98, 1
          %s314 = smul.addr %s313, 8
          %s315 = scalar_lea.vmem [#allocation8], %s314
          %316 = dma.done %s312, 128
        $region56: #{_lambda_.23} parent=51 // pred_fallthru
          _
      $region52: #{_lambda_.23} parent=5 // pred_fallthru
        _
    $region6: #{_lambda_.23} parent=1 // loop_footer
      %s20 = sadd.s32 1, %s16
    $region7: #{_lambda_.23} parent=1 // loop_footer_branch
      %15 = sbr.rel target = $region3
    $region8: #{_lambda_.23} parent=1 // loop_exit
      _
    %317 = vsyncpa [#allocation3], 1
    %s318 = scalar_lea.sflag [#allocation3], 1
    %319 = vsyncpa %s318, 1
    %320 = vsyncpa [#allocation6], 1
    %321 = vsyncpa [#allocation4], 1
    %s322 = scalar_lea.sflag [#allocation4], 1
    %323 = vsyncpa %s322, 1

// kernel: _lambda_.19
$region0: #{_lambda_.19}
  #allocation0 [shape = 'u32[]', space=smem, size = 0x4, offset = 0x4, fixed_abs, tag = 'smem constant byte address 0x4 - core index']
  #allocation1 [shape = 'u32[144,128]{1,0:T(1,128)}', space=vmem, size = 0x12000, scoped, tag = 'internal scratch']
  %s0 = inlined_call_operand.hbm [shape: f32[2,8,32], index: 0, kind: input, shape index: {}]
  %s1 = inlined_call_operand.hbm [shape: f32[2,8,32], index: 1, kind: input, shape index: {}]
  %s2 = inlined_call_operand.hbm [shape: f32[2,1,8], index: 2, kind: input, shape index: {}]
  %s3 = inlined_call_operand.hbm [shape: f32[1,32], index: 3, kind: input, shape index: {}]
  %s4 = inlined_call_operand.hbm [shape: f32[1,32], index: 4, kind: input, shape index: {}]
  %s5 = inlined_call_operand.hbm [shape: bf16[32,64], index: 5, kind: input, shape index: {}]
  %s6 = inlined_call_operand.hbm [shape: f32[1,64], index: 6, kind: input, shape index: {}]
  %s7 = inlined_call_operand.hbm [shape: bf16[32,128], index: 7, kind: input, shape index: {}]
  %s8 = inlined_call_operand.hbm [shape: f32[1,128], index: 8, kind: input, shape index: {}]
  %s9 = inlined_call_operand.hbm [shape: bf16[64,32], index: 9, kind: input, shape index: {}]
  %s10 = inlined_call_operand.hbm [shape: f32[1,32], index: 10, kind: input, shape index: {}]
  %s11 = inlined_call_operand.hbm [shape: f32[2,8,32], index: 11, kind: output, shape index: {}]
  %s12 = sld [smem:[#allocation0]]
  $region121: #{_lambda_.19} parent=0
    _
  %s14 = ssub.s32 1, %s12
  %s15 = scalar_select 0, %s14, %s12
  $region1: #{_lambda_.19} parent=0
    #allocation2 [shape = 'u8[8192]{0}', space=vmem, size = 0x2000, scoped, tag = 'input window, operand 0']
    #allocation3 [shape = 's32[2]{0}', space=sflag, size = 0x8, scoped, tag = 'scoped memory for _lambda_.19']
    #allocation4 [shape = 's32[2]{0}', space=sflag, size = 0x8, scoped, tag = 'scoped memory for _lambda_.19']
    #allocation5 [shape = 'u8[8192]{0}', space=vmem, size = 0x2000, scoped, tag = 'input window, operand 1']
    #allocation6 [shape = 's32[2]{0}', space=sflag, size = 0x8, scoped, tag = 'scoped memory for _lambda_.19']
    #allocation7 [shape = 'u8[1024]{0}', space=vmem, size = 0x400, scoped, tag = 'input window, operand 2']
    #allocation8 [shape = 'u8[512]{0}', space=vmem, size = 0x400, scoped, tag = 'input window, operand 3, single buffered']
    #allocation9 [shape = 's32[1]{0}', space=sflag, size = 0x4, scoped, tag = 'scoped memory for _lambda_.19']
    #allocation10 [shape = 'u8[512]{0}', space=vmem, size = 0x400, scoped, tag = 'input window, operand 4, single buffered']
    #allocation11 [shape = 'u8[8192]{0}', space=vmem, size = 0x2000, scoped, tag = 'input window, operand 5, single buffered']
    #allocation12 [shape = 's32[1]{0}', space=sflag, size = 0x4, scoped, tag = 'scoped memory for _lambda_.19']
    #allocation13 [shape = 'u8[512]{0}', space=vmem, size = 0x400, scoped, tag = 'input window, operand 6, single buffered']
    #allocation14 [shape = 'u8[8192]{0}', space=vmem, size = 0x2000, scoped, tag = 'input window, operand 7, single buffered']
    #allocation15 [shape = 's32[1]{0}', space=sflag, size = 0x4, scoped, tag = 'scoped memory for _lambda_.19']
    #allocation16 [shape = 'u8[512]{0}', space=vmem, size = 0x400, scoped, tag = 'input window, operand 8, single buffered']
    #allocation17 [shape = 'u8[16384]{0}', space=vmem, size = 0x4000, scoped, tag = 'input window, operand 9, single buffered']
    #allocation18 [shape = 's32[1]{0}', space=sflag, size = 0x4, scoped, tag = 'scoped memory for _lambda_.19']
    #allocation19 [shape = 'u8[512]{0}', space=vmem, size = 0x400, scoped, tag = 'input window, operand 10, single buffered']
    #allocation20 [shape = 'u8[8192]{0}', space=vmem, size = 0x2000, scoped, tag = 'output window, operand 0']
    %16 = vsyncpa [#allocation3], 0
    %s17 = scalar_lea.sflag [#allocation3], 1
    %18 = vsyncpa %s17, 0
    %19 = vsyncpa [#allocation6], 0
    %s20 = scalar_lea.sflag [#allocation6], 1
    %21 = vsyncpa %s20, 0
    %22 = vsyncpa [#allocation9], 0
    %23 = vsyncpa [#allocation12], 0
    %24 = vsyncpa [#allocation15], 0
    %25 = vsyncpa [#allocation18], 0
    %26 = vsyncpa [#allocation4], 0
    %s27 = scalar_lea.sflag [#allocation4], 1
    %28 = vsyncpa %s27, 0
    loop: start=0, step=1, limit=4
    $region2: #{_lambda_.19} parent=1 // loop_pre_header
      _
    $region3: #{_lambda_.19} parent=1 // loop_header
      %s30 = sphi 0, %s34
      %p31 = scmp.ge.s32.totalorder %s30, 4
      %s40 = sphi 0, %s42
      %s43 = sphi 0, %s40
      %s44 = sphi 0, %s43
      %s60 = sphi 0, %s44
      %s66 = sphi 0, %s68
      %s69 = sphi 0, %s66
      %s70 = sphi 0, %s69
      %s86 = sphi 0, %s70
      %s92 = sphi 0, %s94
      %s95 = sphi 0, %s92
      %s96 = sphi 0, %s95
      %s112 = sphi 0, %s96
      %s116 = sphi 0, %s116
      %s118 = sphi 0, %s116
      %s119 = sphi 0, %s118
      %s133 = sphi 0, %s119
      %s137 = sphi 0, %s137
      %s139 = sphi 0, %s137
      %s140 = sphi 0, %s139
      %s154 = sphi 0, %s140
      %s158 = sphi 0, %s158
      %s160 = sphi 0, %s158
      %s161 = sphi 0, %s160
      %s175 = sphi 0, %s161
      %s179 = sphi 0, %s179
      %s181 = sphi 0, %s179
      %s182 = sphi 0, %s181
      %s196 = sphi 0, %s182
      %s200 = sphi 0, %s200
      %s202 = sphi 0, %s200
      %s203 = sphi 0, %s202
      %s217 = sphi 0, %s203
      %s221 = sphi 0, %s221
      %s223 = sphi 0, %s221
      %s224 = sphi 0, %s223
      %s238 = sphi 0, %s224
      %s242 = sphi 0, %s242
      %s244 = sphi 0, %s242
      %s245 = sphi 0, %s244
      %s259 = sphi 0, %s245
      %s263 = sphi 0, %s263
      %s265 = sphi 0, %s263
      %s266 = sphi 0, %s265
      %s280 = sphi 0, %s266
      %s286 = sphi 0, %s288
      %s289 = sphi 0, %s286
      %s290 = sphi 0, %s289
      %s306 = sphi 0, %s290
    $region4: #{_lambda_.19} parent=1 // loop_header_branch
      %33 = sbr.rel (%p31) target = $region8
    $region5: #{_lambda_.19} parent=1 // loop_body
      %s35 = ssub.s32 %s30, 1
      %s36 = ssub.s32 %s30, 2
      %s37 = sadd.s32 %s30, 1
      %s38 = ssub.s32 %s30, %s37
      %p39 = scmp.eq.s32.totalorder %s38, 0
      %s41 = sadd.s32 %s40, 1
      %s42 = scalar_select %p39, %s40, %s41
      %p45 = pneg %p39
      %p46 = scmp.eq.s32.totalorder %s30, 1
      %p47 = por %p45, %p46
      %p48 = scmp.ne.s32.totalorder %s40, %s43
      %p49 = scmp.eq.s32.totalorder %s30, 0
      %p50 = por %p48, %p49
      %p51 = scmp.ne.s32.totalorder %s40, %s43
      %p52 = scmp.eq.s32.totalorder %s35, 1
      %p53 = por %p51, %p52
      %p54 = scmp.ne.s32.totalorder %s43, %s44
      %p55 = scmp.eq.s32.totalorder %s35, 0
      %p56 = por %p54, %p55
      %p57 = scmp.ne.s32.totalorder %s43, %s44
      %p58 = scmp.eq.s32.totalorder %s36, 1
      %p59 = por %p57, %p58
      %p61 = scmp.ne.s32.totalorder %s44, %s60
      %p62 = scmp.eq.s32.totalorder %s36, 0
      %p63 = por %p61, %p62
      %s64 = ssub.s32 %s30, %s37
      %p65 = scmp.eq.s32.totalorder %s64, 0
      %s67 = sadd.s32 %s66, 1
      %s68 = scalar_select %p65, %s66, %s67
      %p71 = pneg %p65
      %p72 = scmp.eq.s32.totalorder %s30, 1
      %p73 = por %p71, %p72
      %p74 = scmp.ne.s32.totalorder %s66, %s69
      %p75 = scmp.eq.s32.totalorder %s30, 0
      %p76 = por %p74, %p75
      %p77 = scmp.ne.s32.totalorder %s66, %s69
      %p78 = scmp.eq.s32.totalorder %s35, 1
      %p79 = por %p77, %p78
      %p80 = scmp.ne.s32.totalorder %s69, %s70
      %p81 = scmp.eq.s32.totalorder %s35, 0
      %p82 = por %p80, %p81
      %p83 = scmp.ne.s32.totalorder %s69, %s70
      %p84 = scmp.eq.s32.totalorder %s36, 1
      %p85 = por %p83, %p84
      %p87 = scmp.ne.s32.totalorder %s70, %s86
      %p88 = scmp.eq.s32.totalorder %s36, 0
      %p89 = por %p87, %p88
      %s90 = ssub.s32 %s30, %s37
      %p91 = scmp.eq.s32.totalorder %s90, 0
      %s93 = sadd.s32 %s92, 1
      %s94 = scalar_select %p91, %s92, %s93
      %p97 = pneg %p91
      %p98 = scmp.eq.s32.totalorder %s30, 1
      %p99 = por %p97, %p98
      %p100 = scmp.ne.s32.totalorder %s92, %s95
      %p101 = scmp.eq.s32.totalorder %s30, 0
      %p102 = por %p100, %p101
      %p103 = scmp.ne.s32.totalorder %s92, %s95
      %p104 = scmp.eq.s32.totalorder %s35, 1
      %p105 = por %p103, %p104
      %p106 = scmp.ne.s32.totalorder %s95, %s96
      %p107 = scmp.eq.s32.totalorder %s35, 0
      %p108 = por %p106, %p107
      %p109 = scmp.ne.s32.totalorder %s95, %s96
      %p110 = scmp.eq.s32.totalorder %s36, 1
      %p111 = por %p109, %p110
      %p113 = scmp.ne.s32.totalorder %s96, %s112
      %p114 = scmp.eq.s32.totalorder %s36, 0
      %p115 = por %p113, %p114
      %s117 = sadd.s32 %s116, 1
      %p120 = scmp.eq.s32.totalorder %s30, 1
      %p121 = scmp.ne.s32.totalorder %s116, %s118
      %p122 = scmp.eq.s32.totalorder %s30, 0
      %p123 = por %p121, %p122
      %p124 = scmp.ne.s32.totalorder %s116, %s118
      %p125 = scmp.eq.s32.totalorder %s35, 1
      %p126 = por %p124, %p125
      %p127 = scmp.ne.s32.totalorder %s118, %s119
      %p128 = scmp.eq.s32.totalorder %s35, 0
      %p129 = por %p127, %p128
      %p130 = scmp.ne.s32.totalorder %s118, %s119
      %p131 = scmp.eq.s32.totalorder %s36, 1
      %p132 = por %p130, %p131
      %p134 = scmp.ne.s32.totalorder %s119, %s133
      %p135 = scmp.eq.s32.totalorder %s36, 0
      %p136 = por %p134, %p135
      %s138 = sadd.s32 %s137, 1
      %p141 = scmp.eq.s32.totalorder %s30, 1
      %p142 = scmp.ne.s32.totalorder %s137, %s139
      %p143 = scmp.eq.s32.totalorder %s30, 0
      %p144 = por %p142, %p143
      %p145 = scmp.ne.s32.totalorder %s137, %s139
      %p146 = scmp.eq.s32.totalorder %s35, 1
      %p147 = por %p145, %p146
      %p148 = scmp.ne.s32.totalorder %s139, %s140
      %p149 = scmp.eq.s32.totalorder %s35, 0
      %p150 = por %p148, %p149
      %p151 = scmp.ne.s32.totalorder %s139, %s140
      %p152 = scmp.eq.s32.totalorder %s36, 1
      %p153 = por %p151, %p152
      %p155 = scmp.ne.s32.totalorder %s140, %s154
      %p156 = scmp.eq.s32.totalorder %s36, 0
      %p157 = por %p155, %p156
      %s159 = sadd.s32 %s158, 1
      %p162 = scmp.eq.s32.totalorder %s30, 1
      %p163 = scmp.ne.s32.totalorder %s158, %s160
      %p164 = scmp.eq.s32.totalorder %s30, 0
      %p165 = por %p163, %p164
      %p166 = scmp.ne.s32.totalorder %s158, %s160
      %p167 = scmp.eq.s32.totalorder %s35, 1
      %p168 = por %p166, %p167
      %p169 = scmp.ne.s32.totalorder %s160, %s161
      %p170 = scmp.eq.s32.totalorder %s35, 0
      %p171 = por %p169, %p170
      %p172 = scmp.ne.s32.totalorder %s160, %s161
      %p173 = scmp.eq.s32.totalorder %s36, 1
      %p174 = por %p172, %p173
      %p176 = scmp.ne.s32.totalorder %s161, %s175
      %p177 = scmp.eq.s32.totalorder %s36, 0
      %p178 = por %p176, %p177
      %s180 = sadd.s32 %s179, 1
      %p183 = scmp.eq.s32.totalorder %s30, 1
      %p184 = scmp.ne.s32.totalorder %s179, %s181
      %p185 = scmp.eq.s32.totalorder %s30, 0
      %p186 = por %p184, %p185
      %p187 = scmp.ne.s32.totalorder %s179, %s181
      %p188 = scmp.eq.s32.totalorder %s35, 1
      %p189 = por %p187, %p188
      %p190 = scmp.ne.s32.totalorder %s181, %s182
      %p191 = scmp.eq.s32.totalorder %s35, 0
      %p192 = por %p190, %p191
      %p193 = scmp.ne.s32.totalorder %s181, %s182
      %p194 = scmp.eq.s32.totalorder %s36, 1
      %p195 = por %p193, %p194
      %p197 = scmp.ne.s32.totalorder %s182, %s196
      %p198 = scmp.eq.s32.totalorder %s36, 0
      %p199 = por %p197, %p198
      %s201 = sadd.s32 %s200, 1
      %p204 = scmp.eq.s32.totalorder %s30, 1
      %p205 = scmp.ne.s32.totalorder %s200, %s202
      %p206 = scmp.eq.s32.totalorder %s30, 0
      %p207 = por %p205, %p206
      %p208 = scmp.ne.s32.totalorder %s200, %s202
      %p209 = scmp.eq.s32.totalorder %s35, 1
      %p210 = por %p208, %p209
      %p211 = scmp.ne.s32.totalorder %s202, %s203
      %p212 = scmp.eq.s32.totalorder %s35, 0
      %p213 = por %p211, %p212
      %p214 = scmp.ne.s32.totalorder %s202, %s203
      %p215 = scmp.eq.s32.totalorder %s36, 1
      %p216 = por %p214, %p215
      %p218 = scmp.ne.s32.totalorder %s203, %s217
      %p219 = scmp.eq.s32.totalorder %s36, 0
      %p220 = por %p218, %p219
      %s222 = sadd.s32 %s221, 1
      %p225 = scmp.eq.s32.totalorder %s30, 1
      %p226 = scmp.ne.s32.totalorder %s221, %s223
      %p227 = scmp.eq.s32.totalorder %s30, 0
      %p228 = por %p226, %p227
      %p229 = scmp.ne.s32.totalorder %s221, %s223
      %p230 = scmp.eq.s32.totalorder %s35, 1
      %p231 = por %p229, %p230
      %p232 = scmp.ne.s32.totalorder %s223, %s224
      %p233 = scmp.eq.s32.totalorder %s35, 0
      %p234 = por %p232, %p233
      %p235 = scmp.ne.s32.totalorder %s223, %s224
      %p236 = scmp.eq.s32.totalorder %s36, 1
      %p237 = por %p235, %p236
      %p239 = scmp.ne.s32.totalorder %s224, %s238
      %p240 = scmp.eq.s32.totalorder %s36, 0
      %p241 = por %p239, %p240
      %s243 = sadd.s32 %s242, 1
      %p246 = scmp.eq.s32.totalorder %s30, 1
      %p247 = scmp.ne.s32.totalorder %s242, %s244
      %p248 = scmp.eq.s32.totalorder %s30, 0
      %p249 = por %p247, %p248
      %p250 = scmp.ne.s32.totalorder %s242, %s244
      %p251 = scmp.eq.s32.totalorder %s35, 1
      %p252 = por %p250, %p251
      %p253 = scmp.ne.s32.totalorder %s244, %s245
      %p254 = scmp.eq.s32.totalorder %s35, 0
      %p255 = por %p253, %p254
      %p256 = scmp.ne.s32.totalorder %s244, %s245
      %p257 = scmp.eq.s32.totalorder %s36, 1
      %p258 = por %p256, %p257
      %p260 = scmp.ne.s32.totalorder %s245, %s259
      %p261 = scmp.eq.s32.totalorder %s36, 0
      %p262 = por %p260, %p261
      %s264 = sadd.s32 %s263, 1
      %p267 = scmp.eq.s32.totalorder %s30, 1
      %p268 = scmp.ne.s32.totalorder %s263, %s265
      %p269 = scmp.eq.s32.totalorder %s30, 0
      %p270 = por %p268, %p269
      %p271 = scmp.ne.s32.totalorder %s263, %s265
      %p272 = scmp.eq.s32.totalorder %s35, 1
      %p273 = por %p271, %p272
      %p274 = scmp.ne.s32.totalorder %s265, %s266
      %p275 = scmp.eq.s32.totalorder %s35, 0
      %p276 = por %p274, %p275
      %p277 = scmp.ne.s32.totalorder %s265, %s266
      %p278 = scmp.eq.s32.totalorder %s36, 1
      %p279 = por %p277, %p278
      %p281 = scmp.ne.s32.totalorder %s266, %s280
      %p282 = scmp.eq.s32.totalorder %s36, 0
      %p283 = por %p281, %p282
      %s284 = ssub.s32 %s30, %s37
      %p285 = scmp.eq.s32.totalorder %s284, 0
      %s287 = sadd.s32 %s286, 1
      %s288 = scalar_select %p285, %s286, %s287
      %p291 = pneg %p285
      %p292 = scmp.eq.s32.totalorder %s30, 1
      %p293 = por %p291, %p292
      %p294 = scmp.ne.s32.totalorder %s286, %s289
      %p295 = scmp.eq.s32.totalorder %s30, 0
      %p296 = por %p294, %p295
      %p297 = scmp.ne.s32.totalorder %s286, %s289
      %p298 = scmp.eq.s32.totalorder %s35, 1
      %p299 = por %p297, %p298
      %p300 = scmp.ne.s32.totalorder %s289, %s290
      %p301 = scmp.eq.s32.totalorder %s35, 0
      %p302 = por %p300, %p301
      %p303 = scmp.ne.s32.totalorder %s289, %s290
      %p304 = scmp.eq.s32.totalorder %s36, 1
      %p305 = por %p303, %p304
      %p307 = scmp.ne.s32.totalorder %s290, %s306
      %p308 = scmp.eq.s32.totalorder %s36, 0
      %p309 = por %p307, %p308
      %p310 = scmp.le.s32.totalorder 1, %s30
      %p311 = scmp.lt.s32.totalorder %s30, 3
      %p312 = pnand %p310, %p311
      %p313 = pneg %p312
      // Predicated region
      $region9: #{_lambda_.19} parent=5 // pred_check
        _
      $region10: #{_lambda_.19} parent=5 // pred_check_branch
        %315 = sbr.rel (%p312) target = $region12
      $region11: #{_lambda_.19} parent=5 // pred_region
        %s316 = ssub.s32 %s30, 1
        // Predicated region
        $region13: #{_lambda_.19} parent=11 // pred_check
          %p317 = pneg %p129
        $region14: #{_lambda_.19} parent=11 // pred_check_branch
          %319 = sbr.rel (%p317) target = $region16
        $region15: #{_lambda_.19} parent=11 // pred_region
          %s321 = ssub.s32 16, 16
          %322 = vsyncadd [#allocation9], %s321
          %s324 = sshll.u32 [#allocation8], 4
          %s325 = int_to_ptr.vmem [resolvable:$true] %s324
          %327 = dma.hbm_to_vmem [thread:$0]  %s3, 16, %s325, [#allocation9]
        $region16: #{_lambda_.19} parent=11 // pred_fallthru
          _
        // Predicated region
        $region17: #{_lambda_.19} parent=11 // pred_check
          %p328 = pneg %p150
        $region18: #{_lambda_.19} parent=11 // pred_check_branch
          %330 = sbr.rel (%p328) target = $region20
        $region19: #{_lambda_.19} parent=11 // pred_region
          %s332 = ssub.s32 16, 16
          %333 = vsyncadd [#allocation9], %s332
          %s335 = sshll.u32 [#allocation10], 4
          %s336 = int_to_ptr.vmem [resolvable:$true] %s335
          %338 = dma.hbm_to_vmem [thread:$0]  %s4, 16, %s336, [#allocation9]
        $region20: #{_lambda_.19} parent=11 // pred_fallthru
          _
        // Predicated region
        $region21: #{_lambda_.19} parent=11 // pred_check
          %p339 = pneg %p171
        $region22: #{_lambda_.19} parent=11 // pred_check_branch
          %341 = sbr.rel (%p339) target = $region24
        $region23: #{_lambda_.19} parent=11 // pred_region
          %s343 = ssub.s32 256, 256
          %344 = vsyncadd [#allocation12], %s343
          %s345 = sshll.u32 [#allocation11], 4
          %s346 = int_to_ptr.vmem [resolvable:$true] %s345
          %351 = dma.hbm_to_vmem [thread:$0]  %s5, 256, %s346, [#allocation12], 64, 64, 4
        $region24: #{_lambda_.19} parent=11 // pred_fallthru
          _
        // Predicated region
        $region25: #{_lambda_.19} parent=11 // pred_check
          %p352 = pneg %p192
        $region26: #{_lambda_.19} parent=11 // pred_check_branch
          %354 = sbr.rel (%p352) target = $region28
        $region27: #{_lambda_.19} parent=11 // pred_region
          %s356 = ssub.s32 16, 16
          %357 = vsyncadd [#allocation12], %s356
          %s359 = sshll.u32 [#allocation13], 4
          %s360 = int_to_ptr.vmem [resolvable:$true] %s359
          %362 = dma.hbm_to_vmem [thread:$0]  %s6, 16, %s360, [#allocation12]
        $region28: #{_lambda_.19} parent=11 // pred_fallthru
          _
        // Predicated region
        $region29: #{_lambda_.19} parent=11 // pred_check
          %p363 = pneg %p213
        $region30: #{_lambda_.19} parent=11 // pred_check_branch
          %365 = sbr.rel (%p363) target = $region32
        $region31: #{_lambda_.19} parent=11 // pred_region
          %s367 = ssub.s32 256, 256
          %368 = vsyncadd [#allocation15], %s367
          %s369 = sshll.u32 [#allocation14], 4
          %s370 = int_to_ptr.vmem [resolvable:$true] %s369
          %375 = dma.hbm_to_vmem [thread:$0]  %s7, 256, %s370, [#allocation15], 64, 64, 4
        $region32: #{_lambda_.19} parent=11 // pred_fallthru
          _
        // Predicated region
        $region33: #{_lambda_.19} parent=11 // pred_check
          %p376 = pneg %p234
        $region34: #{_lambda_.19} parent=11 // pred_check_branch
          %378 = sbr.rel (%p376) target = $region36
        $region35: #{_lambda_.19} parent=11 // pred_region
          %s380 = ssub.s32 16, 16
          %381 = vsyncadd [#allocation15], %s380
          %s383 = sshll.u32 [#allocation16], 4
          %s384 = int_to_ptr.vmem [resolvable:$true] %s383
          %386 = dma.hbm_to_vmem [thread:$0]  %s8, 16, %s384, [#allocation15]
        $region36: #{_lambda_.19} parent=11 // pred_fallthru
          _
        // Predicated region
        $region37: #{_lambda_.19} parent=11 // pred_check
          %p387 = pneg %p255
        $region38: #{_lambda_.19} parent=11 // pred_check_branch
          %389 = sbr.rel (%p387) target = $region40
        $region39: #{_lambda_.19} parent=11 // pred_region
          %s391 = ssub.s32 512, 512
          %392 = vsyncadd [#allocation18], %s391
          %s393 = sshll.u32 [#allocation17], 4
          %s394 = int_to_ptr.vmem [resolvable:$true] %s393
          %399 = dma.hbm_to_vmem [thread:$0]  %s9, 512, %s394, [#allocation18], 64, 64, 4
        $region40: #{_lambda_.19} parent=11 // pred_fallthru
          _
        // Predicated region
        $region41: #{_lambda_.19} parent=11 // pred_check
          %p400 = pneg %p276
        $region42: #{_lambda_.19} parent=11 // pred_check_branch
          %402 = sbr.rel (%p400) target = $region44
        $region43: #{_lambda_.19} parent=11 // pred_region
          %s404 = ssub.s32 16, 16
          %405 = vsyncadd [#allocation18], %s404
          %s407 = sshll.u32 [#allocation19], 4
          %s408 = int_to_ptr.vmem [resolvable:$true] %s407
          %410 = dma.hbm_to_vmem [thread:$0]  %s10, 16, %s408, [#allocation18]
        $region44: #{_lambda_.19} parent=11 // pred_fallthru
          _
      $region12: #{_lambda_.19} parent=5 // pred_fallthru
        _
      %p411 = scmp.lt.s32.totalorder %s30, 2
      // Predicated region
      $region45: #{_lambda_.19} parent=5 // pred_check
        %p412 = pneg %p411
      $region46: #{_lambda_.19} parent=5 // pred_check_branch
        %414 = sbr.rel (%p412) target = $region48
      $region47: #{_lambda_.19} parent=5 // pred_region
        // Predicated region
        $region49: #{_lambda_.19} parent=47 // pred_check
          %p415 = pneg %p50
        $region50: #{_lambda_.19} parent=47 // pred_check_branch
          %417 = sbr.rel (%p415) target = $region52
        $region51: #{_lambda_.19} parent=47 // pred_region
          %s418 = sand.u32 %s40, 1
          %s419 = scalar_lea.sflag [#allocation3], %s418
          %s420 = sand.u32 %s40, 1
          %s421 = smul.addr %s420, 8
          %s422 = scalar_lea.vmem [#allocation2], %s421
          %s424 = ssub.s32 128, 128
          %425 = vsyncadd %s419, %s424
          %s426 = smul.addr %s30, 128
          %s427 = scalar_lea.hbm %s0, %s426
          %s429 = sshll.u32 %s422, 4
          %s430 = int_to_ptr.vmem [resolvable:$true] %s429
          %432 = dma.hbm_to_vmem [thread:$0]  %s427, 128, %s430, %s419
        $region52: #{_lambda_.19} parent=47 // pred_fallthru
          _
        // Predicated region
        $region53: #{_lambda_.19} parent=47 // pred_check
          %p433 = pneg %p76
        $region54: #{_lambda_.19} parent=47 // pred_check_branch
          %435 = sbr.rel (%p433) target = $region56
        $region55: #{_lambda_.19} parent=47 // pred_region
          %s436 = sand.u32 %s30, 1
          %s437 = scalar_lea.sflag [#allocation6], %s436
          %s438 = sand.u32 %s66, 1
          %s439 = smul.addr %s438, 8
          %s440 = scalar_lea.vmem [#allocation5], %s439
          %s442 = ssub.s32 128, 128
          %443 = vsyncadd %s437, %s442
          %s444 = smul.addr %s30, 128
          %s445 = scalar_lea.hbm %s1, %s444
          %s447 = sshll.u32 %s440, 4
          %s448 = int_to_ptr.vmem [resolvable:$true] %s447
          %450 = dma.hbm_to_vmem [thread:$0]  %s445, 128, %s448, %s437
        $region56: #{_lambda_.19} parent=47 // pred_fallthru
          _
        // Predicated region
        $region57: #{_lambda_.19} parent=47 // pred_check
          %p451 = pneg %p102
        $region58: #{_lambda_.19} parent=47 // pred_check_branch
          %453 = sbr.rel (%p451) target = $region60
        $region59: #{_lambda_.19} parent=47 // pred_region
          %s454 = sand.u32 %s30, 1
          %s455 = scalar_lea.sflag [#allocation6], %s454
          %s456 = sand.u32 %s92, 1
          %s457 = scalar_lea.vmem [#allocation7], %s456
          %s459 = ssub.s32 16, 16
          %460 = vsyncadd %s455, %s459
          %s461 = smul.addr %s30, 16
          %s462 = scalar_lea.hbm %s2, %s461
          %s464 = sshll.u32 %s457, 4
          %s465 = int_to_ptr.vmem [resolvable:$true] %s464
          %467 = dma.hbm_to_vmem [thread:$0]  %s462, 16, %s465, %s455
        $region60: #{_lambda_.19} parent=47 // pred_fallthru
          _
      $region48: #{_lambda_.19} parent=5 // pred_fallthru
        _
      %p468 = scmp.le.s32.totalorder 1, %s30
      %p469 = scmp.lt.s32.totalorder %s30, 3
      %p470 = pnand %p468, %p469
      %p471 = pneg %p470
      // Predicated region
      $region61: #{_lambda_.19} parent=5 // pred_check
        _
      $region62: #{_lambda_.19} parent=5 // pred_check_branch
        %473 = sbr.rel (%p470) target = $region64
      $region63: #{_lambda_.19} parent=5 // pred_region
        %s474 = ssub.s32 %s30, 1
        %s475 = sand.u32 %s43, 1
        %s476 = scalar_lea.sflag [#allocation3], %s475
        %s477 = sand.u32 %s43, 1
        %s478 = smul.addr %s477, 8
        %s479 = scalar_lea.vmem [#allocation2], %s478
        // Predicated region
        $region65: #{_lambda_.19} parent=63 // pred_check
          %p480 = pneg %p56
        $region66: #{_lambda_.19} parent=63 // pred_check_branch
          %482 = sbr.rel (%p480) target = $region68
        $region67: #{_lambda_.19} parent=63 // pred_region
          %483 = dma.done %s476, 128
        $region68: #{_lambda_.19} parent=63 // pred_fallthru
          _
        %s484 = sand.u32 %s35, 1
        %s485 = scalar_lea.sflag [#allocation6], %s484
        %s486 = sand.u32 %s69, 1
        %s487 = smul.addr %s486, 8
        %s488 = scalar_lea.vmem [#allocation5], %s487
        // Predicated region
        $region69: #{_lambda_.19} parent=63 // pred_check
          %p489 = pneg %p82
        $region70: #{_lambda_.19} parent=63 // pred_check_branch
          %491 = sbr.rel (%p489) target = $region72
        $region71: #{_lambda_.19} parent=63 // pred_region
          %492 = dma.done %s485, 128
        $region72: #{_lambda_.19} parent=63 // pred_fallthru
          _
        %s493 = sand.u32 %s35, 1
        %s494 = scalar_lea.sflag [#allocation6], %s493
        %s495 = sand.u32 %s95, 1
        %s496 = scalar_lea.vmem [#allocation7], %s495
        // Predicated region
        $region73: #{_lambda_.19} parent=63 // pred_check
          %p497 = pneg %p108
        $region74: #{_lambda_.19} parent=63 // pred_check_branch
          %499 = sbr.rel (%p497) target = $region76
        $region75: #{_lambda_.19} parent=63 // pred_region
          %500 = dma.done %s494, 16
        $region76: #{_lambda_.19} parent=63 // pred_fallthru
          _
        // Predicated region
        $region77: #{_lambda_.19} parent=63 // pred_check
          %p501 = pneg %p129
        $region78: #{_lambda_.19} parent=63 // pred_check_branch
          %503 = sbr.rel (%p501) target = $region80
        $region79: #{_lambda_.19} parent=63 // pred_region
          %504 = dma.done [#allocation9], 16
        $region80: #{_lambda_.19} parent=63 // pred_fallthru
          _
        // Predicated region
        $region81: #{_lambda_.19} parent=63 // pred_check
          %p505 = pneg %p150
        $region82: #{_lambda_.19} parent=63 // pred_check_branch
          %507 = sbr.rel (%p505) target = $region84
        $region83: #{_lambda_.19} parent=63 // pred_region
          %508 = dma.done [#allocation9], 16
        $region84: #{_lambda_.19} parent=63 // pred_fallthru
          _
        // Predicated region
        $region85: #{_lambda_.19} parent=63 // pred_check
          %p509 = pneg %p171
        $region86: #{_lambda_.19} parent=63 // pred_check_branch
          %511 = sbr.rel (%p509) target = $region88
        $region87: #{_lambda_.19} parent=63 // pred_region
          %512 = dma.done [#allocation12], 256
        $region88: #{_lambda_.19} parent=63 // pred_fallthru
          _
        // Predicated region
        $region89: #{_lambda_.19} parent=63 // pred_check
          %p513 = pneg %p192
        $region90: #{_lambda_.19} parent=63 // pred_check_branch
          %515 = sbr.rel (%p513) target = $region92
        $region91: #{_lambda_.19} parent=63 // pred_region
          %516 = dma.done [#allocation12], 16
        $region92: #{_lambda_.19} parent=63 // pred_fallthru
          _
        // Predicated region
        $region93: #{_lambda_.19} parent=63 // pred_check
          %p517 = pneg %p213
        $region94: #{_lambda_.19} parent=63 // pred_check_branch
          %519 = sbr.rel (%p517) target = $region96
        $region95: #{_lambda_.19} parent=63 // pred_region
          %520 = dma.done [#allocation15], 256
        $region96: #{_lambda_.19} parent=63 // pred_fallthru
          _
        // Predicated region
        $region97: #{_lambda_.19} parent=63 // pred_check
          %p521 = pneg %p234
        $region98: #{_lambda_.19} parent=63 // pred_check_branch
          %523 = sbr.rel (%p521) target = $region100
        $region99: #{_lambda_.19} parent=63 // pred_region
          %524 = dma.done [#allocation15], 16
        $region100: #{_lambda_.19} parent=63 // pred_fallthru
          _
        // Predicated region
        $region101: #{_lambda_.19} parent=63 // pred_check
          %p525 = pneg %p255
        $region102: #{_lambda_.19} parent=63 // pred_check_branch
          %527 = sbr.rel (%p525) target = $region104
        $region103: #{_lambda_.19} parent=63 // pred_region
          %528 = dma.done [#allocation18], 512
        $region104: #{_lambda_.19} parent=63 // pred_fallthru
          _
        // Predicated region
        $region105: #{_lambda_.19} parent=63 // pred_check
          %p529 = pneg %p276
        $region106: #{_lambda_.19} parent=63 // pred_check_branch
          %531 = sbr.rel (%p529) target = $region108
        $region107: #{_lambda_.19} parent=63 // pred_region
          %532 = dma.done [#allocation18], 16
        $region108: #{_lambda_.19} parent=63 // pred_fallthru
          _
        %s533 = sand.u32 %s43, 1
        %s534 = scalar_lea.sflag [#allocation3], %s533
        %s535 = sand.u32 %s43, 1
        %s536 = smul.addr %s535, 8
        %s537 = scalar_lea.vmem [#allocation2], %s536
        %p538 = pneg %p56
        %p539 = pneg %p53
        %s540 = sand.u32 %s35, 1
        %s541 = scalar_lea.sflag [#allocation6], %s540
        %s542 = sand.u32 %s69, 1
        %s543 = smul.addr %s542, 8
        %s544 = scalar_lea.vmem [#allocation5], %s543
        %p545 = pneg %p82
        %p546 = pneg %p79
        %s547 = sand.u32 %s35, 1
        %s548 = scalar_lea.sflag [#allocation6], %s547
        %s549 = sand.u32 %s95, 1
        %s550 = scalar_lea.vmem [#allocation7], %s549
        %p551 = pneg %p108
        %p552 = pneg %p105
        %p553 = pneg %p129
        %p554 = pneg %p126
        %p555 = pneg %p150
        %p556 = pneg %p147
        %p557 = pneg %p171
        %p558 = pneg %p168
        %p559 = pneg %p192
        %p560 = pneg %p189
        %p561 = pneg %p213
        %p562 = pneg %p210
        %p563 = pneg %p234
        %p564 = pneg %p231
        %p565 = pneg %p255
        %p566 = pneg %p252
        %p567 = pneg %p276
        %p568 = pneg %p273
        %p569 = pneg %p302
        %p570 = pneg %p299
        %s571 = sand.u32 %s289, 1
        %s572 = scalar_lea.sflag [#allocation4], %s571
        %s573 = sand.u32 %s289, 1
        %s574 = smul.addr %s573, 8
        %s575 = scalar_lea.vmem [#allocation20], %s574
        %v577 = vld [vmem:[%s479] sm:$0xff]
        %vm578 = vcmask 261120
        %v579 = vsel %vm578, %v577, 0.0
        %580 = vadd.xlane.f32.xlu0 %v579
        %v581 = vpop.xlane.xlu0 %580
        %v582 = vrcp.pop 32.0
        %v583 = vmul.f32 %v581, %v582
        %v584 = vsub.f32 %v577, %v583
        %v585 = vmul.f32 %v584, %v584
        %v586 = vsel %vm578, %v585, 0.0
        %587 = vadd.xlane.f32.xlu0 %v586
        %v588 = vpop.xlane.xlu0 %587
        %v589 = vmul.f32 %v588, %v582
        %v590 = vadd.f32 %v589, 1e-05
        %v591 = vrsqrt.pop %v590
        %v592 = vmul.f32 %v584, %v591
        %v593 = vld [vmem:[#allocation8] sm:$0x1]
        %v595 = vlaneseq
        %v596 = vshrl.u32 %v595, 7
        %v597 = vsub.s32 0, %v596
        %v598 = vrot.slane %v593, %v597
        %v600 = vmul.f32 %v592, %v598
        %v601 = vld [vmem:[#allocation10] sm:$0x1]
        %v603 = vlaneseq
        %v604 = vshrl.u32 %v603, 7
        %v605 = vsub.s32 0, %v604
        %v606 = vrot.slane %v601, %v605
        %v608 = vadd.f32 %v600, %v606
        %v609 = vpack.c.bf16 %v608, %v608
        %v610 = vld [vmem:[#allocation11] sm:$0xf]
        %v611 = vld [vmem:[#allocation11 + $0x4] sm:$0xf]
        %v612 = vld [vmem:[#allocation11 + $0x8] sm:$0xf]
        %v613 = vld [vmem:[#allocation11 + $0xc] sm:$0xf]
        %v614 = vld [vmem:[#allocation13] sm:$0x1]
        %v616 = vlaneseq
        %v617 = vshrl.u32 %v616, 7
        %v618 = vsub.s32 0, %v617
        %v619 = vrot.slane %v614, %v618
        %v625 = vunpack.c.l.b16 %v610
        %v626 = vunpack.c.l.b16 %v611
        %v627 = vunpack.c.l.b16 %v612
        %v628 = vunpack.c.l.b16 %v613
        %v629 = vpack.c.b16 %v626, %v625
        %v630 = vpack.c.b16 %v628, %v627
        %v634 = vsel %vm578, %v609, 0
        %636 = vmatprep.subr.bf16.mxu0 0
        %637 = vmatpush1.bf16.msra.mxu0 %v629
        %638 = vmatprep.subr.bf16.mxu0 0
        %639 = vmatpush1.bf16.msra.mxu0 %v630
        %640 = vmatprep.subr.bf16.mxu0 0
        %641 = vmatpush1.bf16.msra.mxu0 0
        %642 = vmatprep.subr.bf16.mxu0 0
        %643 = vmatpush1.bf16.msra.mxu0 0
        %644 = vmatprep.subr.bf16.mxu0 0
        %645 = vmatpush1.bf16.msra.mxu0 0
        %646 = vmatprep.subr.bf16.mxu0 0
        %647 = vmatpush1.bf16.msra.mxu0 0
        %648 = vmatprep.subr.bf16.mxu0 0
        %649 = vmatpush1.bf16.msra.mxu0 0
        %650 = vmatprep.subr.bf16.mxu0 0
        %651 = vmatpush1.bf16.msra.mxu0 0
        %652 = vmatprep.subr.bf16.mxu0 0
        %653 = vmatpush1.bf16.msra.mxu0 0
        %654 = vmatprep.subr.bf16.mxu0 0
        %655 = vmatpush1.bf16.msra.mxu0 0
        %656 = vmatprep.subr.bf16.mxu0 0
        %657 = vmatpush1.bf16.msra.mxu0 0
        %658 = vmatprep.subr.bf16.mxu0 0
        %659 = vmatpush1.bf16.msra.mxu0 0
        %660 = vmatprep.subr.bf16.mxu0 0
        %661 = vmatpush1.bf16.msra.mxu0 0
        %662 = vmatprep.subr.bf16.mxu0 0
        %663 = vmatpush1.bf16.msra.mxu0 0
        %664 = vmatprep.subr.bf16.mxu0 0
        %665 = vmatpush1.bf16.msra.mxu0 0
        %666 = vmatprep.subr.bf16.mxu0 0
        %667 = vmatpush1.bf16.msra.mxu0 0
        %668 = vmatprep.mubr.bf16.mxu0 0
        %669 = vmatmul.mubr.bf16.gmra.mrb[0].mxu0 %v634
        %v670 = vpop.f32.mrb[0].mxu0
        %v671 = vadd.f32 %v619, %v670
        %v672 = vpop.f32.mrb[0].mxu0
        %v673 = vpop.f32.mrb[0].mxu0
        %v674 = vpop.f32.mrb[0].mxu0
        %675 = vdwg.mxu0
        %v676 = vld [vmem:[%s488] sm:$0xff]
        %v677 = vpack.c.bf16 %v676, %v676
        %v678 = vld [vmem:[#allocation14] sm:$0xf]
        %v679 = vld [vmem:[#allocation14 + $0x4] sm:$0xf]
        %v680 = vld [vmem:[#allocation14 + $0x8] sm:$0xf]
        %v681 = vld [vmem:[#allocation14 + $0xc] sm:$0xf]
        %v682 = vld [vmem:[#allocation16] sm:$0x1]
        %v684 = vlaneseq
        %v685 = vshrl.u32 %v684, 7
        %v686 = vsub.s32 0, %v685
        %v687 = vrot.slane %v682, %v686
        %v693 = vunpack.c.l.b16 %v678
        %v694 = vunpack.c.l.b16 %v679
        %v695 = vunpack.c.l.b16 %v680
        %v696 = vunpack.c.l.b16 %v681
        %v697 = vpack.c.b16 %v694, %v693
        %v698 = vpack.c.b16 %v696, %v695
        %v702 = vsel %vm578, %v677, 0
        %704 = vmatprep.subr.bf16.mxu0 0
        %705 = vmatpush1.bf16.msra.mxu0 %v697
        %706 = vmatprep.subr.bf16.mxu0 0
        %707 = vmatpush1.bf16.msra.mxu0 %v698
        %708 = vmatprep.subr.bf16.mxu0 0
        %709 = vmatpush1.bf16.msra.mxu0 0
        %710 = vmatprep.subr.bf16.mxu0 0
        %711 = vmatpush1.bf16.msra.mxu0 0
        %712 = vmatprep.subr.bf16.mxu0 0
        %713 = vmatpush1.bf16.msra.mxu0 0
        %714 = vmatprep.subr.bf16.mxu0 0
        %715 = vmatpush1.bf16.msra.mxu0 0
        %716 = vmatprep.subr.bf16.mxu0 0
        %717 = vmatpush1.bf16.msra.mxu0 0
        %718 = vmatprep.subr.bf16.mxu0 0
        %719 = vmatpush1.bf16.msra.mxu0 0
        %720 = vmatprep.subr.bf16.mxu0 0
        %721 = vmatpush1.bf16.msra.mxu0 0
        %722 = vmatprep.subr.bf16.mxu0 0
        %723 = vmatpush1.bf16.msra.mxu0 0
        %724 = vmatprep.subr.bf16.mxu0 0
        %725 = vmatpush1.bf16.msra.mxu0 0
        %726 = vmatprep.subr.bf16.mxu0 0
        %727 = vmatpush1.bf16.msra.mxu0 0
        %728 = vmatprep.subr.bf16.mxu0 0
        %729 = vmatpush1.bf16.msra.mxu0 0
        %730 = vmatprep.subr.bf16.mxu0 0
        %731 = vmatpush1.bf16.msra.mxu0 0
        %732 = vmatprep.subr.bf16.mxu0 0
        %733 = vmatpush1.bf16.msra.mxu0 0
        %734 = vmatprep.subr.bf16.mxu0 0
        %735 = vmatpush1.bf16.msra.mxu0 0
        %736 = vmatprep.mubr.bf16.mxu0 0
        %737 = vmatmul.mubr.bf16.gmra.mrb[0].mxu0 %v702
        %v738 = vpop.f32.mrb[0].mxu0
        %v739 = vadd.f32 %v687, %v738
        %v740 = vpop.f32.mrb[0].mxu0
        %v741 = vpop.f32.mrb[0].mxu0
        %v742 = vpop.f32.mrb[0].mxu0
        %743 = vdwg.mxu0
        %v744 = vld [vmem:[%s496] sm:$0x1]
        %vm745 = vcmp.ne.f32.partialorder %v744, 0.0
        %v746 = vpack.c.bf16 %v671, %v671
        %v747 = vpack.c.bf16 %v739, %v739
        %vm748 = vcmask 130048
        %v750 = vsel %vm748, %v746, 0
        %v753 = vsel %vm748, %v747, 0
        %755 = vmatprep.subr.bf16.mxu0 0
        %756 = vmatpush1.bf16.xpose.msra.mxu0 %v753
        %757 = vmatprep.subr.bf16.mxu0 0
        %758 = vmatpush1.bf16.xpose.msra.mxu0 0
        %759 = vmatprep.subr.bf16.mxu0 0
        %760 = vmatpush1.bf16.xpose.msra.mxu0 0
        %761 = vmatprep.subr.bf16.mxu0 0
        %762 = vmatpush1.bf16.xpose.msra.mxu0 0
        %763 = vmatprep.subr.bf16.mxu0 0
        %764 = vmatpush1.bf16.xpose.msra.mxu0 0
        %765 = vmatprep.subr.bf16.mxu0 0
        %766 = vmatpush1.bf16.xpose.msra.mxu0 0
        %767 = vmatprep.subr.bf16.mxu0 0
        %768 = vmatpush1.bf16.xpose.msra.mxu0 0
        %769 = vmatprep.subr.bf16.mxu0 0
        %770 = vmatpush1.bf16.xpose.msra.mxu0 0
        %771 = vmatprep.subr.bf16.mxu0 0
        %772 = vmatpush1.bf16.xpose.msra.mxu0 0
        %773 = vmatprep.subr.bf16.mxu0 0
        %774 = vmatpush1.bf16.xpose.msra.mxu0 0
        %775 = vmatprep.subr.bf16.mxu0 0
        %776 = vmatpush1.bf16.xpose.msra.mxu0 0
        %777 = vmatprep.subr.bf16.mxu0 0
        %778 = vmatpush1.bf16.xpose.msra.mxu0 0
        %779 = vmatprep.subr.bf16.mxu0 0
        %780 = vmatpush1.bf16.xpose.msra.mxu0 0
        %781 = vmatprep.subr.bf16.mxu0 0
        %782 = vmatpush1.bf16.xpose.msra.mxu0 0
        %783 = vmatprep.subr.bf16.mxu0 0
        %784 = vmatpush1.bf16.xpose.msra.mxu0 0
        %785 = vmatprep.subr.bf16.mxu0 0
        %786 = vmatpush1.bf16.xpose.msra.mxu0 0
        %787 = vmatprep.mubr.bf16.mxu0 0
        %788 = vmatmul.mubr.bf16.gmra.mrb[0].mxu0 %v750
        %v789 = vpop.f32.mrb[0].mxu0
        %v790 = vadd.f32 0.0, %v789
        %v791 = vpop.f32.mrb[0].mxu0
        %v792 = vpop.f32.mrb[0].mxu0
        %v793 = vpop.f32.mrb[0].mxu0
        %794 = vdwg.mxu0
        %v795 = vmul.f32 %v790, 0.25
        %v796 = vsel %vm745, 1, 0
        %v797 = vlaneseq
        %v798 = vshrl.u32 %v797, 7
        %v799 = vsub.s32 0, %v798
        %v800 = vrot.slane %v796, %v799
        %vm801 = vcmp.eq.s32.totalorder %v800, 1
        %v802 = vsel %vm801, %v795, -1e+09
        %vm803 = vcmask 64512
        %v804 = vsel %vm803, %v802, -inf
        %805 = vmax.xlane.f32.xlu0 %v804
        %v806 = vpop.xlane.xlu0 %805
        %v807 = vsub.f32 %v802, %v806
        %v808 = vmul.f32 %v807, 1.442695
        %v809 = vpow.pop %v808
        %v810 = vsel %vm803, %v809, 0.0
        %811 = vadd.xlane.f32.xlu0 %v810
        %v812 = vpop.xlane.xlu0 %811
        %v813 = vrcp.pop %v812
        %v814 = vpack.c.bf16 %v809, %v809
        %816 = vrot.lane.b32.xlu0 %v747, 64
        %v817 = vpop.permute.xlu0 %816
        %v819 = vsel %vm803, %v814, 0
        %vm821 = vcmask 1043456
        %v823 = vsel %vm821, %v817, 0
        %825 = vmatprep.subr.bf16.mxu0 0
        %826 = vmatpush1.bf16.msra.mxu0 %v823
        %827 = vmatprep.subr.bf16.mxu0 0
        %828 = vmatpush1.bf16.msra.mxu0 0
        %829 = vmatprep.subr.bf16.mxu0 0
        %830 = vmatpush1.bf16.msra.mxu0 0
        %831 = vmatprep.subr.bf16.mxu0 0
        %832 = vmatpush1.bf16.msra.mxu0 0
        %833 = vmatprep.subr.bf16.mxu0 0
        %834 = vmatpush1.bf16.msra.mxu0 0
        %835 = vmatprep.subr.bf16.mxu0 0
        %836 = vmatpush1.bf16.msra.mxu0 0
        %837 = vmatprep.subr.bf16.mxu0 0
        %838 = vmatpush1.bf16.msra.mxu0 0
        %839 = vmatprep.subr.bf16.mxu0 0
        %840 = vmatpush1.bf16.msra.mxu0 0
        %841 = vmatprep.subr.bf16.mxu0 0
        %842 = vmatpush1.bf16.msra.mxu0 0
        %843 = vmatprep.subr.bf16.mxu0 0
        %844 = vmatpush1.bf16.msra.mxu0 0
        %845 = vmatprep.subr.bf16.mxu0 0
        %846 = vmatpush1.bf16.msra.mxu0 0
        %847 = vmatprep.subr.bf16.mxu0 0
        %848 = vmatpush1.bf16.msra.mxu0 0
        %849 = vmatprep.subr.bf16.mxu0 0
        %850 = vmatpush1.bf16.msra.mxu0 0
        %851 = vmatprep.subr.bf16.mxu0 0
        %852 = vmatpush1.bf16.msra.mxu0 0
        %853 = vmatprep.subr.bf16.mxu0 0
        %854 = vmatpush1.bf16.msra.mxu0 0
        %855 = vmatprep.subr.bf16.mxu0 0
        %856 = vmatpush1.bf16.msra.mxu0 0
        %857 = vmatprep.mubr.bf16.mxu0 0
        %858 = vmatmul.mubr.bf16.gmra.mrb[0].mxu0 %v819
        %v859 = vpop.f32.mrb[0].mxu0
        %v860 = vadd.f32 0.0, %v859
        %v861 = vpop.f32.mrb[0].mxu0
        %v862 = vpop.f32.mrb[0].mxu0
        %v863 = vpop.f32.mrb[0].mxu0
        %864 = vdwg.mxu0
        %v865 = vmul.f32 %v860, %v813
        %867 = vrot.lane.b32.xlu0 %v746, 112
        %v868 = vpop.permute.xlu0 %867
        %869 = vrot.lane.b32.xlu0 %v747, 112
        %v870 = vpop.permute.xlu0 %869
        %v872 = vsel %vm748, %v868, 0
        %v875 = vsel %vm748, %v870, 0
        %877 = vmatprep.subr.bf16.mxu0 0
        %878 = vmatpush1.bf16.xpose.msra.mxu0 %v875
        %879 = vmatprep.subr.bf16.mxu0 0
        %880 = vmatpush1.bf16.xpose.msra.mxu0 0
        %881 = vmatprep.subr.bf16.mxu0 0
        %882 = vmatpush1.bf16.xpose.msra.mxu0 0
        %883 = vmatprep.subr.bf16.mxu0 0
        %884 = vmatpush1.bf16.xpose.msra.mxu0 0
        %885 = vmatprep.subr.bf16.mxu0 0
        %886 = vmatpush1.bf16.xpose.msra.mxu0 0
        %887 = vmatprep.subr.bf16.mxu0 0
        %888 = vmatpush1.bf16.xpose.msra.mxu0 0
        %889 = vmatprep.subr.bf16.mxu0 0
        %890 = vmatpush1.bf16.xpose.msra.mxu0 0
        %891 = vmatprep.subr.bf16.mxu0 0
        %892 = vmatpush1.bf16.xpose.msra.mxu0 0
        %893 = vmatprep.subr.bf16.mxu0 0
        %894 = vmatpush1.bf16.xpose.msra.mxu0 0
        %895 = vmatprep.subr.bf16.mxu0 0
        %896 = vmatpush1.bf16.xpose.msra.mxu0 0
        %897 = vmatprep.subr.bf16.mxu0 0
        %898 = vmatpush1.bf16.xpose.msra.mxu0 0
        %899 = vmatprep.subr.bf16.mxu0 0
        %900 = vmatpush1.bf16.xpose.msra.mxu0 0
        %901 = vmatprep.subr.bf16.mxu0 0
        %902 = vmatpush1.bf16.xpose.msra.mxu0 0
        %903 = vmatprep.subr.bf16.mxu0 0
        %904 = vmatpush1.bf16.xpose.msra.mxu0 0
        %905 = vmatprep.subr.bf16.mxu0 0
        %906 = vmatpush1.bf16.xpose.msra.mxu0 0
        %907 = vmatprep.subr.bf16.mxu0 0
        %908 = vmatpush1.bf16.xpose.msra.mxu0 0
        %909 = vmatprep.mubr.bf16.mxu0 0
        %910 = vmatmul.mubr.bf16.gmra.mrb[0].mxu0 %v872
        %v911 = vpop.f32.mrb[0].mxu0
        %v912 = vadd.f32 0.0, %v911
        %v913 = vpop.f32.mrb[0].mxu0
        %v914 = vpop.f32.mrb[0].mxu0
        %v915 = vpop.f32.mrb[0].mxu0
        %916 = vdwg.mxu0
        %v917 = vmul.f32 %v912, 0.25
        %v918 = vsel %vm801, %v917, -1e+09
        %v919 = vsel %vm803, %v918, -inf
        %920 = vmax.xlane.f32.xlu0 %v919
        %v921 = vpop.xlane.xlu0 %920
        %v922 = vsub.f32 %v918, %v921
        %v923 = vmul.f32 %v922, 1.442695
        %v924 = vpow.pop %v923
        %v925 = vsel %vm803, %v924, 0.0
        %926 = vadd.xlane.f32.xlu0 %v925
        %v927 = vpop.xlane.xlu0 %926
        %v928 = vrcp.pop %v927
        %v929 = vpack.c.bf16 %v924, %v924
        %930 = vrot.lane.b32.xlu0 %v747, 48
        %v931 = vpop.permute.xlu0 %930
        %v933 = vsel %vm803, %v929, 0
        %v936 = vsel %vm821, %v931, 0
        %938 = vmatprep.subr.bf16.mxu0 0
        %939 = vmatpush1.bf16.msra.mxu0 %v936
        %940 = vmatprep.subr.bf16.mxu0 0
        %941 = vmatpush1.bf16.msra.mxu0 0
        %942 = vmatprep.subr.bf16.mxu0 0
        %943 = vmatpush1.bf16.msra.mxu0 0
        %944 = vmatprep.subr.bf16.mxu0 0
        %945 = vmatpush1.bf16.msra.mxu0 0
        %946 = vmatprep.subr.bf16.mxu0 0
        %947 = vmatpush1.bf16.msra.mxu0 0
        %948 = vmatprep.subr.bf16.mxu0 0
        %949 = vmatpush1.bf16.msra.mxu0 0
        %950 = vmatprep.subr.bf16.mxu0 0
        %951 = vmatpush1.bf16.msra.mxu0 0
        %952 = vmatprep.subr.bf16.mxu0 0
        %953 = vmatpush1.bf16.msra.mxu0 0
        %954 = vmatprep.subr.bf16.mxu0 0
        %955 = vmatpush1.bf16.msra.mxu0 0
        %956 = vmatprep.subr.bf16.mxu0 0
        %957 = vmatpush1.bf16.msra.mxu0 0
        %958 = vmatprep.subr.bf16.mxu0 0
        %959 = vmatpush1.bf16.msra.mxu0 0
        %960 = vmatprep.subr.bf16.mxu0 0
        %961 = vmatpush1.bf16.msra.mxu0 0
        %962 = vmatprep.subr.bf16.mxu0 0
        %963 = vmatpush1.bf16.msra.mxu0 0
        %964 = vmatprep.subr.bf16.mxu0 0
        %965 = vmatpush1.bf16.msra.mxu0 0
        %966 = vmatprep.subr.bf16.mxu0 0
        %967 = vmatpush1.bf16.msra.mxu0 0
        %968 = vmatprep.subr.bf16.mxu0 0
        %969 = vmatpush1.bf16.msra.mxu0 0
        %970 = vmatprep.mubr.bf16.mxu0 0
        %971 = vmatmul.mubr.bf16.gmra.mrb[0].mxu0 %v933
        %v972 = vpop.f32.mrb[0].mxu0
        %v973 = vadd.f32 0.0, %v972
        %v974 = vpop.f32.mrb[0].mxu0
        %v975 = vpop.f32.mrb[0].mxu0
        %v976 = vpop.f32.mrb[0].mxu0
        %977 = vdwg.mxu0
        %v978 = vmul.f32 %v973, %v928
        %979 = vrot.lane.b32.xlu0 %v746, 96
        %v980 = vpop.permute.xlu0 %979
        %981 = vrot.lane.b32.xlu0 %v747, 96
        %v982 = vpop.permute.xlu0 %981
        %v984 = vsel %vm748, %v980, 0
        %v987 = vsel %vm748, %v982, 0
        %989 = vmatprep.subr.bf16.mxu0 0
        %990 = vmatpush1.bf16.xpose.msra.mxu0 %v987
        %991 = vmatprep.subr.bf16.mxu0 0
        %992 = vmatpush1.bf16.xpose.msra.mxu0 0
        %993 = vmatprep.subr.bf16.mxu0 0
        %994 = vmatpush1.bf16.xpose.msra.mxu0 0
        %995 = vmatprep.subr.bf16.mxu0 0
        %996 = vmatpush1.bf16.xpose.msra.mxu0 0
        %997 = vmatprep.subr.bf16.mxu0 0
        %998 = vmatpush1.bf16.xpose.msra.mxu0 0
        %999 = vmatprep.subr.bf16.mxu0 0
        %1000 = vmatpush1.bf16.xpose.msra.mxu0 0
        %1001 = vmatprep.subr.bf16.mxu0 0
        %1002 = vmatpush1.bf16.xpose.msra.mxu0 0
        %1003 = vmatprep.subr.bf16.mxu0 0
        %1004 = vmatpush1.bf16.xpose.msra.mxu0 0
        %1005 = vmatprep.subr.bf16.mxu0 0
        %1006 = vmatpush1.bf16.xpose.msra.mxu0 0
        %1007 = vmatprep.subr.bf16.mxu0 0
        %1008 = vmatpush1.bf16.xpose.msra.mxu0 0
        %1009 = vmatprep.subr.bf16.mxu0 0
        %1010 = vmatpush1.bf16.xpose.msra.mxu0 0
        %1011 = vmatprep.subr.bf16.mxu0 0
        %1012 = vmatpush1.bf16.xpose.msra.mxu0 0
        %1013 = vmatprep.subr.bf16.mxu0 0
        %1014 = vmatpush1.bf16.xpose.msra.mxu0 0
        %1015 = vmatprep.subr.bf16.mxu0 0
        %1016 = vmatpush1.bf16.xpose.msra.mxu0 0
        %1017 = vmatprep.subr.bf16.mxu0 0
        %1018 = vmatpush1.bf16.xpose.msra.mxu0 0
        %1019 = vmatprep.subr.bf16.mxu0 0
        %1020 = vmatpush1.bf16.xpose.msra.mxu0 0
        %1021 = vmatprep.mubr.bf16.mxu0 0
        %1022 = vmatmul.mubr.bf16.gmra.mrb[0].mxu0 %v984
        %v1023 = vpop.f32.mrb[0].mxu0
        %v1024 = vadd.f32 0.0, %v1023
        %v1025 = vpop.f32.mrb[0].mxu0
        %v1026 = vpop.f32.mrb[0].mxu0
        %v1027 = vpop.f32.mrb[0].mxu0
        %1028 = vdwg.mxu0
        %v1029 = vmul.f32 %v1024, 0.25
        %v1030 = vsel %vm801, %v1029, -1e+09
        %v1031 = vsel %vm803, %v1030, -inf
        %1032 = vmax.xlane.f32.xlu0 %v1031
        %v1033 = vpop.xlane.xlu0 %1032
        %v1034 = vsub.f32 %v1030, %v1033
        %v1035 = vmul.f32 %v1034, 1.442695
        %v1036 = vpow.pop %v1035
        %v1037 = vsel %vm803, %v1036, 0.0
        %1038 = vadd.xlane.f32.xlu0 %v1037
        %v1039 = vpop.xlane.xlu0 %1038
        %v1040 = vrcp.pop %v1039
        %v1041 = vpack.c.bf16 %v1036, %v1036
        %1042 = vrot.lane.b32.xlu0 %v747, 32
        %v1043 = vpop.permute.xlu0 %1042
        %v1045 = vsel %vm803, %v1041, 0
        %v1048 = vsel %vm821, %v1043, 0
        %1050 = vmatprep.subr.bf16.mxu0 0
        %1051 = vmatpush1.bf16.msra.mxu0 %v1048
        %1052 = vmatprep.subr.bf16.mxu0 0
        %1053 = vmatpush1.bf16.msra.mxu0 0
        %1054 = vmatprep.subr.bf16.mxu0 0
        %1055 = vmatpush1.bf16.msra.mxu0 0
        %1056 = vmatprep.subr.bf16.mxu0 0
        %1057 = vmatpush1.bf16.msra.mxu0 0
        %1058 = vmatprep.subr.bf16.mxu0 0
        %1059 = vmatpush1.bf16.msra.mxu0 0
        %1060 = vmatprep.subr.bf16.mxu0 0
        %1061 = vmatpush1.bf16.msra.mxu0 0
        %1062 = vmatprep.subr.bf16.mxu0 0
        %1063 = vmatpush1.bf16.msra.mxu0 0
        %1064 = vmatprep.subr.bf16.mxu0 0
        %1065 = vmatpush1.bf16.msra.mxu0 0
        %1066 = vmatprep.subr.bf16.mxu0 0
        %1067 = vmatpush1.bf16.msra.mxu0 0
        %1068 = vmatprep.subr.bf16.mxu0 0
        %1069 = vmatpush1.bf16.msra.mxu0 0
        %1070 = vmatprep.subr.bf16.mxu0 0
        %1071 = vmatpush1.bf16.msra.mxu0 0
        %1072 = vmatprep.subr.bf16.mxu0 0
        %1073 = vmatpush1.bf16.msra.mxu0 0
        %1074 = vmatprep.subr.bf16.mxu0 0
        %1075 = vmatpush1.bf16.msra.mxu0 0
        %1076 = vmatprep.subr.bf16.mxu0 0
        %1077 = vmatpush1.bf16.msra.mxu0 0
        %1078 = vmatprep.subr.bf16.mxu0 0
        %1079 = vmatpush1.bf16.msra.mxu0 0
        %1080 = vmatprep.subr.bf16.mxu0 0
        %1081 = vmatpush1.bf16.msra.mxu0 0
        %1082 = vmatprep.mubr.bf16.mxu0 0
        %1083 = vmatmul.mubr.bf16.gmra.mrb[0].mxu0 %v1045
        %v1084 = vpop.f32.mrb[0].mxu0
        %v1085 = vadd.f32 0.0, %v1084
        %v1086 = vpop.f32.mrb[0].mxu0
        %v1087 = vpop.f32.mrb[0].mxu0
        %v1088 = vpop.f32.mrb[0].mxu0
        %1089 = vdwg.mxu0
        %v1090 = vmul.f32 %v1085, %v1040
        %1091 = vrot.lane.b32.xlu0 %v746, 80
        %v1092 = vpop.permute.xlu0 %1091
        %1093 = vrot.lane.b32.xlu0 %v747, 80
        %v1094 = vpop.permute.xlu0 %1093
        %v1096 = vsel %vm748, %v1092, 0
        %v1099 = vsel %vm748, %v1094, 0
        %1101 = vmatprep.subr.bf16.mxu0 0
        %1102 = vmatpush1.bf16.xpose.msra.mxu0 %v1099
        %1103 = vmatprep.subr.bf16.mxu0 0
        %1104 = vmatpush1.bf16.xpose.msra.mxu0 0
        %1105 = vmatprep.subr.bf16.mxu0 0
        %1106 = vmatpush1.bf16.xpose.msra.mxu0 0
        %1107 = vmatprep.subr.bf16.mxu0 0
        %1108 = vmatpush1.bf16.xpose.msra.mxu0 0
        %1109 = vmatprep.subr.bf16.mxu0 0
        %1110 = vmatpush1.bf16.xpose.msra.mxu0 0
        %1111 = vmatprep.subr.bf16.mxu0 0
        %1112 = vmatpush1.bf16.xpose.msra.mxu0 0
        %1113 = vmatprep.subr.bf16.mxu0 0
        %1114 = vmatpush1.bf16.xpose.msra.mxu0 0
        %1115 = vmatprep.subr.bf16.mxu0 0
        %1116 = vmatpush1.bf16.xpose.msra.mxu0 0
        %1117 = vmatprep.subr.bf16.mxu0 0
        %1118 = vmatpush1.bf16.xpose.msra.mxu0 0
        %1119 = vmatprep.subr.bf16.mxu0 0
        %1120 = vmatpush1.bf16.xpose.msra.mxu0 0
        %1121 = vmatprep.subr.bf16.mxu0 0
        %1122 = vmatpush1.bf16.xpose.msra.mxu0 0
        %1123 = vmatprep.subr.bf16.mxu0 0
        %1124 = vmatpush1.bf16.xpose.msra.mxu0 0
        %1125 = vmatprep.subr.bf16.mxu0 0
        %1126 = vmatpush1.bf16.xpose.msra.mxu0 0
        %1127 = vmatprep.subr.bf16.mxu0 0
        %1128 = vmatpush1.bf16.xpose.msra.mxu0 0
        %1129 = vmatprep.subr.bf16.mxu0 0
        %1130 = vmatpush1.bf16.xpose.msra.mxu0 0
        %1131 = vmatprep.subr.bf16.mxu0 0
        %1132 = vmatpush1.bf16.xpose.msra.mxu0 0
        %1133 = vmatprep.mubr.bf16.mxu0 0
        %1134 = vmatmul.mubr.bf16.gmra.mrb[0].mxu0 %v1096
        %v1135 = vpop.f32.mrb[0].mxu0
        %v1136 = vadd.f32 0.0, %v1135
        %v1137 = vpop.f32.mrb[0].mxu0
        %v1138 = vpop.f32.mrb[0].mxu0
        %v1139 = vpop.f32.mrb[0].mxu0
        %1140 = vdwg.mxu0
        %v1141 = vmul.f32 %v1136, 0.25
        %v1142 = vsel %vm801, %v1141, -1e+09
        %v1143 = vsel %vm803, %v1142, -inf
        %1144 = vmax.xlane.f32.xlu0 %v1143
        %v1145 = vpop.xlane.xlu0 %1144
        %v1146 = vsub.f32 %v1142, %v1145
        %v1147 = vmul.f32 %v1146, 1.442695
        %v1148 = vpow.pop %v1147
        %v1149 = vsel %vm803, %v1148, 0.0
        %1150 = vadd.xlane.f32.xlu0 %v1149
        %v1151 = vpop.xlane.xlu0 %1150
        %v1152 = vrcp.pop %v1151
        %v1153 = vpack.c.bf16 %v1148, %v1148
        %1154 = vrot.lane.b32.xlu0 %v747, 16
        %v1155 = vpop.permute.xlu0 %1154
        %v1157 = vsel %vm803, %v1153, 0
        %v1160 = vsel %vm821, %v1155, 0
        %1162 = vmatprep.subr.bf16.mxu0 0
        %1163 = vmatpush1.bf16.msra.mxu0 %v1160
        %1164 = vmatprep.subr.bf16.mxu0 0
        %1165 = vmatpush1.bf16.msra.mxu0 0
        %1166 = vmatprep.subr.bf16.mxu0 0
        %1167 = vmatpush1.bf16.msra.mxu0 0
        %1168 = vmatprep.subr.bf16.mxu0 0
        %1169 = vmatpush1.bf16.msra.mxu0 0
        %1170 = vmatprep.subr.bf16.mxu0 0
        %1171 = vmatpush1.bf16.msra.mxu0 0
        %1172 = vmatprep.subr.bf16.mxu0 0
        %1173 = vmatpush1.bf16.msra.mxu0 0
        %1174 = vmatprep.subr.bf16.mxu0 0
        %1175 = vmatpush1.bf16.msra.mxu0 0
        %1176 = vmatprep.subr.bf16.mxu0 0
        %1177 = vmatpush1.bf16.msra.mxu0 0
        %1178 = vmatprep.subr.bf16.mxu0 0
        %1179 = vmatpush1.bf16.msra.mxu0 0
        %1180 = vmatprep.subr.bf16.mxu0 0
        %1181 = vmatpush1.bf16.msra.mxu0 0
        %1182 = vmatprep.subr.bf16.mxu0 0
        %1183 = vmatpush1.bf16.msra.mxu0 0
        %1184 = vmatprep.subr.bf16.mxu0 0
        %1185 = vmatpush1.bf16.msra.mxu0 0
        %1186 = vmatprep.subr.bf16.mxu0 0
        %1187 = vmatpush1.bf16.msra.mxu0 0
        %1188 = vmatprep.subr.bf16.mxu0 0
        %1189 = vmatpush1.bf16.msra.mxu0 0
        %1190 = vmatprep.subr.bf16.mxu0 0
        %1191 = vmatpush1.bf16.msra.mxu0 0
        %1192 = vmatprep.subr.bf16.mxu0 0
        %1193 = vmatpush1.bf16.msra.mxu0 0
        %1194 = vmatprep.mubr.bf16.mxu0 0
        %1195 = vmatmul.mubr.bf16.gmra.mrb[0].mxu0 %v1157
        %v1196 = vpop.f32.mrb[0].mxu0
        %v1197 = vadd.f32 0.0, %v1196
        %v1198 = vpop.f32.mrb[0].mxu0
        %v1199 = vpop.f32.mrb[0].mxu0
        %v1200 = vpop.f32.mrb[0].mxu0
        %1201 = vdwg.mxu0
        %v1202 = vmul.f32 %v1197, %v1152
        %1204 = vrot.lane.b32.xlu0 %v978, 16
        %v1205 = vpop.permute.xlu0 %1204
        %1208 = vrot.lane.b32.xlu0 %v1090, 32
        %v1209 = vpop.permute.xlu0 %1208
        %1212 = vrot.lane.b32.xlu0 %v1202, 48
        %v1213 = vpop.permute.xlu0 %1212
        %v1215 = vsel %vm748, %v865, %v1205
        %v1216 = vsel %vm578, %v1215, %v1209
        %vm1217 = vcmask 392192
        %v1218 = vsel %vm1217, %v1216, %v1213
        %v1219 = vpack.c.bf16 %v1218, %v1218
        %v1220 = vld [vmem:[#allocation17] sm:$0xf]
        %v1221 = vld [vmem:[#allocation17 + $0x4] sm:$0xf]
        %v1222 = vld [vmem:[#allocation17 + $0x8] sm:$0xf]
        %v1223 = vld [vmem:[#allocation17 + $0xc] sm:$0xf]
        %v1224 = vld [vmem:[#allocation17 + $0x10] sm:$0xf]
        %v1225 = vld [vmem:[#allocation17 + $0x14] sm:$0xf]
        %v1226 = vld [vmem:[#allocation17 + $0x18] sm:$0xf]
        %v1227 = vld [vmem:[#allocation17 + $0x1c] sm:$0xf]
        %v1228 = vld [vmem:[#allocation19] sm:$0x1]
        %v1230 = vlaneseq
        %v1231 = vshrl.u32 %v1230, 7
        %v1232 = vsub.s32 0, %v1231
        %v1233 = vrot.slane %v1228, %v1232
        %v1243 = vunpack.c.l.b16 %v1220
        %v1244 = vunpack.c.l.b16 %v1221
        %v1245 = vunpack.c.l.b16 %v1222
        %v1246 = vunpack.c.l.b16 %v1223
        %v1247 = vunpack.c.l.b16 %v1224
        %v1248 = vunpack.c.l.b16 %v1225
        %v1249 = vunpack.c.l.b16 %v1226
        %v1250 = vunpack.c.l.b16 %v1227
        %v1251 = vpack.c.b16 %v1244, %v1243
        %v1252 = vpack.c.b16 %v1246, %v1245
        %v1253 = vpack.c.b16 %v1248, %v1247
        %v1254 = vpack.c.b16 %v1250, %v1249
        %vm1259 = vcmask 523264
        %v1261 = vsel %vm1259, %v1219, 0
        %1263 = vmatprep.subr.bf16.mxu0 0
        %1264 = vmatpush1.bf16.msra.mxu0 %v1251
        %1265 = vmatprep.subr.bf16.mxu0 0
        %1266 = vmatpush1.bf16.msra.mxu0 %v1252
        %1267 = vmatprep.subr.bf16.mxu0 0
        %1268 = vmatpush1.bf16.msra.mxu0 %v1253
        %1269 = vmatprep.subr.bf16.mxu0 0
        %1270 = vmatpush1.bf16.msra.mxu0 %v1254
        %1271 = vmatprep.subr.bf16.mxu0 0
        %1272 = vmatpush1.bf16.msra.mxu0 0
        %1273 = vmatprep.subr.bf16.mxu0 0
        %1274 = vmatpush1.bf16.msra.mxu0 0
        %1275 = vmatprep.subr.bf16.mxu0 0
        %1276 = vmatpush1.bf16.msra.mxu0 0
        %1277 = vmatprep.subr.bf16.mxu0 0
        %1278 = vmatpush1.bf16.msra.mxu0 0
        %1279 = vmatprep.subr.bf16.mxu0 0
        %1280 = vmatpush1.bf16.msra.mxu0 0
        %1281 = vmatprep.subr.bf16.mxu0 0
        %1282 = vmatpush1.bf16.msra.mxu0 0
        %1283 = vmatprep.subr.bf16.mxu0 0
        %1284 = vmatpush1.bf16.msra.mxu0 0
        %1285 = vmatprep.subr.bf16.mxu0 0
        %1286 = vmatpush1.bf16.msra.mxu0 0
        %1287 = vmatprep.subr.bf16.mxu0 0
        %1288 = vmatpush1.bf16.msra.mxu0 0
        %1289 = vmatprep.subr.bf16.mxu0 0
        %1290 = vmatpush1.bf16.msra.mxu0 0
        %1291 = vmatprep.subr.bf16.mxu0 0
        %1292 = vmatpush1.bf16.msra.mxu0 0
        %1293 = vmatprep.subr.bf16.mxu0 0
        %1294 = vmatpush1.bf16.msra.mxu0 0
        %1295 = vmatprep.mubr.bf16.mxu0 0
        %1296 = vmatmul.mubr.bf16.gmra.mrb[0].mxu0 %v1261
        %v1297 = vpop.f32.mrb[0].mxu0
        %v1298 = vadd.f32 %v1233, %v1297
        %v1299 = vpop.f32.mrb[0].mxu0
        %v1300 = vpop.f32.mrb[0].mxu0
        %v1301 = vpop.f32.mrb[0].mxu0
        %1302 = vdwg.mxu0
        %v1303 = vadd.f32 %v1298, %v577
        %1304 = vst.msk [vmem:[%s575] sm:$0xff] %vm578, %v1303
        %s1305 = sand.u32 %s289, 1
        %s1306 = scalar_lea.sflag [#allocation4], %s1305
        %s1307 = sand.u32 %s289, 1
        %s1308 = smul.addr %s1307, 8
        %s1309 = scalar_lea.vmem [#allocation20], %s1308
        // Predicated region
        $region109: #{_lambda_.19} parent=63 // pred_check
          %p1310 = pneg %p299
        $region110: #{_lambda_.19} parent=63 // pred_check_branch
          %1312 = sbr.rel (%p1310) target = $region112
        $region111: #{_lambda_.19} parent=63 // pred_region
          %s1314 = ssub.s32 128, 128
          %1315 = vsyncadd %s1306, %s1314
          %s1316 = smul.addr %s35, 128
          %s1317 = scalar_lea.hbm %s11, %s1316
          %s1319 = sshll.u32 %s1309, 4
          %s1320 = int_to_ptr.vmem [resolvable:$true] %s1319
          %1322 = dma.vmem_to_hbm [thread:$0]  %s1320, 128, %s1317, %s1306
        $region112: #{_lambda_.19} parent=63 // pred_fallthru
          _
      $region64: #{_lambda_.19} parent=5 // pred_fallthru
        _
      %p1323 = scmp.le.s32.totalorder 2, %s30
      // Predicated region
      $region113: #{_lambda_.19} parent=5 // pred_check
        %p1324 = pneg %p1323
      $region114: #{_lambda_.19} parent=5 // pred_check_branch
        %1326 = sbr.rel (%p1324) target = $region116
      $region115: #{_lambda_.19} parent=5 // pred_region
        %s1327 = ssub.s32 %s30, 2
        // Predicated region
        $region117: #{_lambda_.19} parent=115 // pred_check
          %p1328 = pneg %p305
        $region118: #{_lambda_.19} parent=115 // pred_check_branch
          %1330 = sbr.rel (%p1328) target = $region120
        $region119: #{_lambda_.19} parent=115 // pred_region
          %s1331 = sand.u32 %s290, 1
          %s1332 = scalar_lea.sflag [#allocation4], %s1331
          %s1333 = sand.u32 %s290, 1
          %s1334 = smul.addr %s1333, 8
          %s1335 = scalar_lea.vmem [#allocation20], %s1334
          %1336 = dma.done %s1332, 128
        $region120: #{_lambda_.19} parent=115 // pred_fallthru
          _
      $region116: #{_lambda_.19} parent=5 // pred_fallthru
        _
    $region6: #{_lambda_.19} parent=1 // loop_footer
      %s34 = sadd.s32 1, %s30
    $region7: #{_lambda_.19} parent=1 // loop_footer_branch
      %29 = sbr.rel target = $region3
    $region8: #{_lambda_.19} parent=1 // loop_exit
      _
    %1337 = vsyncpa [#allocation3], 1
    %s1338 = scalar_lea.sflag [#allocation3], 1
    %1339 = vsyncpa %s1338, 1
    %1340 = vsyncpa [#allocation6], 1
    %s1341 = scalar_lea.sflag [#allocation6], 1
    %1342 = vsyncpa %s1341, 1
    %1343 = vsyncpa [#allocation9], 1
    %1344 = vsyncpa [#allocation12], 1
    %1345 = vsyncpa [#allocation15], 1
    %1346 = vsyncpa [#allocation18], 1
    %1347 = vsyncpa [#allocation4], 1
    %s1348 = scalar_lea.sflag [#allocation4], 1
    %1349 = vsyncpa %s1348, 1

// kernel: _lambda_.17
$region0: #{_lambda_.17}
  #allocation0 [shape = 'u32[]', space=smem, size = 0x4, offset = 0x4, fixed_abs, tag = 'smem constant byte address 0x4 - core index']
  #allocation1 [shape = 'u32[144,128]{1,0:T(1,128)}', space=vmem, size = 0x12000, scoped, tag = 'internal scratch']
  %s0 = inlined_call_operand.hbm [shape: f32[2,8,32], index: 0, kind: input, shape index: {}]
  %s1 = inlined_call_operand.hbm [shape: f32[2,1,8], index: 1, kind: input, shape index: {}]
  %s2 = inlined_call_operand.hbm [shape: f32[1,32], index: 2, kind: input, shape index: {}]
  %s3 = inlined_call_operand.hbm [shape: f32[1,32], index: 3, kind: input, shape index: {}]
  %s4 = inlined_call_operand.hbm [shape: bf16[32,192], index: 4, kind: input, shape index: {}]
  %s5 = inlined_call_operand.hbm [shape: f32[1,192], index: 5, kind: input, shape index: {}]
  %s6 = inlined_call_operand.hbm [shape: bf16[64,32], index: 6, kind: input, shape index: {}]
  %s7 = inlined_call_operand.hbm [shape: f32[1,32], index: 7, kind: input, shape index: {}]
  %s8 = inlined_call_operand.hbm [shape: f32[2,8,32], index: 8, kind: output, shape index: {}]
  %s9 = sld [smem:[#allocation0]]
  $region97: #{_lambda_.17} parent=0
    _
  %s11 = ssub.s32 1, %s9
  %s12 = scalar_select 0, %s11, %s9
  $region1: #{_lambda_.17} parent=0
    #allocation2 [shape = 'u8[8192]{0}', space=vmem, size = 0x2000, scoped, tag = 'input window, operand 0']
    #allocation3 [shape = 's32[2]{0}', space=sflag, size = 0x8, scoped, tag = 'scoped memory for _lambda_.17']
    #allocation4 [shape = 's32[2]{0}', space=sflag, size = 0x8, scoped, tag = 'scoped memory for _lambda_.17']
    #allocation5 [shape = 'u8[1024]{0}', space=vmem, size = 0x400, scoped, tag = 'input window, operand 1']
    #allocation6 [shape = 's32[2]{0}', space=sflag, size = 0x8, scoped, tag = 'scoped memory for _lambda_.17']
    #allocation7 [shape = 'u8[512]{0}', space=vmem, size = 0x400, scoped, tag = 'input window, operand 2, single buffered']
    #allocation8 [shape = 'u8[512]{0}', space=vmem, size = 0x400, scoped, tag = 'input window, operand 3, single buffered']
    #allocation9 [shape = 's32[1]{0}', space=sflag, size = 0x4, scoped, tag = 'scoped memory for _lambda_.17']
    #allocation10 [shape = 'u8[16384]{0}', space=vmem, size = 0x4000, scoped, tag = 'input window, operand 4, single buffered']
    #allocation11 [shape = 'u8[1024]{0}', space=vmem, size = 0x400, scoped, tag = 'input window, operand 5, single buffered']
    #allocation12 [shape = 's32[1]{0}', space=sflag, size = 0x4, scoped, tag = 'scoped memory for _lambda_.17']
    #allocation13 [shape = 'u8[16384]{0}', space=vmem, size = 0x4000, scoped, tag = 'input window, operand 6, single buffered']
    #allocation14 [shape = 'u8[512]{0}', space=vmem, size = 0x400, scoped, tag = 'input window, operand 7, single buffered']
    #allocation15 [shape = 's32[1]{0}', space=sflag, size = 0x4, scoped, tag = 'scoped memory for _lambda_.17']
    #allocation16 [shape = 'u8[8192]{0}', space=vmem, size = 0x2000, scoped, tag = 'output window, operand 0']
    %13 = vsyncpa [#allocation3], 0
    %s14 = scalar_lea.sflag [#allocation3], 1
    %15 = vsyncpa %s14, 0
    %16 = vsyncpa [#allocation6], 0
    %s17 = scalar_lea.sflag [#allocation6], 1
    %18 = vsyncpa %s17, 0
    %19 = vsyncpa [#allocation9], 0
    %20 = vsyncpa [#allocation12], 0
    %21 = vsyncpa [#allocation15], 0
    %22 = vsyncpa [#allocation4], 0
    %s23 = scalar_lea.sflag [#allocation4], 1
    %24 = vsyncpa %s23, 0
    loop: start=0, step=1, limit=4
    $region2: #{_lambda_.17} parent=1 // loop_pre_header
      _
    $region3: #{_lambda_.17} parent=1 // loop_header
      %s26 = sphi 0, %s30
      %p27 = scmp.ge.s32.totalorder %s26, 4
      %s36 = sphi 0, %s38
      %s39 = sphi 0, %s36
      %s40 = sphi 0, %s39
      %s56 = sphi 0, %s40
      %s62 = sphi 0, %s64
      %s65 = sphi 0, %s62
      %s66 = sphi 0, %s65
      %s82 = sphi 0, %s66
      %s86 = sphi 0, %s86
      %s88 = sphi 0, %s86
      %s89 = sphi 0, %s88
      %s103 = sphi 0, %s89
      %s107 = sphi 0, %s107
      %s109 = sphi 0, %s107
      %s110 = sphi 0, %s109
      %s124 = sphi 0, %s110
      %s128 = sphi 0, %s128
      %s130 = sphi 0, %s128
      %s131 = sphi 0, %s130
      %s145 = sphi 0, %s131
      %s149 = sphi 0, %s149
      %s151 = sphi 0, %s149
      %s152 = sphi 0, %s151
      %s166 = sphi 0, %s152
      %s170 = sphi 0, %s170
      %s172 = sphi 0, %s170
      %s173 = sphi 0, %s172
      %s187 = sphi 0, %s173
      %s191 = sphi 0, %s191
      %s193 = sphi 0, %s191
      %s194 = sphi 0, %s193
      %s208 = sphi 0, %s194
      %s214 = sphi 0, %s216
      %s217 = sphi 0, %s214
      %s218 = sphi 0, %s217
      %s234 = sphi 0, %s218
    $region4: #{_lambda_.17} parent=1 // loop_header_branch
      %29 = sbr.rel (%p27) target = $region8
    $region5: #{_lambda_.17} parent=1 // loop_body
      %s31 = ssub.s32 %s26, 1
      %s32 = ssub.s32 %s26, 2
      %s33 = sadd.s32 %s26, 1
      %s34 = ssub.s32 %s26, %s33
      %p35 = scmp.eq.s32.totalorder %s34, 0
      %s37 = sadd.s32 %s36, 1
      %s38 = scalar_select %p35, %s36, %s37
      %p41 = pneg %p35
      %p42 = scmp.eq.s32.totalorder %s26, 1
      %p43 = por %p41, %p42
      %p44 = scmp.ne.s32.totalorder %s36, %s39
      %p45 = scmp.eq.s32.totalorder %s26, 0
      %p46 = por %p44, %p45
      %p47 = scmp.ne.s32.totalorder %s36, %s39
      %p48 = scmp.eq.s32.totalorder %s31, 1
      %p49 = por %p47, %p48
      %p50 = scmp.ne.s32.totalorder %s39, %s40
      %p51 = scmp.eq.s32.totalorder %s31, 0
      %p52 = por %p50, %p51
      %p53 = scmp.ne.s32.totalorder %s39, %s40
      %p54 = scmp.eq.s32.totalorder %s32, 1
      %p55 = por %p53, %p54
      %p57 = scmp.ne.s32.totalorder %s40, %s56
      %p58 = scmp.eq.s32.totalorder %s32, 0
      %p59 = por %p57, %p58
      %s60 = ssub.s32 %s26, %s33
      %p61 = scmp.eq.s32.totalorder %s60, 0
      %s63 = sadd.s32 %s62, 1
      %s64 = scalar_select %p61, %s62, %s63
      %p67 = pneg %p61
      %p68 = scmp.eq.s32.totalorder %s26, 1
      %p69 = por %p67, %p68
      %p70 = scmp.ne.s32.totalorder %s62, %s65
      %p71 = scmp.eq.s32.totalorder %s26, 0
      %p72 = por %p70, %p71
      %p73 = scmp.ne.s32.totalorder %s62, %s65
      %p74 = scmp.eq.s32.totalorder %s31, 1
      %p75 = por %p73, %p74
      %p76 = scmp.ne.s32.totalorder %s65, %s66
      %p77 = scmp.eq.s32.totalorder %s31, 0
      %p78 = por %p76, %p77
      %p79 = scmp.ne.s32.totalorder %s65, %s66
      %p80 = scmp.eq.s32.totalorder %s32, 1
      %p81 = por %p79, %p80
      %p83 = scmp.ne.s32.totalorder %s66, %s82
      %p84 = scmp.eq.s32.totalorder %s32, 0
      %p85 = por %p83, %p84
      %s87 = sadd.s32 %s86, 1
      %p90 = scmp.eq.s32.totalorder %s26, 1
      %p91 = scmp.ne.s32.totalorder %s86, %s88
      %p92 = scmp.eq.s32.totalorder %s26, 0
      %p93 = por %p91, %p92
      %p94 = scmp.ne.s32.totalorder %s86, %s88
      %p95 = scmp.eq.s32.totalorder %s31, 1
      %p96 = por %p94, %p95
      %p97 = scmp.ne.s32.totalorder %s88, %s89
      %p98 = scmp.eq.s32.totalorder %s31, 0
      %p99 = por %p97, %p98
      %p100 = scmp.ne.s32.totalorder %s88, %s89
      %p101 = scmp.eq.s32.totalorder %s32, 1
      %p102 = por %p100, %p101
      %p104 = scmp.ne.s32.totalorder %s89, %s103
      %p105 = scmp.eq.s32.totalorder %s32, 0
      %p106 = por %p104, %p105
      %s108 = sadd.s32 %s107, 1
      %p111 = scmp.eq.s32.totalorder %s26, 1
      %p112 = scmp.ne.s32.totalorder %s107, %s109
      %p113 = scmp.eq.s32.totalorder %s26, 0
      %p114 = por %p112, %p113
      %p115 = scmp.ne.s32.totalorder %s107, %s109
      %p116 = scmp.eq.s32.totalorder %s31, 1
      %p117 = por %p115, %p116
      %p118 = scmp.ne.s32.totalorder %s109, %s110
      %p119 = scmp.eq.s32.totalorder %s31, 0
      %p120 = por %p118, %p119
      %p121 = scmp.ne.s32.totalorder %s109, %s110
      %p122 = scmp.eq.s32.totalorder %s32, 1
      %p123 = por %p121, %p122
      %p125 = scmp.ne.s32.totalorder %s110, %s124
      %p126 = scmp.eq.s32.totalorder %s32, 0
      %p127 = por %p125, %p126
      %s129 = sadd.s32 %s128, 1
      %p132 = scmp.eq.s32.totalorder %s26, 1
      %p133 = scmp.ne.s32.totalorder %s128, %s130
      %p134 = scmp.eq.s32.totalorder %s26, 0
      %p135 = por %p133, %p134
      %p136 = scmp.ne.s32.totalorder %s128, %s130
      %p137 = scmp.eq.s32.totalorder %s31, 1
      %p138 = por %p136, %p137
      %p139 = scmp.ne.s32.totalorder %s130, %s131
      %p140 = scmp.eq.s32.totalorder %s31, 0
      %p141 = por %p139, %p140
      %p142 = scmp.ne.s32.totalorder %s130, %s131
      %p143 = scmp.eq.s32.totalorder %s32, 1
      %p144 = por %p142, %p143
      %p146 = scmp.ne.s32.totalorder %s131, %s145
      %p147 = scmp.eq.s32.totalorder %s32, 0
      %p148 = por %p146, %p147
      %s150 = sadd.s32 %s149, 1
      %p153 = scmp.eq.s32.totalorder %s26, 1
      %p154 = scmp.ne.s32.totalorder %s149, %s151
      %p155 = scmp.eq.s32.totalorder %s26, 0
      %p156 = por %p154, %p155
      %p157 = scmp.ne.s32.totalorder %s149, %s151
      %p158 = scmp.eq.s32.totalorder %s31, 1
      %p159 = por %p157, %p158
      %p160 = scmp.ne.s32.totalorder %s151, %s152
      %p161 = scmp.eq.s32.totalorder %s31, 0
      %p162 = por %p160, %p161
      %p163 = scmp.ne.s32.totalorder %s151, %s152
      %p164 = scmp.eq.s32.totalorder %s32, 1
      %p165 = por %p163, %p164
      %p167 = scmp.ne.s32.totalorder %s152, %s166
      %p168 = scmp.eq.s32.totalorder %s32, 0
      %p169 = por %p167, %p168
      %s171 = sadd.s32 %s170, 1
      %p174 = scmp.eq.s32.totalorder %s26, 1
      %p175 = scmp.ne.s32.totalorder %s170, %s172
      %p176 = scmp.eq.s32.totalorder %s26, 0
      %p177 = por %p175, %p176
      %p178 = scmp.ne.s32.totalorder %s170, %s172
      %p179 = scmp.eq.s32.totalorder %s31, 1
      %p180 = por %p178, %p179
      %p181 = scmp.ne.s32.totalorder %s172, %s173
      %p182 = scmp.eq.s32.totalorder %s31, 0
      %p183 = por %p181, %p182
      %p184 = scmp.ne.s32.totalorder %s172, %s173
      %p185 = scmp.eq.s32.totalorder %s32, 1
      %p186 = por %p184, %p185
      %p188 = scmp.ne.s32.totalorder %s173, %s187
      %p189 = scmp.eq.s32.totalorder %s32, 0
      %p190 = por %p188, %p189
      %s192 = sadd.s32 %s191, 1
      %p195 = scmp.eq.s32.totalorder %s26, 1
      %p196 = scmp.ne.s32.totalorder %s191, %s193
      %p197 = scmp.eq.s32.totalorder %s26, 0
      %p198 = por %p196, %p197
      %p199 = scmp.ne.s32.totalorder %s191, %s193
      %p200 = scmp.eq.s32.totalorder %s31, 1
      %p201 = por %p199, %p200
      %p202 = scmp.ne.s32.totalorder %s193, %s194
      %p203 = scmp.eq.s32.totalorder %s31, 0
      %p204 = por %p202, %p203
      %p205 = scmp.ne.s32.totalorder %s193, %s194
      %p206 = scmp.eq.s32.totalorder %s32, 1
      %p207 = por %p205, %p206
      %p209 = scmp.ne.s32.totalorder %s194, %s208
      %p210 = scmp.eq.s32.totalorder %s32, 0
      %p211 = por %p209, %p210
      %s212 = ssub.s32 %s26, %s33
      %p213 = scmp.eq.s32.totalorder %s212, 0
      %s215 = sadd.s32 %s214, 1
      %s216 = scalar_select %p213, %s214, %s215
      %p219 = pneg %p213
      %p220 = scmp.eq.s32.totalorder %s26, 1
      %p221 = por %p219, %p220
      %p222 = scmp.ne.s32.totalorder %s214, %s217
      %p223 = scmp.eq.s32.totalorder %s26, 0
      %p224 = por %p222, %p223
      %p225 = scmp.ne.s32.totalorder %s214, %s217
      %p226 = scmp.eq.s32.totalorder %s31, 1
      %p227 = por %p225, %p226
      %p228 = scmp.ne.s32.totalorder %s217, %s218
      %p229 = scmp.eq.s32.totalorder %s31, 0
      %p230 = por %p228, %p229
      %p231 = scmp.ne.s32.totalorder %s217, %s218
      %p232 = scmp.eq.s32.totalorder %s32, 1
      %p233 = por %p231, %p232
      %p235 = scmp.ne.s32.totalorder %s218, %s234
      %p236 = scmp.eq.s32.totalorder %s32, 0
      %p237 = por %p235, %p236
      %p238 = scmp.le.s32.totalorder 1, %s26
      %p239 = scmp.lt.s32.totalorder %s26, 3
      %p240 = pnand %p238, %p239
      %p241 = pneg %p240
      // Predicated region
      $region9: #{_lambda_.17} parent=5 // pred_check
        _
      $region10: #{_lambda_.17} parent=5 // pred_check_branch
        %243 = sbr.rel (%p240) target = $region12
      $region11: #{_lambda_.17} parent=5 // pred_region
        %s244 = ssub.s32 %s26, 1
        // Predicated region
        $region13: #{_lambda_.17} parent=11 // pred_check
          %p245 = pneg %p99
        $region14: #{_lambda_.17} parent=11 // pred_check_branch
          %247 = sbr.rel (%p245) target = $region16
        $region15: #{_lambda_.17} parent=11 // pred_region
          %s249 = ssub.s32 16, 16
          %250 = vsyncadd [#allocation6], %s249
          %s252 = sshll.u32 [#allocation7], 4
          %s253 = int_to_ptr.vmem [resolvable:$true] %s252
          %255 = dma.hbm_to_vmem [thread:$0]  %s2, 16, %s253, [#allocation6]
        $region16: #{_lambda_.17} parent=11 // pred_fallthru
          _
        // Predicated region
        $region17: #{_lambda_.17} parent=11 // pred_check
          %p256 = pneg %p120
        $region18: #{_lambda_.17} parent=11 // pred_check_branch
          %258 = sbr.rel (%p256) target = $region20
        $region19: #{_lambda_.17} parent=11 // pred_region
          %s260 = ssub.s32 16, 16
          %261 = vsyncadd [#allocation9], %s260
          %s263 = sshll.u32 [#allocation8], 4
          %s264 = int_to_ptr.vmem [resolvable:$true] %s263
          %266 = dma.hbm_to_vmem [thread:$0]  %s3, 16, %s264, [#allocation9]
        $region20: #{_lambda_.17} parent=11 // pred_fallthru
          _
        // Predicated region
        $region21: #{_lambda_.17} parent=11 // pred_check
          %p267 = pneg %p141
        $region22: #{_lambda_.17} parent=11 // pred_check_branch
          %269 = sbr.rel (%p267) target = $region24
        $region23: #{_lambda_.17} parent=11 // pred_region
          %s271 = ssub.s32 512, 512
          %272 = vsyncadd [#allocation9], %s271
          %s273 = sshll.u32 [#allocation10], 4
          %s274 = int_to_ptr.vmem [resolvable:$true] %s273
          %279 = dma.hbm_to_vmem [thread:$0]  %s4, 512, %s274, [#allocation9], 128, 128, 8
        $region24: #{_lambda_.17} parent=11 // pred_fallthru
          _
        // Predicated region
        $region25: #{_lambda_.17} parent=11 // pred_check
          %p280 = pneg %p162
        $region26: #{_lambda_.17} parent=11 // pred_check_branch
          %282 = sbr.rel (%p280) target = $region28
        $region27: #{_lambda_.17} parent=11 // pred_region
          %s284 = ssub.s32 32, 32
          %285 = vsyncadd [#allocation12], %s284
          %s287 = sshll.u32 [#allocation11], 4
          %s288 = int_to_ptr.vmem [resolvable:$true] %s287
          %290 = dma.hbm_to_vmem [thread:$0]  %s5, 32, %s288, [#allocation12]
        $region28: #{_lambda_.17} parent=11 // pred_fallthru
          _
        // Predicated region
        $region29: #{_lambda_.17} parent=11 // pred_check
          %p291 = pneg %p183
        $region30: #{_lambda_.17} parent=11 // pred_check_branch
          %293 = sbr.rel (%p291) target = $region32
        $region31: #{_lambda_.17} parent=11 // pred_region
          %s295 = ssub.s32 512, 512
          %296 = vsyncadd [#allocation12], %s295
          %s297 = sshll.u32 [#allocation13], 4
          %s298 = int_to_ptr.vmem [resolvable:$true] %s297
          %303 = dma.hbm_to_vmem [thread:$0]  %s6, 512, %s298, [#allocation12], 64, 64, 4
        $region32: #{_lambda_.17} parent=11 // pred_fallthru
          _
        // Predicated region
        $region33: #{_lambda_.17} parent=11 // pred_check
          %p304 = pneg %p204
        $region34: #{_lambda_.17} parent=11 // pred_check_branch
          %306 = sbr.rel (%p304) target = $region36
        $region35: #{_lambda_.17} parent=11 // pred_region
          %s308 = ssub.s32 16, 16
          %309 = vsyncadd [#allocation15], %s308
          %s311 = sshll.u32 [#allocation14], 4
          %s312 = int_to_ptr.vmem [resolvable:$true] %s311
          %314 = dma.hbm_to_vmem [thread:$0]  %s7, 16, %s312, [#allocation15]
        $region36: #{_lambda_.17} parent=11 // pred_fallthru
          _
      $region12: #{_lambda_.17} parent=5 // pred_fallthru
        _
      %p315 = scmp.lt.s32.totalorder %s26, 2
      // Predicated region
      $region37: #{_lambda_.17} parent=5 // pred_check
        %p316 = pneg %p315
      $region38: #{_lambda_.17} parent=5 // pred_check_branch
        %318 = sbr.rel (%p316) target = $region40
      $region39: #{_lambda_.17} parent=5 // pred_region
        // Predicated region
        $region41: #{_lambda_.17} parent=39 // pred_check
          %p319 = pneg %p46
        $region42: #{_lambda_.17} parent=39 // pred_check_branch
          %321 = sbr.rel (%p319) target = $region44
        $region43: #{_lambda_.17} parent=39 // pred_region
          %s322 = sand.u32 %s36, 1
          %s323 = scalar_lea.sflag [#allocation3], %s322
          %s324 = sand.u32 %s36, 1
          %s325 = smul.addr %s324, 8
          %s326 = scalar_lea.vmem [#allocation2], %s325
          %s328 = ssub.s32 128, 128
          %329 = vsyncadd %s323, %s328
          %s330 = smul.addr %s26, 128
          %s331 = scalar_lea.hbm %s0, %s330
          %s333 = sshll.u32 %s326, 4
          %s334 = int_to_ptr.vmem [resolvable:$true] %s333
          %336 = dma.hbm_to_vmem [thread:$0]  %s331, 128, %s334, %s323
        $region44: #{_lambda_.17} parent=39 // pred_fallthru
          _
        // Predicated region
        $region45: #{_lambda_.17} parent=39 // pred_check
          %p337 = pneg %p72
        $region46: #{_lambda_.17} parent=39 // pred_check_branch
          %339 = sbr.rel (%p337) target = $region48
        $region47: #{_lambda_.17} parent=39 // pred_region
          %s340 = sand.u32 %s26, 1
          %s341 = scalar_lea.sflag [#allocation6], %s340
          %s342 = sand.u32 %s62, 1
          %s343 = scalar_lea.vmem [#allocation5], %s342
          %s345 = ssub.s32 16, 16
          %346 = vsyncadd %s341, %s345
          %s347 = smul.addr %s26, 16
          %s348 = scalar_lea.hbm %s1, %s347
          %s350 = sshll.u32 %s343, 4
          %s351 = int_to_ptr.vmem [resolvable:$true] %s350
          %353 = dma.hbm_to_vmem [thread:$0]  %s348, 16, %s351, %s341
        $region48: #{_lambda_.17} parent=39 // pred_fallthru
          _
      $region40: #{_lambda_.17} parent=5 // pred_fallthru
        _
      %p354 = scmp.le.s32.totalorder 1, %s26
      %p355 = scmp.lt.s32.totalorder %s26, 3
      %p356 = pnand %p354, %p355
      %p357 = pneg %p356
      // Predicated region
      $region49: #{_lambda_.17} parent=5 // pred_check
        _
      $region50: #{_lambda_.17} parent=5 // pred_check_branch
        %359 = sbr.rel (%p356) target = $region52
      $region51: #{_lambda_.17} parent=5 // pred_region
        %s360 = ssub.s32 %s26, 1
        %s361 = sand.u32 %s39, 1
        %s362 = scalar_lea.sflag [#allocation3], %s361
        %s363 = sand.u32 %s39, 1
        %s364 = smul.addr %s363, 8
        %s365 = scalar_lea.vmem [#allocation2], %s364
        // Predicated region
        $region53: #{_lambda_.17} parent=51 // pred_check
          %p366 = pneg %p52
        $region54: #{_lambda_.17} parent=51 // pred_check_branch
          %368 = sbr.rel (%p366) target = $region56
        $region55: #{_lambda_.17} parent=51 // pred_region
          %369 = dma.done %s362, 128
        $region56: #{_lambda_.17} parent=51 // pred_fallthru
          _
        %s370 = sand.u32 %s31, 1
        %s371 = scalar_lea.sflag [#allocation6], %s370
        %s372 = sand.u32 %s65, 1
        %s373 = scalar_lea.vmem [#allocation5], %s372
        // Predicated region
        $region57: #{_lambda_.17} parent=51 // pred_check
          %p374 = pneg %p78
        $region58: #{_lambda_.17} parent=51 // pred_check_branch
          %376 = sbr.rel (%p374) target = $region60
        $region59: #{_lambda_.17} parent=51 // pred_region
          %377 = dma.done %s371, 16
        $region60: #{_lambda_.17} parent=51 // pred_fallthru
          _
        // Predicated region
        $region61: #{_lambda_.17} parent=51 // pred_check
          %p378 = pneg %p99
        $region62: #{_lambda_.17} parent=51 // pred_check_branch
          %380 = sbr.rel (%p378) target = $region64
        $region63: #{_lambda_.17} parent=51 // pred_region
          %381 = dma.done [#allocation6], 16
        $region64: #{_lambda_.17} parent=51 // pred_fallthru
          _
        // Predicated region
        $region65: #{_lambda_.17} parent=51 // pred_check
          %p382 = pneg %p120
        $region66: #{_lambda_.17} parent=51 // pred_check_branch
          %384 = sbr.rel (%p382) target = $region68
        $region67: #{_lambda_.17} parent=51 // pred_region
          %385 = dma.done [#allocation9], 16
        $region68: #{_lambda_.17} parent=51 // pred_fallthru
          _
        // Predicated region
        $region69: #{_lambda_.17} parent=51 // pred_check
          %p386 = pneg %p141
        $region70: #{_lambda_.17} parent=51 // pred_check_branch
          %388 = sbr.rel (%p386) target = $region72
        $region71: #{_lambda_.17} parent=51 // pred_region
          %389 = dma.done [#allocation9], 512
        $region72: #{_lambda_.17} parent=51 // pred_fallthru
          _
        // Predicated region
        $region73: #{_lambda_.17} parent=51 // pred_check
          %p390 = pneg %p162
        $region74: #{_lambda_.17} parent=51 // pred_check_branch
          %392 = sbr.rel (%p390) target = $region76
        $region75: #{_lambda_.17} parent=51 // pred_region
          %393 = dma.done [#allocation12], 32
        $region76: #{_lambda_.17} parent=51 // pred_fallthru
          _
        // Predicated region
        $region77: #{_lambda_.17} parent=51 // pred_check
          %p394 = pneg %p183
        $region78: #{_lambda_.17} parent=51 // pred_check_branch
          %396 = sbr.rel (%p394) target = $region80
        $region79: #{_lambda_.17} parent=51 // pred_region
          %397 = dma.done [#allocation12], 512
        $region80: #{_lambda_.17} parent=51 // pred_fallthru
          _
        // Predicated region
        $region81: #{_lambda_.17} parent=51 // pred_check
          %p398 = pneg %p204
        $region82: #{_lambda_.17} parent=51 // pred_check_branch
          %400 = sbr.rel (%p398) target = $region84
        $region83: #{_lambda_.17} parent=51 // pred_region
          %401 = dma.done [#allocation15], 16
        $region84: #{_lambda_.17} parent=51 // pred_fallthru
          _
        %s402 = sand.u32 %s39, 1
        %s403 = scalar_lea.sflag [#allocation3], %s402
        %s404 = sand.u32 %s39, 1
        %s405 = smul.addr %s404, 8
        %s406 = scalar_lea.vmem [#allocation2], %s405
        %p407 = pneg %p52
        %p408 = pneg %p49
        %s409 = sand.u32 %s31, 1
        %s410 = scalar_lea.sflag [#allocation6], %s409
        %s411 = sand.u32 %s65, 1
        %s412 = scalar_lea.vmem [#allocation5], %s411
        %p413 = pneg %p78
        %p414 = pneg %p75
        %p415 = pneg %p99
        %p416 = pneg %p96
        %p417 = pneg %p120
        %p418 = pneg %p117
        %p419 = pneg %p141
        %p420 = pneg %p138
        %p421 = pneg %p162
        %p422 = pneg %p159
        %p423 = pneg %p183
        %p424 = pneg %p180
        %p425 = pneg %p204
        %p426 = pneg %p201
        %p427 = pneg %p230
        %p428 = pneg %p227
        %s429 = sand.u32 %s217, 1
        %s430 = scalar_lea.sflag [#allocation4], %s429
        %s431 = sand.u32 %s217, 1
        %s432 = smul.addr %s431, 8
        %s433 = scalar_lea.vmem [#allocation16], %s432
        %v435 = vld [vmem:[%s365] sm:$0xff]
        %vm436 = vcmask 261120
        %v437 = vsel %vm436, %v435, 0.0
        %438 = vadd.xlane.f32.xlu0 %v437
        %v439 = vpop.xlane.xlu0 %438
        %v440 = vrcp.pop 32.0
        %v441 = vmul.f32 %v439, %v440
        %v442 = vsub.f32 %v435, %v441
        %v443 = vmul.f32 %v442, %v442
        %v444 = vsel %vm436, %v443, 0.0
        %445 = vadd.xlane.f32.xlu0 %v444
        %v446 = vpop.xlane.xlu0 %445
        %v447 = vmul.f32 %v446, %v440
        %v448 = vadd.f32 %v447, 1e-05
        %v449 = vrsqrt.pop %v448
        %v450 = vmul.f32 %v442, %v449
        %v451 = vld [vmem:[#allocation7] sm:$0x1]
        %v453 = vlaneseq
        %v454 = vshrl.u32 %v453, 7
        %v455 = vsub.s32 0, %v454
        %v456 = vrot.slane %v451, %v455
        %v458 = vmul.f32 %v450, %v456
        %v459 = vld [vmem:[#allocation8] sm:$0x1]
        %v461 = vlaneseq
        %v462 = vshrl.u32 %v461, 7
        %v463 = vsub.s32 0, %v462
        %v464 = vrot.slane %v459, %v463
        %v466 = vadd.f32 %v458, %v464
        %v467 = vpack.c.bf16 %v466, %v466
        %v468 = vld [vmem:[#allocation10] sm:$0xff]
        %v469 = vld [vmem:[#allocation10 + $0x8] sm:$0xff]
        %v470 = vld [vmem:[#allocation10 + $0x10] sm:$0xff]
        %v471 = vld [vmem:[#allocation10 + $0x18] sm:$0xff]
        %v472 = vld [vmem:[#allocation11] sm:$0x3]
        %v474 = vlaneseq
        %v475 = vshrl.u32 %v474, 7
        %v476 = vsub.s32 0, %v475
        %v477 = vrot.slane %v472, %v476
        %v478 = vlaneseq
        %v479 = vshrl.u32 %v478, 7
        %v480 = vsub.s32 1, %v479
        %v481 = vrot.slane %v472, %v480
        %v488 = vunpack.c.l.b16 %v468
        %v489 = vunpack.c.h.b16 %v468
        %v490 = vunpack.c.l.b16 %v469
        %v491 = vunpack.c.h.b16 %v469
        %v492 = vunpack.c.l.b16 %v470
        %v493 = vunpack.c.h.b16 %v470
        %v494 = vunpack.c.l.b16 %v471
        %v495 = vunpack.c.h.b16 %v471
        %v496 = vpack.c.b16 %v490, %v488
        %v497 = vpack.c.b16 %v491, %v489
        %v498 = vpack.c.b16 %v494, %v492
        %v499 = vpack.c.b16 %v495, %v493
        %v505 = vsel %vm436, %v467, 0
        %507 = vmatprep.subr.bf16.mxu0 %v497
        %508 = vmatpush1.bf16.msra.mxu0 %v496
        %509 = vmatprep.subr.bf16.mxu0 %v499
        %510 = vmatpush1.bf16.msra.mxu0 %v498
        %511 = vmatprep.subr.bf16.mxu0 0
        %512 = vmatpush1.bf16.msra.mxu0 0
        %513 = vmatprep.subr.bf16.mxu0 0
        %514 = vmatpush1.bf16.msra.mxu0 0
        %515 = vmatprep.subr.bf16.mxu0 0
        %516 = vmatpush1.bf16.msra.mxu0 0
        %517 = vmatprep.subr.bf16.mxu0 0
        %518 = vmatpush1.bf16.msra.mxu0 0
        %519 = vmatprep.subr.bf16.mxu0 0
        %520 = vmatpush1.bf16.msra.mxu0 0
        %521 = vmatprep.subr.bf16.mxu0 0
        %522 = vmatpush1.bf16.msra.mxu0 0
        %523 = vmatprep.subr.bf16.mxu0 0
        %524 = vmatpush1.bf16.msra.mxu0 0
        %525 = vmatprep.subr.bf16.mxu0 0
        %526 = vmatpush1.bf16.msra.mxu0 0
        %527 = vmatprep.subr.bf16.mxu0 0
        %528 = vmatpush1.bf16.msra.mxu0 0
        %529 = vmatprep.subr.bf16.mxu0 0
        %530 = vmatpush1.bf16.msra.mxu0 0
        %531 = vmatprep.subr.bf16.mxu0 0
        %532 = vmatpush1.bf16.msra.mxu0 0
        %533 = vmatprep.subr.bf16.mxu0 0
        %534 = vmatpush1.bf16.msra.mxu0 0
        %535 = vmatprep.subr.bf16.mxu0 0
        %536 = vmatpush1.bf16.msra.mxu0 0
        %537 = vmatprep.subr.bf16.mxu0 0
        %538 = vmatpush1.bf16.msra.mxu0 0
        %539 = vmatprep.mubr.bf16.mxu0 0
        %540 = vmatmul.mubr.bf16.gmra.mrb[0].mxu0 %v505
        %v541 = vpop.f32.mrb[0].mxu0
        %v542 = vadd.f32 %v477, %v541
        %v543 = vpop.f32.mrb[0].mxu0
        %v544 = vadd.f32 %v481, %v543
        %v545 = vpop.f32.mrb[0].mxu0
        %v546 = vpop.f32.mrb[0].mxu0
        %547 = vdwg.mxu0
        %v548 = vld [vmem:[%s373] sm:$0x1]
        %vm549 = vcmp.ne.f32.partialorder %v548, 0.0
        %v550 = vpack.c.bf16 %v542, %v542
        %v551 = vpack.c.bf16 %v544, %v544
        %553 = vrot.lane.b32.xlu0 %v550, 64
        %v554 = vpop.permute.xlu0 %553
        %vm555 = vcmask 130048
        %v557 = vsel %vm555, %v550, 0
        %v560 = vsel %vm555, %v554, 0
        %562 = vmatprep.subr.bf16.mxu0 0
        %563 = vmatpush1.bf16.xpose.msra.mxu0 %v560
        %564 = vmatprep.subr.bf16.mxu0 0
        %565 = vmatpush1.bf16.xpose.msra.mxu0 0
        %566 = vmatprep.subr.bf16.mxu0 0
        %567 = vmatpush1.bf16.xpose.msra.mxu0 0
        %568 = vmatprep.subr.bf16.mxu0 0
        %569 = vmatpush1.bf16.xpose.msra.mxu0 0
        %570 = vmatprep.subr.bf16.mxu0 0
        %571 = vmatpush1.bf16.xpose.msra.mxu0 0
        %572 = vmatprep.subr.bf16.mxu0 0
        %573 = vmatpush1.bf16.xpose.msra.mxu0 0
        %574 = vmatprep.subr.bf16.mxu0 0
        %575 = vmatpush1.bf16.xpose.msra.mxu0 0
        %576 = vmatprep.subr.bf16.mxu0 0
        %577 = vmatpush1.bf16.xpose.msra.mxu0 0
        %578 = vmatprep.subr.bf16.mxu0 0
        %579 = vmatpush1.bf16.xpose.msra.mxu0 0
        %580 = vmatprep.subr.bf16.mxu0 0
        %581 = vmatpush1.bf16.xpose.msra.mxu0 0
        %582 = vmatprep.subr.bf16.mxu0 0
        %583 = vmatpush1.bf16.xpose.msra.mxu0 0
        %584 = vmatprep.subr.bf16.mxu0 0
        %585 = vmatpush1.bf16.xpose.msra.mxu0 0
        %586 = vmatprep.subr.bf16.mxu0 0
        %587 = vmatpush1.bf16.xpose.msra.mxu0 0
        %588 = vmatprep.subr.bf16.mxu0 0
        %589 = vmatpush1.bf16.xpose.msra.mxu0 0
        %590 = vmatprep.subr.bf16.mxu0 0
        %591 = vmatpush1.bf16.xpose.msra.mxu0 0
        %592 = vmatprep.subr.bf16.mxu0 0
        %593 = vmatpush1.bf16.xpose.msra.mxu0 0
        %594 = vmatprep.mubr.bf16.mxu0 0
        %595 = vmatmul.mubr.bf16.gmra.mrb[0].mxu0 %v557
        %v596 = vpop.f32.mrb[0].mxu0
        %v597 = vadd.f32 0.0, %v596
        %v598 = vpop.f32.mrb[0].mxu0
        %v599 = vpop.f32.mrb[0].mxu0
        %v600 = vpop.f32.mrb[0].mxu0
        %601 = vdwg.mxu0
        %v602 = vmul.f32 %v597, 0.25
        %v603 = vsel %vm549, 1, 0
        %v604 = vlaneseq
        %v605 = vshrl.u32 %v604, 7
        %v606 = vsub.s32 0, %v605
        %v607 = vrot.slane %v603, %v606
        %vm608 = vcmp.eq.s32.totalorder %v607, 1
        %v609 = vsel %vm608, %v602, -1e+09
        %vm610 = vcmask 64512
        %v611 = vsel %vm610, %v609, -inf
        %612 = vmax.xlane.f32.xlu0 %v611
        %v613 = vpop.xlane.xlu0 %612
        %v614 = vsub.f32 %v609, %v613
        %v615 = vmul.f32 %v614, 1.442695
        %v616 = vpow.pop %v615
        %v617 = vsel %vm610, %v616, 0.0
        %618 = vadd.xlane.f32.xlu0 %v617
        %v619 = vpop.xlane.xlu0 %618
        %v620 = vrcp.pop %v619
        %v621 = vpack.c.bf16 %v616, %v616
        %v623 = vsel %vm610, %v621, 0
        %vm625 = vcmask 1043456
        %v627 = vsel %vm625, %v551, 0
        %629 = vmatprep.subr.bf16.mxu0 0
        %630 = vmatpush1.bf16.msra.mxu0 %v627
        %631 = vmatprep.subr.bf16.mxu0 0
        %632 = vmatpush1.bf16.msra.mxu0 0
        %633 = vmatprep.subr.bf16.mxu0 0
        %634 = vmatpush1.bf16.msra.mxu0 0
        %635 = vmatprep.subr.bf16.mxu0 0
        %636 = vmatpush1.bf16.msra.mxu0 0
        %637 = vmatprep.subr.bf16.mxu0 0
        %638 = vmatpush1.bf16.msra.mxu0 0
        %639 = vmatprep.subr.bf16.mxu0 0
        %640 = vmatpush1.bf16.msra.mxu0 0
        %641 = vmatprep.subr.bf16.mxu0 0
        %642 = vmatpush1.bf16.msra.mxu0 0
        %643 = vmatprep.subr.bf16.mxu0 0
        %644 = vmatpush1.bf16.msra.mxu0 0
        %645 = vmatprep.subr.bf16.mxu0 0
        %646 = vmatpush1.bf16.msra.mxu0 0
        %647 = vmatprep.subr.bf16.mxu0 0
        %648 = vmatpush1.bf16.msra.mxu0 0
        %649 = vmatprep.subr.bf16.mxu0 0
        %650 = vmatpush1.bf16.msra.mxu0 0
        %651 = vmatprep.subr.bf16.mxu0 0
        %652 = vmatpush1.bf16.msra.mxu0 0
        %653 = vmatprep.subr.bf16.mxu0 0
        %654 = vmatpush1.bf16.msra.mxu0 0
        %655 = vmatprep.subr.bf16.mxu0 0
        %656 = vmatpush1.bf16.msra.mxu0 0
        %657 = vmatprep.subr.bf16.mxu0 0
        %658 = vmatpush1.bf16.msra.mxu0 0
        %659 = vmatprep.subr.bf16.mxu0 0
        %660 = vmatpush1.bf16.msra.mxu0 0
        %661 = vmatprep.mubr.bf16.mxu0 0
        %662 = vmatmul.mubr.bf16.gmra.mrb[0].mxu0 %v623
        %v663 = vpop.f32.mrb[0].mxu0
        %v664 = vadd.f32 0.0, %v663
        %v665 = vpop.f32.mrb[0].mxu0
        %v666 = vpop.f32.mrb[0].mxu0
        %v667 = vpop.f32.mrb[0].mxu0
        %668 = vdwg.mxu0
        %v669 = vmul.f32 %v664, %v620
        %670 = vrot.lane.b32.xlu0 %v550, 112
        %v671 = vpop.permute.xlu0 %670
        %672 = vrot.lane.b32.xlu0 %v550, 48
        %v673 = vpop.permute.xlu0 %672
        %v675 = vsel %vm555, %v671, 0
        %v678 = vsel %vm555, %v673, 0
        %680 = vmatprep.subr.bf16.mxu0 0
        %681 = vmatpush1.bf16.xpose.msra.mxu0 %v678
        %682 = vmatprep.subr.bf16.mxu0 0
        %683 = vmatpush1.bf16.xpose.msra.mxu0 0
        %684 = vmatprep.subr.bf16.mxu0 0
        %685 = vmatpush1.bf16.xpose.msra.mxu0 0
        %686 = vmatprep.subr.bf16.mxu0 0
        %687 = vmatpush1.bf16.xpose.msra.mxu0 0
        %688 = vmatprep.subr.bf16.mxu0 0
        %689 = vmatpush1.bf16.xpose.msra.mxu0 0
        %690 = vmatprep.subr.bf16.mxu0 0
        %691 = vmatpush1.bf16.xpose.msra.mxu0 0
        %692 = vmatprep.subr.bf16.mxu0 0
        %693 = vmatpush1.bf16.xpose.msra.mxu0 0
        %694 = vmatprep.subr.bf16.mxu0 0
        %695 = vmatpush1.bf16.xpose.msra.mxu0 0
        %696 = vmatprep.subr.bf16.mxu0 0
        %697 = vmatpush1.bf16.xpose.msra.mxu0 0
        %698 = vmatprep.subr.bf16.mxu0 0
        %699 = vmatpush1.bf16.xpose.msra.mxu0 0
        %700 = vmatprep.subr.bf16.mxu0 0
        %701 = vmatpush1.bf16.xpose.msra.mxu0 0
        %702 = vmatprep.subr.bf16.mxu0 0
        %703 = vmatpush1.bf16.xpose.msra.mxu0 0
        %704 = vmatprep.subr.bf16.mxu0 0
        %705 = vmatpush1.bf16.xpose.msra.mxu0 0
        %706 = vmatprep.subr.bf16.mxu0 0
        %707 = vmatpush1.bf16.xpose.msra.mxu0 0
        %708 = vmatprep.subr.bf16.mxu0 0
        %709 = vmatpush1.bf16.xpose.msra.mxu0 0
        %710 = vmatprep.subr.bf16.mxu0 0
        %711 = vmatpush1.bf16.xpose.msra.mxu0 0
        %712 = vmatprep.mubr.bf16.mxu0 0
        %713 = vmatmul.mubr.bf16.gmra.mrb[0].mxu0 %v675
        %v714 = vpop.f32.mrb[0].mxu0
        %v715 = vadd.f32 0.0, %v714
        %v716 = vpop.f32.mrb[0].mxu0
        %v717 = vpop.f32.mrb[0].mxu0
        %v718 = vpop.f32.mrb[0].mxu0
        %719 = vdwg.mxu0
        %v720 = vmul.f32 %v715, 0.25
        %v721 = vsel %vm608, %v720, -1e+09
        %v722 = vsel %vm610, %v721, -inf
        %723 = vmax.xlane.f32.xlu0 %v722
        %v724 = vpop.xlane.xlu0 %723
        %v725 = vsub.f32 %v721, %v724
        %v726 = vmul.f32 %v725, 1.442695
        %v727 = vpow.pop %v726
        %v728 = vsel %vm610, %v727, 0.0
        %729 = vadd.xlane.f32.xlu0 %v728
        %v730 = vpop.xlane.xlu0 %729
        %v731 = vrcp.pop %v730
        %v732 = vpack.c.bf16 %v727, %v727
        %734 = vrot.lane.b32.xlu0 %v551, 112
        %v735 = vpop.permute.xlu0 %734
        %v737 = vsel %vm610, %v732, 0
        %v740 = vsel %vm625, %v735, 0
        %742 = vmatprep.subr.bf16.mxu0 0
        %743 = vmatpush1.bf16.msra.mxu0 %v740
        %744 = vmatprep.subr.bf16.mxu0 0
        %745 = vmatpush1.bf16.msra.mxu0 0
        %746 = vmatprep.subr.bf16.mxu0 0
        %747 = vmatpush1.bf16.msra.mxu0 0
        %748 = vmatprep.subr.bf16.mxu0 0
        %749 = vmatpush1.bf16.msra.mxu0 0
        %750 = vmatprep.subr.bf16.mxu0 0
        %751 = vmatpush1.bf16.msra.mxu0 0
        %752 = vmatprep.subr.bf16.mxu0 0
        %753 = vmatpush1.bf16.msra.mxu0 0
        %754 = vmatprep.subr.bf16.mxu0 0
        %755 = vmatpush1.bf16.msra.mxu0 0
        %756 = vmatprep.subr.bf16.mxu0 0
        %757 = vmatpush1.bf16.msra.mxu0 0
        %758 = vmatprep.subr.bf16.mxu0 0
        %759 = vmatpush1.bf16.msra.mxu0 0
        %760 = vmatprep.subr.bf16.mxu0 0
        %761 = vmatpush1.bf16.msra.mxu0 0
        %762 = vmatprep.subr.bf16.mxu0 0
        %763 = vmatpush1.bf16.msra.mxu0 0
        %764 = vmatprep.subr.bf16.mxu0 0
        %765 = vmatpush1.bf16.msra.mxu0 0
        %766 = vmatprep.subr.bf16.mxu0 0
        %767 = vmatpush1.bf16.msra.mxu0 0
        %768 = vmatprep.subr.bf16.mxu0 0
        %769 = vmatpush1.bf16.msra.mxu0 0
        %770 = vmatprep.subr.bf16.mxu0 0
        %771 = vmatpush1.bf16.msra.mxu0 0
        %772 = vmatprep.subr.bf16.mxu0 0
        %773 = vmatpush1.bf16.msra.mxu0 0
        %774 = vmatprep.mubr.bf16.mxu0 0
        %775 = vmatmul.mubr.bf16.gmra.mrb[0].mxu0 %v737
        %v776 = vpop.f32.mrb[0].mxu0
        %v777 = vadd.f32 0.0, %v776
        %v778 = vpop.f32.mrb[0].mxu0
        %v779 = vpop.f32.mrb[0].mxu0
        %v780 = vpop.f32.mrb[0].mxu0
        %781 = vdwg.mxu0
        %v782 = vmul.f32 %v777, %v731
        %783 = vrot.lane.b32.xlu0 %v550, 96
        %v784 = vpop.permute.xlu0 %783
        %785 = vrot.lane.b32.xlu0 %v550, 32
        %v786 = vpop.permute.xlu0 %785
        %v788 = vsel %vm555, %v784, 0
        %v791 = vsel %vm555, %v786, 0
        %793 = vmatprep.subr.bf16.mxu0 0
        %794 = vmatpush1.bf16.xpose.msra.mxu0 %v791
        %795 = vmatprep.subr.bf16.mxu0 0
        %796 = vmatpush1.bf16.xpose.msra.mxu0 0
        %797 = vmatprep.subr.bf16.mxu0 0
        %798 = vmatpush1.bf16.xpose.msra.mxu0 0
        %799 = vmatprep.subr.bf16.mxu0 0
        %800 = vmatpush1.bf16.xpose.msra.mxu0 0
        %801 = vmatprep.subr.bf16.mxu0 0
        %802 = vmatpush1.bf16.xpose.msra.mxu0 0
        %803 = vmatprep.subr.bf16.mxu0 0
        %804 = vmatpush1.bf16.xpose.msra.mxu0 0
        %805 = vmatprep.subr.bf16.mxu0 0
        %806 = vmatpush1.bf16.xpose.msra.mxu0 0
        %807 = vmatprep.subr.bf16.mxu0 0
        %808 = vmatpush1.bf16.xpose.msra.mxu0 0
        %809 = vmatprep.subr.bf16.mxu0 0
        %810 = vmatpush1.bf16.xpose.msra.mxu0 0
        %811 = vmatprep.subr.bf16.mxu0 0
        %812 = vmatpush1.bf16.xpose.msra.mxu0 0
        %813 = vmatprep.subr.bf16.mxu0 0
        %814 = vmatpush1.bf16.xpose.msra.mxu0 0
        %815 = vmatprep.subr.bf16.mxu0 0
        %816 = vmatpush1.bf16.xpose.msra.mxu0 0
        %817 = vmatprep.subr.bf16.mxu0 0
        %818 = vmatpush1.bf16.xpose.msra.mxu0 0
        %819 = vmatprep.subr.bf16.mxu0 0
        %820 = vmatpush1.bf16.xpose.msra.mxu0 0
        %821 = vmatprep.subr.bf16.mxu0 0
        %822 = vmatpush1.bf16.xpose.msra.mxu0 0
        %823 = vmatprep.subr.bf16.mxu0 0
        %824 = vmatpush1.bf16.xpose.msra.mxu0 0
        %825 = vmatprep.mubr.bf16.mxu0 0
        %826 = vmatmul.mubr.bf16.gmra.mrb[0].mxu0 %v788
        %v827 = vpop.f32.mrb[0].mxu0
        %v828 = vadd.f32 0.0, %v827
        %v829 = vpop.f32.mrb[0].mxu0
        %v830 = vpop.f32.mrb[0].mxu0
        %v831 = vpop.f32.mrb[0].mxu0
        %832 = vdwg.mxu0
        %v833 = vmul.f32 %v828, 0.25
        %v834 = vsel %vm608, %v833, -1e+09
        %v835 = vsel %vm610, %v834, -inf
        %836 = vmax.xlane.f32.xlu0 %v835
        %v837 = vpop.xlane.xlu0 %836
        %v838 = vsub.f32 %v834, %v837
        %v839 = vmul.f32 %v838, 1.442695
        %v840 = vpow.pop %v839
        %v841 = vsel %vm610, %v840, 0.0
        %842 = vadd.xlane.f32.xlu0 %v841
        %v843 = vpop.xlane.xlu0 %842
        %v844 = vrcp.pop %v843
        %v845 = vpack.c.bf16 %v840, %v840
        %846 = vrot.lane.b32.xlu0 %v551, 96
        %v847 = vpop.permute.xlu0 %846
        %v849 = vsel %vm610, %v845, 0
        %v852 = vsel %vm625, %v847, 0
        %854 = vmatprep.subr.bf16.mxu0 0
        %855 = vmatpush1.bf16.msra.mxu0 %v852
        %856 = vmatprep.subr.bf16.mxu0 0
        %857 = vmatpush1.bf16.msra.mxu0 0
        %858 = vmatprep.subr.bf16.mxu0 0
        %859 = vmatpush1.bf16.msra.mxu0 0
        %860 = vmatprep.subr.bf16.mxu0 0
        %861 = vmatpush1.bf16.msra.mxu0 0
        %862 = vmatprep.subr.bf16.mxu0 0
        %863 = vmatpush1.bf16.msra.mxu0 0
        %864 = vmatprep.subr.bf16.mxu0 0
        %865 = vmatpush1.bf16.msra.mxu0 0
        %866 = vmatprep.subr.bf16.mxu0 0
        %867 = vmatpush1.bf16.msra.mxu0 0
        %868 = vmatprep.subr.bf16.mxu0 0
        %869 = vmatpush1.bf16.msra.mxu0 0
        %870 = vmatprep.subr.bf16.mxu0 0
        %871 = vmatpush1.bf16.msra.mxu0 0
        %872 = vmatprep.subr.bf16.mxu0 0
        %873 = vmatpush1.bf16.msra.mxu0 0
        %874 = vmatprep.subr.bf16.mxu0 0
        %875 = vmatpush1.bf16.msra.mxu0 0
        %876 = vmatprep.subr.bf16.mxu0 0
        %877 = vmatpush1.bf16.msra.mxu0 0
        %878 = vmatprep.subr.bf16.mxu0 0
        %879 = vmatpush1.bf16.msra.mxu0 0
        %880 = vmatprep.subr.bf16.mxu0 0
        %881 = vmatpush1.bf16.msra.mxu0 0
        %882 = vmatprep.subr.bf16.mxu0 0
        %883 = vmatpush1.bf16.msra.mxu0 0
        %884 = vmatprep.subr.bf16.mxu0 0
        %885 = vmatpush1.bf16.msra.mxu0 0
        %886 = vmatprep.mubr.bf16.mxu0 0
        %887 = vmatmul.mubr.bf16.gmra.mrb[0].mxu0 %v849
        %v888 = vpop.f32.mrb[0].mxu0
        %v889 = vadd.f32 0.0, %v888
        %v890 = vpop.f32.mrb[0].mxu0
        %v891 = vpop.f32.mrb[0].mxu0
        %v892 = vpop.f32.mrb[0].mxu0
        %893 = vdwg.mxu0
        %v894 = vmul.f32 %v889, %v844
        %895 = vrot.lane.b32.xlu0 %v550, 80
        %v896 = vpop.permute.xlu0 %895
        %897 = vrot.lane.b32.xlu0 %v550, 16
        %v898 = vpop.permute.xlu0 %897
        %v900 = vsel %vm555, %v896, 0
        %v903 = vsel %vm555, %v898, 0
        %905 = vmatprep.subr.bf16.mxu0 0
        %906 = vmatpush1.bf16.xpose.msra.mxu0 %v903
        %907 = vmatprep.subr.bf16.mxu0 0
        %908 = vmatpush1.bf16.xpose.msra.mxu0 0
        %909 = vmatprep.subr.bf16.mxu0 0
        %910 = vmatpush1.bf16.xpose.msra.mxu0 0
        %911 = vmatprep.subr.bf16.mxu0 0
        %912 = vmatpush1.bf16.xpose.msra.mxu0 0
        %913 = vmatprep.subr.bf16.mxu0 0
        %914 = vmatpush1.bf16.xpose.msra.mxu0 0
        %915 = vmatprep.subr.bf16.mxu0 0
        %916 = vmatpush1.bf16.xpose.msra.mxu0 0
        %917 = vmatprep.subr.bf16.mxu0 0
        %918 = vmatpush1.bf16.xpose.msra.mxu0 0
        %919 = vmatprep.subr.bf16.mxu0 0
        %920 = vmatpush1.bf16.xpose.msra.mxu0 0
        %921 = vmatprep.subr.bf16.mxu0 0
        %922 = vmatpush1.bf16.xpose.msra.mxu0 0
        %923 = vmatprep.subr.bf16.mxu0 0
        %924 = vmatpush1.bf16.xpose.msra.mxu0 0
        %925 = vmatprep.subr.bf16.mxu0 0
        %926 = vmatpush1.bf16.xpose.msra.mxu0 0
        %927 = vmatprep.subr.bf16.mxu0 0
        %928 = vmatpush1.bf16.xpose.msra.mxu0 0
        %929 = vmatprep.subr.bf16.mxu0 0
        %930 = vmatpush1.bf16.xpose.msra.mxu0 0
        %931 = vmatprep.subr.bf16.mxu0 0
        %932 = vmatpush1.bf16.xpose.msra.mxu0 0
        %933 = vmatprep.subr.bf16.mxu0 0
        %934 = vmatpush1.bf16.xpose.msra.mxu0 0
        %935 = vmatprep.subr.bf16.mxu0 0
        %936 = vmatpush1.bf16.xpose.msra.mxu0 0
        %937 = vmatprep.mubr.bf16.mxu0 0
        %938 = vmatmul.mubr.bf16.gmra.mrb[0].mxu0 %v900
        %v939 = vpop.f32.mrb[0].mxu0
        %v940 = vadd.f32 0.0, %v939
        %v941 = vpop.f32.mrb[0].mxu0
        %v942 = vpop.f32.mrb[0].mxu0
        %v943 = vpop.f32.mrb[0].mxu0
        %944 = vdwg.mxu0
        %v945 = vmul.f32 %v940, 0.25
        %v946 = vsel %vm608, %v945, -1e+09
        %v947 = vsel %vm610, %v946, -inf
        %948 = vmax.xlane.f32.xlu0 %v947
        %v949 = vpop.xlane.xlu0 %948
        %v950 = vsub.f32 %v946, %v949
        %v951 = vmul.f32 %v950, 1.442695
        %v952 = vpow.pop %v951
        %v953 = vsel %vm610, %v952, 0.0
        %954 = vadd.xlane.f32.xlu0 %v953
        %v955 = vpop.xlane.xlu0 %954
        %v956 = vrcp.pop %v955
        %v957 = vpack.c.bf16 %v952, %v952
        %958 = vrot.lane.b32.xlu0 %v551, 80
        %v959 = vpop.permute.xlu0 %958
        %v961 = vsel %vm610, %v957, 0
        %v964 = vsel %vm625, %v959, 0
        %966 = vmatprep.subr.bf16.mxu0 0
        %967 = vmatpush1.bf16.msra.mxu0 %v964
        %968 = vmatprep.subr.bf16.mxu0 0
        %969 = vmatpush1.bf16.msra.mxu0 0
        %970 = vmatprep.subr.bf16.mxu0 0
        %971 = vmatpush1.bf16.msra.mxu0 0
        %972 = vmatprep.subr.bf16.mxu0 0
        %973 = vmatpush1.bf16.msra.mxu0 0
        %974 = vmatprep.subr.bf16.mxu0 0
        %975 = vmatpush1.bf16.msra.mxu0 0
        %976 = vmatprep.subr.bf16.mxu0 0
        %977 = vmatpush1.bf16.msra.mxu0 0
        %978 = vmatprep.subr.bf16.mxu0 0
        %979 = vmatpush1.bf16.msra.mxu0 0
        %980 = vmatprep.subr.bf16.mxu0 0
        %981 = vmatpush1.bf16.msra.mxu0 0
        %982 = vmatprep.subr.bf16.mxu0 0
        %983 = vmatpush1.bf16.msra.mxu0 0
        %984 = vmatprep.subr.bf16.mxu0 0
        %985 = vmatpush1.bf16.msra.mxu0 0
        %986 = vmatprep.subr.bf16.mxu0 0
        %987 = vmatpush1.bf16.msra.mxu0 0
        %988 = vmatprep.subr.bf16.mxu0 0
        %989 = vmatpush1.bf16.msra.mxu0 0
        %990 = vmatprep.subr.bf16.mxu0 0
        %991 = vmatpush1.bf16.msra.mxu0 0
        %992 = vmatprep.subr.bf16.mxu0 0
        %993 = vmatpush1.bf16.msra.mxu0 0
        %994 = vmatprep.subr.bf16.mxu0 0
        %995 = vmatpush1.bf16.msra.mxu0 0
        %996 = vmatprep.subr.bf16.mxu0 0
        %997 = vmatpush1.bf16.msra.mxu0 0
        %998 = vmatprep.mubr.bf16.mxu0 0
        %999 = vmatmul.mubr.bf16.gmra.mrb[0].mxu0 %v961
        %v1000 = vpop.f32.mrb[0].mxu0
        %v1001 = vadd.f32 0.0, %v1000
        %v1002 = vpop.f32.mrb[0].mxu0
        %v1003 = vpop.f32.mrb[0].mxu0
        %v1004 = vpop.f32.mrb[0].mxu0
        %1005 = vdwg.mxu0
        %v1006 = vmul.f32 %v1001, %v956
        %1008 = vrot.lane.b32.xlu0 %v782, 16
        %v1009 = vpop.permute.xlu0 %1008
        %1012 = vrot.lane.b32.xlu0 %v894, 32
        %v1013 = vpop.permute.xlu0 %1012
        %1016 = vrot.lane.b32.xlu0 %v1006, 48
        %v1017 = vpop.permute.xlu0 %1016
        %v1019 = vsel %vm555, %v669, %v1009
        %v1020 = vsel %vm436, %v1019, %v1013
        %vm1021 = vcmask 392192
        %v1022 = vsel %vm1021, %v1020, %v1017
        %v1023 = vpack.c.bf16 %v1022, %v1022
        %v1024 = vld [vmem:[#allocation13] sm:$0xf]
        %v1025 = vld [vmem:[#allocation13 + $0x4] sm:$0xf]
        %v1026 = vld [vmem:[#allocation13 + $0x8] sm:$0xf]
        %v1027 = vld [vmem:[#allocation13 + $0xc] sm:$0xf]
        %v1028 = vld [vmem:[#allocation13 + $0x10] sm:$0xf]
        %v1029 = vld [vmem:[#allocation13 + $0x14] sm:$0xf]
        %v1030 = vld [vmem:[#allocation13 + $0x18] sm:$0xf]
        %v1031 = vld [vmem:[#allocation13 + $0x1c] sm:$0xf]
        %v1032 = vld [vmem:[#allocation14] sm:$0x1]
        %v1034 = vlaneseq
        %v1035 = vshrl.u32 %v1034, 7
        %v1036 = vsub.s32 0, %v1035
        %v1037 = vrot.slane %v1032, %v1036
        %v1047 = vunpack.c.l.b16 %v1024
        %v1048 = vunpack.c.l.b16 %v1025
        %v1049 = vunpack.c.l.b16 %v1026
        %v1050 = vunpack.c.l.b16 %v1027
        %v1051 = vunpack.c.l.b16 %v1028
        %v1052 = vunpack.c.l.b16 %v1029
        %v1053 = vunpack.c.l.b16 %v1030
        %v1054 = vunpack.c.l.b16 %v1031
        %v1055 = vpack.c.b16 %v1048, %v1047
        %v1056 = vpack.c.b16 %v1050, %v1049
        %v1057 = vpack.c.b16 %v1052, %v1051
        %v1058 = vpack.c.b16 %v1054, %v1053
        %vm1063 = vcmask 523264
        %v1065 = vsel %vm1063, %v1023, 0
        %1067 = vmatprep.subr.bf16.mxu0 0
        %1068 = vmatpush1.bf16.msra.mxu0 %v1055
        %1069 = vmatprep.subr.bf16.mxu0 0
        %1070 = vmatpush1.bf16.msra.mxu0 %v1056
        %1071 = vmatprep.subr.bf16.mxu0 0
        %1072 = vmatpush1.bf16.msra.mxu0 %v1057
        %1073 = vmatprep.subr.bf16.mxu0 0
        %1074 = vmatpush1.bf16.msra.mxu0 %v1058
        %1075 = vmatprep.subr.bf16.mxu0 0
        %1076 = vmatpush1.bf16.msra.mxu0 0
        %1077 = vmatprep.subr.bf16.mxu0 0
        %1078 = vmatpush1.bf16.msra.mxu0 0
        %1079 = vmatprep.subr.bf16.mxu0 0
        %1080 = vmatpush1.bf16.msra.mxu0 0
        %1081 = vmatprep.subr.bf16.mxu0 0
        %1082 = vmatpush1.bf16.msra.mxu0 0
        %1083 = vmatprep.subr.bf16.mxu0 0
        %1084 = vmatpush1.bf16.msra.mxu0 0
        %1085 = vmatprep.subr.bf16.mxu0 0
        %1086 = vmatpush1.bf16.msra.mxu0 0
        %1087 = vmatprep.subr.bf16.mxu0 0
        %1088 = vmatpush1.bf16.msra.mxu0 0
        %1089 = vmatprep.subr.bf16.mxu0 0
        %1090 = vmatpush1.bf16.msra.mxu0 0
        %1091 = vmatprep.subr.bf16.mxu0 0
        %1092 = vmatpush1.bf16.msra.mxu0 0
        %1093 = vmatprep.subr.bf16.mxu0 0
        %1094 = vmatpush1.bf16.msra.mxu0 0
        %1095 = vmatprep.subr.bf16.mxu0 0
        %1096 = vmatpush1.bf16.msra.mxu0 0
        %1097 = vmatprep.subr.bf16.mxu0 0
        %1098 = vmatpush1.bf16.msra.mxu0 0
        %1099 = vmatprep.mubr.bf16.mxu0 0
        %1100 = vmatmul.mubr.bf16.gmra.mrb[0].mxu0 %v1065
        %v1101 = vpop.f32.mrb[0].mxu0
        %v1102 = vadd.f32 %v1037, %v1101
        %v1103 = vpop.f32.mrb[0].mxu0
        %v1104 = vpop.f32.mrb[0].mxu0
        %v1105 = vpop.f32.mrb[0].mxu0
        %1106 = vdwg.mxu0
        %v1107 = vadd.f32 %v1102, %v435
        %1108 = vst.msk [vmem:[%s433] sm:$0xff] %vm436, %v1107
        %s1109 = sand.u32 %s217, 1
        %s1110 = scalar_lea.sflag [#allocation4], %s1109
        %s1111 = sand.u32 %s217, 1
        %s1112 = smul.addr %s1111, 8
        %s1113 = scalar_lea.vmem [#allocation16], %s1112
        // Predicated region
        $region85: #{_lambda_.17} parent=51 // pred_check
          %p1114 = pneg %p227
        $region86: #{_lambda_.17} parent=51 // pred_check_branch
          %1116 = sbr.rel (%p1114) target = $region88
        $region87: #{_lambda_.17} parent=51 // pred_region
          %s1118 = ssub.s32 128, 128
          %1119 = vsyncadd %s1110, %s1118
          %s1120 = smul.addr %s31, 128
          %s1121 = scalar_lea.hbm %s8, %s1120
          %s1123 = sshll.u32 %s1113, 4
          %s1124 = int_to_ptr.vmem [resolvable:$true] %s1123
          %1126 = dma.vmem_to_hbm [thread:$0]  %s1124, 128, %s1121, %s1110
        $region88: #{_lambda_.17} parent=51 // pred_fallthru
          _
      $region52: #{_lambda_.17} parent=5 // pred_fallthru
        _
      %p1127 = scmp.le.s32.totalorder 2, %s26
      // Predicated region
      $region89: #{_lambda_.17} parent=5 // pred_check
        %p1128 = pneg %p1127
      $region90: #{_lambda_.17} parent=5 // pred_check_branch
        %1130 = sbr.rel (%p1128) target = $region92
      $region91: #{_lambda_.17} parent=5 // pred_region
        %s1131 = ssub.s32 %s26, 2
        // Predicated region
        $region93: #{_lambda_.17} parent=91 // pred_check
          %p1132 = pneg %p233
        $region94: #{_lambda_.17} parent=91 // pred_check_branch
          %1134 = sbr.rel (%p1132) target = $region96
        $region95: #{_lambda_.17} parent=91 // pred_region
          %s1135 = sand.u32 %s218, 1
          %s1136 = scalar_lea.sflag [#allocation4], %s1135
          %s1137 = sand.u32 %s218, 1
          %s1138 = smul.addr %s1137, 8
          %s1139 = scalar_lea.vmem [#allocation16], %s1138
          %1140 = dma.done %s1136, 128
        $region96: #{_lambda_.17} parent=91 // pred_fallthru
          _
      $region92: #{_lambda_.17} parent=5 // pred_fallthru
        _
    $region6: #{_lambda_.17} parent=1 // loop_footer
      %s30 = sadd.s32 1, %s26
    $region7: #{_lambda_.17} parent=1 // loop_footer_branch
      %25 = sbr.rel target = $region3
    $region8: #{_lambda_.17} parent=1 // loop_exit
      _
    %1141 = vsyncpa [#allocation3], 1
    %s1142 = scalar_lea.sflag [#allocation3], 1
    %1143 = vsyncpa %s1142, 1
    %1144 = vsyncpa [#allocation6], 1
    %s1145 = scalar_lea.sflag [#allocation6], 1
    %1146 = vsyncpa %s1145, 1
    %1147 = vsyncpa [#allocation9], 1
    %1148 = vsyncpa [#allocation12], 1
    %1149 = vsyncpa [#allocation15], 1
    %1150 = vsyncpa [#allocation4], 1
    %s1151 = scalar_lea.sflag [#allocation4], 1
    %1152 = vsyncpa %s1151, 1

// kernel: _lambda_.21
$region0: #{_lambda_.21}
  #allocation0 [shape = 'u32[]', space=smem, size = 0x4, offset = 0x4, fixed_abs, tag = 'smem constant byte address 0x4 - core index']
  #allocation1 [shape = 'u32[144,128]{1,0:T(1,128)}', space=vmem, size = 0x12000, scoped, tag = 'internal scratch']
  %s0 = inlined_call_operand.hbm [shape: f32[16,32], index: 0, kind: input, shape index: {}]
  %s1 = inlined_call_operand.hbm [shape: f32[1,32], index: 1, kind: input, shape index: {}]
  %s2 = inlined_call_operand.hbm [shape: f32[1,32], index: 2, kind: input, shape index: {}]
  %s3 = inlined_call_operand.hbm [shape: bf16[32,64], index: 3, kind: input, shape index: {}]
  %s4 = inlined_call_operand.hbm [shape: f32[1,64], index: 4, kind: input, shape index: {}]
  %s5 = inlined_call_operand.hbm [shape: bf16[64,32], index: 5, kind: input, shape index: {}]
  %s6 = inlined_call_operand.hbm [shape: f32[1,32], index: 6, kind: input, shape index: {}]
  %s7 = inlined_call_operand.hbm [shape: f32[16,32], index: 7, kind: output, shape index: {}]
  %s8 = sld [smem:[#allocation0]]
  $region89: #{_lambda_.21} parent=0
    _
  %s10 = ssub.s32 1, %s8
  %s11 = scalar_select 0, %s10, %s8
  $region1: #{_lambda_.21} parent=0
    #allocation2 [shape = 'u8[8192]{0}', space=vmem, size = 0x2000, scoped, tag = 'input window, operand 0']
    #allocation3 [shape = 's32[2]{0}', space=sflag, size = 0x8, scoped, tag = 'scoped memory for _lambda_.21']
    #allocation4 [shape = 's32[2]{0}', space=sflag, size = 0x8, scoped, tag = 'scoped memory for _lambda_.21']
    #allocation5 [shape = 'u8[512]{0}', space=vmem, size = 0x400, scoped, tag = 'input window, operand 1, single buffered']
    #allocation6 [shape = 's32[1]{0}', space=sflag, size = 0x4, scoped, tag = 'scoped memory for _lambda_.21']
    #allocation7 [shape = 'u8[512]{0}', space=vmem, size = 0x400, scoped, tag = 'input window, operand 2, single buffered']
    #allocation8 [shape = 'u8[8192]{0}', space=vmem, size = 0x2000, scoped, tag = 'input window, operand 3, single buffered']
    #allocation9 [shape = 's32[1]{0}', space=sflag, size = 0x4, scoped, tag = 'scoped memory for _lambda_.21']
    #allocation10 [shape = 'u8[512]{0}', space=vmem, size = 0x400, scoped, tag = 'input window, operand 4, single buffered']
    #allocation11 [shape = 'u8[16384]{0}', space=vmem, size = 0x4000, scoped, tag = 'input window, operand 5, single buffered']
    #allocation12 [shape = 's32[1]{0}', space=sflag, size = 0x4, scoped, tag = 'scoped memory for _lambda_.21']
    #allocation13 [shape = 'u8[512]{0}', space=vmem, size = 0x400, scoped, tag = 'input window, operand 6, single buffered']
    #allocation14 [shape = 'u8[8192]{0}', space=vmem, size = 0x2000, scoped, tag = 'output window, operand 0']
    %12 = vsyncpa [#allocation3], 0
    %s13 = scalar_lea.sflag [#allocation3], 1
    %14 = vsyncpa %s13, 0
    %15 = vsyncpa [#allocation6], 0
    %16 = vsyncpa [#allocation9], 0
    %17 = vsyncpa [#allocation12], 0
    %18 = vsyncpa [#allocation4], 0
    %s19 = scalar_lea.sflag [#allocation4], 1
    %20 = vsyncpa %s19, 0
    loop: start=0, step=1, limit=4
    $region2: #{_lambda_.21} parent=1 // loop_pre_header
      _
    $region3: #{_lambda_.21} parent=1 // loop_header
      %s22 = sphi 0, %s26
      %p23 = scmp.ge.s32.totalorder %s22, 4
      %s32 = sphi 0, %s34
      %s35 = sphi 0, %s32
      %s36 = sphi 0, %s35
      %s52 = sphi 0, %s36
      %s56 = sphi 0, %s56
      %s58 = sphi 0, %s56
      %s59 = sphi 0, %s58
      %s73 = sphi 0, %s59
      %s77 = sphi 0, %s77
      %s79 = sphi 0, %s77
      %s80 = sphi 0, %s79
      %s94 = sphi 0, %s80
      %s98 = sphi 0, %s98
      %s100 = sphi 0, %s98
      %s101 = sphi 0, %s100
      %s115 = sphi 0, %s101
      %s119 = sphi 0, %s119
      %s121 = sphi 0, %s119
      %s122 = sphi 0, %s121
      %s136 = sphi 0, %s122
      %s140 = sphi 0, %s140
      %s142 = sphi 0, %s140
      %s143 = sphi 0, %s142
      %s157 = sphi 0, %s143
      %s161 = sphi 0, %s161
      %s163 = sphi 0, %s161
      %s164 = sphi 0, %s163
      %s178 = sphi 0, %s164
      %s184 = sphi 0, %s186
      %s187 = sphi 0, %s184
      %s188 = sphi 0, %s187
      %s204 = sphi 0, %s188
    $region4: #{_lambda_.21} parent=1 // loop_header_branch
      %25 = sbr.rel (%p23) target = $region8
    $region5: #{_lambda_.21} parent=1 // loop_body
      %s27 = ssub.s32 %s22, 1
      %s28 = ssub.s32 %s22, 2
      %s29 = sadd.s32 %s22, 1
      %s30 = ssub.s32 %s22, %s29
      %p31 = scmp.eq.s32.totalorder %s30, 0
      %s33 = sadd.s32 %s32, 1
      %s34 = scalar_select %p31, %s32, %s33
      %p37 = pneg %p31
      %p38 = scmp.eq.s32.totalorder %s22, 1
      %p39 = por %p37, %p38
      %p40 = scmp.ne.s32.totalorder %s32, %s35
      %p41 = scmp.eq.s32.totalorder %s22, 0
      %p42 = por %p40, %p41
      %p43 = scmp.ne.s32.totalorder %s32, %s35
      %p44 = scmp.eq.s32.totalorder %s27, 1
      %p45 = por %p43, %p44
      %p46 = scmp.ne.s32.totalorder %s35, %s36
      %p47 = scmp.eq.s32.totalorder %s27, 0
      %p48 = por %p46, %p47
      %p49 = scmp.ne.s32.totalorder %s35, %s36
      %p50 = scmp.eq.s32.totalorder %s28, 1
      %p51 = por %p49, %p50
      %p53 = scmp.ne.s32.totalorder %s36, %s52
      %p54 = scmp.eq.s32.totalorder %s28, 0
      %p55 = por %p53, %p54
      %s57 = sadd.s32 %s56, 1
      %p60 = scmp.eq.s32.totalorder %s22, 1
      %p61 = scmp.ne.s32.totalorder %s56, %s58
      %p62 = scmp.eq.s32.totalorder %s22, 0
      %p63 = por %p61, %p62
      %p64 = scmp.ne.s32.totalorder %s56, %s58
      %p65 = scmp.eq.s32.totalorder %s27, 1
      %p66 = por %p64, %p65
      %p67 = scmp.ne.s32.totalorder %s58, %s59
      %p68 = scmp.eq.s32.totalorder %s27, 0
      %p69 = por %p67, %p68
      %p70 = scmp.ne.s32.totalorder %s58, %s59
      %p71 = scmp.eq.s32.totalorder %s28, 1
      %p72 = por %p70, %p71
      %p74 = scmp.ne.s32.totalorder %s59, %s73
      %p75 = scmp.eq.s32.totalorder %s28, 0
      %p76 = por %p74, %p75
      %s78 = sadd.s32 %s77, 1
      %p81 = scmp.eq.s32.totalorder %s22, 1
      %p82 = scmp.ne.s32.totalorder %s77, %s79
      %p83 = scmp.eq.s32.totalorder %s22, 0
      %p84 = por %p82, %p83
      %p85 = scmp.ne.s32.totalorder %s77, %s79
      %p86 = scmp.eq.s32.totalorder %s27, 1
      %p87 = por %p85, %p86
      %p88 = scmp.ne.s32.totalorder %s79, %s80
      %p89 = scmp.eq.s32.totalorder %s27, 0
      %p90 = por %p88, %p89
      %p91 = scmp.ne.s32.totalorder %s79, %s80
      %p92 = scmp.eq.s32.totalorder %s28, 1
      %p93 = por %p91, %p92
      %p95 = scmp.ne.s32.totalorder %s80, %s94
      %p96 = scmp.eq.s32.totalorder %s28, 0
      %p97 = por %p95, %p96
      %s99 = sadd.s32 %s98, 1
      %p102 = scmp.eq.s32.totalorder %s22, 1
      %p103 = scmp.ne.s32.totalorder %s98, %s100
      %p104 = scmp.eq.s32.totalorder %s22, 0
      %p105 = por %p103, %p104
      %p106 = scmp.ne.s32.totalorder %s98, %s100
      %p107 = scmp.eq.s32.totalorder %s27, 1
      %p108 = por %p106, %p107
      %p109 = scmp.ne.s32.totalorder %s100, %s101
      %p110 = scmp.eq.s32.totalorder %s27, 0
      %p111 = por %p109, %p110
      %p112 = scmp.ne.s32.totalorder %s100, %s101
      %p113 = scmp.eq.s32.totalorder %s28, 1
      %p114 = por %p112, %p113
      %p116 = scmp.ne.s32.totalorder %s101, %s115
      %p117 = scmp.eq.s32.totalorder %s28, 0
      %p118 = por %p116, %p117
      %s120 = sadd.s32 %s119, 1
      %p123 = scmp.eq.s32.totalorder %s22, 1
      %p124 = scmp.ne.s32.totalorder %s119, %s121
      %p125 = scmp.eq.s32.totalorder %s22, 0
      %p126 = por %p124, %p125
      %p127 = scmp.ne.s32.totalorder %s119, %s121
      %p128 = scmp.eq.s32.totalorder %s27, 1
      %p129 = por %p127, %p128
      %p130 = scmp.ne.s32.totalorder %s121, %s122
      %p131 = scmp.eq.s32.totalorder %s27, 0
      %p132 = por %p130, %p131
      %p133 = scmp.ne.s32.totalorder %s121, %s122
      %p134 = scmp.eq.s32.totalorder %s28, 1
      %p135 = por %p133, %p134
      %p137 = scmp.ne.s32.totalorder %s122, %s136
      %p138 = scmp.eq.s32.totalorder %s28, 0
      %p139 = por %p137, %p138
      %s141 = sadd.s32 %s140, 1
      %p144 = scmp.eq.s32.totalorder %s22, 1
      %p145 = scmp.ne.s32.totalorder %s140, %s142
      %p146 = scmp.eq.s32.totalorder %s22, 0
      %p147 = por %p145, %p146
      %p148 = scmp.ne.s32.totalorder %s140, %s142
      %p149 = scmp.eq.s32.totalorder %s27, 1
      %p150 = por %p148, %p149
      %p151 = scmp.ne.s32.totalorder %s142, %s143
      %p152 = scmp.eq.s32.totalorder %s27, 0
      %p153 = por %p151, %p152
      %p154 = scmp.ne.s32.totalorder %s142, %s143
      %p155 = scmp.eq.s32.totalorder %s28, 1
      %p156 = por %p154, %p155
      %p158 = scmp.ne.s32.totalorder %s143, %s157
      %p159 = scmp.eq.s32.totalorder %s28, 0
      %p160 = por %p158, %p159
      %s162 = sadd.s32 %s161, 1
      %p165 = scmp.eq.s32.totalorder %s22, 1
      %p166 = scmp.ne.s32.totalorder %s161, %s163
      %p167 = scmp.eq.s32.totalorder %s22, 0
      %p168 = por %p166, %p167
      %p169 = scmp.ne.s32.totalorder %s161, %s163
      %p170 = scmp.eq.s32.totalorder %s27, 1
      %p171 = por %p169, %p170
      %p172 = scmp.ne.s32.totalorder %s163, %s164
      %p173 = scmp.eq.s32.totalorder %s27, 0
      %p174 = por %p172, %p173
      %p175 = scmp.ne.s32.totalorder %s163, %s164
      %p176 = scmp.eq.s32.totalorder %s28, 1
      %p177 = por %p175, %p176
      %p179 = scmp.ne.s32.totalorder %s164, %s178
      %p180 = scmp.eq.s32.totalorder %s28, 0
      %p181 = por %p179, %p180
      %s182 = ssub.s32 %s22, %s29
      %p183 = scmp.eq.s32.totalorder %s182, 0
      %s185 = sadd.s32 %s184, 1
      %s186 = scalar_select %p183, %s184, %s185
      %p189 = pneg %p183
      %p190 = scmp.eq.s32.totalorder %s22, 1
      %p191 = por %p189, %p190
      %p192 = scmp.ne.s32.totalorder %s184, %s187
      %p193 = scmp.eq.s32.totalorder %s22, 0
      %p194 = por %p192, %p193
      %p195 = scmp.ne.s32.totalorder %s184, %s187
      %p196 = scmp.eq.s32.totalorder %s27, 1
      %p197 = por %p195, %p196
      %p198 = scmp.ne.s32.totalorder %s187, %s188
      %p199 = scmp.eq.s32.totalorder %s27, 0
      %p200 = por %p198, %p199
      %p201 = scmp.ne.s32.totalorder %s187, %s188
      %p202 = scmp.eq.s32.totalorder %s28, 1
      %p203 = por %p201, %p202
      %p205 = scmp.ne.s32.totalorder %s188, %s204
      %p206 = scmp.eq.s32.totalorder %s28, 0
      %p207 = por %p205, %p206
      %p208 = scmp.le.s32.totalorder 1, %s22
      %p209 = scmp.lt.s32.totalorder %s22, 3
      %p210 = pnand %p208, %p209
      %p211 = pneg %p210
      // Predicated region
      $region9: #{_lambda_.21} parent=5 // pred_check
        _
      $region10: #{_lambda_.21} parent=5 // pred_check_branch
        %213 = sbr.rel (%p210) target = $region12
      $region11: #{_lambda_.21} parent=5 // pred_region
        %s214 = ssub.s32 %s22, 1
        // Predicated region
        $region13: #{_lambda_.21} parent=11 // pred_check
          %p215 = pneg %p69
        $region14: #{_lambda_.21} parent=11 // pred_check_branch
          %217 = sbr.rel (%p215) target = $region16
        $region15: #{_lambda_.21} parent=11 // pred_region
          %s219 = ssub.s32 16, 16
          %220 = vsyncadd [#allocation6], %s219
          %s222 = sshll.u32 [#allocation5], 4
          %s223 = int_to_ptr.vmem [resolvable:$true] %s222
          %225 = dma.hbm_to_vmem [thread:$0]  %s1, 16, %s223, [#allocation6]
        $region16: #{_lambda_.21} parent=11 // pred_fallthru
          _
        // Predicated region
        $region17: #{_lambda_.21} parent=11 // pred_check
          %p226 = pneg %p90
        $region18: #{_lambda_.21} parent=11 // pred_check_branch
          %228 = sbr.rel (%p226) target = $region20
        $region19: #{_lambda_.21} parent=11 // pred_region
          %s230 = ssub.s32 16, 16
          %231 = vsyncadd [#allocation6], %s230
          %s233 = sshll.u32 [#allocation7], 4
          %s234 = int_to_ptr.vmem [resolvable:$true] %s233
          %236 = dma.hbm_to_vmem [thread:$0]  %s2, 16, %s234, [#allocation6]
        $region20: #{_lambda_.21} parent=11 // pred_fallthru
          _
        // Predicated region
        $region21: #{_lambda_.21} parent=11 // pred_check
          %p237 = pneg %p111
        $region22: #{_lambda_.21} parent=11 // pred_check_branch
          %239 = sbr.rel (%p237) target = $region24
        $region23: #{_lambda_.21} parent=11 // pred_region
          %s241 = ssub.s32 256, 256
          %242 = vsyncadd [#allocation9], %s241
          %s243 = sshll.u32 [#allocation8], 4
          %s244 = int_to_ptr.vmem [resolvable:$true] %s243
          %249 = dma.hbm_to_vmem [thread:$0]  %s3, 256, %s244, [#allocation9], 64, 64, 4
        $region24: #{_lambda_.21} parent=11 // pred_fallthru
          _
        // Predicated region
        $region25: #{_lambda_.21} parent=11 // pred_check
          %p250 = pneg %p132
        $region26: #{_lambda_.21} parent=11 // pred_check_branch
          %252 = sbr.rel (%p250) target = $region28
        $region27: #{_lambda_.21} parent=11 // pred_region
          %s254 = ssub.s32 16, 16
          %255 = vsyncadd [#allocation9], %s254
          %s257 = sshll.u32 [#allocation10], 4
          %s258 = int_to_ptr.vmem [resolvable:$true] %s257
          %260 = dma.hbm_to_vmem [thread:$0]  %s4, 16, %s258, [#allocation9]
        $region28: #{_lambda_.21} parent=11 // pred_fallthru
          _
        // Predicated region
        $region29: #{_lambda_.21} parent=11 // pred_check
          %p261 = pneg %p153
        $region30: #{_lambda_.21} parent=11 // pred_check_branch
          %263 = sbr.rel (%p261) target = $region32
        $region31: #{_lambda_.21} parent=11 // pred_region
          %s265 = ssub.s32 512, 512
          %266 = vsyncadd [#allocation12], %s265
          %s267 = sshll.u32 [#allocation11], 4
          %s268 = int_to_ptr.vmem [resolvable:$true] %s267
          %273 = dma.hbm_to_vmem [thread:$0]  %s5, 512, %s268, [#allocation12], 64, 64, 4
        $region32: #{_lambda_.21} parent=11 // pred_fallthru
          _
        // Predicated region
        $region33: #{_lambda_.21} parent=11 // pred_check
          %p274 = pneg %p174
        $region34: #{_lambda_.21} parent=11 // pred_check_branch
          %276 = sbr.rel (%p274) target = $region36
        $region35: #{_lambda_.21} parent=11 // pred_region
          %s278 = ssub.s32 16, 16
          %279 = vsyncadd [#allocation12], %s278
          %s281 = sshll.u32 [#allocation13], 4
          %s282 = int_to_ptr.vmem [resolvable:$true] %s281
          %284 = dma.hbm_to_vmem [thread:$0]  %s6, 16, %s282, [#allocation12]
        $region36: #{_lambda_.21} parent=11 // pred_fallthru
          _
      $region12: #{_lambda_.21} parent=5 // pred_fallthru
        _
      %p285 = scmp.lt.s32.totalorder %s22, 2
      // Predicated region
      $region37: #{_lambda_.21} parent=5 // pred_check
        %p286 = pneg %p285
      $region38: #{_lambda_.21} parent=5 // pred_check_branch
        %288 = sbr.rel (%p286) target = $region40
      $region39: #{_lambda_.21} parent=5 // pred_region
        // Predicated region
        $region41: #{_lambda_.21} parent=39 // pred_check
          %p289 = pneg %p42
        $region42: #{_lambda_.21} parent=39 // pred_check_branch
          %291 = sbr.rel (%p289) target = $region44
        $region43: #{_lambda_.21} parent=39 // pred_region
          %s292 = sand.u32 %s32, 1
          %s293 = scalar_lea.sflag [#allocation3], %s292
          %s294 = sand.u32 %s32, 1
          %s295 = smul.addr %s294, 8
          %s296 = scalar_lea.vmem [#allocation2], %s295
          %s298 = ssub.s32 128, 128
          %299 = vsyncadd %s293, %s298
          %s300 = smul.addr %s22, 128
          %s301 = scalar_lea.hbm %s0, %s300
          %s303 = sshll.u32 %s296, 4
          %s304 = int_to_ptr.vmem [resolvable:$true] %s303
          %306 = dma.hbm_to_vmem [thread:$0]  %s301, 128, %s304, %s293
        $region44: #{_lambda_.21} parent=39 // pred_fallthru
          _
      $region40: #{_lambda_.21} parent=5 // pred_fallthru
        _
      %p307 = scmp.le.s32.totalorder 1, %s22
      %p308 = scmp.lt.s32.totalorder %s22, 3
      %p309 = pnand %p307, %p308
      %p310 = pneg %p309
      // Predicated region
      $region45: #{_lambda_.21} parent=5 // pred_check
        _
      $region46: #{_lambda_.21} parent=5 // pred_check_branch
        %312 = sbr.rel (%p309) target = $region48
      $region47: #{_lambda_.21} parent=5 // pred_region
        %s313 = ssub.s32 %s22, 1
        %s314 = sand.u32 %s35, 1
        %s315 = scalar_lea.sflag [#allocation3], %s314
        %s316 = sand.u32 %s35, 1
        %s317 = smul.addr %s316, 8
        %s318 = scalar_lea.vmem [#allocation2], %s317
        // Predicated region
        $region49: #{_lambda_.21} parent=47 // pred_check
          %p319 = pneg %p48
        $region50: #{_lambda_.21} parent=47 // pred_check_branch
          %321 = sbr.rel (%p319) target = $region52
        $region51: #{_lambda_.21} parent=47 // pred_region
          %322 = dma.done %s315, 128
        $region52: #{_lambda_.21} parent=47 // pred_fallthru
          _
        // Predicated region
        $region53: #{_lambda_.21} parent=47 // pred_check
          %p323 = pneg %p69
        $region54: #{_lambda_.21} parent=47 // pred_check_branch
          %325 = sbr.rel (%p323) target = $region56
        $region55: #{_lambda_.21} parent=47 // pred_region
          %326 = dma.done [#allocation6], 16
        $region56: #{_lambda_.21} parent=47 // pred_fallthru
          _
        // Predicated region
        $region57: #{_lambda_.21} parent=47 // pred_check
          %p327 = pneg %p90
        $region58: #{_lambda_.21} parent=47 // pred_check_branch
          %329 = sbr.rel (%p327) target = $region60
        $region59: #{_lambda_.21} parent=47 // pred_region
          %330 = dma.done [#allocation6], 16
        $region60: #{_lambda_.21} parent=47 // pred_fallthru
          _
        // Predicated region
        $region61: #{_lambda_.21} parent=47 // pred_check
          %p331 = pneg %p111
        $region62: #{_lambda_.21} parent=47 // pred_check_branch
          %333 = sbr.rel (%p331) target = $region64
        $region63: #{_lambda_.21} parent=47 // pred_region
          %334 = dma.done [#allocation9], 256
        $region64: #{_lambda_.21} parent=47 // pred_fallthru
          _
        // Predicated region
        $region65: #{_lambda_.21} parent=47 // pred_check
          %p335 = pneg %p132
        $region66: #{_lambda_.21} parent=47 // pred_check_branch
          %337 = sbr.rel (%p335) target = $region68
        $region67: #{_lambda_.21} parent=47 // pred_region
          %338 = dma.done [#allocation9], 16
        $region68: #{_lambda_.21} parent=47 // pred_fallthru
          _
        // Predicated region
        $region69: #{_lambda_.21} parent=47 // pred_check
          %p339 = pneg %p153
        $region70: #{_lambda_.21} parent=47 // pred_check_branch
          %341 = sbr.rel (%p339) target = $region72
        $region71: #{_lambda_.21} parent=47 // pred_region
          %342 = dma.done [#allocation12], 512
        $region72: #{_lambda_.21} parent=47 // pred_fallthru
          _
        // Predicated region
        $region73: #{_lambda_.21} parent=47 // pred_check
          %p343 = pneg %p174
        $region74: #{_lambda_.21} parent=47 // pred_check_branch
          %345 = sbr.rel (%p343) target = $region76
        $region75: #{_lambda_.21} parent=47 // pred_region
          %346 = dma.done [#allocation12], 16
        $region76: #{_lambda_.21} parent=47 // pred_fallthru
          _
        %s347 = sand.u32 %s35, 1
        %s348 = scalar_lea.sflag [#allocation3], %s347
        %s349 = sand.u32 %s35, 1
        %s350 = smul.addr %s349, 8
        %s351 = scalar_lea.vmem [#allocation2], %s350
        %p352 = pneg %p48
        %p353 = pneg %p45
        %p354 = pneg %p69
        %p355 = pneg %p66
        %p356 = pneg %p90
        %p357 = pneg %p87
        %p358 = pneg %p111
        %p359 = pneg %p108
        %p360 = pneg %p132
        %p361 = pneg %p129
        %p362 = pneg %p153
        %p363 = pneg %p150
        %p364 = pneg %p174
        %p365 = pneg %p171
        %p366 = pneg %p200
        %p367 = pneg %p197
        %s368 = sand.u32 %s187, 1
        %s369 = scalar_lea.sflag [#allocation4], %s368
        %s370 = sand.u32 %s187, 1
        %s371 = smul.addr %s370, 8
        %s372 = scalar_lea.vmem [#allocation14], %s371
        %v374 = vld [vmem:[%s318] sm:$0xff]
        %vm375 = vcmask 261120
        %v376 = vsel %vm375, %v374, 0.0
        %377 = vadd.xlane.f32.xlu0 %v376
        %v378 = vpop.xlane.xlu0 %377
        %v379 = vrcp.pop 32.0
        %v380 = vmul.f32 %v378, %v379
        %v381 = vsub.f32 %v374, %v380
        %v382 = vmul.f32 %v381, %v381
        %v383 = vsel %vm375, %v382, 0.0
        %384 = vadd.xlane.f32.xlu0 %v383
        %v385 = vpop.xlane.xlu0 %384
        %v386 = vmul.f32 %v385, %v379
        %v387 = vadd.f32 %v386, 1e-05
        %v388 = vrsqrt.pop %v387
        %v389 = vmul.f32 %v381, %v388
        %v390 = vld [vmem:[#allocation5] sm:$0x1]
        %v392 = vlaneseq
        %v393 = vshrl.u32 %v392, 7
        %v394 = vsub.s32 0, %v393
        %v395 = vrot.slane %v390, %v394
        %v397 = vmul.f32 %v389, %v395
        %v398 = vld [vmem:[#allocation7] sm:$0x1]
        %v400 = vlaneseq
        %v401 = vshrl.u32 %v400, 7
        %v402 = vsub.s32 0, %v401
        %v403 = vrot.slane %v398, %v402
        %v405 = vadd.f32 %v397, %v403
        %v406 = vpack.c.bf16 %v405, %v405
        %v407 = vld [vmem:[#allocation8] sm:$0xf]
        %v408 = vld [vmem:[#allocation8 + $0x4] sm:$0xf]
        %v409 = vld [vmem:[#allocation8 + $0x8] sm:$0xf]
        %v410 = vld [vmem:[#allocation8 + $0xc] sm:$0xf]
        %v411 = vld [vmem:[#allocation10] sm:$0x1]
        %v413 = vlaneseq
        %v414 = vshrl.u32 %v413, 7
        %v415 = vsub.s32 0, %v414
        %v416 = vrot.slane %v411, %v415
        %v422 = vunpack.c.l.b16 %v407
        %v423 = vunpack.c.l.b16 %v408
        %v424 = vunpack.c.l.b16 %v409
        %v425 = vunpack.c.l.b16 %v410
        %v426 = vpack.c.b16 %v423, %v422
        %v427 = vpack.c.b16 %v425, %v424
        %v431 = vsel %vm375, %v406, 0
        %433 = vmatprep.subr.bf16.mxu0 0
        %434 = vmatpush1.bf16.msra.mxu0 %v426
        %435 = vmatprep.subr.bf16.mxu0 0
        %436 = vmatpush1.bf16.msra.mxu0 %v427
        %437 = vmatprep.subr.bf16.mxu0 0
        %438 = vmatpush1.bf16.msra.mxu0 0
        %439 = vmatprep.subr.bf16.mxu0 0
        %440 = vmatpush1.bf16.msra.mxu0 0
        %441 = vmatprep.subr.bf16.mxu0 0
        %442 = vmatpush1.bf16.msra.mxu0 0
        %443 = vmatprep.subr.bf16.mxu0 0
        %444 = vmatpush1.bf16.msra.mxu0 0
        %445 = vmatprep.subr.bf16.mxu0 0
        %446 = vmatpush1.bf16.msra.mxu0 0
        %447 = vmatprep.subr.bf16.mxu0 0
        %448 = vmatpush1.bf16.msra.mxu0 0
        %449 = vmatprep.subr.bf16.mxu0 0
        %450 = vmatpush1.bf16.msra.mxu0 0
        %451 = vmatprep.subr.bf16.mxu0 0
        %452 = vmatpush1.bf16.msra.mxu0 0
        %453 = vmatprep.subr.bf16.mxu0 0
        %454 = vmatpush1.bf16.msra.mxu0 0
        %455 = vmatprep.subr.bf16.mxu0 0
        %456 = vmatpush1.bf16.msra.mxu0 0
        %457 = vmatprep.subr.bf16.mxu0 0
        %458 = vmatpush1.bf16.msra.mxu0 0
        %459 = vmatprep.subr.bf16.mxu0 0
        %460 = vmatpush1.bf16.msra.mxu0 0
        %461 = vmatprep.subr.bf16.mxu0 0
        %462 = vmatpush1.bf16.msra.mxu0 0
        %463 = vmatprep.subr.bf16.mxu0 0
        %464 = vmatpush1.bf16.msra.mxu0 0
        %465 = vmatprep.mubr.bf16.mxu0 0
        %466 = vmatmul.mubr.bf16.gmra.mrb[0].mxu0 %v431
        %v467 = vpop.f32.mrb[0].mxu0
        %v468 = vadd.f32 %v416, %v467
        %v469 = vpop.f32.mrb[0].mxu0
        %v470 = vpop.f32.mrb[0].mxu0
        %v471 = vpop.f32.mrb[0].mxu0
        %472 = vdwg.mxu0
        %v473 = vmax.f32 %v468, 0.0
        %v474 = vpack.c.bf16 %v473, %v473
        %v475 = vld [vmem:[#allocation11] sm:$0xf]
        %v476 = vld [vmem:[#allocation11 + $0x4] sm:$0xf]
        %v477 = vld [vmem:[#allocation11 + $0x8] sm:$0xf]
        %v478 = vld [vmem:[#allocation11 + $0xc] sm:$0xf]
        %v479 = vld [vmem:[#allocation11 + $0x10] sm:$0xf]
        %v480 = vld [vmem:[#allocation11 + $0x14] sm:$0xf]
        %v481 = vld [vmem:[#allocation11 + $0x18] sm:$0xf]
        %v482 = vld [vmem:[#allocation11 + $0x1c] sm:$0xf]
        %v483 = vld [vmem:[#allocation13] sm:$0x1]
        %v485 = vlaneseq
        %v486 = vshrl.u32 %v485, 7
        %v487 = vsub.s32 0, %v486
        %v488 = vrot.slane %v483, %v487
        %v498 = vunpack.c.l.b16 %v475
        %v499 = vunpack.c.l.b16 %v476
        %v500 = vunpack.c.l.b16 %v477
        %v501 = vunpack.c.l.b16 %v478
        %v502 = vunpack.c.l.b16 %v479
        %v503 = vunpack.c.l.b16 %v480
        %v504 = vunpack.c.l.b16 %v481
        %v505 = vunpack.c.l.b16 %v482
        %v506 = vpack.c.b16 %v499, %v498
        %v507 = vpack.c.b16 %v501, %v500
        %v508 = vpack.c.b16 %v503, %v502
        %v509 = vpack.c.b16 %v505, %v504
        %vm514 = vcmask 523264
        %v516 = vsel %vm514, %v474, 0
        %518 = vmatprep.subr.bf16.mxu0 0
        %519 = vmatpush1.bf16.msra.mxu0 %v506
        %520 = vmatprep.subr.bf16.mxu0 0
        %521 = vmatpush1.bf16.msra.mxu0 %v507
        %522 = vmatprep.subr.bf16.mxu0 0
        %523 = vmatpush1.bf16.msra.mxu0 %v508
        %524 = vmatprep.subr.bf16.mxu0 0
        %525 = vmatpush1.bf16.msra.mxu0 %v509
        %526 = vmatprep.subr.bf16.mxu0 0
        %527 = vmatpush1.bf16.msra.mxu0 0
        %528 = vmatprep.subr.bf16.mxu0 0
        %529 = vmatpush1.bf16.msra.mxu0 0
        %530 = vmatprep.subr.bf16.mxu0 0
        %531 = vmatpush1.bf16.msra.mxu0 0
        %532 = vmatprep.subr.bf16.mxu0 0
        %533 = vmatpush1.bf16.msra.mxu0 0
        %534 = vmatprep.subr.bf16.mxu0 0
        %535 = vmatpush1.bf16.msra.mxu0 0
        %536 = vmatprep.subr.bf16.mxu0 0
        %537 = vmatpush1.bf16.msra.mxu0 0
        %538 = vmatprep.subr.bf16.mxu0 0
        %539 = vmatpush1.bf16.msra.mxu0 0
        %540 = vmatprep.subr.bf16.mxu0 0
        %541 = vmatpush1.bf16.msra.mxu0 0
        %542 = vmatprep.subr.bf16.mxu0 0
        %543 = vmatpush1.bf16.msra.mxu0 0
        %544 = vmatprep.subr.bf16.mxu0 0
        %545 = vmatpush1.bf16.msra.mxu0 0
        %546 = vmatprep.subr.bf16.mxu0 0
        %547 = vmatpush1.bf16.msra.mxu0 0
        %548 = vmatprep.subr.bf16.mxu0 0
        %549 = vmatpush1.bf16.msra.mxu0 0
        %550 = vmatprep.mubr.bf16.mxu0 0
        %551 = vmatmul.mubr.bf16.gmra.mrb[0].mxu0 %v516
        %v552 = vpop.f32.mrb[0].mxu0
        %v553 = vadd.f32 %v488, %v552
        %v554 = vpop.f32.mrb[0].mxu0
        %v555 = vpop.f32.mrb[0].mxu0
        %v556 = vpop.f32.mrb[0].mxu0
        %557 = vdwg.mxu0
        %v558 = vadd.f32 %v553, %v374
        %559 = vst.msk [vmem:[%s372] sm:$0xff] %vm375, %v558
        %s560 = sand.u32 %s187, 1
        %s561 = scalar_lea.sflag [#allocation4], %s560
        %s562 = sand.u32 %s187, 1
        %s563 = smul.addr %s562, 8
        %s564 = scalar_lea.vmem [#allocation14], %s563
        // Predicated region
        $region77: #{_lambda_.21} parent=47 // pred_check
          %p565 = pneg %p197
        $region78: #{_lambda_.21} parent=47 // pred_check_branch
          %567 = sbr.rel (%p565) target = $region80
        $region79: #{_lambda_.21} parent=47 // pred_region
          %s569 = ssub.s32 128, 128
          %570 = vsyncadd %s561, %s569
          %s571 = smul.addr %s27, 128
          %s572 = scalar_lea.hbm %s7, %s571
          %s574 = sshll.u32 %s564, 4
          %s575 = int_to_ptr.vmem [resolvable:$true] %s574
          %577 = dma.vmem_to_hbm [thread:$0]  %s575, 128, %s572, %s561
        $region80: #{_lambda_.21} parent=47 // pred_fallthru
          _
      $region48: #{_lambda_.21} parent=5 // pred_fallthru
        _
      %p578 = scmp.le.s32.totalorder 2, %s22
      // Predicated region
      $region81: #{_lambda_.21} parent=5 // pred_check
        %p579 = pneg %p578
      $region82: #{_lambda_.21} parent=5 // pred_check_branch
        %581 = sbr.rel (%p579) target = $region84
      $region83: #{_lambda_.21} parent=5 // pred_region
        %s582 = ssub.s32 %s22, 2
        // Predicated region
        $region85: #{_lambda_.21} parent=83 // pred_check
          %p583 = pneg %p203
        $region86: #{_lambda_.21} parent=83 // pred_check_branch
          %585 = sbr.rel (%p583) target = $region88
        $region87: #{_lambda_.21} parent=83 // pred_region
          %s586 = sand.u32 %s188, 1
          %s587 = scalar_lea.sflag [#allocation4], %s586
          %s588 = sand.u32 %s188, 1
          %s589 = smul.addr %s588, 8
          %s590 = scalar_lea.vmem [#allocation14], %s589
          %591 = dma.done %s587, 128
        $region88: #{_lambda_.21} parent=83 // pred_fallthru
          _
      $region84: #{_lambda_.21} parent=5 // pred_fallthru
        _
    $region6: #{_lambda_.21} parent=1 // loop_footer
      %s26 = sadd.s32 1, %s22
    $region7: #{_lambda_.21} parent=1 // loop_footer_branch
      %21 = sbr.rel target = $region3
    $region8: #{_lambda_.21} parent=1 // loop_exit
      _
    %592 = vsyncpa [#allocation3], 1
    %s593 = scalar_lea.sflag [#allocation3], 1
    %594 = vsyncpa %s593, 1
    %595 = vsyncpa [#allocation6], 1
    %596 = vsyncpa [#allocation9], 1
    %597 = vsyncpa [#allocation12], 1
    %598 = vsyncpa [#allocation4], 1
    %s599 = scalar_lea.sflag [#allocation4], 1
    %600 = vsyncpa %s599, 1

// kernel: _lambda_.29
$region0: #{_lambda_.29}
  #allocation0 [shape = 'u32[]', space=smem, size = 0x4, offset = 0x4, fixed_abs, tag = 'smem constant byte address 0x4 - core index']
  #allocation1 [shape = 'u32[144,128]{1,0:T(1,128)}', space=vmem, size = 0x12000, scoped, tag = 'internal scratch']
  %s0 = inlined_call_operand.hbm [shape: f32[16,32], index: 0, kind: input, shape index: {}]
  %s1 = inlined_call_operand.hbm [shape: f32[1,32], index: 1, kind: input, shape index: {}]
  %s2 = inlined_call_operand.hbm [shape: f32[1,32], index: 2, kind: input, shape index: {}]
  %s3 = inlined_call_operand.hbm [shape: bf16[32,128], index: 3, kind: input, shape index: {}]
  %s4 = inlined_call_operand.hbm [shape: f32[1,128], index: 4, kind: input, shape index: {}]
  %s5 = inlined_call_operand.hbm [shape: bf16[128,32], index: 5, kind: input, shape index: {}]
  %s6 = inlined_call_operand.hbm [shape: f32[1,32], index: 6, kind: input, shape index: {}]
  %s7 = inlined_call_operand.hbm [shape: f32[16,32], index: 7, kind: output, shape index: {}]
  %s8 = sld [smem:[#allocation0]]
  $region89: #{_lambda_.29} parent=0
    _
  %s10 = ssub.s32 1, %s8
  %s11 = scalar_select 0, %s10, %s8
  $region1: #{_lambda_.29} parent=0
    #allocation2 [shape = 'u8[8192]{0}', space=vmem, size = 0x2000, scoped, tag = 'input window, operand 0']
    #allocation3 [shape = 's32[2]{0}', space=sflag, size = 0x8, scoped, tag = 'scoped memory for _lambda_.29']
    #allocation4 [shape = 's32[2]{0}', space=sflag, size = 0x8, scoped, tag = 'scoped memory for _lambda_.29']
    #allocation5 [shape = 'u8[512]{0}', space=vmem, size = 0x400, scoped, tag = 'input window, operand 1, single buffered']
    #allocation6 [shape = 's32[1]{0}', space=sflag, size = 0x4, scoped, tag = 'scoped memory for _lambda_.29']
    #allocation7 [shape = 'u8[512]{0}', space=vmem, size = 0x400, scoped, tag = 'input window, operand 2, single buffered']
    #allocation8 [shape = 'u8[8192]{0}', space=vmem, size = 0x2000, scoped, tag = 'input window, operand 3, single buffered']
    #allocation9 [shape = 's32[1]{0}', space=sflag, size = 0x4, scoped, tag = 'scoped memory for _lambda_.29']
    #allocation10 [shape = 'u8[512]{0}', space=vmem, size = 0x400, scoped, tag = 'input window, operand 4, single buffered']
    #allocation11 [shape = 'u8[32768]{0}', space=vmem, size = 0x8000, scoped, tag = 'input window, operand 5, single buffered']
    #allocation12 [shape = 's32[1]{0}', space=sflag, size = 0x4, scoped, tag = 'scoped memory for _lambda_.29']
    #allocation13 [shape = 'u8[512]{0}', space=vmem, size = 0x400, scoped, tag = 'input window, operand 6, single buffered']
    #allocation14 [shape = 'u8[8192]{0}', space=vmem, size = 0x2000, scoped, tag = 'output window, operand 0']
    %12 = vsyncpa [#allocation3], 0
    %s13 = scalar_lea.sflag [#allocation3], 1
    %14 = vsyncpa %s13, 0
    %15 = vsyncpa [#allocation6], 0
    %16 = vsyncpa [#allocation9], 0
    %17 = vsyncpa [#allocation12], 0
    %18 = vsyncpa [#allocation4], 0
    %s19 = scalar_lea.sflag [#allocation4], 1
    %20 = vsyncpa %s19, 0
    loop: start=0, step=1, limit=4
    $region2: #{_lambda_.29} parent=1 // loop_pre_header
      _
    $region3: #{_lambda_.29} parent=1 // loop_header
      %s22 = sphi 0, %s26
      %p23 = scmp.ge.s32.totalorder %s22, 4
      %s32 = sphi 0, %s34
      %s35 = sphi 0, %s32
      %s36 = sphi 0, %s35
      %s52 = sphi 0, %s36
      %s56 = sphi 0, %s56
      %s58 = sphi 0, %s56
      %s59 = sphi 0, %s58
      %s73 = sphi 0, %s59
      %s77 = sphi 0, %s77
      %s79 = sphi 0, %s77
      %s80 = sphi 0, %s79
      %s94 = sphi 0, %s80
      %s98 = sphi 0, %s98
      %s100 = sphi 0, %s98
      %s101 = sphi 0, %s100
      %s115 = sphi 0, %s101
      %s119 = sphi 0, %s119
      %s121 = sphi 0, %s119
      %s122 = sphi 0, %s121
      %s136 = sphi 0, %s122
      %s140 = sphi 0, %s140
      %s142 = sphi 0, %s140
      %s143 = sphi 0, %s142
      %s157 = sphi 0, %s143
      %s161 = sphi 0, %s161
      %s163 = sphi 0, %s161
      %s164 = sphi 0, %s163
      %s178 = sphi 0, %s164
      %s184 = sphi 0, %s186
      %s187 = sphi 0, %s184
      %s188 = sphi 0, %s187
      %s204 = sphi 0, %s188
    $region4: #{_lambda_.29} parent=1 // loop_header_branch
      %25 = sbr.rel (%p23) target = $region8
    $region5: #{_lambda_.29} parent=1 // loop_body
      %s27 = ssub.s32 %s22, 1
      %s28 = ssub.s32 %s22, 2
      %s29 = sadd.s32 %s22, 1
      %s30 = ssub.s32 %s22, %s29
      %p31 = scmp.eq.s32.totalorder %s30, 0
      %s33 = sadd.s32 %s32, 1
      %s34 = scalar_select %p31, %s32, %s33
      %p37 = pneg %p31
      %p38 = scmp.eq.s32.totalorder %s22, 1
      %p39 = por %p37, %p38
      %p40 = scmp.ne.s32.totalorder %s32, %s35
      %p41 = scmp.eq.s32.totalorder %s22, 0
      %p42 = por %p40, %p41
      %p43 = scmp.ne.s32.totalorder %s32, %s35
      %p44 = scmp.eq.s32.totalorder %s27, 1
      %p45 = por %p43, %p44
      %p46 = scmp.ne.s32.totalorder %s35, %s36
      %p47 = scmp.eq.s32.totalorder %s27, 0
      %p48 = por %p46, %p47
      %p49 = scmp.ne.s32.totalorder %s35, %s36
      %p50 = scmp.eq.s32.totalorder %s28, 1
      %p51 = por %p49, %p50
      %p53 = scmp.ne.s32.totalorder %s36, %s52
      %p54 = scmp.eq.s32.totalorder %s28, 0
      %p55 = por %p53, %p54
      %s57 = sadd.s32 %s56, 1
      %p60 = scmp.eq.s32.totalorder %s22, 1
      %p61 = scmp.ne.s32.totalorder %s56, %s58
      %p62 = scmp.eq.s32.totalorder %s22, 0
      %p63 = por %p61, %p62
      %p64 = scmp.ne.s32.totalorder %s56, %s58
      %p65 = scmp.eq.s32.totalorder %s27, 1
      %p66 = por %p64, %p65
      %p67 = scmp.ne.s32.totalorder %s58, %s59
      %p68 = scmp.eq.s32.totalorder %s27, 0
      %p69 = por %p67, %p68
      %p70 = scmp.ne.s32.totalorder %s58, %s59
      %p71 = scmp.eq.s32.totalorder %s28, 1
      %p72 = por %p70, %p71
      %p74 = scmp.ne.s32.totalorder %s59, %s73
      %p75 = scmp.eq.s32.totalorder %s28, 0
      %p76 = por %p74, %p75
      %s78 = sadd.s32 %s77, 1
      %p81 = scmp.eq.s32.totalorder %s22, 1
      %p82 = scmp.ne.s32.totalorder %s77, %s79
      %p83 = scmp.eq.s32.totalorder %s22, 0
      %p84 = por %p82, %p83
      %p85 = scmp.ne.s32.totalorder %s77, %s79
      %p86 = scmp.eq.s32.totalorder %s27, 1
      %p87 = por %p85, %p86
      %p88 = scmp.ne.s32.totalorder %s79, %s80
      %p89 = scmp.eq.s32.totalorder %s27, 0
      %p90 = por %p88, %p89
      %p91 = scmp.ne.s32.totalorder %s79, %s80
      %p92 = scmp.eq.s32.totalorder %s28, 1
      %p93 = por %p91, %p92
      %p95 = scmp.ne.s32.totalorder %s80, %s94
      %p96 = scmp.eq.s32.totalorder %s28, 0
      %p97 = por %p95, %p96
      %s99 = sadd.s32 %s98, 1
      %p102 = scmp.eq.s32.totalorder %s22, 1
      %p103 = scmp.ne.s32.totalorder %s98, %s100
      %p104 = scmp.eq.s32.totalorder %s22, 0
      %p105 = por %p103, %p104
      %p106 = scmp.ne.s32.totalorder %s98, %s100
      %p107 = scmp.eq.s32.totalorder %s27, 1
      %p108 = por %p106, %p107
      %p109 = scmp.ne.s32.totalorder %s100, %s101
      %p110 = scmp.eq.s32.totalorder %s27, 0
      %p111 = por %p109, %p110
      %p112 = scmp.ne.s32.totalorder %s100, %s101
      %p113 = scmp.eq.s32.totalorder %s28, 1
      %p114 = por %p112, %p113
      %p116 = scmp.ne.s32.totalorder %s101, %s115
      %p117 = scmp.eq.s32.totalorder %s28, 0
      %p118 = por %p116, %p117
      %s120 = sadd.s32 %s119, 1
      %p123 = scmp.eq.s32.totalorder %s22, 1
      %p124 = scmp.ne.s32.totalorder %s119, %s121
      %p125 = scmp.eq.s32.totalorder %s22, 0
      %p126 = por %p124, %p125
      %p127 = scmp.ne.s32.totalorder %s119, %s121
      %p128 = scmp.eq.s32.totalorder %s27, 1
      %p129 = por %p127, %p128
      %p130 = scmp.ne.s32.totalorder %s121, %s122
      %p131 = scmp.eq.s32.totalorder %s27, 0
      %p132 = por %p130, %p131
      %p133 = scmp.ne.s32.totalorder %s121, %s122
      %p134 = scmp.eq.s32.totalorder %s28, 1
      %p135 = por %p133, %p134
      %p137 = scmp.ne.s32.totalorder %s122, %s136
      %p138 = scmp.eq.s32.totalorder %s28, 0
      %p139 = por %p137, %p138
      %s141 = sadd.s32 %s140, 1
      %p144 = scmp.eq.s32.totalorder %s22, 1
      %p145 = scmp.ne.s32.totalorder %s140, %s142
      %p146 = scmp.eq.s32.totalorder %s22, 0
      %p147 = por %p145, %p146
      %p148 = scmp.ne.s32.totalorder %s140, %s142
      %p149 = scmp.eq.s32.totalorder %s27, 1
      %p150 = por %p148, %p149
      %p151 = scmp.ne.s32.totalorder %s142, %s143
      %p152 = scmp.eq.s32.totalorder %s27, 0
      %p153 = por %p151, %p152
      %p154 = scmp.ne.s32.totalorder %s142, %s143
      %p155 = scmp.eq.s32.totalorder %s28, 1
      %p156 = por %p154, %p155
      %p158 = scmp.ne.s32.totalorder %s143, %s157
      %p159 = scmp.eq.s32.totalorder %s28, 0
      %p160 = por %p158, %p159
      %s162 = sadd.s32 %s161, 1
      %p165 = scmp.eq.s32.totalorder %s22, 1
      %p166 = scmp.ne.s32.totalorder %s161, %s163
      %p167 = scmp.eq.s32.totalorder %s22, 0
      %p168 = por %p166, %p167
      %p169 = scmp.ne.s32.totalorder %s161, %s163
      %p170 = scmp.eq.s32.totalorder %s27, 1
      %p171 = por %p169, %p170
      %p172 = scmp.ne.s32.totalorder %s163, %s164
      %p173 = scmp.eq.s32.totalorder %s27, 0
      %p174 = por %p172, %p173
      %p175 = scmp.ne.s32.totalorder %s163, %s164
      %p176 = scmp.eq.s32.totalorder %s28, 1
      %p177 = por %p175, %p176
      %p179 = scmp.ne.s32.totalorder %s164, %s178
      %p180 = scmp.eq.s32.totalorder %s28, 0
      %p181 = por %p179, %p180
      %s182 = ssub.s32 %s22, %s29
      %p183 = scmp.eq.s32.totalorder %s182, 0
      %s185 = sadd.s32 %s184, 1
      %s186 = scalar_select %p183, %s184, %s185
      %p189 = pneg %p183
      %p190 = scmp.eq.s32.totalorder %s22, 1
      %p191 = por %p189, %p190
      %p192 = scmp.ne.s32.totalorder %s184, %s187
      %p193 = scmp.eq.s32.totalorder %s22, 0
      %p194 = por %p192, %p193
      %p195 = scmp.ne.s32.totalorder %s184, %s187
      %p196 = scmp.eq.s32.totalorder %s27, 1
      %p197 = por %p195, %p196
      %p198 = scmp.ne.s32.totalorder %s187, %s188
      %p199 = scmp.eq.s32.totalorder %s27, 0
      %p200 = por %p198, %p199
      %p201 = scmp.ne.s32.totalorder %s187, %s188
      %p202 = scmp.eq.s32.totalorder %s28, 1
      %p203 = por %p201, %p202
      %p205 = scmp.ne.s32.totalorder %s188, %s204
      %p206 = scmp.eq.s32.totalorder %s28, 0
      %p207 = por %p205, %p206
      %p208 = scmp.le.s32.totalorder 1, %s22
      %p209 = scmp.lt.s32.totalorder %s22, 3
      %p210 = pnand %p208, %p209
      %p211 = pneg %p210
      // Predicated region
      $region9: #{_lambda_.29} parent=5 // pred_check
        _
      $region10: #{_lambda_.29} parent=5 // pred_check_branch
        %213 = sbr.rel (%p210) target = $region12
      $region11: #{_lambda_.29} parent=5 // pred_region
        %s214 = ssub.s32 %s22, 1
        // Predicated region
        $region13: #{_lambda_.29} parent=11 // pred_check
          %p215 = pneg %p69
        $region14: #{_lambda_.29} parent=11 // pred_check_branch
          %217 = sbr.rel (%p215) target = $region16
        $region15: #{_lambda_.29} parent=11 // pred_region
          %s219 = ssub.s32 16, 16
          %220 = vsyncadd [#allocation6], %s219
          %s222 = sshll.u32 [#allocation5], 4
          %s223 = int_to_ptr.vmem [resolvable:$true] %s222
          %225 = dma.hbm_to_vmem [thread:$0]  %s1, 16, %s223, [#allocation6]
        $region16: #{_lambda_.29} parent=11 // pred_fallthru
          _
        // Predicated region
        $region17: #{_lambda_.29} parent=11 // pred_check
          %p226 = pneg %p90
        $region18: #{_lambda_.29} parent=11 // pred_check_branch
          %228 = sbr.rel (%p226) target = $region20
        $region19: #{_lambda_.29} parent=11 // pred_region
          %s230 = ssub.s32 16, 16
          %231 = vsyncadd [#allocation6], %s230
          %s233 = sshll.u32 [#allocation7], 4
          %s234 = int_to_ptr.vmem [resolvable:$true] %s233
          %236 = dma.hbm_to_vmem [thread:$0]  %s2, 16, %s234, [#allocation6]
        $region20: #{_lambda_.29} parent=11 // pred_fallthru
          _
        // Predicated region
        $region21: #{_lambda_.29} parent=11 // pred_check
          %p237 = pneg %p111
        $region22: #{_lambda_.29} parent=11 // pred_check_branch
          %239 = sbr.rel (%p237) target = $region24
        $region23: #{_lambda_.29} parent=11 // pred_region
          %s241 = ssub.s32 256, 256
          %242 = vsyncadd [#allocation9], %s241
          %s243 = sshll.u32 [#allocation8], 4
          %s244 = int_to_ptr.vmem [resolvable:$true] %s243
          %249 = dma.hbm_to_vmem [thread:$0]  %s3, 256, %s244, [#allocation9], 64, 64, 4
        $region24: #{_lambda_.29} parent=11 // pred_fallthru
          _
        // Predicated region
        $region25: #{_lambda_.29} parent=11 // pred_check
          %p250 = pneg %p132
        $region26: #{_lambda_.29} parent=11 // pred_check_branch
          %252 = sbr.rel (%p250) target = $region28
        $region27: #{_lambda_.29} parent=11 // pred_region
          %s254 = ssub.s32 16, 16
          %255 = vsyncadd [#allocation9], %s254
          %s257 = sshll.u32 [#allocation10], 4
          %s258 = int_to_ptr.vmem [resolvable:$true] %s257
          %260 = dma.hbm_to_vmem [thread:$0]  %s4, 16, %s258, [#allocation9]
        $region28: #{_lambda_.29} parent=11 // pred_fallthru
          _
        // Predicated region
        $region29: #{_lambda_.29} parent=11 // pred_check
          %p261 = pneg %p153
        $region30: #{_lambda_.29} parent=11 // pred_check_branch
          %263 = sbr.rel (%p261) target = $region32
        $region31: #{_lambda_.29} parent=11 // pred_region
          %s265 = ssub.s32 1024, 1024
          %266 = vsyncadd [#allocation12], %s265
          %s267 = sshll.u32 [#allocation11], 4
          %s268 = int_to_ptr.vmem [resolvable:$true] %s267
          %273 = dma.hbm_to_vmem [thread:$0]  %s5, 1024, %s268, [#allocation12], 64, 64, 4
        $region32: #{_lambda_.29} parent=11 // pred_fallthru
          _
        // Predicated region
        $region33: #{_lambda_.29} parent=11 // pred_check
          %p274 = pneg %p174
        $region34: #{_lambda_.29} parent=11 // pred_check_branch
          %276 = sbr.rel (%p274) target = $region36
        $region35: #{_lambda_.29} parent=11 // pred_region
          %s278 = ssub.s32 16, 16
          %279 = vsyncadd [#allocation12], %s278
          %s281 = sshll.u32 [#allocation13], 4
          %s282 = int_to_ptr.vmem [resolvable:$true] %s281
          %284 = dma.hbm_to_vmem [thread:$0]  %s6, 16, %s282, [#allocation12]
        $region36: #{_lambda_.29} parent=11 // pred_fallthru
          _
      $region12: #{_lambda_.29} parent=5 // pred_fallthru
        _
      %p285 = scmp.lt.s32.totalorder %s22, 2
      // Predicated region
      $region37: #{_lambda_.29} parent=5 // pred_check
        %p286 = pneg %p285
      $region38: #{_lambda_.29} parent=5 // pred_check_branch
        %288 = sbr.rel (%p286) target = $region40
      $region39: #{_lambda_.29} parent=5 // pred_region
        // Predicated region
        $region41: #{_lambda_.29} parent=39 // pred_check
          %p289 = pneg %p42
        $region42: #{_lambda_.29} parent=39 // pred_check_branch
          %291 = sbr.rel (%p289) target = $region44
        $region43: #{_lambda_.29} parent=39 // pred_region
          %s292 = sand.u32 %s32, 1
          %s293 = scalar_lea.sflag [#allocation3], %s292
          %s294 = sand.u32 %s32, 1
          %s295 = smul.addr %s294, 8
          %s296 = scalar_lea.vmem [#allocation2], %s295
          %s298 = ssub.s32 128, 128
          %299 = vsyncadd %s293, %s298
          %s300 = smul.addr %s22, 128
          %s301 = scalar_lea.hbm %s0, %s300
          %s303 = sshll.u32 %s296, 4
          %s304 = int_to_ptr.vmem [resolvable:$true] %s303
          %306 = dma.hbm_to_vmem [thread:$0]  %s301, 128, %s304, %s293
        $region44: #{_lambda_.29} parent=39 // pred_fallthru
          _
      $region40: #{_lambda_.29} parent=5 // pred_fallthru
        _
      %p307 = scmp.le.s32.totalorder 1, %s22
      %p308 = scmp.lt.s32.totalorder %s22, 3
      %p309 = pnand %p307, %p308
      %p310 = pneg %p309
      // Predicated region
      $region45: #{_lambda_.29} parent=5 // pred_check
        _
      $region46: #{_lambda_.29} parent=5 // pred_check_branch
        %312 = sbr.rel (%p309) target = $region48
      $region47: #{_lambda_.29} parent=5 // pred_region
        %s313 = ssub.s32 %s22, 1
        %s314 = sand.u32 %s35, 1
        %s315 = scalar_lea.sflag [#allocation3], %s314
        %s316 = sand.u32 %s35, 1
        %s317 = smul.addr %s316, 8
        %s318 = scalar_lea.vmem [#allocation2], %s317
        // Predicated region
        $region49: #{_lambda_.29} parent=47 // pred_check
          %p319 = pneg %p48
        $region50: #{_lambda_.29} parent=47 // pred_check_branch
          %321 = sbr.rel (%p319) target = $region52
        $region51: #{_lambda_.29} parent=47 // pred_region
          %322 = dma.done %s315, 128
        $region52: #{_lambda_.29} parent=47 // pred_fallthru
          _
        // Predicated region
        $region53: #{_lambda_.29} parent=47 // pred_check
          %p323 = pneg %p69
        $region54: #{_lambda_.29} parent=47 // pred_check_branch
          %325 = sbr.rel (%p323) target = $region56
        $region55: #{_lambda_.29} parent=47 // pred_region
          %326 = dma.done [#allocation6], 16
        $region56: #{_lambda_.29} parent=47 // pred_fallthru
          _
        // Predicated region
        $region57: #{_lambda_.29} parent=47 // pred_check
          %p327 = pneg %p90
        $region58: #{_lambda_.29} parent=47 // pred_check_branch
          %329 = sbr.rel (%p327) target = $region60
        $region59: #{_lambda_.29} parent=47 // pred_region
          %330 = dma.done [#allocation6], 16
        $region60: #{_lambda_.29} parent=47 // pred_fallthru
          _
        // Predicated region
        $region61: #{_lambda_.29} parent=47 // pred_check
          %p331 = pneg %p111
        $region62: #{_lambda_.29} parent=47 // pred_check_branch
          %333 = sbr.rel (%p331) target = $region64
        $region63: #{_lambda_.29} parent=47 // pred_region
          %334 = dma.done [#allocation9], 256
        $region64: #{_lambda_.29} parent=47 // pred_fallthru
          _
        // Predicated region
        $region65: #{_lambda_.29} parent=47 // pred_check
          %p335 = pneg %p132
        $region66: #{_lambda_.29} parent=47 // pred_check_branch
          %337 = sbr.rel (%p335) target = $region68
        $region67: #{_lambda_.29} parent=47 // pred_region
          %338 = dma.done [#allocation9], 16
        $region68: #{_lambda_.29} parent=47 // pred_fallthru
          _
        // Predicated region
        $region69: #{_lambda_.29} parent=47 // pred_check
          %p339 = pneg %p153
        $region70: #{_lambda_.29} parent=47 // pred_check_branch
          %341 = sbr.rel (%p339) target = $region72
        $region71: #{_lambda_.29} parent=47 // pred_region
          %342 = dma.done [#allocation12], 1024
        $region72: #{_lambda_.29} parent=47 // pred_fallthru
          _
        // Predicated region
        $region73: #{_lambda_.29} parent=47 // pred_check
          %p343 = pneg %p174
        $region74: #{_lambda_.29} parent=47 // pred_check_branch
          %345 = sbr.rel (%p343) target = $region76
        $region75: #{_lambda_.29} parent=47 // pred_region
          %346 = dma.done [#allocation12], 16
        $region76: #{_lambda_.29} parent=47 // pred_fallthru
          _
        %s347 = sand.u32 %s35, 1
        %s348 = scalar_lea.sflag [#allocation3], %s347
        %s349 = sand.u32 %s35, 1
        %s350 = smul.addr %s349, 8
        %s351 = scalar_lea.vmem [#allocation2], %s350
        %p352 = pneg %p48
        %p353 = pneg %p45
        %p354 = pneg %p69
        %p355 = pneg %p66
        %p356 = pneg %p90
        %p357 = pneg %p87
        %p358 = pneg %p111
        %p359 = pneg %p108
        %p360 = pneg %p132
        %p361 = pneg %p129
        %p362 = pneg %p153
        %p363 = pneg %p150
        %p364 = pneg %p174
        %p365 = pneg %p171
        %p366 = pneg %p200
        %p367 = pneg %p197
        %s368 = sand.u32 %s187, 1
        %s369 = scalar_lea.sflag [#allocation4], %s368
        %s370 = sand.u32 %s187, 1
        %s371 = smul.addr %s370, 8
        %s372 = scalar_lea.vmem [#allocation14], %s371
        %v374 = vld [vmem:[%s318] sm:$0xff]
        %vm375 = vcmask 261120
        %v376 = vsel %vm375, %v374, 0.0
        %377 = vadd.xlane.f32.xlu0 %v376
        %v378 = vpop.xlane.xlu0 %377
        %v379 = vrcp.pop 32.0
        %v380 = vmul.f32 %v378, %v379
        %v381 = vsub.f32 %v374, %v380
        %v382 = vmul.f32 %v381, %v381
        %v383 = vsel %vm375, %v382, 0.0
        %384 = vadd.xlane.f32.xlu0 %v383
        %v385 = vpop.xlane.xlu0 %384
        %v386 = vmul.f32 %v385, %v379
        %v387 = vadd.f32 %v386, 1e-05
        %v388 = vrsqrt.pop %v387
        %v389 = vmul.f32 %v381, %v388
        %v390 = vld [vmem:[#allocation5] sm:$0x1]
        %v392 = vlaneseq
        %v393 = vshrl.u32 %v392, 7
        %v394 = vsub.s32 0, %v393
        %v395 = vrot.slane %v390, %v394
        %v397 = vmul.f32 %v389, %v395
        %v398 = vld [vmem:[#allocation7] sm:$0x1]
        %v400 = vlaneseq
        %v401 = vshrl.u32 %v400, 7
        %v402 = vsub.s32 0, %v401
        %v403 = vrot.slane %v398, %v402
        %v405 = vadd.f32 %v397, %v403
        %v406 = vpack.c.bf16 %v405, %v405
        %v407 = vld [vmem:[#allocation8] sm:$0xf]
        %v408 = vld [vmem:[#allocation8 + $0x4] sm:$0xf]
        %v409 = vld [vmem:[#allocation8 + $0x8] sm:$0xf]
        %v410 = vld [vmem:[#allocation8 + $0xc] sm:$0xf]
        %v411 = vld [vmem:[#allocation10] sm:$0x1]
        %v413 = vlaneseq
        %v414 = vshrl.u32 %v413, 7
        %v415 = vsub.s32 0, %v414
        %v416 = vrot.slane %v411, %v415
        %v422 = vunpack.c.l.b16 %v407
        %v423 = vunpack.c.l.b16 %v408
        %v424 = vunpack.c.l.b16 %v409
        %v425 = vunpack.c.l.b16 %v410
        %v426 = vpack.c.b16 %v423, %v422
        %v427 = vpack.c.b16 %v425, %v424
        %v431 = vsel %vm375, %v406, 0
        %433 = vmatprep.subr.bf16.mxu0 0
        %434 = vmatpush1.bf16.msra.mxu0 %v426
        %435 = vmatprep.subr.bf16.mxu0 0
        %436 = vmatpush1.bf16.msra.mxu0 %v427
        %437 = vmatprep.subr.bf16.mxu0 0
        %438 = vmatpush1.bf16.msra.mxu0 0
        %439 = vmatprep.subr.bf16.mxu0 0
        %440 = vmatpush1.bf16.msra.mxu0 0
        %441 = vmatprep.subr.bf16.mxu0 0
        %442 = vmatpush1.bf16.msra.mxu0 0
        %443 = vmatprep.subr.bf16.mxu0 0
        %444 = vmatpush1.bf16.msra.mxu0 0
        %445 = vmatprep.subr.bf16.mxu0 0
        %446 = vmatpush1.bf16.msra.mxu0 0
        %447 = vmatprep.subr.bf16.mxu0 0
        %448 = vmatpush1.bf16.msra.mxu0 0
        %449 = vmatprep.subr.bf16.mxu0 0
        %450 = vmatpush1.bf16.msra.mxu0 0
        %451 = vmatprep.subr.bf16.mxu0 0
        %452 = vmatpush1.bf16.msra.mxu0 0
        %453 = vmatprep.subr.bf16.mxu0 0
        %454 = vmatpush1.bf16.msra.mxu0 0
        %455 = vmatprep.subr.bf16.mxu0 0
        %456 = vmatpush1.bf16.msra.mxu0 0
        %457 = vmatprep.subr.bf16.mxu0 0
        %458 = vmatpush1.bf16.msra.mxu0 0
        %459 = vmatprep.subr.bf16.mxu0 0
        %460 = vmatpush1.bf16.msra.mxu0 0
        %461 = vmatprep.subr.bf16.mxu0 0
        %462 = vmatpush1.bf16.msra.mxu0 0
        %463 = vmatprep.subr.bf16.mxu0 0
        %464 = vmatpush1.bf16.msra.mxu0 0
        %465 = vmatprep.mubr.bf16.mxu0 0
        %466 = vmatmul.mubr.bf16.gmra.mrb[0].mxu0 %v431
        %v467 = vpop.f32.mrb[0].mxu0
        %v468 = vadd.f32 %v416, %v467
        %v469 = vpop.f32.mrb[0].mxu0
        %v470 = vpop.f32.mrb[0].mxu0
        %v471 = vpop.f32.mrb[0].mxu0
        %472 = vdwg.mxu0
        %v473 = vmax.f32 %v468, 0.0
        %v474 = vpack.c.bf16 %v473, %v473
        %v475 = vld [vmem:[#allocation11] sm:$0xf]
        %v476 = vld [vmem:[#allocation11 + $0x4] sm:$0xf]
        %v477 = vld [vmem:[#allocation11 + $0x8] sm:$0xf]
        %v478 = vld [vmem:[#allocation11 + $0xc] sm:$0xf]
        %v479 = vld [vmem:[#allocation11 + $0x10] sm:$0xf]
        %v480 = vld [vmem:[#allocation11 + $0x14] sm:$0xf]
        %v481 = vld [vmem:[#allocation11 + $0x18] sm:$0xf]
        %v482 = vld [vmem:[#allocation11 + $0x1c] sm:$0xf]
        %v483 = vld [vmem:[#allocation11 + $0x20] sm:$0xf]
        %v484 = vld [vmem:[#allocation11 + $0x24] sm:$0xf]
        %v485 = vld [vmem:[#allocation11 + $0x28] sm:$0xf]
        %v486 = vld [vmem:[#allocation11 + $0x2c] sm:$0xf]
        %v487 = vld [vmem:[#allocation11 + $0x30] sm:$0xf]
        %v488 = vld [vmem:[#allocation11 + $0x34] sm:$0xf]
        %v489 = vld [vmem:[#allocation11 + $0x38] sm:$0xf]
        %v490 = vld [vmem:[#allocation11 + $0x3c] sm:$0xf]
        %v491 = vld [vmem:[#allocation13] sm:$0x1]
        %v493 = vlaneseq
        %v494 = vshrl.u32 %v493, 7
        %v495 = vsub.s32 0, %v494
        %v496 = vrot.slane %v491, %v495
        %v514 = vunpack.c.l.b16 %v475
        %v515 = vunpack.c.l.b16 %v476
        %v516 = vunpack.c.l.b16 %v477
        %v517 = vunpack.c.l.b16 %v478
        %v518 = vunpack.c.l.b16 %v479
        %v519 = vunpack.c.l.b16 %v480
        %v520 = vunpack.c.l.b16 %v481
        %v521 = vunpack.c.l.b16 %v482
        %v522 = vunpack.c.l.b16 %v483
        %v523 = vunpack.c.l.b16 %v484
        %v524 = vunpack.c.l.b16 %v485
        %v525 = vunpack.c.l.b16 %v486
        %v526 = vunpack.c.l.b16 %v487
        %v527 = vunpack.c.l.b16 %v488
        %v528 = vunpack.c.l.b16 %v489
        %v529 = vunpack.c.l.b16 %v490
        %v530 = vpack.c.b16 %v515, %v514
        %v531 = vpack.c.b16 %v517, %v516
        %v532 = vpack.c.b16 %v519, %v518
        %v533 = vpack.c.b16 %v521, %v520
        %v534 = vpack.c.b16 %v523, %v522
        %v535 = vpack.c.b16 %v525, %v524
        %v536 = vpack.c.b16 %v527, %v526
        %v537 = vpack.c.b16 %v529, %v528
        %546 = vmatprep.subr.bf16.mxu0 0
        %547 = vmatpush1.bf16.msra.mxu0 %v530
        %548 = vmatprep.subr.bf16.mxu0 0
        %549 = vmatpush1.bf16.msra.mxu0 %v531
        %550 = vmatprep.subr.bf16.mxu0 0
        %551 = vmatpush1.bf16.msra.mxu0 %v532
        %552 = vmatprep.subr.bf16.mxu0 0
        %553 = vmatpush1.bf16.msra.mxu0 %v533
        %554 = vmatprep.subr.bf16.mxu0 0
        %555 = vmatpush1.bf16.msra.mxu0 %v534
        %556 = vmatprep.subr.bf16.mxu0 0
        %557 = vmatpush1.bf16.msra.mxu0 %v535
        %558 = vmatprep.subr.bf16.mxu0 0
        %559 = vmatpush1.bf16.msra.mxu0 %v536
        %560 = vmatprep.subr.bf16.mxu0 0
        %561 = vmatpush1.bf16.msra.mxu0 %v537
        %562 = vmatprep.subr.bf16.mxu0 0
        %563 = vmatpush1.bf16.msra.mxu0 0
        %564 = vmatprep.subr.bf16.mxu0 0
        %565 = vmatpush1.bf16.msra.mxu0 0
        %566 = vmatprep.subr.bf16.mxu0 0
        %567 = vmatpush1.bf16.msra.mxu0 0
        %568 = vmatprep.subr.bf16.mxu0 0
        %569 = vmatpush1.bf16.msra.mxu0 0
        %570 = vmatprep.subr.bf16.mxu0 0
        %571 = vmatpush1.bf16.msra.mxu0 0
        %572 = vmatprep.subr.bf16.mxu0 0
        %573 = vmatpush1.bf16.msra.mxu0 0
        %574 = vmatprep.subr.bf16.mxu0 0
        %575 = vmatpush1.bf16.msra.mxu0 0
        %576 = vmatprep.subr.bf16.mxu0 0
        %577 = vmatpush1.bf16.msra.mxu0 0
        %578 = vmatprep.mubr.bf16.mxu0 0
        %579 = vmatmul.mubr.bf16.gmra.mrb[0].mxu0 %v474
        %v580 = vpop.f32.mrb[0].mxu0
        %v581 = vadd.f32 %v496, %v580
        %v582 = vpop.f32.mrb[0].mxu0
        %v583 = vpop.f32.mrb[0].mxu0
        %v584 = vpop.f32.mrb[0].mxu0
        %585 = vdwg.mxu0
        %v586 = vadd.f32 %v581, %v374
        %587 = vst.msk [vmem:[%s372] sm:$0xff] %vm375, %v586
        %s588 = sand.u32 %s187, 1
        %s589 = scalar_lea.sflag [#allocation4], %s588
        %s590 = sand.u32 %s187, 1
        %s591 = smul.addr %s590, 8
        %s592 = scalar_lea.vmem [#allocation14], %s591
        // Predicated region
        $region77: #{_lambda_.29} parent=47 // pred_check
          %p593 = pneg %p197
        $region78: #{_lambda_.29} parent=47 // pred_check_branch
          %595 = sbr.rel (%p593) target = $region80
        $region79: #{_lambda_.29} parent=47 // pred_region
          %s597 = ssub.s32 128, 128
          %598 = vsyncadd %s589, %s597
          %s599 = smul.addr %s27, 128
          %s600 = scalar_lea.hbm %s7, %s599
          %s602 = sshll.u32 %s592, 4
          %s603 = int_to_ptr.vmem [resolvable:$true] %s602
          %605 = dma.vmem_to_hbm [thread:$0]  %s603, 128, %s600, %s589
        $region80: #{_lambda_.29} parent=47 // pred_fallthru
          _
      $region48: #{_lambda_.29} parent=5 // pred_fallthru
        _
      %p606 = scmp.le.s32.totalorder 2, %s22
      // Predicated region
      $region81: #{_lambda_.29} parent=5 // pred_check
        %p607 = pneg %p606
      $region82: #{_lambda_.29} parent=5 // pred_check_branch
        %609 = sbr.rel (%p607) target = $region84
      $region83: #{_lambda_.29} parent=5 // pred_region
        %s610 = ssub.s32 %s22, 2
        // Predicated region
        $region85: #{_lambda_.29} parent=83 // pred_check
          %p611 = pneg %p203
        $region86: #{_lambda_.29} parent=83 // pred_check_branch
          %613 = sbr.rel (%p611) target = $region88
        $region87: #{_lambda_.29} parent=83 // pred_region
          %s614 = sand.u32 %s188, 1
          %s615 = scalar_lea.sflag [#allocation4], %s614
          %s616 = sand.u32 %s188, 1
          %s617 = smul.addr %s616, 8
          %s618 = scalar_lea.vmem [#allocation14], %s617
          %619 = dma.done %s615, 128
        $region88: #{_lambda_.29} parent=83 // pred_fallthru
          _
      $region84: #{_lambda_.29} parent=5 // pred_fallthru
        _
    $region6: #{_lambda_.29} parent=1 // loop_footer
      %s26 = sadd.s32 1, %s22
    $region7: #{_lambda_.29} parent=1 // loop_footer_branch
      %21 = sbr.rel target = $region3
    $region8: #{_lambda_.29} parent=1 // loop_exit
      _
    %620 = vsyncpa [#allocation3], 1
    %s621 = scalar_lea.sflag [#allocation3], 1
    %622 = vsyncpa %s621, 1
    %623 = vsyncpa [#allocation6], 1
    %624 = vsyncpa [#allocation9], 1
    %625 = vsyncpa [#allocation12], 1
    %626 = vsyncpa [#allocation4], 1
    %s627 = scalar_lea.sflag [#allocation4], 1
    %628 = vsyncpa %s627, 1

// kernel: _lambda_.25
$region0: #{_lambda_.25}
  #allocation0 [shape = 'u32[]', space=smem, size = 0x4, offset = 0x4, fixed_abs, tag = 'smem constant byte address 0x4 - core index']
  #allocation1 [shape = 'u32[144,128]{1,0:T(1,128)}', space=vmem, size = 0x12000, scoped, tag = 'internal scratch']
  %s0 = inlined_call_operand.hbm [shape: f32[2,8,32], index: 0, kind: input, shape index: {}]
  %s1 = inlined_call_operand.hbm [shape: f32[1,32], index: 1, kind: input, shape index: {}]
  %s2 = inlined_call_operand.hbm [shape: f32[1,32], index: 2, kind: input, shape index: {}]
  %s3 = inlined_call_operand.hbm [shape: bf16[32,192], index: 3, kind: input, shape index: {}]
  %s4 = inlined_call_operand.hbm [shape: f32[1,192], index: 4, kind: input, shape index: {}]
  %s5 = inlined_call_operand.hbm [shape: bf16[64,32], index: 5, kind: input, shape index: {}]
  %s6 = inlined_call_operand.hbm [shape: f32[1,32], index: 6, kind: input, shape index: {}]
  %s7 = inlined_call_operand.hbm [shape: f32[2,8,32], index: 7, kind: output, shape index: {}]
  %s8 = sld [smem:[#allocation0]]
  $region89: #{_lambda_.25} parent=0
    _
  %s10 = ssub.s32 1, %s8
  %s11 = scalar_select 0, %s10, %s8
  $region1: #{_lambda_.25} parent=0
    #allocation2 [shape = 'u8[8192]{0}', space=vmem, size = 0x2000, scoped, tag = 'input window, operand 0']
    #allocation3 [shape = 's32[2]{0}', space=sflag, size = 0x8, scoped, tag = 'scoped memory for _lambda_.25']
    #allocation4 [shape = 's32[2]{0}', space=sflag, size = 0x8, scoped, tag = 'scoped memory for _lambda_.25']
    #allocation5 [shape = 'u8[512]{0}', space=vmem, size = 0x400, scoped, tag = 'input window, operand 1, single buffered']
    #allocation6 [shape = 's32[1]{0}', space=sflag, size = 0x4, scoped, tag = 'scoped memory for _lambda_.25']
    #allocation7 [shape = 'u8[512]{0}', space=vmem, size = 0x400, scoped, tag = 'input window, operand 2, single buffered']
    #allocation8 [shape = 'u8[16384]{0}', space=vmem, size = 0x4000, scoped, tag = 'input window, operand 3, single buffered']
    #allocation9 [shape = 's32[1]{0}', space=sflag, size = 0x4, scoped, tag = 'scoped memory for _lambda_.25']
    #allocation10 [shape = 'u8[1024]{0}', space=vmem, size = 0x400, scoped, tag = 'input window, operand 4, single buffered']
    #allocation11 [shape = 'u8[16384]{0}', space=vmem, size = 0x4000, scoped, tag = 'input window, operand 5, single buffered']
    #allocation12 [shape = 's32[1]{0}', space=sflag, size = 0x4, scoped, tag = 'scoped memory for _lambda_.25']
    #allocation13 [shape = 'u8[512]{0}', space=vmem, size = 0x400, scoped, tag = 'input window, operand 6, single buffered']
    #allocation14 [shape = 'u8[8192]{0}', space=vmem, size = 0x2000, scoped, tag = 'output window, operand 0']
    %12 = vsyncpa [#allocation3], 0
    %s13 = scalar_lea.sflag [#allocation3], 1
    %14 = vsyncpa %s13, 0
    %15 = vsyncpa [#allocation6], 0
    %16 = vsyncpa [#allocation9], 0
    %17 = vsyncpa [#allocation12], 0
    %18 = vsyncpa [#allocation4], 0
    %s19 = scalar_lea.sflag [#allocation4], 1
    %20 = vsyncpa %s19, 0
    loop: start=0, step=1, limit=4
    $region2: #{_lambda_.25} parent=1 // loop_pre_header
      _
    $region3: #{_lambda_.25} parent=1 // loop_header
      %s22 = sphi 0, %s26
      %p23 = scmp.ge.s32.totalorder %s22, 4
      %s32 = sphi 0, %s34
      %s35 = sphi 0, %s32
      %s36 = sphi 0, %s35
      %s52 = sphi 0, %s36
      %s56 = sphi 0, %s56
      %s58 = sphi 0, %s56
      %s59 = sphi 0, %s58
      %s73 = sphi 0, %s59
      %s77 = sphi 0, %s77
      %s79 = sphi 0, %s77
      %s80 = sphi 0, %s79
      %s94 = sphi 0, %s80
      %s98 = sphi 0, %s98
      %s100 = sphi 0, %s98
      %s101 = sphi 0, %s100
      %s115 = sphi 0, %s101
      %s119 = sphi 0, %s119
      %s121 = sphi 0, %s119
      %s122 = sphi 0, %s121
      %s136 = sphi 0, %s122
      %s140 = sphi 0, %s140
      %s142 = sphi 0, %s140
      %s143 = sphi 0, %s142
      %s157 = sphi 0, %s143
      %s161 = sphi 0, %s161
      %s163 = sphi 0, %s161
      %s164 = sphi 0, %s163
      %s178 = sphi 0, %s164
      %s184 = sphi 0, %s186
      %s187 = sphi 0, %s184
      %s188 = sphi 0, %s187
      %s204 = sphi 0, %s188
    $region4: #{_lambda_.25} parent=1 // loop_header_branch
      %25 = sbr.rel (%p23) target = $region8
    $region5: #{_lambda_.25} parent=1 // loop_body
      %s27 = ssub.s32 %s22, 1
      %s28 = ssub.s32 %s22, 2
      %s29 = sadd.s32 %s22, 1
      %s30 = ssub.s32 %s22, %s29
      %p31 = scmp.eq.s32.totalorder %s30, 0
      %s33 = sadd.s32 %s32, 1
      %s34 = scalar_select %p31, %s32, %s33
      %p37 = pneg %p31
      %p38 = scmp.eq.s32.totalorder %s22, 1
      %p39 = por %p37, %p38
      %p40 = scmp.ne.s32.totalorder %s32, %s35
      %p41 = scmp.eq.s32.totalorder %s22, 0
      %p42 = por %p40, %p41
      %p43 = scmp.ne.s32.totalorder %s32, %s35
      %p44 = scmp.eq.s32.totalorder %s27, 1
      %p45 = por %p43, %p44
      %p46 = scmp.ne.s32.totalorder %s35, %s36
      %p47 = scmp.eq.s32.totalorder %s27, 0
      %p48 = por %p46, %p47
      %p49 = scmp.ne.s32.totalorder %s35, %s36
      %p50 = scmp.eq.s32.totalorder %s28, 1
      %p51 = por %p49, %p50
      %p53 = scmp.ne.s32.totalorder %s36, %s52
      %p54 = scmp.eq.s32.totalorder %s28, 0
      %p55 = por %p53, %p54
      %s57 = sadd.s32 %s56, 1
      %p60 = scmp.eq.s32.totalorder %s22, 1
      %p61 = scmp.ne.s32.totalorder %s56, %s58
      %p62 = scmp.eq.s32.totalorder %s22, 0
      %p63 = por %p61, %p62
      %p64 = scmp.ne.s32.totalorder %s56, %s58
      %p65 = scmp.eq.s32.totalorder %s27, 1
      %p66 = por %p64, %p65
      %p67 = scmp.ne.s32.totalorder %s58, %s59
      %p68 = scmp.eq.s32.totalorder %s27, 0
      %p69 = por %p67, %p68
      %p70 = scmp.ne.s32.totalorder %s58, %s59
      %p71 = scmp.eq.s32.totalorder %s28, 1
      %p72 = por %p70, %p71
      %p74 = scmp.ne.s32.totalorder %s59, %s73
      %p75 = scmp.eq.s32.totalorder %s28, 0
      %p76 = por %p74, %p75
      %s78 = sadd.s32 %s77, 1
      %p81 = scmp.eq.s32.totalorder %s22, 1
      %p82 = scmp.ne.s32.totalorder %s77, %s79
      %p83 = scmp.eq.s32.totalorder %s22, 0
      %p84 = por %p82, %p83
      %p85 = scmp.ne.s32.totalorder %s77, %s79
      %p86 = scmp.eq.s32.totalorder %s27, 1
      %p87 = por %p85, %p86
      %p88 = scmp.ne.s32.totalorder %s79, %s80
      %p89 = scmp.eq.s32.totalorder %s27, 0
      %p90 = por %p88, %p89
      %p91 = scmp.ne.s32.totalorder %s79, %s80
      %p92 = scmp.eq.s32.totalorder %s28, 1
      %p93 = por %p91, %p92
      %p95 = scmp.ne.s32.totalorder %s80, %s94
      %p96 = scmp.eq.s32.totalorder %s28, 0
      %p97 = por %p95, %p96
      %s99 = sadd.s32 %s98, 1
      %p102 = scmp.eq.s32.totalorder %s22, 1
      %p103 = scmp.ne.s32.totalorder %s98, %s100
      %p104 = scmp.eq.s32.totalorder %s22, 0
      %p105 = por %p103, %p104
      %p106 = scmp.ne.s32.totalorder %s98, %s100
      %p107 = scmp.eq.s32.totalorder %s27, 1
      %p108 = por %p106, %p107
      %p109 = scmp.ne.s32.totalorder %s100, %s101
      %p110 = scmp.eq.s32.totalorder %s27, 0
      %p111 = por %p109, %p110
      %p112 = scmp.ne.s32.totalorder %s100, %s101
      %p113 = scmp.eq.s32.totalorder %s28, 1
      %p114 = por %p112, %p113
      %p116 = scmp.ne.s32.totalorder %s101, %s115
      %p117 = scmp.eq.s32.totalorder %s28, 0
      %p118 = por %p116, %p117
      %s120 = sadd.s32 %s119, 1
      %p123 = scmp.eq.s32.totalorder %s22, 1
      %p124 = scmp.ne.s32.totalorder %s119, %s121
      %p125 = scmp.eq.s32.totalorder %s22, 0
      %p126 = por %p124, %p125
      %p127 = scmp.ne.s32.totalorder %s119, %s121
      %p128 = scmp.eq.s32.totalorder %s27, 1
      %p129 = por %p127, %p128
      %p130 = scmp.ne.s32.totalorder %s121, %s122
      %p131 = scmp.eq.s32.totalorder %s27, 0
      %p132 = por %p130, %p131
      %p133 = scmp.ne.s32.totalorder %s121, %s122
      %p134 = scmp.eq.s32.totalorder %s28, 1
      %p135 = por %p133, %p134
      %p137 = scmp.ne.s32.totalorder %s122, %s136
      %p138 = scmp.eq.s32.totalorder %s28, 0
      %p139 = por %p137, %p138
      %s141 = sadd.s32 %s140, 1
      %p144 = scmp.eq.s32.totalorder %s22, 1
      %p145 = scmp.ne.s32.totalorder %s140, %s142
      %p146 = scmp.eq.s32.totalorder %s22, 0
      %p147 = por %p145, %p146
      %p148 = scmp.ne.s32.totalorder %s140, %s142
      %p149 = scmp.eq.s32.totalorder %s27, 1
      %p150 = por %p148, %p149
      %p151 = scmp.ne.s32.totalorder %s142, %s143
      %p152 = scmp.eq.s32.totalorder %s27, 0
      %p153 = por %p151, %p152
      %p154 = scmp.ne.s32.totalorder %s142, %s143
      %p155 = scmp.eq.s32.totalorder %s28, 1
      %p156 = por %p154, %p155
      %p158 = scmp.ne.s32.totalorder %s143, %s157
      %p159 = scmp.eq.s32.totalorder %s28, 0
      %p160 = por %p158, %p159
      %s162 = sadd.s32 %s161, 1
      %p165 = scmp.eq.s32.totalorder %s22, 1
      %p166 = scmp.ne.s32.totalorder %s161, %s163
      %p167 = scmp.eq.s32.totalorder %s22, 0
      %p168 = por %p166, %p167
      %p169 = scmp.ne.s32.totalorder %s161, %s163
      %p170 = scmp.eq.s32.totalorder %s27, 1
      %p171 = por %p169, %p170
      %p172 = scmp.ne.s32.totalorder %s163, %s164
      %p173 = scmp.eq.s32.totalorder %s27, 0
      %p174 = por %p172, %p173
      %p175 = scmp.ne.s32.totalorder %s163, %s164
      %p176 = scmp.eq.s32.totalorder %s28, 1
      %p177 = por %p175, %p176
      %p179 = scmp.ne.s32.totalorder %s164, %s178
      %p180 = scmp.eq.s32.totalorder %s28, 0
      %p181 = por %p179, %p180
      %s182 = ssub.s32 %s22, %s29
      %p183 = scmp.eq.s32.totalorder %s182, 0
      %s185 = sadd.s32 %s184, 1
      %s186 = scalar_select %p183, %s184, %s185
      %p189 = pneg %p183
      %p190 = scmp.eq.s32.totalorder %s22, 1
      %p191 = por %p189, %p190
      %p192 = scmp.ne.s32.totalorder %s184, %s187
      %p193 = scmp.eq.s32.totalorder %s22, 0
      %p194 = por %p192, %p193
      %p195 = scmp.ne.s32.totalorder %s184, %s187
      %p196 = scmp.eq.s32.totalorder %s27, 1
      %p197 = por %p195, %p196
      %p198 = scmp.ne.s32.totalorder %s187, %s188
      %p199 = scmp.eq.s32.totalorder %s27, 0
      %p200 = por %p198, %p199
      %p201 = scmp.ne.s32.totalorder %s187, %s188
      %p202 = scmp.eq.s32.totalorder %s28, 1
      %p203 = por %p201, %p202
      %p205 = scmp.ne.s32.totalorder %s188, %s204
      %p206 = scmp.eq.s32.totalorder %s28, 0
      %p207 = por %p205, %p206
      %p208 = scmp.le.s32.totalorder 1, %s22
      %p209 = scmp.lt.s32.totalorder %s22, 3
      %p210 = pnand %p208, %p209
      %p211 = pneg %p210
      // Predicated region
      $region9: #{_lambda_.25} parent=5 // pred_check
        _
      $region10: #{_lambda_.25} parent=5 // pred_check_branch
        %213 = sbr.rel (%p210) target = $region12
      $region11: #{_lambda_.25} parent=5 // pred_region
        %s214 = ssub.s32 %s22, 1
        // Predicated region
        $region13: #{_lambda_.25} parent=11 // pred_check
          %p215 = pneg %p69
        $region14: #{_lambda_.25} parent=11 // pred_check_branch
          %217 = sbr.rel (%p215) target = $region16
        $region15: #{_lambda_.25} parent=11 // pred_region
          %s219 = ssub.s32 16, 16
          %220 = vsyncadd [#allocation6], %s219
          %s222 = sshll.u32 [#allocation5], 4
          %s223 = int_to_ptr.vmem [resolvable:$true] %s222
          %225 = dma.hbm_to_vmem [thread:$0]  %s1, 16, %s223, [#allocation6]
        $region16: #{_lambda_.25} parent=11 // pred_fallthru
          _
        // Predicated region
        $region17: #{_lambda_.25} parent=11 // pred_check
          %p226 = pneg %p90
        $region18: #{_lambda_.25} parent=11 // pred_check_branch
          %228 = sbr.rel (%p226) target = $region20
        $region19: #{_lambda_.25} parent=11 // pred_region
          %s230 = ssub.s32 16, 16
          %231 = vsyncadd [#allocation6], %s230
          %s233 = sshll.u32 [#allocation7], 4
          %s234 = int_to_ptr.vmem [resolvable:$true] %s233
          %236 = dma.hbm_to_vmem [thread:$0]  %s2, 16, %s234, [#allocation6]
        $region20: #{_lambda_.25} parent=11 // pred_fallthru
          _
        // Predicated region
        $region21: #{_lambda_.25} parent=11 // pred_check
          %p237 = pneg %p111
        $region22: #{_lambda_.25} parent=11 // pred_check_branch
          %239 = sbr.rel (%p237) target = $region24
        $region23: #{_lambda_.25} parent=11 // pred_region
          %s241 = ssub.s32 512, 512
          %242 = vsyncadd [#allocation9], %s241
          %s243 = sshll.u32 [#allocation8], 4
          %s244 = int_to_ptr.vmem [resolvable:$true] %s243
          %249 = dma.hbm_to_vmem [thread:$0]  %s3, 512, %s244, [#allocation9], 128, 128, 8
        $region24: #{_lambda_.25} parent=11 // pred_fallthru
          _
        // Predicated region
        $region25: #{_lambda_.25} parent=11 // pred_check
          %p250 = pneg %p132
        $region26: #{_lambda_.25} parent=11 // pred_check_branch
          %252 = sbr.rel (%p250) target = $region28
        $region27: #{_lambda_.25} parent=11 // pred_region
          %s254 = ssub.s32 32, 32
          %255 = vsyncadd [#allocation9], %s254
          %s257 = sshll.u32 [#allocation10], 4
          %s258 = int_to_ptr.vmem [resolvable:$true] %s257
          %260 = dma.hbm_to_vmem [thread:$0]  %s4, 32, %s258, [#allocation9]
        $region28: #{_lambda_.25} parent=11 // pred_fallthru
          _
        // Predicated region
        $region29: #{_lambda_.25} parent=11 // pred_check
          %p261 = pneg %p153
        $region30: #{_lambda_.25} parent=11 // pred_check_branch
          %263 = sbr.rel (%p261) target = $region32
        $region31: #{_lambda_.25} parent=11 // pred_region
          %s265 = ssub.s32 512, 512
          %266 = vsyncadd [#allocation12], %s265
          %s267 = sshll.u32 [#allocation11], 4
          %s268 = int_to_ptr.vmem [resolvable:$true] %s267
          %273 = dma.hbm_to_vmem [thread:$0]  %s5, 512, %s268, [#allocation12], 64, 64, 4
        $region32: #{_lambda_.25} parent=11 // pred_fallthru
          _
        // Predicated region
        $region33: #{_lambda_.25} parent=11 // pred_check
          %p274 = pneg %p174
        $region34: #{_lambda_.25} parent=11 // pred_check_branch
          %276 = sbr.rel (%p274) target = $region36
        $region35: #{_lambda_.25} parent=11 // pred_region
          %s278 = ssub.s32 16, 16
          %279 = vsyncadd [#allocation12], %s278
          %s281 = sshll.u32 [#allocation13], 4
          %s282 = int_to_ptr.vmem [resolvable:$true] %s281
          %284 = dma.hbm_to_vmem [thread:$0]  %s6, 16, %s282, [#allocation12]
        $region36: #{_lambda_.25} parent=11 // pred_fallthru
          _
      $region12: #{_lambda_.25} parent=5 // pred_fallthru
        _
      %p285 = scmp.lt.s32.totalorder %s22, 2
      // Predicated region
      $region37: #{_lambda_.25} parent=5 // pred_check
        %p286 = pneg %p285
      $region38: #{_lambda_.25} parent=5 // pred_check_branch
        %288 = sbr.rel (%p286) target = $region40
      $region39: #{_lambda_.25} parent=5 // pred_region
        // Predicated region
        $region41: #{_lambda_.25} parent=39 // pred_check
          %p289 = pneg %p42
        $region42: #{_lambda_.25} parent=39 // pred_check_branch
          %291 = sbr.rel (%p289) target = $region44
        $region43: #{_lambda_.25} parent=39 // pred_region
          %s292 = sand.u32 %s32, 1
          %s293 = scalar_lea.sflag [#allocation3], %s292
          %s294 = sand.u32 %s32, 1
          %s295 = smul.addr %s294, 8
          %s296 = scalar_lea.vmem [#allocation2], %s295
          %s298 = ssub.s32 128, 128
          %299 = vsyncadd %s293, %s298
          %s300 = smul.addr %s22, 128
          %s301 = scalar_lea.hbm %s0, %s300
          %s303 = sshll.u32 %s296, 4
          %s304 = int_to_ptr.vmem [resolvable:$true] %s303
          %306 = dma.hbm_to_vmem [thread:$0]  %s301, 128, %s304, %s293
        $region44: #{_lambda_.25} parent=39 // pred_fallthru
          _
      $region40: #{_lambda_.25} parent=5 // pred_fallthru
        _
      %p307 = scmp.le.s32.totalorder 1, %s22
      %p308 = scmp.lt.s32.totalorder %s22, 3
      %p309 = pnand %p307, %p308
      %p310 = pneg %p309
      // Predicated region
      $region45: #{_lambda_.25} parent=5 // pred_check
        _
      $region46: #{_lambda_.25} parent=5 // pred_check_branch
        %312 = sbr.rel (%p309) target = $region48
      $region47: #{_lambda_.25} parent=5 // pred_region
        %s313 = ssub.s32 %s22, 1
        %s314 = sand.u32 %s35, 1
        %s315 = scalar_lea.sflag [#allocation3], %s314
        %s316 = sand.u32 %s35, 1
        %s317 = smul.addr %s316, 8
        %s318 = scalar_lea.vmem [#allocation2], %s317
        // Predicated region
        $region49: #{_lambda_.25} parent=47 // pred_check
          %p319 = pneg %p48
        $region50: #{_lambda_.25} parent=47 // pred_check_branch
          %321 = sbr.rel (%p319) target = $region52
        $region51: #{_lambda_.25} parent=47 // pred_region
          %322 = dma.done %s315, 128
        $region52: #{_lambda_.25} parent=47 // pred_fallthru
          _
        // Predicated region
        $region53: #{_lambda_.25} parent=47 // pred_check
          %p323 = pneg %p69
        $region54: #{_lambda_.25} parent=47 // pred_check_branch
          %325 = sbr.rel (%p323) target = $region56
        $region55: #{_lambda_.25} parent=47 // pred_region
          %326 = dma.done [#allocation6], 16
        $region56: #{_lambda_.25} parent=47 // pred_fallthru
          _
        // Predicated region
        $region57: #{_lambda_.25} parent=47 // pred_check
          %p327 = pneg %p90
        $region58: #{_lambda_.25} parent=47 // pred_check_branch
          %329 = sbr.rel (%p327) target = $region60
        $region59: #{_lambda_.25} parent=47 // pred_region
          %330 = dma.done [#allocation6], 16
        $region60: #{_lambda_.25} parent=47 // pred_fallthru
          _
        // Predicated region
        $region61: #{_lambda_.25} parent=47 // pred_check
          %p331 = pneg %p111
        $region62: #{_lambda_.25} parent=47 // pred_check_branch
          %333 = sbr.rel (%p331) target = $region64
        $region63: #{_lambda_.25} parent=47 // pred_region
          %334 = dma.done [#allocation9], 512
        $region64: #{_lambda_.25} parent=47 // pred_fallthru
          _
        // Predicated region
        $region65: #{_lambda_.25} parent=47 // pred_check
          %p335 = pneg %p132
        $region66: #{_lambda_.25} parent=47 // pred_check_branch
          %337 = sbr.rel (%p335) target = $region68
        $region67: #{_lambda_.25} parent=47 // pred_region
          %338 = dma.done [#allocation9], 32
        $region68: #{_lambda_.25} parent=47 // pred_fallthru
          _
        // Predicated region
        $region69: #{_lambda_.25} parent=47 // pred_check
          %p339 = pneg %p153
        $region70: #{_lambda_.25} parent=47 // pred_check_branch
          %341 = sbr.rel (%p339) target = $region72
        $region71: #{_lambda_.25} parent=47 // pred_region
          %342 = dma.done [#allocation12], 512
        $region72: #{_lambda_.25} parent=47 // pred_fallthru
          _
        // Predicated region
        $region73: #{_lambda_.25} parent=47 // pred_check
          %p343 = pneg %p174
        $region74: #{_lambda_.25} parent=47 // pred_check_branch
          %345 = sbr.rel (%p343) target = $region76
        $region75: #{_lambda_.25} parent=47 // pred_region
          %346 = dma.done [#allocation12], 16
        $region76: #{_lambda_.25} parent=47 // pred_fallthru
          _
        %s347 = sand.u32 %s35, 1
        %s348 = scalar_lea.sflag [#allocation3], %s347
        %s349 = sand.u32 %s35, 1
        %s350 = smul.addr %s349, 8
        %s351 = scalar_lea.vmem [#allocation2], %s350
        %p352 = pneg %p48
        %p353 = pneg %p45
        %p354 = pneg %p69
        %p355 = pneg %p66
        %p356 = pneg %p90
        %p357 = pneg %p87
        %p358 = pneg %p111
        %p359 = pneg %p108
        %p360 = pneg %p132
        %p361 = pneg %p129
        %p362 = pneg %p153
        %p363 = pneg %p150
        %p364 = pneg %p174
        %p365 = pneg %p171
        %p366 = pneg %p200
        %p367 = pneg %p197
        %s368 = sand.u32 %s187, 1
        %s369 = scalar_lea.sflag [#allocation4], %s368
        %s370 = sand.u32 %s187, 1
        %s371 = smul.addr %s370, 8
        %s372 = scalar_lea.vmem [#allocation14], %s371
        %v374 = vld [vmem:[%s318] sm:$0xff]
        %vm375 = vcmask 261120
        %v376 = vsel %vm375, %v374, 0.0
        %377 = vadd.xlane.f32.xlu0 %v376
        %v378 = vpop.xlane.xlu0 %377
        %v379 = vrcp.pop 32.0
        %v380 = vmul.f32 %v378, %v379
        %v381 = vsub.f32 %v374, %v380
        %v382 = vmul.f32 %v381, %v381
        %v383 = vsel %vm375, %v382, 0.0
        %384 = vadd.xlane.f32.xlu0 %v383
        %v385 = vpop.xlane.xlu0 %384
        %v386 = vmul.f32 %v385, %v379
        %v387 = vadd.f32 %v386, 1e-05
        %v388 = vrsqrt.pop %v387
        %v389 = vmul.f32 %v381, %v388
        %v390 = vld [vmem:[#allocation5] sm:$0x1]
        %v392 = vlaneseq
        %v393 = vshrl.u32 %v392, 7
        %v394 = vsub.s32 0, %v393
        %v395 = vrot.slane %v390, %v394
        %v397 = vmul.f32 %v389, %v395
        %v398 = vld [vmem:[#allocation7] sm:$0x1]
        %v400 = vlaneseq
        %v401 = vshrl.u32 %v400, 7
        %v402 = vsub.s32 0, %v401
        %v403 = vrot.slane %v398, %v402
        %v405 = vadd.f32 %v397, %v403
        %v406 = vpack.c.bf16 %v405, %v405
        %v407 = vld [vmem:[#allocation8] sm:$0xff]
        %v408 = vld [vmem:[#allocation8 + $0x8] sm:$0xff]
        %v409 = vld [vmem:[#allocation8 + $0x10] sm:$0xff]
        %v410 = vld [vmem:[#allocation8 + $0x18] sm:$0xff]
        %v411 = vld [vmem:[#allocation10] sm:$0x3]
        %v413 = vlaneseq
        %v414 = vshrl.u32 %v413, 7
        %v415 = vsub.s32 0, %v414
        %v416 = vrot.slane %v411, %v415
        %v417 = vlaneseq
        %v418 = vshrl.u32 %v417, 7
        %v419 = vsub.s32 1, %v418
        %v420 = vrot.slane %v411, %v419
        %v427 = vunpack.c.l.b16 %v407
        %v428 = vunpack.c.h.b16 %v407
        %v429 = vunpack.c.l.b16 %v408
        %v430 = vunpack.c.h.b16 %v408
        %v431 = vunpack.c.l.b16 %v409
        %v432 = vunpack.c.h.b16 %v409
        %v433 = vunpack.c.l.b16 %v410
        %v434 = vunpack.c.h.b16 %v410
        %v435 = vpack.c.b16 %v429, %v427
        %v436 = vpack.c.b16 %v430, %v428
        %v437 = vpack.c.b16 %v433, %v431
        %v438 = vpack.c.b16 %v434, %v432
        %v444 = vsel %vm375, %v406, 0
        %446 = vmatprep.subr.bf16.mxu0 %v436
        %447 = vmatpush1.bf16.msra.mxu0 %v435
        %448 = vmatprep.subr.bf16.mxu0 %v438
        %449 = vmatpush1.bf16.msra.mxu0 %v437
        %450 = vmatprep.subr.bf16.mxu0 0
        %451 = vmatpush1.bf16.msra.mxu0 0
        %452 = vmatprep.subr.bf16.mxu0 0
        %453 = vmatpush1.bf16.msra.mxu0 0
        %454 = vmatprep.subr.bf16.mxu0 0
        %455 = vmatpush1.bf16.msra.mxu0 0
        %456 = vmatprep.subr.bf16.mxu0 0
        %457 = vmatpush1.bf16.msra.mxu0 0
        %458 = vmatprep.subr.bf16.mxu0 0
        %459 = vmatpush1.bf16.msra.mxu0 0
        %460 = vmatprep.subr.bf16.mxu0 0
        %461 = vmatpush1.bf16.msra.mxu0 0
        %462 = vmatprep.subr.bf16.mxu0 0
        %463 = vmatpush1.bf16.msra.mxu0 0
        %464 = vmatprep.subr.bf16.mxu0 0
        %465 = vmatpush1.bf16.msra.mxu0 0
        %466 = vmatprep.subr.bf16.mxu0 0
        %467 = vmatpush1.bf16.msra.mxu0 0
        %468 = vmatprep.subr.bf16.mxu0 0
        %469 = vmatpush1.bf16.msra.mxu0 0
        %470 = vmatprep.subr.bf16.mxu0 0
        %471 = vmatpush1.bf16.msra.mxu0 0
        %472 = vmatprep.subr.bf16.mxu0 0
        %473 = vmatpush1.bf16.msra.mxu0 0
        %474 = vmatprep.subr.bf16.mxu0 0
        %475 = vmatpush1.bf16.msra.mxu0 0
        %476 = vmatprep.subr.bf16.mxu0 0
        %477 = vmatpush1.bf16.msra.mxu0 0
        %478 = vmatprep.mubr.bf16.mxu0 0
        %479 = vmatmul.mubr.bf16.gmra.mrb[0].mxu0 %v444
        %v480 = vpop.f32.mrb[0].mxu0
        %v481 = vadd.f32 %v416, %v480
        %v482 = vpop.f32.mrb[0].mxu0
        %v483 = vadd.f32 %v420, %v482
        %v484 = vpop.f32.mrb[0].mxu0
        %v485 = vpop.f32.mrb[0].mxu0
        %486 = vdwg.mxu0
        %v487 = vpack.c.bf16 %v481, %v481
        %v488 = vpack.c.bf16 %v483, %v483
        %490 = vrot.lane.b32.xlu0 %v487, 64
        %v491 = vpop.permute.xlu0 %490
        %vm492 = vcmask 130048
        %v494 = vsel %vm492, %v487, 0
        %v497 = vsel %vm492, %v491, 0
        %499 = vmatprep.subr.bf16.mxu0 0
        %500 = vmatpush1.bf16.xpose.msra.mxu0 %v497
        %501 = vmatprep.subr.bf16.mxu0 0
        %502 = vmatpush1.bf16.xpose.msra.mxu0 0
        %503 = vmatprep.subr.bf16.mxu0 0
        %504 = vmatpush1.bf16.xpose.msra.mxu0 0
        %505 = vmatprep.subr.bf16.mxu0 0
        %506 = vmatpush1.bf16.xpose.msra.mxu0 0
        %507 = vmatprep.subr.bf16.mxu0 0
        %508 = vmatpush1.bf16.xpose.msra.mxu0 0
        %509 = vmatprep.subr.bf16.mxu0 0
        %510 = vmatpush1.bf16.xpose.msra.mxu0 0
        %511 = vmatprep.subr.bf16.mxu0 0
        %512 = vmatpush1.bf16.xpose.msra.mxu0 0
        %513 = vmatprep.subr.bf16.mxu0 0
        %514 = vmatpush1.bf16.xpose.msra.mxu0 0
        %515 = vmatprep.subr.bf16.mxu0 0
        %516 = vmatpush1.bf16.xpose.msra.mxu0 0
        %517 = vmatprep.subr.bf16.mxu0 0
        %518 = vmatpush1.bf16.xpose.msra.mxu0 0
        %519 = vmatprep.subr.bf16.mxu0 0
        %520 = vmatpush1.bf16.xpose.msra.mxu0 0
        %521 = vmatprep.subr.bf16.mxu0 0
        %522 = vmatpush1.bf16.xpose.msra.mxu0 0
        %523 = vmatprep.subr.bf16.mxu0 0
        %524 = vmatpush1.bf16.xpose.msra.mxu0 0
        %525 = vmatprep.subr.bf16.mxu0 0
        %526 = vmatpush1.bf16.xpose.msra.mxu0 0
        %527 = vmatprep.subr.bf16.mxu0 0
        %528 = vmatpush1.bf16.xpose.msra.mxu0 0
        %529 = vmatprep.subr.bf16.mxu0 0
        %530 = vmatpush1.bf16.xpose.msra.mxu0 0
        %531 = vmatprep.mubr.bf16.mxu0 0
        %532 = vmatmul.mubr.bf16.gmra.mrb[0].mxu0 %v494
        %v533 = vpop.f32.mrb[0].mxu0
        %v534 = vadd.f32 0.0, %v533
        %v535 = vpop.f32.mrb[0].mxu0
        %v536 = vpop.f32.mrb[0].mxu0
        %v537 = vpop.f32.mrb[0].mxu0
        %538 = vdwg.mxu0
        %v539 = vmul.f32 %v534, 0.25
        %vm540 = vcmask 64512
        %v541 = vsel %vm540, %v539, -inf
        %542 = vmax.xlane.f32.xlu0 %v541
        %v543 = vpop.xlane.xlu0 %542
        %v544 = vsub.f32 %v539, %v543
        %v545 = vmul.f32 %v544, 1.442695
        %v546 = vpow.pop %v545
        %v547 = vsel %vm540, %v546, 0.0
        %548 = vadd.xlane.f32.xlu0 %v547
        %v549 = vpop.xlane.xlu0 %548
        %v550 = vrcp.pop %v549
        %v551 = vpack.c.bf16 %v546, %v546
        %v553 = vsel %vm540, %v551, 0
        %vm555 = vcmask 1043456
        %v557 = vsel %vm555, %v488, 0
        %559 = vmatprep.subr.bf16.mxu0 0
        %560 = vmatpush1.bf16.msra.mxu0 %v557
        %561 = vmatprep.subr.bf16.mxu0 0
        %562 = vmatpush1.bf16.msra.mxu0 0
        %563 = vmatprep.subr.bf16.mxu0 0
        %564 = vmatpush1.bf16.msra.mxu0 0
        %565 = vmatprep.subr.bf16.mxu0 0
        %566 = vmatpush1.bf16.msra.mxu0 0
        %567 = vmatprep.subr.bf16.mxu0 0
        %568 = vmatpush1.bf16.msra.mxu0 0
        %569 = vmatprep.subr.bf16.mxu0 0
        %570 = vmatpush1.bf16.msra.mxu0 0
        %571 = vmatprep.subr.bf16.mxu0 0
        %572 = vmatpush1.bf16.msra.mxu0 0
        %573 = vmatprep.subr.bf16.mxu0 0
        %574 = vmatpush1.bf16.msra.mxu0 0
        %575 = vmatprep.subr.bf16.mxu0 0
        %576 = vmatpush1.bf16.msra.mxu0 0
        %577 = vmatprep.subr.bf16.mxu0 0
        %578 = vmatpush1.bf16.msra.mxu0 0
        %579 = vmatprep.subr.bf16.mxu0 0
        %580 = vmatpush1.bf16.msra.mxu0 0
        %581 = vmatprep.subr.bf16.mxu0 0
        %582 = vmatpush1.bf16.msra.mxu0 0
        %583 = vmatprep.subr.bf16.mxu0 0
        %584 = vmatpush1.bf16.msra.mxu0 0
        %585 = vmatprep.subr.bf16.mxu0 0
        %586 = vmatpush1.bf16.msra.mxu0 0
        %587 = vmatprep.subr.bf16.mxu0 0
        %588 = vmatpush1.bf16.msra.mxu0 0
        %589 = vmatprep.subr.bf16.mxu0 0
        %590 = vmatpush1.bf16.msra.mxu0 0
        %591 = vmatprep.mubr.bf16.mxu0 0
        %592 = vmatmul.mubr.bf16.gmra.mrb[0].mxu0 %v553
        %v593 = vpop.f32.mrb[0].mxu0
        %v594 = vadd.f32 0.0, %v593
        %v595 = vpop.f32.mrb[0].mxu0
        %v596 = vpop.f32.mrb[0].mxu0
        %v597 = vpop.f32.mrb[0].mxu0
        %598 = vdwg.mxu0
        %v599 = vmul.f32 %v594, %v550
        %600 = vrot.lane.b32.xlu0 %v487, 112
        %v601 = vpop.permute.xlu0 %600
        %602 = vrot.lane.b32.xlu0 %v487, 48
        %v603 = vpop.permute.xlu0 %602
        %v605 = vsel %vm492, %v601, 0
        %v608 = vsel %vm492, %v603, 0
        %610 = vmatprep.subr.bf16.mxu0 0
        %611 = vmatpush1.bf16.xpose.msra.mxu0 %v608
        %612 = vmatprep.subr.bf16.mxu0 0
        %613 = vmatpush1.bf16.xpose.msra.mxu0 0
        %614 = vmatprep.subr.bf16.mxu0 0
        %615 = vmatpush1.bf16.xpose.msra.mxu0 0
        %616 = vmatprep.subr.bf16.mxu0 0
        %617 = vmatpush1.bf16.xpose.msra.mxu0 0
        %618 = vmatprep.subr.bf16.mxu0 0
        %619 = vmatpush1.bf16.xpose.msra.mxu0 0
        %620 = vmatprep.subr.bf16.mxu0 0
        %621 = vmatpush1.bf16.xpose.msra.mxu0 0
        %622 = vmatprep.subr.bf16.mxu0 0
        %623 = vmatpush1.bf16.xpose.msra.mxu0 0
        %624 = vmatprep.subr.bf16.mxu0 0
        %625 = vmatpush1.bf16.xpose.msra.mxu0 0
        %626 = vmatprep.subr.bf16.mxu0 0
        %627 = vmatpush1.bf16.xpose.msra.mxu0 0
        %628 = vmatprep.subr.bf16.mxu0 0
        %629 = vmatpush1.bf16.xpose.msra.mxu0 0
        %630 = vmatprep.subr.bf16.mxu0 0
        %631 = vmatpush1.bf16.xpose.msra.mxu0 0
        %632 = vmatprep.subr.bf16.mxu0 0
        %633 = vmatpush1.bf16.xpose.msra.mxu0 0
        %634 = vmatprep.subr.bf16.mxu0 0
        %635 = vmatpush1.bf16.xpose.msra.mxu0 0
        %636 = vmatprep.subr.bf16.mxu0 0
        %637 = vmatpush1.bf16.xpose.msra.mxu0 0
        %638 = vmatprep.subr.bf16.mxu0 0
        %639 = vmatpush1.bf16.xpose.msra.mxu0 0
        %640 = vmatprep.subr.bf16.mxu0 0
        %641 = vmatpush1.bf16.xpose.msra.mxu0 0
        %642 = vmatprep.mubr.bf16.mxu0 0
        %643 = vmatmul.mubr.bf16.gmra.mrb[0].mxu0 %v605
        %v644 = vpop.f32.mrb[0].mxu0
        %v645 = vadd.f32 0.0, %v644
        %v646 = vpop.f32.mrb[0].mxu0
        %v647 = vpop.f32.mrb[0].mxu0
        %v648 = vpop.f32.mrb[0].mxu0
        %649 = vdwg.mxu0
        %v650 = vmul.f32 %v645, 0.25
        %v651 = vsel %vm540, %v650, -inf
        %652 = vmax.xlane.f32.xlu0 %v651
        %v653 = vpop.xlane.xlu0 %652
        %v654 = vsub.f32 %v650, %v653
        %v655 = vmul.f32 %v654, 1.442695
        %v656 = vpow.pop %v655
        %v657 = vsel %vm540, %v656, 0.0
        %658 = vadd.xlane.f32.xlu0 %v657
        %v659 = vpop.xlane.xlu0 %658
        %v660 = vrcp.pop %v659
        %v661 = vpack.c.bf16 %v656, %v656
        %663 = vrot.lane.b32.xlu0 %v488, 112
        %v664 = vpop.permute.xlu0 %663
        %v666 = vsel %vm540, %v661, 0
        %v669 = vsel %vm555, %v664, 0
        %671 = vmatprep.subr.bf16.mxu0 0
        %672 = vmatpush1.bf16.msra.mxu0 %v669
        %673 = vmatprep.subr.bf16.mxu0 0
        %674 = vmatpush1.bf16.msra.mxu0 0
        %675 = vmatprep.subr.bf16.mxu0 0
        %676 = vmatpush1.bf16.msra.mxu0 0
        %677 = vmatprep.subr.bf16.mxu0 0
        %678 = vmatpush1.bf16.msra.mxu0 0
        %679 = vmatprep.subr.bf16.mxu0 0
        %680 = vmatpush1.bf16.msra.mxu0 0
        %681 = vmatprep.subr.bf16.mxu0 0
        %682 = vmatpush1.bf16.msra.mxu0 0
        %683 = vmatprep.subr.bf16.mxu0 0
        %684 = vmatpush1.bf16.msra.mxu0 0
        %685 = vmatprep.subr.bf16.mxu0 0
        %686 = vmatpush1.bf16.msra.mxu0 0
        %687 = vmatprep.subr.bf16.mxu0 0
        %688 = vmatpush1.bf16.msra.mxu0 0
        %689 = vmatprep.subr.bf16.mxu0 0
        %690 = vmatpush1.bf16.msra.mxu0 0
        %691 = vmatprep.subr.bf16.mxu0 0
        %692 = vmatpush1.bf16.msra.mxu0 0
        %693 = vmatprep.subr.bf16.mxu0 0
        %694 = vmatpush1.bf16.msra.mxu0 0
        %695 = vmatprep.subr.bf16.mxu0 0
        %696 = vmatpush1.bf16.msra.mxu0 0
        %697 = vmatprep.subr.bf16.mxu0 0
        %698 = vmatpush1.bf16.msra.mxu0 0
        %699 = vmatprep.subr.bf16.mxu0 0
        %700 = vmatpush1.bf16.msra.mxu0 0
        %701 = vmatprep.subr.bf16.mxu0 0
        %702 = vmatpush1.bf16.msra.mxu0 0
        %703 = vmatprep.mubr.bf16.mxu0 0
        %704 = vmatmul.mubr.bf16.gmra.mrb[0].mxu0 %v666
        %v705 = vpop.f32.mrb[0].mxu0
        %v706 = vadd.f32 0.0, %v705
        %v707 = vpop.f32.mrb[0].mxu0
        %v708 = vpop.f32.mrb[0].mxu0
        %v709 = vpop.f32.mrb[0].mxu0
        %710 = vdwg.mxu0
        %v711 = vmul.f32 %v706, %v660
        %712 = vrot.lane.b32.xlu0 %v487, 96
        %v713 = vpop.permute.xlu0 %712
        %714 = vrot.lane.b32.xlu0 %v487, 32
        %v715 = vpop.permute.xlu0 %714
        %v717 = vsel %vm492, %v713, 0
        %v720 = vsel %vm492, %v715, 0
        %722 = vmatprep.subr.bf16.mxu0 0
        %723 = vmatpush1.bf16.xpose.msra.mxu0 %v720
        %724 = vmatprep.subr.bf16.mxu0 0
        %725 = vmatpush1.bf16.xpose.msra.mxu0 0
        %726 = vmatprep.subr.bf16.mxu0 0
        %727 = vmatpush1.bf16.xpose.msra.mxu0 0
        %728 = vmatprep.subr.bf16.mxu0 0
        %729 = vmatpush1.bf16.xpose.msra.mxu0 0
        %730 = vmatprep.subr.bf16.mxu0 0
        %731 = vmatpush1.bf16.xpose.msra.mxu0 0
        %732 = vmatprep.subr.bf16.mxu0 0
        %733 = vmatpush1.bf16.xpose.msra.mxu0 0
        %734 = vmatprep.subr.bf16.mxu0 0
        %735 = vmatpush1.bf16.xpose.msra.mxu0 0
        %736 = vmatprep.subr.bf16.mxu0 0
        %737 = vmatpush1.bf16.xpose.msra.mxu0 0
        %738 = vmatprep.subr.bf16.mxu0 0
        %739 = vmatpush1.bf16.xpose.msra.mxu0 0
        %740 = vmatprep.subr.bf16.mxu0 0
        %741 = vmatpush1.bf16.xpose.msra.mxu0 0
        %742 = vmatprep.subr.bf16.mxu0 0
        %743 = vmatpush1.bf16.xpose.msra.mxu0 0
        %744 = vmatprep.subr.bf16.mxu0 0
        %745 = vmatpush1.bf16.xpose.msra.mxu0 0
        %746 = vmatprep.subr.bf16.mxu0 0
        %747 = vmatpush1.bf16.xpose.msra.mxu0 0
        %748 = vmatprep.subr.bf16.mxu0 0
        %749 = vmatpush1.bf16.xpose.msra.mxu0 0
        %750 = vmatprep.subr.bf16.mxu0 0
        %751 = vmatpush1.bf16.xpose.msra.mxu0 0
        %752 = vmatprep.subr.bf16.mxu0 0
        %753 = vmatpush1.bf16.xpose.msra.mxu0 0
        %754 = vmatprep.mubr.bf16.mxu0 0
        %755 = vmatmul.mubr.bf16.gmra.mrb[0].mxu0 %v717
        %v756 = vpop.f32.mrb[0].mxu0
        %v757 = vadd.f32 0.0, %v756
        %v758 = vpop.f32.mrb[0].mxu0
        %v759 = vpop.f32.mrb[0].mxu0
        %v760 = vpop.f32.mrb[0].mxu0
        %761 = vdwg.mxu0
        %v762 = vmul.f32 %v757, 0.25
        %v763 = vsel %vm540, %v762, -inf
        %764 = vmax.xlane.f32.xlu0 %v763
        %v765 = vpop.xlane.xlu0 %764
        %v766 = vsub.f32 %v762, %v765
        %v767 = vmul.f32 %v766, 1.442695
        %v768 = vpow.pop %v767
        %v769 = vsel %vm540, %v768, 0.0
        %770 = vadd.xlane.f32.xlu0 %v769
        %v771 = vpop.xlane.xlu0 %770
        %v772 = vrcp.pop %v771
        %v773 = vpack.c.bf16 %v768, %v768
        %774 = vrot.lane.b32.xlu0 %v488, 96
        %v775 = vpop.permute.xlu0 %774
        %v777 = vsel %vm540, %v773, 0
        %v780 = vsel %vm555, %v775, 0
        %782 = vmatprep.subr.bf16.mxu0 0
        %783 = vmatpush1.bf16.msra.mxu0 %v780
        %784 = vmatprep.subr.bf16.mxu0 0
        %785 = vmatpush1.bf16.msra.mxu0 0
        %786 = vmatprep.subr.bf16.mxu0 0
        %787 = vmatpush1.bf16.msra.mxu0 0
        %788 = vmatprep.subr.bf16.mxu0 0
        %789 = vmatpush1.bf16.msra.mxu0 0
        %790 = vmatprep.subr.bf16.mxu0 0
        %791 = vmatpush1.bf16.msra.mxu0 0
        %792 = vmatprep.subr.bf16.mxu0 0
        %793 = vmatpush1.bf16.msra.mxu0 0
        %794 = vmatprep.subr.bf16.mxu0 0
        %795 = vmatpush1.bf16.msra.mxu0 0
        %796 = vmatprep.subr.bf16.mxu0 0
        %797 = vmatpush1.bf16.msra.mxu0 0
        %798 = vmatprep.subr.bf16.mxu0 0
        %799 = vmatpush1.bf16.msra.mxu0 0
        %800 = vmatprep.subr.bf16.mxu0 0
        %801 = vmatpush1.bf16.msra.mxu0 0
        %802 = vmatprep.subr.bf16.mxu0 0
        %803 = vmatpush1.bf16.msra.mxu0 0
        %804 = vmatprep.subr.bf16.mxu0 0
        %805 = vmatpush1.bf16.msra.mxu0 0
        %806 = vmatprep.subr.bf16.mxu0 0
        %807 = vmatpush1.bf16.msra.mxu0 0
        %808 = vmatprep.subr.bf16.mxu0 0
        %809 = vmatpush1.bf16.msra.mxu0 0
        %810 = vmatprep.subr.bf16.mxu0 0
        %811 = vmatpush1.bf16.msra.mxu0 0
        %812 = vmatprep.subr.bf16.mxu0 0
        %813 = vmatpush1.bf16.msra.mxu0 0
        %814 = vmatprep.mubr.bf16.mxu0 0
        %815 = vmatmul.mubr.bf16.gmra.mrb[0].mxu0 %v777
        %v816 = vpop.f32.mrb[0].mxu0
        %v817 = vadd.f32 0.0, %v816
        %v818 = vpop.f32.mrb[0].mxu0
        %v819 = vpop.f32.mrb[0].mxu0
        %v820 = vpop.f32.mrb[0].mxu0
        %821 = vdwg.mxu0
        %v822 = vmul.f32 %v817, %v772
        %823 = vrot.lane.b32.xlu0 %v487, 80
        %v824 = vpop.permute.xlu0 %823
        %825 = vrot.lane.b32.xlu0 %v487, 16
        %v826 = vpop.permute.xlu0 %825
        %v828 = vsel %vm492, %v824, 0
        %v831 = vsel %vm492, %v826, 0
        %833 = vmatprep.subr.bf16.mxu0 0
        %834 = vmatpush1.bf16.xpose.msra.mxu0 %v831
        %835 = vmatprep.subr.bf16.mxu0 0
        %836 = vmatpush1.bf16.xpose.msra.mxu0 0
        %837 = vmatprep.subr.bf16.mxu0 0
        %838 = vmatpush1.bf16.xpose.msra.mxu0 0
        %839 = vmatprep.subr.bf16.mxu0 0
        %840 = vmatpush1.bf16.xpose.msra.mxu0 0
        %841 = vmatprep.subr.bf16.mxu0 0
        %842 = vmatpush1.bf16.xpose.msra.mxu0 0
        %843 = vmatprep.subr.bf16.mxu0 0
        %844 = vmatpush1.bf16.xpose.msra.mxu0 0
        %845 = vmatprep.subr.bf16.mxu0 0
        %846 = vmatpush1.bf16.xpose.msra.mxu0 0
        %847 = vmatprep.subr.bf16.mxu0 0
        %848 = vmatpush1.bf16.xpose.msra.mxu0 0
        %849 = vmatprep.subr.bf16.mxu0 0
        %850 = vmatpush1.bf16.xpose.msra.mxu0 0
        %851 = vmatprep.subr.bf16.mxu0 0
        %852 = vmatpush1.bf16.xpose.msra.mxu0 0
        %853 = vmatprep.subr.bf16.mxu0 0
        %854 = vmatpush1.bf16.xpose.msra.mxu0 0
        %855 = vmatprep.subr.bf16.mxu0 0
        %856 = vmatpush1.bf16.xpose.msra.mxu0 0
        %857 = vmatprep.subr.bf16.mxu0 0
        %858 = vmatpush1.bf16.xpose.msra.mxu0 0
        %859 = vmatprep.subr.bf16.mxu0 0
        %860 = vmatpush1.bf16.xpose.msra.mxu0 0
        %861 = vmatprep.subr.bf16.mxu0 0
        %862 = vmatpush1.bf16.xpose.msra.mxu0 0
        %863 = vmatprep.subr.bf16.mxu0 0
        %864 = vmatpush1.bf16.xpose.msra.mxu0 0
        %865 = vmatprep.mubr.bf16.mxu0 0
        %866 = vmatmul.mubr.bf16.gmra.mrb[0].mxu0 %v828
        %v867 = vpop.f32.mrb[0].mxu0
        %v868 = vadd.f32 0.0, %v867
        %v869 = vpop.f32.mrb[0].mxu0
        %v870 = vpop.f32.mrb[0].mxu0
        %v871 = vpop.f32.mrb[0].mxu0
        %872 = vdwg.mxu0
        %v873 = vmul.f32 %v868, 0.25
        %v874 = vsel %vm540, %v873, -inf
        %875 = vmax.xlane.f32.xlu0 %v874
        %v876 = vpop.xlane.xlu0 %875
        %v877 = vsub.f32 %v873, %v876
        %v878 = vmul.f32 %v877, 1.442695
        %v879 = vpow.pop %v878
        %v880 = vsel %vm540, %v879, 0.0
        %881 = vadd.xlane.f32.xlu0 %v880
        %v882 = vpop.xlane.xlu0 %881
        %v883 = vrcp.pop %v882
        %v884 = vpack.c.bf16 %v879, %v879
        %885 = vrot.lane.b32.xlu0 %v488, 80
        %v886 = vpop.permute.xlu0 %885
        %v888 = vsel %vm540, %v884, 0
        %v891 = vsel %vm555, %v886, 0
        %893 = vmatprep.subr.bf16.mxu0 0
        %894 = vmatpush1.bf16.msra.mxu0 %v891
        %895 = vmatprep.subr.bf16.mxu0 0
        %896 = vmatpush1.bf16.msra.mxu0 0
        %897 = vmatprep.subr.bf16.mxu0 0
        %898 = vmatpush1.bf16.msra.mxu0 0
        %899 = vmatprep.subr.bf16.mxu0 0
        %900 = vmatpush1.bf16.msra.mxu0 0
        %901 = vmatprep.subr.bf16.mxu0 0
        %902 = vmatpush1.bf16.msra.mxu0 0
        %903 = vmatprep.subr.bf16.mxu0 0
        %904 = vmatpush1.bf16.msra.mxu0 0
        %905 = vmatprep.subr.bf16.mxu0 0
        %906 = vmatpush1.bf16.msra.mxu0 0
        %907 = vmatprep.subr.bf16.mxu0 0
        %908 = vmatpush1.bf16.msra.mxu0 0
        %909 = vmatprep.subr.bf16.mxu0 0
        %910 = vmatpush1.bf16.msra.mxu0 0
        %911 = vmatprep.subr.bf16.mxu0 0
        %912 = vmatpush1.bf16.msra.mxu0 0
        %913 = vmatprep.subr.bf16.mxu0 0
        %914 = vmatpush1.bf16.msra.mxu0 0
        %915 = vmatprep.subr.bf16.mxu0 0
        %916 = vmatpush1.bf16.msra.mxu0 0
        %917 = vmatprep.subr.bf16.mxu0 0
        %918 = vmatpush1.bf16.msra.mxu0 0
        %919 = vmatprep.subr.bf16.mxu0 0
        %920 = vmatpush1.bf16.msra.mxu0 0
        %921 = vmatprep.subr.bf16.mxu0 0
        %922 = vmatpush1.bf16.msra.mxu0 0
        %923 = vmatprep.subr.bf16.mxu0 0
        %924 = vmatpush1.bf16.msra.mxu0 0
        %925 = vmatprep.mubr.bf16.mxu0 0
        %926 = vmatmul.mubr.bf16.gmra.mrb[0].mxu0 %v888
        %v927 = vpop.f32.mrb[0].mxu0
        %v928 = vadd.f32 0.0, %v927
        %v929 = vpop.f32.mrb[0].mxu0
        %v930 = vpop.f32.mrb[0].mxu0
        %v931 = vpop.f32.mrb[0].mxu0
        %932 = vdwg.mxu0
        %v933 = vmul.f32 %v928, %v883
        %935 = vrot.lane.b32.xlu0 %v711, 16
        %v936 = vpop.permute.xlu0 %935
        %939 = vrot.lane.b32.xlu0 %v822, 32
        %v940 = vpop.permute.xlu0 %939
        %943 = vrot.lane.b32.xlu0 %v933, 48
        %v944 = vpop.permute.xlu0 %943
        %v946 = vsel %vm492, %v599, %v936
        %v947 = vsel %vm375, %v946, %v940
        %vm948 = vcmask 392192
        %v949 = vsel %vm948, %v947, %v944
        %v950 = vpack.c.bf16 %v949, %v949
        %v951 = vld [vmem:[#allocation11] sm:$0xf]
        %v952 = vld [vmem:[#allocation11 + $0x4] sm:$0xf]
        %v953 = vld [vmem:[#allocation11 + $0x8] sm:$0xf]
        %v954 = vld [vmem:[#allocation11 + $0xc] sm:$0xf]
        %v955 = vld [vmem:[#allocation11 + $0x10] sm:$0xf]
        %v956 = vld [vmem:[#allocation11 + $0x14] sm:$0xf]
        %v957 = vld [vmem:[#allocation11 + $0x18] sm:$0xf]
        %v958 = vld [vmem:[#allocation11 + $0x1c] sm:$0xf]
        %v959 = vld [vmem:[#allocation13] sm:$0x1]
        %v961 = vlaneseq
        %v962 = vshrl.u32 %v961, 7
        %v963 = vsub.s32 0, %v962
        %v964 = vrot.slane %v959, %v963
        %v974 = vunpack.c.l.b16 %v951
        %v975 = vunpack.c.l.b16 %v952
        %v976 = vunpack.c.l.b16 %v953
        %v977 = vunpack.c.l.b16 %v954
        %v978 = vunpack.c.l.b16 %v955
        %v979 = vunpack.c.l.b16 %v956
        %v980 = vunpack.c.l.b16 %v957
        %v981 = vunpack.c.l.b16 %v958
        %v982 = vpack.c.b16 %v975, %v974
        %v983 = vpack.c.b16 %v977, %v976
        %v984 = vpack.c.b16 %v979, %v978
        %v985 = vpack.c.b16 %v981, %v980
        %vm990 = vcmask 523264
        %v992 = vsel %vm990, %v950, 0
        %994 = vmatprep.subr.bf16.mxu0 0
        %995 = vmatpush1.bf16.msra.mxu0 %v982
        %996 = vmatprep.subr.bf16.mxu0 0
        %997 = vmatpush1.bf16.msra.mxu0 %v983
        %998 = vmatprep.subr.bf16.mxu0 0
        %999 = vmatpush1.bf16.msra.mxu0 %v984
        %1000 = vmatprep.subr.bf16.mxu0 0
        %1001 = vmatpush1.bf16.msra.mxu0 %v985
        %1002 = vmatprep.subr.bf16.mxu0 0
        %1003 = vmatpush1.bf16.msra.mxu0 0
        %1004 = vmatprep.subr.bf16.mxu0 0
        %1005 = vmatpush1.bf16.msra.mxu0 0
        %1006 = vmatprep.subr.bf16.mxu0 0
        %1007 = vmatpush1.bf16.msra.mxu0 0
        %1008 = vmatprep.subr.bf16.mxu0 0
        %1009 = vmatpush1.bf16.msra.mxu0 0
        %1010 = vmatprep.subr.bf16.mxu0 0
        %1011 = vmatpush1.bf16.msra.mxu0 0
        %1012 = vmatprep.subr.bf16.mxu0 0
        %1013 = vmatpush1.bf16.msra.mxu0 0
        %1014 = vmatprep.subr.bf16.mxu0 0
        %1015 = vmatpush1.bf16.msra.mxu0 0
        %1016 = vmatprep.subr.bf16.mxu0 0
        %1017 = vmatpush1.bf16.msra.mxu0 0
        %1018 = vmatprep.subr.bf16.mxu0 0
        %1019 = vmatpush1.bf16.msra.mxu0 0
        %1020 = vmatprep.subr.bf16.mxu0 0
        %1021 = vmatpush1.bf16.msra.mxu0 0
        %1022 = vmatprep.subr.bf16.mxu0 0
        %1023 = vmatpush1.bf16.msra.mxu0 0
        %1024 = vmatprep.subr.bf16.mxu0 0
        %1025 = vmatpush1.bf16.msra.mxu0 0
        %1026 = vmatprep.mubr.bf16.mxu0 0
        %1027 = vmatmul.mubr.bf16.gmra.mrb[0].mxu0 %v992
        %v1028 = vpop.f32.mrb[0].mxu0
        %v1029 = vadd.f32 %v964, %v1028
        %v1030 = vpop.f32.mrb[0].mxu0
        %v1031 = vpop.f32.mrb[0].mxu0
        %v1032 = vpop.f32.mrb[0].mxu0
        %1033 = vdwg.mxu0
        %v1034 = vadd.f32 %v1029, %v374
        %1035 = vst.msk [vmem:[%s372] sm:$0xff] %vm375, %v1034
        %s1036 = sand.u32 %s187, 1
        %s1037 = scalar_lea.sflag [#allocation4], %s1036
        %s1038 = sand.u32 %s187, 1
        %s1039 = smul.addr %s1038, 8
        %s1040 = scalar_lea.vmem [#allocation14], %s1039
        // Predicated region
        $region77: #{_lambda_.25} parent=47 // pred_check
          %p1041 = pneg %p197
        $region78: #{_lambda_.25} parent=47 // pred_check_branch
          %1043 = sbr.rel (%p1041) target = $region80
        $region79: #{_lambda_.25} parent=47 // pred_region
          %s1045 = ssub.s32 128, 128
          %1046 = vsyncadd %s1037, %s1045
          %s1047 = smul.addr %s27, 128
          %s1048 = scalar_lea.hbm %s7, %s1047
          %s1050 = sshll.u32 %s1040, 4
          %s1051 = int_to_ptr.vmem [resolvable:$true] %s1050
          %1053 = dma.vmem_to_hbm [thread:$0]  %s1051, 128, %s1048, %s1037
        $region80: #{_lambda_.25} parent=47 // pred_fallthru
          _
      $region48: #{_lambda_.25} parent=5 // pred_fallthru
        _
      %p1054 = scmp.le.s32.totalorder 2, %s22
      // Predicated region
      $region81: #{_lambda_.25} parent=5 // pred_check
        %p1055 = pneg %p1054
      $region82: #{_lambda_.25} parent=5 // pred_check_branch
        %1057 = sbr.rel (%p1055) target = $region84
      $region83: #{_lambda_.25} parent=5 // pred_region
        %s1058 = ssub.s32 %s22, 2
        // Predicated region
        $region85: #{_lambda_.25} parent=83 // pred_check
          %p1059 = pneg %p203
        $region86: #{_lambda_.25} parent=83 // pred_check_branch
          %1061 = sbr.rel (%p1059) target = $region88
        $region87: #{_lambda_.25} parent=83 // pred_region
          %s1062 = sand.u32 %s188, 1
          %s1063 = scalar_lea.sflag [#allocation4], %s1062
          %s1064 = sand.u32 %s188, 1
          %s1065 = smul.addr %s1064, 8
          %s1066 = scalar_lea.vmem [#allocation14], %s1065
          %1067 = dma.done %s1063, 128
        $region88: #{_lambda_.25} parent=83 // pred_fallthru
          _
      $region84: #{_lambda_.25} parent=5 // pred_fallthru
        _
    $region6: #{_lambda_.25} parent=1 // loop_footer
      %s26 = sadd.s32 1, %s22
    $region7: #{_lambda_.25} parent=1 // loop_footer_branch
      %21 = sbr.rel target = $region3
    $region8: #{_lambda_.25} parent=1 // loop_exit
      _
    %1068 = vsyncpa [#allocation3], 1
    %s1069 = scalar_lea.sflag [#allocation3], 1
    %1070 = vsyncpa %s1069, 1
    %1071 = vsyncpa [#allocation6], 1
    %1072 = vsyncpa [#allocation9], 1
    %1073 = vsyncpa [#allocation12], 1
    %1074 = vsyncpa [#allocation4], 1
    %s1075 = scalar_lea.sflag [#allocation4], 1
    %1076 = vsyncpa %s1075, 1

// kernel: _lambda_.28
$region0: #{_lambda_.28}
  #allocation0 [shape = 'u32[]', space=smem, size = 0x4, offset = 0x4, fixed_abs, tag = 'smem constant byte address 0x4 - core index']
  #allocation1 [shape = 'u32[144,128]{1,0:T(1,128)}', space=vmem, size = 0x12000, scoped, tag = 'internal scratch']
  %s0 = inlined_call_operand.hbm [shape: f32[2,8,32], index: 0, kind: input, shape index: {}]
  %s1 = inlined_call_operand.hbm [shape: f32[2,8,32], index: 1, kind: input, shape index: {}]
  %s2 = inlined_call_operand.hbm [shape: f32[1,32], index: 2, kind: input, shape index: {}]
  %s3 = inlined_call_operand.hbm [shape: f32[1,32], index: 3, kind: input, shape index: {}]
  %s4 = inlined_call_operand.hbm [shape: bf16[32,64], index: 4, kind: input, shape index: {}]
  %s5 = inlined_call_operand.hbm [shape: f32[1,64], index: 5, kind: input, shape index: {}]
  %s6 = inlined_call_operand.hbm [shape: bf16[32,128], index: 6, kind: input, shape index: {}]
  %s7 = inlined_call_operand.hbm [shape: f32[1,128], index: 7, kind: input, shape index: {}]
  %s8 = inlined_call_operand.hbm [shape: bf16[64,32], index: 8, kind: input, shape index: {}]
  %s9 = inlined_call_operand.hbm [shape: f32[1,32], index: 9, kind: input, shape index: {}]
  %s10 = inlined_call_operand.hbm [shape: f32[2,8,32], index: 10, kind: output, shape index: {}]
  %s11 = sld [smem:[#allocation0]]
  $region113: #{_lambda_.28} parent=0
    _
  %s13 = ssub.s32 1, %s11
  %s14 = scalar_select 0, %s13, %s11
  $region1: #{_lambda_.28} parent=0
    #allocation2 [shape = 'u8[8192]{0}', space=vmem, size = 0x2000, scoped, tag = 'input window, operand 0']
    #allocation3 [shape = 's32[2]{0}', space=sflag, size = 0x8, scoped, tag = 'scoped memory for _lambda_.28']
    #allocation4 [shape = 's32[2]{0}', space=sflag, size = 0x8, scoped, tag = 'scoped memory for _lambda_.28']
    #allocation5 [shape = 'u8[8192]{0}', space=vmem, size = 0x2000, scoped, tag = 'input window, operand 1']
    #allocation6 [shape = 's32[2]{0}', space=sflag, size = 0x8, scoped, tag = 'scoped memory for _lambda_.28']
    #allocation7 [shape = 'u8[512]{0}', space=vmem, size = 0x400, scoped, tag = 'input window, operand 2, single buffered']
    #allocation8 [shape = 'u8[512]{0}', space=vmem, size = 0x400, scoped, tag = 'input window, operand 3, single buffered']
    #allocation9 [shape = 's32[1]{0}', space=sflag, size = 0x4, scoped, tag = 'scoped memory for _lambda_.28']
    #allocation10 [shape = 'u8[8192]{0}', space=vmem, size = 0x2000, scoped, tag = 'input window, operand 4, single buffered']
    #allocation11 [shape = 'u8[512]{0}', space=vmem, size = 0x400, scoped, tag = 'input window, operand 5, single buffered']
    #allocation12 [shape = 's32[1]{0}', space=sflag, size = 0x4, scoped, tag = 'scoped memory for _lambda_.28']
    #allocation13 [shape = 'u8[8192]{0}', space=vmem, size = 0x2000, scoped, tag = 'input window, operand 6, single buffered']
    #allocation14 [shape = 'u8[512]{0}', space=vmem, size = 0x400, scoped, tag = 'input window, operand 7, single buffered']
    #allocation15 [shape = 's32[1]{0}', space=sflag, size = 0x4, scoped, tag = 'scoped memory for _lambda_.28']
    #allocation16 [shape = 'u8[16384]{0}', space=vmem, size = 0x4000, scoped, tag = 'input window, operand 8, single buffered']
    #allocation17 [shape = 'u8[512]{0}', space=vmem, size = 0x400, scoped, tag = 'input window, operand 9, single buffered']
    #allocation18 [shape = 's32[1]{0}', space=sflag, size = 0x4, scoped, tag = 'scoped memory for _lambda_.28']
    #allocation19 [shape = 'u8[8192]{0}', space=vmem, size = 0x2000, scoped, tag = 'output window, operand 0']
    %15 = vsyncpa [#allocation3], 0
    %s16 = scalar_lea.sflag [#allocation3], 1
    %17 = vsyncpa %s16, 0
    %18 = vsyncpa [#allocation6], 0
    %s19 = scalar_lea.sflag [#allocation6], 1
    %20 = vsyncpa %s19, 0
    %21 = vsyncpa [#allocation9], 0
    %22 = vsyncpa [#allocation12], 0
    %23 = vsyncpa [#allocation15], 0
    %24 = vsyncpa [#allocation18], 0
    %25 = vsyncpa [#allocation4], 0
    %s26 = scalar_lea.sflag [#allocation4], 1
    %27 = vsyncpa %s26, 0
    loop: start=0, step=1, limit=4
    $region2: #{_lambda_.28} parent=1 // loop_pre_header
      _
    $region3: #{_lambda_.28} parent=1 // loop_header
      %s29 = sphi 0, %s33
      %p30 = scmp.ge.s32.totalorder %s29, 4
      %s39 = sphi 0, %s41
      %s42 = sphi 0, %s39
      %s43 = sphi 0, %s42
      %s59 = sphi 0, %s43
      %s65 = sphi 0, %s67
      %s68 = sphi 0, %s65
      %s69 = sphi 0, %s68
      %s85 = sphi 0, %s69
      %s89 = sphi 0, %s89
      %s91 = sphi 0, %s89
      %s92 = sphi 0, %s91
      %s106 = sphi 0, %s92
      %s110 = sphi 0, %s110
      %s112 = sphi 0, %s110
      %s113 = sphi 0, %s112
      %s127 = sphi 0, %s113
      %s131 = sphi 0, %s131
      %s133 = sphi 0, %s131
      %s134 = sphi 0, %s133
      %s148 = sphi 0, %s134
      %s152 = sphi 0, %s152
      %s154 = sphi 0, %s152
      %s155 = sphi 0, %s154
      %s169 = sphi 0, %s155
      %s173 = sphi 0, %s173
      %s175 = sphi 0, %s173
      %s176 = sphi 0, %s175
      %s190 = sphi 0, %s176
      %s194 = sphi 0, %s194
      %s196 = sphi 0, %s194
      %s197 = sphi 0, %s196
      %s211 = sphi 0, %s197
      %s215 = sphi 0, %s215
      %s217 = sphi 0, %s215
      %s218 = sphi 0, %s217
      %s232 = sphi 0, %s218
      %s236 = sphi 0, %s236
      %s238 = sphi 0, %s236
      %s239 = sphi 0, %s238
      %s253 = sphi 0, %s239
      %s259 = sphi 0, %s261
      %s262 = sphi 0, %s259
      %s263 = sphi 0, %s262
      %s279 = sphi 0, %s263
    $region4: #{_lambda_.28} parent=1 // loop_header_branch
      %32 = sbr.rel (%p30) target = $region8
    $region5: #{_lambda_.28} parent=1 // loop_body
      %s34 = ssub.s32 %s29, 1
      %s35 = ssub.s32 %s29, 2
      %s36 = sadd.s32 %s29, 1
      %s37 = ssub.s32 %s29, %s36
      %p38 = scmp.eq.s32.totalorder %s37, 0
      %s40 = sadd.s32 %s39, 1
      %s41 = scalar_select %p38, %s39, %s40
      %p44 = pneg %p38
      %p45 = scmp.eq.s32.totalorder %s29, 1
      %p46 = por %p44, %p45
      %p47 = scmp.ne.s32.totalorder %s39, %s42
      %p48 = scmp.eq.s32.totalorder %s29, 0
      %p49 = por %p47, %p48
      %p50 = scmp.ne.s32.totalorder %s39, %s42
      %p51 = scmp.eq.s32.totalorder %s34, 1
      %p52 = por %p50, %p51
      %p53 = scmp.ne.s32.totalorder %s42, %s43
      %p54 = scmp.eq.s32.totalorder %s34, 0
      %p55 = por %p53, %p54
      %p56 = scmp.ne.s32.totalorder %s42, %s43
      %p57 = scmp.eq.s32.totalorder %s35, 1
      %p58 = por %p56, %p57
      %p60 = scmp.ne.s32.totalorder %s43, %s59
      %p61 = scmp.eq.s32.totalorder %s35, 0
      %p62 = por %p60, %p61
      %s63 = ssub.s32 %s29, %s36
      %p64 = scmp.eq.s32.totalorder %s63, 0
      %s66 = sadd.s32 %s65, 1
      %s67 = scalar_select %p64, %s65, %s66
      %p70 = pneg %p64
      %p71 = scmp.eq.s32.totalorder %s29, 1
      %p72 = por %p70, %p71
      %p73 = scmp.ne.s32.totalorder %s65, %s68
      %p74 = scmp.eq.s32.totalorder %s29, 0
      %p75 = por %p73, %p74
      %p76 = scmp.ne.s32.totalorder %s65, %s68
      %p77 = scmp.eq.s32.totalorder %s34, 1
      %p78 = por %p76, %p77
      %p79 = scmp.ne.s32.totalorder %s68, %s69
      %p80 = scmp.eq.s32.totalorder %s34, 0
      %p81 = por %p79, %p80
      %p82 = scmp.ne.s32.totalorder %s68, %s69
      %p83 = scmp.eq.s32.totalorder %s35, 1
      %p84 = por %p82, %p83
      %p86 = scmp.ne.s32.totalorder %s69, %s85
      %p87 = scmp.eq.s32.totalorder %s35, 0
      %p88 = por %p86, %p87
      %s90 = sadd.s32 %s89, 1
      %p93 = scmp.eq.s32.totalorder %s29, 1
      %p94 = scmp.ne.s32.totalorder %s89, %s91
      %p95 = scmp.eq.s32.totalorder %s29, 0
      %p96 = por %p94, %p95
      %p97 = scmp.ne.s32.totalorder %s89, %s91
      %p98 = scmp.eq.s32.totalorder %s34, 1
      %p99 = por %p97, %p98
      %p100 = scmp.ne.s32.totalorder %s91, %s92
      %p101 = scmp.eq.s32.totalorder %s34, 0
      %p102 = por %p100, %p101
      %p103 = scmp.ne.s32.totalorder %s91, %s92
      %p104 = scmp.eq.s32.totalorder %s35, 1
      %p105 = por %p103, %p104
      %p107 = scmp.ne.s32.totalorder %s92, %s106
      %p108 = scmp.eq.s32.totalorder %s35, 0
      %p109 = por %p107, %p108
      %s111 = sadd.s32 %s110, 1
      %p114 = scmp.eq.s32.totalorder %s29, 1
      %p115 = scmp.ne.s32.totalorder %s110, %s112
      %p116 = scmp.eq.s32.totalorder %s29, 0
      %p117 = por %p115, %p116
      %p118 = scmp.ne.s32.totalorder %s110, %s112
      %p119 = scmp.eq.s32.totalorder %s34, 1
      %p120 = por %p118, %p119
      %p121 = scmp.ne.s32.totalorder %s112, %s113
      %p122 = scmp.eq.s32.totalorder %s34, 0
      %p123 = por %p121, %p122
      %p124 = scmp.ne.s32.totalorder %s112, %s113
      %p125 = scmp.eq.s32.totalorder %s35, 1
      %p126 = por %p124, %p125
      %p128 = scmp.ne.s32.totalorder %s113, %s127
      %p129 = scmp.eq.s32.totalorder %s35, 0
      %p130 = por %p128, %p129
      %s132 = sadd.s32 %s131, 1
      %p135 = scmp.eq.s32.totalorder %s29, 1
      %p136 = scmp.ne.s32.totalorder %s131, %s133
      %p137 = scmp.eq.s32.totalorder %s29, 0
      %p138 = por %p136, %p137
      %p139 = scmp.ne.s32.totalorder %s131, %s133
      %p140 = scmp.eq.s32.totalorder %s34, 1
      %p141 = por %p139, %p140
      %p142 = scmp.ne.s32.totalorder %s133, %s134
      %p143 = scmp.eq.s32.totalorder %s34, 0
      %p144 = por %p142, %p143
      %p145 = scmp.ne.s32.totalorder %s133, %s134
      %p146 = scmp.eq.s32.totalorder %s35, 1
      %p147 = por %p145, %p146
      %p149 = scmp.ne.s32.totalorder %s134, %s148
      %p150 = scmp.eq.s32.totalorder %s35, 0
      %p151 = por %p149, %p150
      %s153 = sadd.s32 %s152, 1
      %p156 = scmp.eq.s32.totalorder %s29, 1
      %p157 = scmp.ne.s32.totalorder %s152, %s154
      %p158 = scmp.eq.s32.totalorder %s29, 0
      %p159 = por %p157, %p158
      %p160 = scmp.ne.s32.totalorder %s152, %s154
      %p161 = scmp.eq.s32.totalorder %s34, 1
      %p162 = por %p160, %p161
      %p163 = scmp.ne.s32.totalorder %s154, %s155
      %p164 = scmp.eq.s32.totalorder %s34, 0
      %p165 = por %p163, %p164
      %p166 = scmp.ne.s32.totalorder %s154, %s155
      %p167 = scmp.eq.s32.totalorder %s35, 1
      %p168 = por %p166, %p167
      %p170 = scmp.ne.s32.totalorder %s155, %s169
      %p171 = scmp.eq.s32.totalorder %s35, 0
      %p172 = por %p170, %p171
      %s174 = sadd.s32 %s173, 1
      %p177 = scmp.eq.s32.totalorder %s29, 1
      %p178 = scmp.ne.s32.totalorder %s173, %s175
      %p179 = scmp.eq.s32.totalorder %s29, 0
      %p180 = por %p178, %p179
      %p181 = scmp.ne.s32.totalorder %s173, %s175
      %p182 = scmp.eq.s32.totalorder %s34, 1
      %p183 = por %p181, %p182
      %p184 = scmp.ne.s32.totalorder %s175, %s176
      %p185 = scmp.eq.s32.totalorder %s34, 0
      %p186 = por %p184, %p185
      %p187 = scmp.ne.s32.totalorder %s175, %s176
      %p188 = scmp.eq.s32.totalorder %s35, 1
      %p189 = por %p187, %p188
      %p191 = scmp.ne.s32.totalorder %s176, %s190
      %p192 = scmp.eq.s32.totalorder %s35, 0
      %p193 = por %p191, %p192
      %s195 = sadd.s32 %s194, 1
      %p198 = scmp.eq.s32.totalorder %s29, 1
      %p199 = scmp.ne.s32.totalorder %s194, %s196
      %p200 = scmp.eq.s32.totalorder %s29, 0
      %p201 = por %p199, %p200
      %p202 = scmp.ne.s32.totalorder %s194, %s196
      %p203 = scmp.eq.s32.totalorder %s34, 1
      %p204 = por %p202, %p203
      %p205 = scmp.ne.s32.totalorder %s196, %s197
      %p206 = scmp.eq.s32.totalorder %s34, 0
      %p207 = por %p205, %p206
      %p208 = scmp.ne.s32.totalorder %s196, %s197
      %p209 = scmp.eq.s32.totalorder %s35, 1
      %p210 = por %p208, %p209
      %p212 = scmp.ne.s32.totalorder %s197, %s211
      %p213 = scmp.eq.s32.totalorder %s35, 0
      %p214 = por %p212, %p213
      %s216 = sadd.s32 %s215, 1
      %p219 = scmp.eq.s32.totalorder %s29, 1
      %p220 = scmp.ne.s32.totalorder %s215, %s217
      %p221 = scmp.eq.s32.totalorder %s29, 0
      %p222 = por %p220, %p221
      %p223 = scmp.ne.s32.totalorder %s215, %s217
      %p224 = scmp.eq.s32.totalorder %s34, 1
      %p225 = por %p223, %p224
      %p226 = scmp.ne.s32.totalorder %s217, %s218
      %p227 = scmp.eq.s32.totalorder %s34, 0
      %p228 = por %p226, %p227
      %p229 = scmp.ne.s32.totalorder %s217, %s218
      %p230 = scmp.eq.s32.totalorder %s35, 1
      %p231 = por %p229, %p230
      %p233 = scmp.ne.s32.totalorder %s218, %s232
      %p234 = scmp.eq.s32.totalorder %s35, 0
      %p235 = por %p233, %p234
      %s237 = sadd.s32 %s236, 1
      %p240 = scmp.eq.s32.totalorder %s29, 1
      %p241 = scmp.ne.s32.totalorder %s236, %s238
      %p242 = scmp.eq.s32.totalorder %s29, 0
      %p243 = por %p241, %p242
      %p244 = scmp.ne.s32.totalorder %s236, %s238
      %p245 = scmp.eq.s32.totalorder %s34, 1
      %p246 = por %p244, %p245
      %p247 = scmp.ne.s32.totalorder %s238, %s239
      %p248 = scmp.eq.s32.totalorder %s34, 0
      %p249 = por %p247, %p248
      %p250 = scmp.ne.s32.totalorder %s238, %s239
      %p251 = scmp.eq.s32.totalorder %s35, 1
      %p252 = por %p250, %p251
      %p254 = scmp.ne.s32.totalorder %s239, %s253
      %p255 = scmp.eq.s32.totalorder %s35, 0
      %p256 = por %p254, %p255
      %s257 = ssub.s32 %s29, %s36
      %p258 = scmp.eq.s32.totalorder %s257, 0
      %s260 = sadd.s32 %s259, 1
      %s261 = scalar_select %p258, %s259, %s260
      %p264 = pneg %p258
      %p265 = scmp.eq.s32.totalorder %s29, 1
      %p266 = por %p264, %p265
      %p267 = scmp.ne.s32.totalorder %s259, %s262
      %p268 = scmp.eq.s32.totalorder %s29, 0
      %p269 = por %p267, %p268
      %p270 = scmp.ne.s32.totalorder %s259, %s262
      %p271 = scmp.eq.s32.totalorder %s34, 1
      %p272 = por %p270, %p271
      %p273 = scmp.ne.s32.totalorder %s262, %s263
      %p274 = scmp.eq.s32.totalorder %s34, 0
      %p275 = por %p273, %p274
      %p276 = scmp.ne.s32.totalorder %s262, %s263
      %p277 = scmp.eq.s32.totalorder %s35, 1
      %p278 = por %p276, %p277
      %p280 = scmp.ne.s32.totalorder %s263, %s279
      %p281 = scmp.eq.s32.totalorder %s35, 0
      %p282 = por %p280, %p281
      %p283 = scmp.le.s32.totalorder 1, %s29
      %p284 = scmp.lt.s32.totalorder %s29, 3
      %p285 = pnand %p283, %p284
      %p286 = pneg %p285
      // Predicated region
      $region9: #{_lambda_.28} parent=5 // pred_check
        _
      $region10: #{_lambda_.28} parent=5 // pred_check_branch
        %288 = sbr.rel (%p285) target = $region12
      $region11: #{_lambda_.28} parent=5 // pred_region
        %s289 = ssub.s32 %s29, 1
        // Predicated region
        $region13: #{_lambda_.28} parent=11 // pred_check
          %p290 = pneg %p102
        $region14: #{_lambda_.28} parent=11 // pred_check_branch
          %292 = sbr.rel (%p290) target = $region16
        $region15: #{_lambda_.28} parent=11 // pred_region
          %s294 = ssub.s32 16, 16
          %295 = vsyncadd [#allocation6], %s294
          %s297 = sshll.u32 [#allocation7], 4
          %s298 = int_to_ptr.vmem [resolvable:$true] %s297
          %300 = dma.hbm_to_vmem [thread:$0]  %s2, 16, %s298, [#allocation6]
        $region16: #{_lambda_.28} parent=11 // pred_fallthru
          _
        // Predicated region
        $region17: #{_lambda_.28} parent=11 // pred_check
          %p301 = pneg %p123
        $region18: #{_lambda_.28} parent=11 // pred_check_branch
          %303 = sbr.rel (%p301) target = $region20
        $region19: #{_lambda_.28} parent=11 // pred_region
          %s305 = ssub.s32 16, 16
          %306 = vsyncadd [#allocation9], %s305
          %s308 = sshll.u32 [#allocation8], 4
          %s309 = int_to_ptr.vmem [resolvable:$true] %s308
          %311 = dma.hbm_to_vmem [thread:$0]  %s3, 16, %s309, [#allocation9]
        $region20: #{_lambda_.28} parent=11 // pred_fallthru
          _
        // Predicated region
        $region21: #{_lambda_.28} parent=11 // pred_check
          %p312 = pneg %p144
        $region22: #{_lambda_.28} parent=11 // pred_check_branch
          %314 = sbr.rel (%p312) target = $region24
        $region23: #{_lambda_.28} parent=11 // pred_region
          %s316 = ssub.s32 256, 256
          %317 = vsyncadd [#allocation9], %s316
          %s318 = sshll.u32 [#allocation10], 4
          %s319 = int_to_ptr.vmem [resolvable:$true] %s318
          %324 = dma.hbm_to_vmem [thread:$0]  %s4, 256, %s319, [#allocation9], 64, 64, 4
        $region24: #{_lambda_.28} parent=11 // pred_fallthru
          _
        // Predicated region
        $region25: #{_lambda_.28} parent=11 // pred_check
          %p325 = pneg %p165
        $region26: #{_lambda_.28} parent=11 // pred_check_branch
          %327 = sbr.rel (%p325) target = $region28
        $region27: #{_lambda_.28} parent=11 // pred_region
          %s329 = ssub.s32 16, 16
          %330 = vsyncadd [#allocation12], %s329
          %s332 = sshll.u32 [#allocation11], 4
          %s333 = int_to_ptr.vmem [resolvable:$true] %s332
          %335 = dma.hbm_to_vmem [thread:$0]  %s5, 16, %s333, [#allocation12]
        $region28: #{_lambda_.28} parent=11 // pred_fallthru
          _
        // Predicated region
        $region29: #{_lambda_.28} parent=11 // pred_check
          %p336 = pneg %p186
        $region30: #{_lambda_.28} parent=11 // pred_check_branch
          %338 = sbr.rel (%p336) target = $region32
        $region31: #{_lambda_.28} parent=11 // pred_region
          %s340 = ssub.s32 256, 256
          %341 = vsyncadd [#allocation12], %s340
          %s342 = sshll.u32 [#allocation13], 4
          %s343 = int_to_ptr.vmem [resolvable:$true] %s342
          %348 = dma.hbm_to_vmem [thread:$0]  %s6, 256, %s343, [#allocation12], 64, 64, 4
        $region32: #{_lambda_.28} parent=11 // pred_fallthru
          _
        // Predicated region
        $region33: #{_lambda_.28} parent=11 // pred_check
          %p349 = pneg %p207
        $region34: #{_lambda_.28} parent=11 // pred_check_branch
          %351 = sbr.rel (%p349) target = $region36
        $region35: #{_lambda_.28} parent=11 // pred_region
          %s353 = ssub.s32 16, 16
          %354 = vsyncadd [#allocation15], %s353
          %s356 = sshll.u32 [#allocation14], 4
          %s357 = int_to_ptr.vmem [resolvable:$true] %s356
          %359 = dma.hbm_to_vmem [thread:$0]  %s7, 16, %s357, [#allocation15]
        $region36: #{_lambda_.28} parent=11 // pred_fallthru
          _
        // Predicated region
        $region37: #{_lambda_.28} parent=11 // pred_check
          %p360 = pneg %p228
        $region38: #{_lambda_.28} parent=11 // pred_check_branch
          %362 = sbr.rel (%p360) target = $region40
        $region39: #{_lambda_.28} parent=11 // pred_region
          %s364 = ssub.s32 512, 512
          %365 = vsyncadd [#allocation15], %s364
          %s366 = sshll.u32 [#allocation16], 4
          %s367 = int_to_ptr.vmem [resolvable:$true] %s366
          %372 = dma.hbm_to_vmem [thread:$0]  %s8, 512, %s367, [#allocation15], 64, 64, 4
        $region40: #{_lambda_.28} parent=11 // pred_fallthru
          _
        // Predicated region
        $region41: #{_lambda_.28} parent=11 // pred_check
          %p373 = pneg %p249
        $region42: #{_lambda_.28} parent=11 // pred_check_branch
          %375 = sbr.rel (%p373) target = $region44
        $region43: #{_lambda_.28} parent=11 // pred_region
          %s377 = ssub.s32 16, 16
          %378 = vsyncadd [#allocation18], %s377
          %s380 = sshll.u32 [#allocation17], 4
          %s381 = int_to_ptr.vmem [resolvable:$true] %s380
          %383 = dma.hbm_to_vmem [thread:$0]  %s9, 16, %s381, [#allocation18]
        $region44: #{_lambda_.28} parent=11 // pred_fallthru
          _
      $region12: #{_lambda_.28} parent=5 // pred_fallthru
        _
      %p384 = scmp.lt.s32.totalorder %s29, 2
      // Predicated region
      $region45: #{_lambda_.28} parent=5 // pred_check
        %p385 = pneg %p384
      $region46: #{_lambda_.28} parent=5 // pred_check_branch
        %387 = sbr.rel (%p385) target = $region48
      $region47: #{_lambda_.28} parent=5 // pred_region
        // Predicated region
        $region49: #{_lambda_.28} parent=47 // pred_check
          %p388 = pneg %p49
        $region50: #{_lambda_.28} parent=47 // pred_check_branch
          %390 = sbr.rel (%p388) target = $region52
        $region51: #{_lambda_.28} parent=47 // pred_region
          %s391 = sand.u32 %s39, 1
          %s392 = scalar_lea.sflag [#allocation3], %s391
          %s393 = sand.u32 %s39, 1
          %s394 = smul.addr %s393, 8
          %s395 = scalar_lea.vmem [#allocation2], %s394
          %s397 = ssub.s32 128, 128
          %398 = vsyncadd %s392, %s397
          %s399 = smul.addr %s29, 128
          %s400 = scalar_lea.hbm %s0, %s399
          %s402 = sshll.u32 %s395, 4
          %s403 = int_to_ptr.vmem [resolvable:$true] %s402
          %405 = dma.hbm_to_vmem [thread:$0]  %s400, 128, %s403, %s392
        $region52: #{_lambda_.28} parent=47 // pred_fallthru
          _
        // Predicated region
        $region53: #{_lambda_.28} parent=47 // pred_check
          %p406 = pneg %p75
        $region54: #{_lambda_.28} parent=47 // pred_check_branch
          %408 = sbr.rel (%p406) target = $region56
        $region55: #{_lambda_.28} parent=47 // pred_region
          %s409 = sand.u32 %s29, 1
          %s410 = scalar_lea.sflag [#allocation6], %s409
          %s411 = sand.u32 %s65, 1
          %s412 = smul.addr %s411, 8
          %s413 = scalar_lea.vmem [#allocation5], %s412
          %s415 = ssub.s32 128, 128
          %416 = vsyncadd %s410, %s415
          %s417 = smul.addr %s29, 128
          %s418 = scalar_lea.hbm %s1, %s417
          %s420 = sshll.u32 %s413, 4
          %s421 = int_to_ptr.vmem [resolvable:$true] %s420
          %423 = dma.hbm_to_vmem [thread:$0]  %s418, 128, %s421, %s410
        $region56: #{_lambda_.28} parent=47 // pred_fallthru
          _
      $region48: #{_lambda_.28} parent=5 // pred_fallthru
        _
      %p424 = scmp.le.s32.totalorder 1, %s29
      %p425 = scmp.lt.s32.totalorder %s29, 3
      %p426 = pnand %p424, %p425
      %p427 = pneg %p426
      // Predicated region
      $region57: #{_lambda_.28} parent=5 // pred_check
        _
      $region58: #{_lambda_.28} parent=5 // pred_check_branch
        %429 = sbr.rel (%p426) target = $region60
      $region59: #{_lambda_.28} parent=5 // pred_region
        %s430 = ssub.s32 %s29, 1
        %s431 = sand.u32 %s42, 1
        %s432 = scalar_lea.sflag [#allocation3], %s431
        %s433 = sand.u32 %s42, 1
        %s434 = smul.addr %s433, 8
        %s435 = scalar_lea.vmem [#allocation2], %s434
        // Predicated region
        $region61: #{_lambda_.28} parent=59 // pred_check
          %p436 = pneg %p55
        $region62: #{_lambda_.28} parent=59 // pred_check_branch
          %438 = sbr.rel (%p436) target = $region64
        $region63: #{_lambda_.28} parent=59 // pred_region
          %439 = dma.done %s432, 128
        $region64: #{_lambda_.28} parent=59 // pred_fallthru
          _
        %s440 = sand.u32 %s34, 1
        %s441 = scalar_lea.sflag [#allocation6], %s440
        %s442 = sand.u32 %s68, 1
        %s443 = smul.addr %s442, 8
        %s444 = scalar_lea.vmem [#allocation5], %s443
        // Predicated region
        $region65: #{_lambda_.28} parent=59 // pred_check
          %p445 = pneg %p81
        $region66: #{_lambda_.28} parent=59 // pred_check_branch
          %447 = sbr.rel (%p445) target = $region68
        $region67: #{_lambda_.28} parent=59 // pred_region
          %448 = dma.done %s441, 128
        $region68: #{_lambda_.28} parent=59 // pred_fallthru
          _
        // Predicated region
        $region69: #{_lambda_.28} parent=59 // pred_check
          %p449 = pneg %p102
        $region70: #{_lambda_.28} parent=59 // pred_check_branch
          %451 = sbr.rel (%p449) target = $region72
        $region71: #{_lambda_.28} parent=59 // pred_region
          %452 = dma.done [#allocation6], 16
        $region72: #{_lambda_.28} parent=59 // pred_fallthru
          _
        // Predicated region
        $region73: #{_lambda_.28} parent=59 // pred_check
          %p453 = pneg %p123
        $region74: #{_lambda_.28} parent=59 // pred_check_branch
          %455 = sbr.rel (%p453) target = $region76
        $region75: #{_lambda_.28} parent=59 // pred_region
          %456 = dma.done [#allocation9], 16
        $region76: #{_lambda_.28} parent=59 // pred_fallthru
          _
        // Predicated region
        $region77: #{_lambda_.28} parent=59 // pred_check
          %p457 = pneg %p144
        $region78: #{_lambda_.28} parent=59 // pred_check_branch
          %459 = sbr.rel (%p457) target = $region80
        $region79: #{_lambda_.28} parent=59 // pred_region
          %460 = dma.done [#allocation9], 256
        $region80: #{_lambda_.28} parent=59 // pred_fallthru
          _
        // Predicated region
        $region81: #{_lambda_.28} parent=59 // pred_check
          %p461 = pneg %p165
        $region82: #{_lambda_.28} parent=59 // pred_check_branch
          %463 = sbr.rel (%p461) target = $region84
        $region83: #{_lambda_.28} parent=59 // pred_region
          %464 = dma.done [#allocation12], 16
        $region84: #{_lambda_.28} parent=59 // pred_fallthru
          _
        // Predicated region
        $region85: #{_lambda_.28} parent=59 // pred_check
          %p465 = pneg %p186
        $region86: #{_lambda_.28} parent=59 // pred_check_branch
          %467 = sbr.rel (%p465) target = $region88
        $region87: #{_lambda_.28} parent=59 // pred_region
          %468 = dma.done [#allocation12], 256
        $region88: #{_lambda_.28} parent=59 // pred_fallthru
          _
        // Predicated region
        $region89: #{_lambda_.28} parent=59 // pred_check
          %p469 = pneg %p207
        $region90: #{_lambda_.28} parent=59 // pred_check_branch
          %471 = sbr.rel (%p469) target = $region92
        $region91: #{_lambda_.28} parent=59 // pred_region
          %472 = dma.done [#allocation15], 16
        $region92: #{_lambda_.28} parent=59 // pred_fallthru
          _
        // Predicated region
        $region93: #{_lambda_.28} parent=59 // pred_check
          %p473 = pneg %p228
        $region94: #{_lambda_.28} parent=59 // pred_check_branch
          %475 = sbr.rel (%p473) target = $region96
        $region95: #{_lambda_.28} parent=59 // pred_region
          %476 = dma.done [#allocation15], 512
        $region96: #{_lambda_.28} parent=59 // pred_fallthru
          _
        // Predicated region
        $region97: #{_lambda_.28} parent=59 // pred_check
          %p477 = pneg %p249
        $region98: #{_lambda_.28} parent=59 // pred_check_branch
          %479 = sbr.rel (%p477) target = $region100
        $region99: #{_lambda_.28} parent=59 // pred_region
          %480 = dma.done [#allocation18], 16
        $region100: #{_lambda_.28} parent=59 // pred_fallthru
          _
        %s481 = sand.u32 %s42, 1
        %s482 = scalar_lea.sflag [#allocation3], %s481
        %s483 = sand.u32 %s42, 1
        %s484 = smul.addr %s483, 8
        %s485 = scalar_lea.vmem [#allocation2], %s484
        %p486 = pneg %p55
        %p487 = pneg %p52
        %s488 = sand.u32 %s34, 1
        %s489 = scalar_lea.sflag [#allocation6], %s488
        %s490 = sand.u32 %s68, 1
        %s491 = smul.addr %s490, 8
        %s492 = scalar_lea.vmem [#allocation5], %s491
        %p493 = pneg %p81
        %p494 = pneg %p78
        %p495 = pneg %p102
        %p496 = pneg %p99
        %p497 = pneg %p123
        %p498 = pneg %p120
        %p499 = pneg %p144
        %p500 = pneg %p141
        %p501 = pneg %p165
        %p502 = pneg %p162
        %p503 = pneg %p186
        %p504 = pneg %p183
        %p505 = pneg %p207
        %p506 = pneg %p204
        %p507 = pneg %p228
        %p508 = pneg %p225
        %p509 = pneg %p249
        %p510 = pneg %p246
        %p511 = pneg %p275
        %p512 = pneg %p272
        %s513 = sand.u32 %s262, 1
        %s514 = scalar_lea.sflag [#allocation4], %s513
        %s515 = sand.u32 %s262, 1
        %s516 = smul.addr %s515, 8
        %s517 = scalar_lea.vmem [#allocation19], %s516
        %v519 = vld [vmem:[%s435] sm:$0xff]
        %vm520 = vcmask 261120
        %v521 = vsel %vm520, %v519, 0.0
        %522 = vadd.xlane.f32.xlu0 %v521
        %v523 = vpop.xlane.xlu0 %522
        %v524 = vrcp.pop 32.0
        %v525 = vmul.f32 %v523, %v524
        %v526 = vsub.f32 %v519, %v525
        %v527 = vmul.f32 %v526, %v526
        %v528 = vsel %vm520, %v527, 0.0
        %529 = vadd.xlane.f32.xlu0 %v528
        %v530 = vpop.xlane.xlu0 %529
        %v531 = vmul.f32 %v530, %v524
        %v532 = vadd.f32 %v531, 1e-05
        %v533 = vrsqrt.pop %v532
        %v534 = vmul.f32 %v526, %v533
        %v535 = vld [vmem:[#allocation7] sm:$0x1]
        %v537 = vlaneseq
        %v538 = vshrl.u32 %v537, 7
        %v539 = vsub.s32 0, %v538
        %v540 = vrot.slane %v535, %v539
        %v542 = vmul.f32 %v534, %v540
        %v543 = vld [vmem:[#allocation8] sm:$0x1]
        %v545 = vlaneseq
        %v546 = vshrl.u32 %v545, 7
        %v547 = vsub.s32 0, %v546
        %v548 = vrot.slane %v543, %v547
        %v550 = vadd.f32 %v542, %v548
        %v551 = vpack.c.bf16 %v550, %v550
        %v552 = vld [vmem:[#allocation10] sm:$0xf]
        %v553 = vld [vmem:[#allocation10 + $0x4] sm:$0xf]
        %v554 = vld [vmem:[#allocation10 + $0x8] sm:$0xf]
        %v555 = vld [vmem:[#allocation10 + $0xc] sm:$0xf]
        %v556 = vld [vmem:[#allocation11] sm:$0x1]
        %v558 = vlaneseq
        %v559 = vshrl.u32 %v558, 7
        %v560 = vsub.s32 0, %v559
        %v561 = vrot.slane %v556, %v560
        %v567 = vunpack.c.l.b16 %v552
        %v568 = vunpack.c.l.b16 %v553
        %v569 = vunpack.c.l.b16 %v554
        %v570 = vunpack.c.l.b16 %v555
        %v571 = vpack.c.b16 %v568, %v567
        %v572 = vpack.c.b16 %v570, %v569
        %v576 = vsel %vm520, %v551, 0
        %578 = vmatprep.subr.bf16.mxu0 0
        %579 = vmatpush1.bf16.msra.mxu0 %v571
        %580 = vmatprep.subr.bf16.mxu0 0
        %581 = vmatpush1.bf16.msra.mxu0 %v572
        %582 = vmatprep.subr.bf16.mxu0 0
        %583 = vmatpush1.bf16.msra.mxu0 0
        %584 = vmatprep.subr.bf16.mxu0 0
        %585 = vmatpush1.bf16.msra.mxu0 0
        %586 = vmatprep.subr.bf16.mxu0 0
        %587 = vmatpush1.bf16.msra.mxu0 0
        %588 = vmatprep.subr.bf16.mxu0 0
        %589 = vmatpush1.bf16.msra.mxu0 0
        %590 = vmatprep.subr.bf16.mxu0 0
        %591 = vmatpush1.bf16.msra.mxu0 0
        %592 = vmatprep.subr.bf16.mxu0 0
        %593 = vmatpush1.bf16.msra.mxu0 0
        %594 = vmatprep.subr.bf16.mxu0 0
        %595 = vmatpush1.bf16.msra.mxu0 0
        %596 = vmatprep.subr.bf16.mxu0 0
        %597 = vmatpush1.bf16.msra.mxu0 0
        %598 = vmatprep.subr.bf16.mxu0 0
        %599 = vmatpush1.bf16.msra.mxu0 0
        %600 = vmatprep.subr.bf16.mxu0 0
        %601 = vmatpush1.bf16.msra.mxu0 0
        %602 = vmatprep.subr.bf16.mxu0 0
        %603 = vmatpush1.bf16.msra.mxu0 0
        %604 = vmatprep.subr.bf16.mxu0 0
        %605 = vmatpush1.bf16.msra.mxu0 0
        %606 = vmatprep.subr.bf16.mxu0 0
        %607 = vmatpush1.bf16.msra.mxu0 0
        %608 = vmatprep.subr.bf16.mxu0 0
        %609 = vmatpush1.bf16.msra.mxu0 0
        %610 = vmatprep.mubr.bf16.mxu0 0
        %611 = vmatmul.mubr.bf16.gmra.mrb[0].mxu0 %v576
        %v612 = vpop.f32.mrb[0].mxu0
        %v613 = vadd.f32 %v561, %v612
        %v614 = vpop.f32.mrb[0].mxu0
        %v615 = vpop.f32.mrb[0].mxu0
        %v616 = vpop.f32.mrb[0].mxu0
        %617 = vdwg.mxu0
        %v618 = vld [vmem:[%s444] sm:$0xff]
        %v619 = vpack.c.bf16 %v618, %v618
        %v620 = vld [vmem:[#allocation13] sm:$0xf]
        %v621 = vld [vmem:[#allocation13 + $0x4] sm:$0xf]
        %v622 = vld [vmem:[#allocation13 + $0x8] sm:$0xf]
        %v623 = vld [vmem:[#allocation13 + $0xc] sm:$0xf]
        %v624 = vld [vmem:[#allocation14] sm:$0x1]
        %v626 = vlaneseq
        %v627 = vshrl.u32 %v626, 7
        %v628 = vsub.s32 0, %v627
        %v629 = vrot.slane %v624, %v628
        %v635 = vunpack.c.l.b16 %v620
        %v636 = vunpack.c.l.b16 %v621
        %v637 = vunpack.c.l.b16 %v622
        %v638 = vunpack.c.l.b16 %v623
        %v639 = vpack.c.b16 %v636, %v635
        %v640 = vpack.c.b16 %v638, %v637
        %v644 = vsel %vm520, %v619, 0
        %646 = vmatprep.subr.bf16.mxu0 0
        %647 = vmatpush1.bf16.msra.mxu0 %v639
        %648 = vmatprep.subr.bf16.mxu0 0
        %649 = vmatpush1.bf16.msra.mxu0 %v640
        %650 = vmatprep.subr.bf16.mxu0 0
        %651 = vmatpush1.bf16.msra.mxu0 0
        %652 = vmatprep.subr.bf16.mxu0 0
        %653 = vmatpush1.bf16.msra.mxu0 0
        %654 = vmatprep.subr.bf16.mxu0 0
        %655 = vmatpush1.bf16.msra.mxu0 0
        %656 = vmatprep.subr.bf16.mxu0 0
        %657 = vmatpush1.bf16.msra.mxu0 0
        %658 = vmatprep.subr.bf16.mxu0 0
        %659 = vmatpush1.bf16.msra.mxu0 0
        %660 = vmatprep.subr.bf16.mxu0 0
        %661 = vmatpush1.bf16.msra.mxu0 0
        %662 = vmatprep.subr.bf16.mxu0 0
        %663 = vmatpush1.bf16.msra.mxu0 0
        %664 = vmatprep.subr.bf16.mxu0 0
        %665 = vmatpush1.bf16.msra.mxu0 0
        %666 = vmatprep.subr.bf16.mxu0 0
        %667 = vmatpush1.bf16.msra.mxu0 0
        %668 = vmatprep.subr.bf16.mxu0 0
        %669 = vmatpush1.bf16.msra.mxu0 0
        %670 = vmatprep.subr.bf16.mxu0 0
        %671 = vmatpush1.bf16.msra.mxu0 0
        %672 = vmatprep.subr.bf16.mxu0 0
        %673 = vmatpush1.bf16.msra.mxu0 0
        %674 = vmatprep.subr.bf16.mxu0 0
        %675 = vmatpush1.bf16.msra.mxu0 0
        %676 = vmatprep.subr.bf16.mxu0 0
        %677 = vmatpush1.bf16.msra.mxu0 0
        %678 = vmatprep.mubr.bf16.mxu0 0
        %679 = vmatmul.mubr.bf16.gmra.mrb[0].mxu0 %v644
        %v680 = vpop.f32.mrb[0].mxu0
        %v681 = vadd.f32 %v629, %v680
        %v682 = vpop.f32.mrb[0].mxu0
        %v683 = vpop.f32.mrb[0].mxu0
        %v684 = vpop.f32.mrb[0].mxu0
        %685 = vdwg.mxu0
        %v686 = vpack.c.bf16 %v613, %v613
        %v687 = vpack.c.bf16 %v681, %v681
        %vm688 = vcmask 130048
        %v690 = vsel %vm688, %v686, 0
        %v693 = vsel %vm688, %v687, 0
        %695 = vmatprep.subr.bf16.mxu0 0
        %696 = vmatpush1.bf16.xpose.msra.mxu0 %v693
        %697 = vmatprep.subr.bf16.mxu0 0
        %698 = vmatpush1.bf16.xpose.msra.mxu0 0
        %699 = vmatprep.subr.bf16.mxu0 0
        %700 = vmatpush1.bf16.xpose.msra.mxu0 0
        %701 = vmatprep.subr.bf16.mxu0 0
        %702 = vmatpush1.bf16.xpose.msra.mxu0 0
        %703 = vmatprep.subr.bf16.mxu0 0
        %704 = vmatpush1.bf16.xpose.msra.mxu0 0
        %705 = vmatprep.subr.bf16.mxu0 0
        %706 = vmatpush1.bf16.xpose.msra.mxu0 0
        %707 = vmatprep.subr.bf16.mxu0 0
        %708 = vmatpush1.bf16.xpose.msra.mxu0 0
        %709 = vmatprep.subr.bf16.mxu0 0
        %710 = vmatpush1.bf16.xpose.msra.mxu0 0
        %711 = vmatprep.subr.bf16.mxu0 0
        %712 = vmatpush1.bf16.xpose.msra.mxu0 0
        %713 = vmatprep.subr.bf16.mxu0 0
        %714 = vmatpush1.bf16.xpose.msra.mxu0 0
        %715 = vmatprep.subr.bf16.mxu0 0
        %716 = vmatpush1.bf16.xpose.msra.mxu0 0
        %717 = vmatprep.subr.bf16.mxu0 0
        %718 = vmatpush1.bf16.xpose.msra.mxu0 0
        %719 = vmatprep.subr.bf16.mxu0 0
        %720 = vmatpush1.bf16.xpose.msra.mxu0 0
        %721 = vmatprep.subr.bf16.mxu0 0
        %722 = vmatpush1.bf16.xpose.msra.mxu0 0
        %723 = vmatprep.subr.bf16.mxu0 0
        %724 = vmatpush1.bf16.xpose.msra.mxu0 0
        %725 = vmatprep.subr.bf16.mxu0 0
        %726 = vmatpush1.bf16.xpose.msra.mxu0 0
        %727 = vmatprep.mubr.bf16.mxu0 0
        %728 = vmatmul.mubr.bf16.gmra.mrb[0].mxu0 %v690
        %v729 = vpop.f32.mrb[0].mxu0
        %v730 = vadd.f32 0.0, %v729
        %v731 = vpop.f32.mrb[0].mxu0
        %v732 = vpop.f32.mrb[0].mxu0
        %v733 = vpop.f32.mrb[0].mxu0
        %734 = vdwg.mxu0
        %v735 = vmul.f32 %v730, 0.25
        %vm736 = vcmask 64512
        %v737 = vsel %vm736, %v735, -inf
        %738 = vmax.xlane.f32.xlu0 %v737
        %v739 = vpop.xlane.xlu0 %738
        %v740 = vsub.f32 %v735, %v739
        %v741 = vmul.f32 %v740, 1.442695
        %v742 = vpow.pop %v741
        %v743 = vsel %vm736, %v742, 0.0
        %744 = vadd.xlane.f32.xlu0 %v743
        %v745 = vpop.xlane.xlu0 %744
        %v746 = vrcp.pop %v745
        %v747 = vpack.c.bf16 %v742, %v742
        %749 = vrot.lane.b32.xlu0 %v687, 64
        %v750 = vpop.permute.xlu0 %749
        %v752 = vsel %vm736, %v747, 0
        %vm754 = vcmask 1043456
        %v756 = vsel %vm754, %v750, 0
        %758 = vmatprep.subr.bf16.mxu0 0
        %759 = vmatpush1.bf16.msra.mxu0 %v756
        %760 = vmatprep.subr.bf16.mxu0 0
        %761 = vmatpush1.bf16.msra.mxu0 0
        %762 = vmatprep.subr.bf16.mxu0 0
        %763 = vmatpush1.bf16.msra.mxu0 0
        %764 = vmatprep.subr.bf16.mxu0 0
        %765 = vmatpush1.bf16.msra.mxu0 0
        %766 = vmatprep.subr.bf16.mxu0 0
        %767 = vmatpush1.bf16.msra.mxu0 0
        %768 = vmatprep.subr.bf16.mxu0 0
        %769 = vmatpush1.bf16.msra.mxu0 0
        %770 = vmatprep.subr.bf16.mxu0 0
        %771 = vmatpush1.bf16.msra.mxu0 0
        %772 = vmatprep.subr.bf16.mxu0 0
        %773 = vmatpush1.bf16.msra.mxu0 0
        %774 = vmatprep.subr.bf16.mxu0 0
        %775 = vmatpush1.bf16.msra.mxu0 0
        %776 = vmatprep.subr.bf16.mxu0 0
        %777 = vmatpush1.bf16.msra.mxu0 0
        %778 = vmatprep.subr.bf16.mxu0 0
        %779 = vmatpush1.bf16.msra.mxu0 0
        %780 = vmatprep.subr.bf16.mxu0 0
        %781 = vmatpush1.bf16.msra.mxu0 0
        %782 = vmatprep.subr.bf16.mxu0 0
        %783 = vmatpush1.bf16.msra.mxu0 0
        %784 = vmatprep.subr.bf16.mxu0 0
        %785 = vmatpush1.bf16.msra.mxu0 0
        %786 = vmatprep.subr.bf16.mxu0 0
        %787 = vmatpush1.bf16.msra.mxu0 0
        %788 = vmatprep.subr.bf16.mxu0 0
        %789 = vmatpush1.bf16.msra.mxu0 0
        %790 = vmatprep.mubr.bf16.mxu0 0
        %791 = vmatmul.mubr.bf16.gmra.mrb[0].mxu0 %v752
        %v792 = vpop.f32.mrb[0].mxu0
        %v793 = vadd.f32 0.0, %v792
        %v794 = vpop.f32.mrb[0].mxu0
        %v795 = vpop.f32.mrb[0].mxu0
        %v796 = vpop.f32.mrb[0].mxu0
        %797 = vdwg.mxu0
        %v798 = vmul.f32 %v793, %v746
        %800 = vrot.lane.b32.xlu0 %v686, 112
        %v801 = vpop.permute.xlu0 %800
        %802 = vrot.lane.b32.xlu0 %v687, 112
        %v803 = vpop.permute.xlu0 %802
        %v805 = vsel %vm688, %v801, 0
        %v808 = vsel %vm688, %v803, 0
        %810 = vmatprep.subr.bf16.mxu0 0
        %811 = vmatpush1.bf16.xpose.msra.mxu0 %v808
        %812 = vmatprep.subr.bf16.mxu0 0
        %813 = vmatpush1.bf16.xpose.msra.mxu0 0
        %814 = vmatprep.subr.bf16.mxu0 0
        %815 = vmatpush1.bf16.xpose.msra.mxu0 0
        %816 = vmatprep.subr.bf16.mxu0 0
        %817 = vmatpush1.bf16.xpose.msra.mxu0 0
        %818 = vmatprep.subr.bf16.mxu0 0
        %819 = vmatpush1.bf16.xpose.msra.mxu0 0
        %820 = vmatprep.subr.bf16.mxu0 0
        %821 = vmatpush1.bf16.xpose.msra.mxu0 0
        %822 = vmatprep.subr.bf16.mxu0 0
        %823 = vmatpush1.bf16.xpose.msra.mxu0 0
        %824 = vmatprep.subr.bf16.mxu0 0
        %825 = vmatpush1.bf16.xpose.msra.mxu0 0
        %826 = vmatprep.subr.bf16.mxu0 0
        %827 = vmatpush1.bf16.xpose.msra.mxu0 0
        %828 = vmatprep.subr.bf16.mxu0 0
        %829 = vmatpush1.bf16.xpose.msra.mxu0 0
        %830 = vmatprep.subr.bf16.mxu0 0
        %831 = vmatpush1.bf16.xpose.msra.mxu0 0
        %832 = vmatprep.subr.bf16.mxu0 0
        %833 = vmatpush1.bf16.xpose.msra.mxu0 0
        %834 = vmatprep.subr.bf16.mxu0 0
        %835 = vmatpush1.bf16.xpose.msra.mxu0 0
        %836 = vmatprep.subr.bf16.mxu0 0
        %837 = vmatpush1.bf16.xpose.msra.mxu0 0
        %838 = vmatprep.subr.bf16.mxu0 0
        %839 = vmatpush1.bf16.xpose.msra.mxu0 0
        %840 = vmatprep.subr.bf16.mxu0 0
        %841 = vmatpush1.bf16.xpose.msra.mxu0 0
        %842 = vmatprep.mubr.bf16.mxu0 0
        %843 = vmatmul.mubr.bf16.gmra.mrb[0].mxu0 %v805
        %v844 = vpop.f32.mrb[0].mxu0
        %v845 = vadd.f32 0.0, %v844
        %v846 = vpop.f32.mrb[0].mxu0
        %v847 = vpop.f32.mrb[0].mxu0
        %v848 = vpop.f32.mrb[0].mxu0
        %849 = vdwg.mxu0
        %v850 = vmul.f32 %v845, 0.25
        %v851 = vsel %vm736, %v850, -inf
        %852 = vmax.xlane.f32.xlu0 %v851
        %v853 = vpop.xlane.xlu0 %852
        %v854 = vsub.f32 %v850, %v853
        %v855 = vmul.f32 %v854, 1.442695
        %v856 = vpow.pop %v855
        %v857 = vsel %vm736, %v856, 0.0
        %858 = vadd.xlane.f32.xlu0 %v857
        %v859 = vpop.xlane.xlu0 %858
        %v860 = vrcp.pop %v859
        %v861 = vpack.c.bf16 %v856, %v856
        %862 = vrot.lane.b32.xlu0 %v687, 48
        %v863 = vpop.permute.xlu0 %862
        %v865 = vsel %vm736, %v861, 0
        %v868 = vsel %vm754, %v863, 0
        %870 = vmatprep.subr.bf16.mxu0 0
        %871 = vmatpush1.bf16.msra.mxu0 %v868
        %872 = vmatprep.subr.bf16.mxu0 0
        %873 = vmatpush1.bf16.msra.mxu0 0
        %874 = vmatprep.subr.bf16.mxu0 0
        %875 = vmatpush1.bf16.msra.mxu0 0
        %876 = vmatprep.subr.bf16.mxu0 0
        %877 = vmatpush1.bf16.msra.mxu0 0
        %878 = vmatprep.subr.bf16.mxu0 0
        %879 = vmatpush1.bf16.msra.mxu0 0
        %880 = vmatprep.subr.bf16.mxu0 0
        %881 = vmatpush1.bf16.msra.mxu0 0
        %882 = vmatprep.subr.bf16.mxu0 0
        %883 = vmatpush1.bf16.msra.mxu0 0
        %884 = vmatprep.subr.bf16.mxu0 0
        %885 = vmatpush1.bf16.msra.mxu0 0
        %886 = vmatprep.subr.bf16.mxu0 0
        %887 = vmatpush1.bf16.msra.mxu0 0
        %888 = vmatprep.subr.bf16.mxu0 0
        %889 = vmatpush1.bf16.msra.mxu0 0
        %890 = vmatprep.subr.bf16.mxu0 0
        %891 = vmatpush1.bf16.msra.mxu0 0
        %892 = vmatprep.subr.bf16.mxu0 0
        %893 = vmatpush1.bf16.msra.mxu0 0
        %894 = vmatprep.subr.bf16.mxu0 0
        %895 = vmatpush1.bf16.msra.mxu0 0
        %896 = vmatprep.subr.bf16.mxu0 0
        %897 = vmatpush1.bf16.msra.mxu0 0
        %898 = vmatprep.subr.bf16.mxu0 0
        %899 = vmatpush1.bf16.msra.mxu0 0
        %900 = vmatprep.subr.bf16.mxu0 0
        %901 = vmatpush1.bf16.msra.mxu0 0
        %902 = vmatprep.mubr.bf16.mxu0 0
        %903 = vmatmul.mubr.bf16.gmra.mrb[0].mxu0 %v865
        %v904 = vpop.f32.mrb[0].mxu0
        %v905 = vadd.f32 0.0, %v904
        %v906 = vpop.f32.mrb[0].mxu0
        %v907 = vpop.f32.mrb[0].mxu0
        %v908 = vpop.f32.mrb[0].mxu0
        %909 = vdwg.mxu0
        %v910 = vmul.f32 %v905, %v860
        %911 = vrot.lane.b32.xlu0 %v686, 96
        %v912 = vpop.permute.xlu0 %911
        %913 = vrot.lane.b32.xlu0 %v687, 96
        %v914 = vpop.permute.xlu0 %913
        %v916 = vsel %vm688, %v912, 0
        %v919 = vsel %vm688, %v914, 0
        %921 = vmatprep.subr.bf16.mxu0 0
        %922 = vmatpush1.bf16.xpose.msra.mxu0 %v919
        %923 = vmatprep.subr.bf16.mxu0 0
        %924 = vmatpush1.bf16.xpose.msra.mxu0 0
        %925 = vmatprep.subr.bf16.mxu0 0
        %926 = vmatpush1.bf16.xpose.msra.mxu0 0
        %927 = vmatprep.subr.bf16.mxu0 0
        %928 = vmatpush1.bf16.xpose.msra.mxu0 0
        %929 = vmatprep.subr.bf16.mxu0 0
        %930 = vmatpush1.bf16.xpose.msra.mxu0 0
        %931 = vmatprep.subr.bf16.mxu0 0
        %932 = vmatpush1.bf16.xpose.msra.mxu0 0
        %933 = vmatprep.subr.bf16.mxu0 0
        %934 = vmatpush1.bf16.xpose.msra.mxu0 0
        %935 = vmatprep.subr.bf16.mxu0 0
        %936 = vmatpush1.bf16.xpose.msra.mxu0 0
        %937 = vmatprep.subr.bf16.mxu0 0
        %938 = vmatpush1.bf16.xpose.msra.mxu0 0
        %939 = vmatprep.subr.bf16.mxu0 0
        %940 = vmatpush1.bf16.xpose.msra.mxu0 0
        %941 = vmatprep.subr.bf16.mxu0 0
        %942 = vmatpush1.bf16.xpose.msra.mxu0 0
        %943 = vmatprep.subr.bf16.mxu0 0
        %944 = vmatpush1.bf16.xpose.msra.mxu0 0
        %945 = vmatprep.subr.bf16.mxu0 0
        %946 = vmatpush1.bf16.xpose.msra.mxu0 0
        %947 = vmatprep.subr.bf16.mxu0 0
        %948 = vmatpush1.bf16.xpose.msra.mxu0 0
        %949 = vmatprep.subr.bf16.mxu0 0
        %950 = vmatpush1.bf16.xpose.msra.mxu0 0
        %951 = vmatprep.subr.bf16.mxu0 0
        %952 = vmatpush1.bf16.xpose.msra.mxu0 0
        %953 = vmatprep.mubr.bf16.mxu0 0
        %954 = vmatmul.mubr.bf16.gmra.mrb[0].mxu0 %v916
        %v955 = vpop.f32.mrb[0].mxu0
        %v956 = vadd.f32 0.0, %v955
        %v957 = vpop.f32.mrb[0].mxu0
        %v958 = vpop.f32.mrb[0].mxu0
        %v959 = vpop.f32.mrb[0].mxu0
        %960 = vdwg.mxu0
        %v961 = vmul.f32 %v956, 0.25
        %v962 = vsel %vm736, %v961, -inf
        %963 = vmax.xlane.f32.xlu0 %v962
        %v964 = vpop.xlane.xlu0 %963
        %v965 = vsub.f32 %v961, %v964
        %v966 = vmul.f32 %v965, 1.442695
        %v967 = vpow.pop %v966
        %v968 = vsel %vm736, %v967, 0.0
        %969 = vadd.xlane.f32.xlu0 %v968
        %v970 = vpop.xlane.xlu0 %969
        %v971 = vrcp.pop %v970
        %v972 = vpack.c.bf16 %v967, %v967
        %973 = vrot.lane.b32.xlu0 %v687, 32
        %v974 = vpop.permute.xlu0 %973
        %v976 = vsel %vm736, %v972, 0
        %v979 = vsel %vm754, %v974, 0
        %981 = vmatprep.subr.bf16.mxu0 0
        %982 = vmatpush1.bf16.msra.mxu0 %v979
        %983 = vmatprep.subr.bf16.mxu0 0
        %984 = vmatpush1.bf16.msra.mxu0 0
        %985 = vmatprep.subr.bf16.mxu0 0
        %986 = vmatpush1.bf16.msra.mxu0 0
        %987 = vmatprep.subr.bf16.mxu0 0
        %988 = vmatpush1.bf16.msra.mxu0 0
        %989 = vmatprep.subr.bf16.mxu0 0
        %990 = vmatpush1.bf16.msra.mxu0 0
        %991 = vmatprep.subr.bf16.mxu0 0
        %992 = vmatpush1.bf16.msra.mxu0 0
        %993 = vmatprep.subr.bf16.mxu0 0
        %994 = vmatpush1.bf16.msra.mxu0 0
        %995 = vmatprep.subr.bf16.mxu0 0
        %996 = vmatpush1.bf16.msra.mxu0 0
        %997 = vmatprep.subr.bf16.mxu0 0
        %998 = vmatpush1.bf16.msra.mxu0 0
        %999 = vmatprep.subr.bf16.mxu0 0
        %1000 = vmatpush1.bf16.msra.mxu0 0
        %1001 = vmatprep.subr.bf16.mxu0 0
        %1002 = vmatpush1.bf16.msra.mxu0 0
        %1003 = vmatprep.subr.bf16.mxu0 0
        %1004 = vmatpush1.bf16.msra.mxu0 0
        %1005 = vmatprep.subr.bf16.mxu0 0
        %1006 = vmatpush1.bf16.msra.mxu0 0
        %1007 = vmatprep.subr.bf16.mxu0 0
        %1008 = vmatpush1.bf16.msra.mxu0 0
        %1009 = vmatprep.subr.bf16.mxu0 0
        %1010 = vmatpush1.bf16.msra.mxu0 0
        %1011 = vmatprep.subr.bf16.mxu0 0
        %1012 = vmatpush1.bf16.msra.mxu0 0
        %1013 = vmatprep.mubr.bf16.mxu0 0
        %1014 = vmatmul.mubr.bf16.gmra.mrb[0].mxu0 %v976
        %v1015 = vpop.f32.mrb[0].mxu0
        %v1016 = vadd.f32 0.0, %v1015
        %v1017 = vpop.f32.mrb[0].mxu0
        %v1018 = vpop.f32.mrb[0].mxu0
        %v1019 = vpop.f32.mrb[0].mxu0
        %1020 = vdwg.mxu0
        %v1021 = vmul.f32 %v1016, %v971
        %1022 = vrot.lane.b32.xlu0 %v686, 80
        %v1023 = vpop.permute.xlu0 %1022
        %1024 = vrot.lane.b32.xlu0 %v687, 80
        %v1025 = vpop.permute.xlu0 %1024
        %v1027 = vsel %vm688, %v1023, 0
        %v1030 = vsel %vm688, %v1025, 0
        %1032 = vmatprep.subr.bf16.mxu0 0
        %1033 = vmatpush1.bf16.xpose.msra.mxu0 %v1030
        %1034 = vmatprep.subr.bf16.mxu0 0
        %1035 = vmatpush1.bf16.xpose.msra.mxu0 0
        %1036 = vmatprep.subr.bf16.mxu0 0
        %1037 = vmatpush1.bf16.xpose.msra.mxu0 0
        %1038 = vmatprep.subr.bf16.mxu0 0
        %1039 = vmatpush1.bf16.xpose.msra.mxu0 0
        %1040 = vmatprep.subr.bf16.mxu0 0
        %1041 = vmatpush1.bf16.xpose.msra.mxu0 0
        %1042 = vmatprep.subr.bf16.mxu0 0
        %1043 = vmatpush1.bf16.xpose.msra.mxu0 0
        %1044 = vmatprep.subr.bf16.mxu0 0
        %1045 = vmatpush1.bf16.xpose.msra.mxu0 0
        %1046 = vmatprep.subr.bf16.mxu0 0
        %1047 = vmatpush1.bf16.xpose.msra.mxu0 0
        %1048 = vmatprep.subr.bf16.mxu0 0
        %1049 = vmatpush1.bf16.xpose.msra.mxu0 0
        %1050 = vmatprep.subr.bf16.mxu0 0
        %1051 = vmatpush1.bf16.xpose.msra.mxu0 0
        %1052 = vmatprep.subr.bf16.mxu0 0
        %1053 = vmatpush1.bf16.xpose.msra.mxu0 0
        %1054 = vmatprep.subr.bf16.mxu0 0
        %1055 = vmatpush1.bf16.xpose.msra.mxu0 0
        %1056 = vmatprep.subr.bf16.mxu0 0
        %1057 = vmatpush1.bf16.xpose.msra.mxu0 0
        %1058 = vmatprep.subr.bf16.mxu0 0
        %1059 = vmatpush1.bf16.xpose.msra.mxu0 0
        %1060 = vmatprep.subr.bf16.mxu0 0
        %1061 = vmatpush1.bf16.xpose.msra.mxu0 0
        %1062 = vmatprep.subr.bf16.mxu0 0
        %1063 = vmatpush1.bf16.xpose.msra.mxu0 0
        %1064 = vmatprep.mubr.bf16.mxu0 0
        %1065 = vmatmul.mubr.bf16.gmra.mrb[0].mxu0 %v1027
        %v1066 = vpop.f32.mrb[0].mxu0
        %v1067 = vadd.f32 0.0, %v1066
        %v1068 = vpop.f32.mrb[0].mxu0
        %v1069 = vpop.f32.mrb[0].mxu0
        %v1070 = vpop.f32.mrb[0].mxu0
        %1071 = vdwg.mxu0
        %v1072 = vmul.f32 %v1067, 0.25
        %v1073 = vsel %vm736, %v1072, -inf
        %1074 = vmax.xlane.f32.xlu0 %v1073
        %v1075 = vpop.xlane.xlu0 %1074
        %v1076 = vsub.f32 %v1072, %v1075
        %v1077 = vmul.f32 %v1076, 1.442695
        %v1078 = vpow.pop %v1077
        %v1079 = vsel %vm736, %v1078, 0.0
        %1080 = vadd.xlane.f32.xlu0 %v1079
        %v1081 = vpop.xlane.xlu0 %1080
        %v1082 = vrcp.pop %v1081
        %v1083 = vpack.c.bf16 %v1078, %v1078
        %1084 = vrot.lane.b32.xlu0 %v687, 16
        %v1085 = vpop.permute.xlu0 %1084
        %v1087 = vsel %vm736, %v1083, 0
        %v1090 = vsel %vm754, %v1085, 0
        %1092 = vmatprep.subr.bf16.mxu0 0
        %1093 = vmatpush1.bf16.msra.mxu0 %v1090
        %1094 = vmatprep.subr.bf16.mxu0 0
        %1095 = vmatpush1.bf16.msra.mxu0 0
        %1096 = vmatprep.subr.bf16.mxu0 0
        %1097 = vmatpush1.bf16.msra.mxu0 0
        %1098 = vmatprep.subr.bf16.mxu0 0
        %1099 = vmatpush1.bf16.msra.mxu0 0
        %1100 = vmatprep.subr.bf16.mxu0 0
        %1101 = vmatpush1.bf16.msra.mxu0 0
        %1102 = vmatprep.subr.bf16.mxu0 0
        %1103 = vmatpush1.bf16.msra.mxu0 0
        %1104 = vmatprep.subr.bf16.mxu0 0
        %1105 = vmatpush1.bf16.msra.mxu0 0
        %1106 = vmatprep.subr.bf16.mxu0 0
        %1107 = vmatpush1.bf16.msra.mxu0 0
        %1108 = vmatprep.subr.bf16.mxu0 0
        %1109 = vmatpush1.bf16.msra.mxu0 0
        %1110 = vmatprep.subr.bf16.mxu0 0
        %1111 = vmatpush1.bf16.msra.mxu0 0
        %1112 = vmatprep.subr.bf16.mxu0 0
        %1113 = vmatpush1.bf16.msra.mxu0 0
        %1114 = vmatprep.subr.bf16.mxu0 0
        %1115 = vmatpush1.bf16.msra.mxu0 0
        %1116 = vmatprep.subr.bf16.mxu0 0
        %1117 = vmatpush1.bf16.msra.mxu0 0
        %1118 = vmatprep.subr.bf16.mxu0 0
        %1119 = vmatpush1.bf16.msra.mxu0 0
        %1120 = vmatprep.subr.bf16.mxu0 0
        %1121 = vmatpush1.bf16.msra.mxu0 0
        %1122 = vmatprep.subr.bf16.mxu0 0
        %1123 = vmatpush1.bf16.msra.mxu0 0
        %1124 = vmatprep.mubr.bf16.mxu0 0
        %1125 = vmatmul.mubr.bf16.gmra.mrb[0].mxu0 %v1087
        %v1126 = vpop.f32.mrb[0].mxu0
        %v1127 = vadd.f32 0.0, %v1126
        %v1128 = vpop.f32.mrb[0].mxu0
        %v1129 = vpop.f32.mrb[0].mxu0
        %v1130 = vpop.f32.mrb[0].mxu0
        %1131 = vdwg.mxu0
        %v1132 = vmul.f32 %v1127, %v1082
        %1134 = vrot.lane.b32.xlu0 %v910, 16
        %v1135 = vpop.permute.xlu0 %1134
        %1138 = vrot.lane.b32.xlu0 %v1021, 32
        %v1139 = vpop.permute.xlu0 %1138
        %1142 = vrot.lane.b32.xlu0 %v1132, 48
        %v1143 = vpop.permute.xlu0 %1142
        %v1145 = vsel %vm688, %v798, %v1135
        %v1146 = vsel %vm520, %v1145, %v1139
        %vm1147 = vcmask 392192
        %v1148 = vsel %vm1147, %v1146, %v1143
        %v1149 = vpack.c.bf16 %v1148, %v1148
        %v1150 = vld [vmem:[#allocation16] sm:$0xf]
        %v1151 = vld [vmem:[#allocation16 + $0x4] sm:$0xf]
        %v1152 = vld [vmem:[#allocation16 + $0x8] sm:$0xf]
        %v1153 = vld [vmem:[#allocation16 + $0xc] sm:$0xf]
        %v1154 = vld [vmem:[#allocation16 + $0x10] sm:$0xf]
        %v1155 = vld [vmem:[#allocation16 + $0x14] sm:$0xf]
        %v1156 = vld [vmem:[#allocation16 + $0x18] sm:$0xf]
        %v1157 = vld [vmem:[#allocation16 + $0x1c] sm:$0xf]
        %v1158 = vld [vmem:[#allocation17] sm:$0x1]
        %v1160 = vlaneseq
        %v1161 = vshrl.u32 %v1160, 7
        %v1162 = vsub.s32 0, %v1161
        %v1163 = vrot.slane %v1158, %v1162
        %v1173 = vunpack.c.l.b16 %v1150
        %v1174 = vunpack.c.l.b16 %v1151
        %v1175 = vunpack.c.l.b16 %v1152
        %v1176 = vunpack.c.l.b16 %v1153
        %v1177 = vunpack.c.l.b16 %v1154
        %v1178 = vunpack.c.l.b16 %v1155
        %v1179 = vunpack.c.l.b16 %v1156
        %v1180 = vunpack.c.l.b16 %v1157
        %v1181 = vpack.c.b16 %v1174, %v1173
        %v1182 = vpack.c.b16 %v1176, %v1175
        %v1183 = vpack.c.b16 %v1178, %v1177
        %v1184 = vpack.c.b16 %v1180, %v1179
        %vm1189 = vcmask 523264
        %v1191 = vsel %vm1189, %v1149, 0
        %1193 = vmatprep.subr.bf16.mxu0 0
        %1194 = vmatpush1.bf16.msra.mxu0 %v1181
        %1195 = vmatprep.subr.bf16.mxu0 0
        %1196 = vmatpush1.bf16.msra.mxu0 %v1182
        %1197 = vmatprep.subr.bf16.mxu0 0
        %1198 = vmatpush1.bf16.msra.mxu0 %v1183
        %1199 = vmatprep.subr.bf16.mxu0 0
        %1200 = vmatpush1.bf16.msra.mxu0 %v1184
        %1201 = vmatprep.subr.bf16.mxu0 0
        %1202 = vmatpush1.bf16.msra.mxu0 0
        %1203 = vmatprep.subr.bf16.mxu0 0
        %1204 = vmatpush1.bf16.msra.mxu0 0
        %1205 = vmatprep.subr.bf16.mxu0 0
        %1206 = vmatpush1.bf16.msra.mxu0 0
        %1207 = vmatprep.subr.bf16.mxu0 0
        %1208 = vmatpush1.bf16.msra.mxu0 0
        %1209 = vmatprep.subr.bf16.mxu0 0
        %1210 = vmatpush1.bf16.msra.mxu0 0
        %1211 = vmatprep.subr.bf16.mxu0 0
        %1212 = vmatpush1.bf16.msra.mxu0 0
        %1213 = vmatprep.subr.bf16.mxu0 0
        %1214 = vmatpush1.bf16.msra.mxu0 0
        %1215 = vmatprep.subr.bf16.mxu0 0
        %1216 = vmatpush1.bf16.msra.mxu0 0
        %1217 = vmatprep.subr.bf16.mxu0 0
        %1218 = vmatpush1.bf16.msra.mxu0 0
        %1219 = vmatprep.subr.bf16.mxu0 0
        %1220 = vmatpush1.bf16.msra.mxu0 0
        %1221 = vmatprep.subr.bf16.mxu0 0
        %1222 = vmatpush1.bf16.msra.mxu0 0
        %1223 = vmatprep.subr.bf16.mxu0 0
        %1224 = vmatpush1.bf16.msra.mxu0 0
        %1225 = vmatprep.mubr.bf16.mxu0 0
        %1226 = vmatmul.mubr.bf16.gmra.mrb[0].mxu0 %v1191
        %v1227 = vpop.f32.mrb[0].mxu0
        %v1228 = vadd.f32 %v1163, %v1227
        %v1229 = vpop.f32.mrb[0].mxu0
        %v1230 = vpop.f32.mrb[0].mxu0
        %v1231 = vpop.f32.mrb[0].mxu0
        %1232 = vdwg.mxu0
        %v1233 = vadd.f32 %v1228, %v519
        %1234 = vst.msk [vmem:[%s517] sm:$0xff] %vm520, %v1233
        %s1235 = sand.u32 %s262, 1
        %s1236 = scalar_lea.sflag [#allocation4], %s1235
        %s1237 = sand.u32 %s262, 1
        %s1238 = smul.addr %s1237, 8
        %s1239 = scalar_lea.vmem [#allocation19], %s1238
        // Predicated region
        $region101: #{_lambda_.28} parent=59 // pred_check
          %p1240 = pneg %p272
        $region102: #{_lambda_.28} parent=59 // pred_check_branch
          %1242 = sbr.rel (%p1240) target = $region104
        $region103: #{_lambda_.28} parent=59 // pred_region
          %s1244 = ssub.s32 128, 128
          %1245 = vsyncadd %s1236, %s1244
          %s1246 = smul.addr %s34, 128
          %s1247 = scalar_lea.hbm %s10, %s1246
          %s1249 = sshll.u32 %s1239, 4
          %s1250 = int_to_ptr.vmem [resolvable:$true] %s1249
          %1252 = dma.vmem_to_hbm [thread:$0]  %s1250, 128, %s1247, %s1236
        $region104: #{_lambda_.28} parent=59 // pred_fallthru
          _
      $region60: #{_lambda_.28} parent=5 // pred_fallthru
        _
      %p1253 = scmp.le.s32.totalorder 2, %s29
      // Predicated region
      $region105: #{_lambda_.28} parent=5 // pred_check
        %p1254 = pneg %p1253
      $region106: #{_lambda_.28} parent=5 // pred_check_branch
        %1256 = sbr.rel (%p1254) target = $region108
      $region107: #{_lambda_.28} parent=5 // pred_region
        %s1257 = ssub.s32 %s29, 2
        // Predicated region
        $region109: #{_lambda_.28} parent=107 // pred_check
          %p1258 = pneg %p278
        $region110: #{_lambda_.28} parent=107 // pred_check_branch
          %1260 = sbr.rel (%p1258) target = $region112
        $region111: #{_lambda_.28} parent=107 // pred_region
          %s1261 = sand.u32 %s263, 1
          %s1262 = scalar_lea.sflag [#allocation4], %s1261
          %s1263 = sand.u32 %s263, 1
          %s1264 = smul.addr %s1263, 8
          %s1265 = scalar_lea.vmem [#allocation19], %s1264
          %1266 = dma.done %s1262, 128
        $region112: #{_lambda_.28} parent=107 // pred_fallthru
          _
      $region108: #{_lambda_.28} parent=5 // pred_fallthru
        _
    $region6: #{_lambda_.28} parent=1 // loop_footer
      %s33 = sadd.s32 1, %s29
    $region7: #{_lambda_.28} parent=1 // loop_footer_branch
      %28 = sbr.rel target = $region3
    $region8: #{_lambda_.28} parent=1 // loop_exit
      _
    %1267 = vsyncpa [#allocation3], 1
    %s1268 = scalar_lea.sflag [#allocation3], 1
    %1269 = vsyncpa %s1268, 1
    %1270 = vsyncpa [#allocation6], 1
    %s1271 = scalar_lea.sflag [#allocation6], 1
    %1272 = vsyncpa %s1271, 1
    %1273 = vsyncpa [#allocation9], 1
    %1274 = vsyncpa [#allocation12], 1
    %1275 = vsyncpa [#allocation15], 1
    %1276 = vsyncpa [#allocation18], 1
    %1277 = vsyncpa [#allocation4], 1
    %s1278 = scalar_lea.sflag [#allocation4], 1
    %1279 = vsyncpa %s1278, 1

// kernel: _lambda_.33
$region0: #{_lambda_.33}
  #allocation0 [shape = 'u32[]', space=smem, size = 0x4, offset = 0x4, fixed_abs, tag = 'smem constant byte address 0x4 - core index']
  #allocation1 [shape = 'u32[144,128]{1,0:T(1,128)}', space=vmem, size = 0x12000, scoped, tag = 'internal scratch']
  %s0 = inlined_call_operand.hbm [shape: f32[8,32], index: 0, kind: input, shape index: {}]
  %s1 = inlined_call_operand.hbm [shape: f32[8,32], index: 1, kind: input, shape index: {}]
  %s2 = inlined_call_operand.hbm [shape: f32[8,32], index: 2, kind: input, shape index: {}]
  %s3 = inlined_call_operand.hbm [shape: bf16[32,32], index: 3, kind: input, shape index: {}]
  %s4 = inlined_call_operand.hbm [shape: bf16[32,32], index: 4, kind: input, shape index: {}]
  %s5 = inlined_call_operand.hbm [shape: bf16[32,32], index: 5, kind: input, shape index: {}]
  %s6 = inlined_call_operand.hbm [shape: f32[1,32], index: 6, kind: input, shape index: {}]
  %s7 = inlined_call_operand.hbm [shape: f32[8,32], index: 7, kind: output, shape index: {}]
  %s8 = sld [smem:[#allocation0]]
  $region66: #{_lambda_.33} parent=0
    _
  %s10 = ssub.s32 1, %s8
  %s11 = scalar_select 0, %s10, %s8
  $region1: #{_lambda_.33} parent=0
    #allocation2 [shape = 'u8[4096]{0}', space=vmem, size = 0x1000, scoped, tag = 'input window, operand 0, single buffered']
    #allocation3 [shape = 's32[1]{0}', space=sflag, size = 0x4, scoped, tag = 'scoped memory for _lambda_.33']
    #allocation4 [shape = 's32[1]{0}', space=sflag, size = 0x4, scoped, tag = 'scoped memory for _lambda_.33']
    #allocation5 [shape = 'u8[4096]{0}', space=vmem, size = 0x1000, scoped, tag = 'input window, operand 1, single buffered']
    #allocation6 [shape = 's32[1]{0}', space=sflag, size = 0x4, scoped, tag = 'scoped memory for _lambda_.33']
    #allocation7 [shape = 'u8[4096]{0}', space=vmem, size = 0x1000, scoped, tag = 'input window, operand 2, single buffered']
    #allocation8 [shape = 'u8[8192]{0}', space=vmem, size = 0x2000, scoped, tag = 'input window, operand 3, single buffered']
    #allocation9 [shape = 's32[1]{0}', space=sflag, size = 0x4, scoped, tag = 'scoped memory for _lambda_.33']
    #allocation10 [shape = 'u8[8192]{0}', space=vmem, size = 0x2000, scoped, tag = 'input window, operand 4, single buffered']
    #allocation11 [shape = 'u8[8192]{0}', space=vmem, size = 0x2000, scoped, tag = 'input window, operand 5, single buffered']
    #allocation12 [shape = 's32[1]{0}', space=sflag, size = 0x4, scoped, tag = 'scoped memory for _lambda_.33']
    #allocation13 [shape = 'u8[512]{0}', space=vmem, size = 0x400, scoped, tag = 'input window, operand 6, single buffered']
    #allocation14 [shape = 'u8[4096]{0}', space=vmem, size = 0x1000, scoped, tag = 'output window, operand 0, single buffered']
    %12 = vsyncpa [#allocation3], 0
    %13 = vsyncpa [#allocation6], 0
    %14 = vsyncpa [#allocation9], 0
    %15 = vsyncpa [#allocation12], 0
    %16 = vsyncpa [#allocation4], 0
    // Predicated region
    $region2: #{_lambda_.33} parent=1 // pred_check
      _
    $region3: #{_lambda_.33} parent=1 // pred_check_branch
      %18 = sbr.rel (0) target = $region5
    $region4: #{_lambda_.33} parent=1 // pred_region
      %s20 = ssub.s32 128, 128
      %21 = vsyncadd [#allocation3], %s20
      %s23 = sshll.u32 [#allocation2], 4
      %s24 = int_to_ptr.vmem [resolvable:$true] %s23
      %26 = dma.hbm_to_vmem [thread:$0]  %s0, 128, %s24, [#allocation3]
    $region5: #{_lambda_.33} parent=1 // pred_fallthru
      _
    // Predicated region
    $region6: #{_lambda_.33} parent=1 // pred_check
      _
    $region7: #{_lambda_.33} parent=1 // pred_check_branch
      %28 = sbr.rel (0) target = $region9
    $region8: #{_lambda_.33} parent=1 // pred_region
      %s30 = ssub.s32 128, 128
      %31 = vsyncadd [#allocation6], %s30
      %s33 = sshll.u32 [#allocation5], 4
      %s34 = int_to_ptr.vmem [resolvable:$true] %s33
      %36 = dma.hbm_to_vmem [thread:$0]  %s1, 128, %s34, [#allocation6]
    $region9: #{_lambda_.33} parent=1 // pred_fallthru
      _
    // Predicated region
    $region10: #{_lambda_.33} parent=1 // pred_check
      _
    $region11: #{_lambda_.33} parent=1 // pred_check_branch
      %38 = sbr.rel (0) target = $region13
    $region12: #{_lambda_.33} parent=1 // pred_region
      %s40 = ssub.s32 128, 128
      %41 = vsyncadd [#allocation6], %s40
      %s43 = sshll.u32 [#allocation7], 4
      %s44 = int_to_ptr.vmem [resolvable:$true] %s43
      %46 = dma.hbm_to_vmem [thread:$0]  %s2, 128, %s44, [#allocation6]
    $region13: #{_lambda_.33} parent=1 // pred_fallthru
      _
    // Predicated region
    $region14: #{_lambda_.33} parent=1 // pred_check
      _
    $region15: #{_lambda_.33} parent=1 // pred_check_branch
      %48 = sbr.rel (0) target = $region17
    $region16: #{_lambda_.33} parent=1 // pred_region
      %s50 = ssub.s32 256, 256
      %51 = vsyncadd [#allocation9], %s50
      %s52 = sshll.u32 [#allocation8], 4
      %s53 = int_to_ptr.vmem [resolvable:$true] %s52
      %58 = dma.hbm_to_vmem [thread:$0]  %s3, 256, %s53, [#allocation9], 64, 64, 4
    $region17: #{_lambda_.33} parent=1 // pred_fallthru
      _
    // Predicated region
    $region18: #{_lambda_.33} parent=1 // pred_check
      _
    $region19: #{_lambda_.33} parent=1 // pred_check_branch
      %60 = sbr.rel (0) target = $region21
    $region20: #{_lambda_.33} parent=1 // pred_region
      %s62 = ssub.s32 256, 256
      %63 = vsyncadd [#allocation9], %s62
      %s64 = sshll.u32 [#allocation10], 4
      %s65 = int_to_ptr.vmem [resolvable:$true] %s64
      %70 = dma.hbm_to_vmem [thread:$0]  %s4, 256, %s65, [#allocation9], 64, 64, 4
    $region21: #{_lambda_.33} parent=1 // pred_fallthru
      _
    // Predicated region
    $region22: #{_lambda_.33} parent=1 // pred_check
      _
    $region23: #{_lambda_.33} parent=1 // pred_check_branch
      %72 = sbr.rel (0) target = $region25
    $region24: #{_lambda_.33} parent=1 // pred_region
      %s74 = ssub.s32 256, 256
      %75 = vsyncadd [#allocation12], %s74
      %s76 = sshll.u32 [#allocation11], 4
      %s77 = int_to_ptr.vmem [resolvable:$true] %s76
      %82 = dma.hbm_to_vmem [thread:$0]  %s5, 256, %s77, [#allocation12], 64, 64, 4
    $region25: #{_lambda_.33} parent=1 // pred_fallthru
      _
    // Predicated region
    $region26: #{_lambda_.33} parent=1 // pred_check
      _
    $region27: #{_lambda_.33} parent=1 // pred_check_branch
      %84 = sbr.rel (0) target = $region29
    $region28: #{_lambda_.33} parent=1 // pred_region
      %s86 = ssub.s32 16, 16
      %87 = vsyncadd [#allocation12], %s86
      %s89 = sshll.u32 [#allocation13], 4
      %s90 = int_to_ptr.vmem [resolvable:$true] %s89
      %92 = dma.hbm_to_vmem [thread:$0]  %s6, 16, %s90, [#allocation12]
    $region29: #{_lambda_.33} parent=1 // pred_fallthru
      _
    // Predicated region
    $region30: #{_lambda_.33} parent=1 // pred_check
      _
    $region31: #{_lambda_.33} parent=1 // pred_check_branch
      %94 = sbr.rel (0) target = $region33
    $region32: #{_lambda_.33} parent=1 // pred_region
      %95 = dma.done [#allocation3], 128
    $region33: #{_lambda_.33} parent=1 // pred_fallthru
      _
    // Predicated region
    $region34: #{_lambda_.33} parent=1 // pred_check
      _
    $region35: #{_lambda_.33} parent=1 // pred_check_branch
      %97 = sbr.rel (0) target = $region37
    $region36: #{_lambda_.33} parent=1 // pred_region
      %98 = dma.done [#allocation6], 128
    $region37: #{_lambda_.33} parent=1 // pred_fallthru
      _
    // Predicated region
    $region38: #{_lambda_.33} parent=1 // pred_check
      _
    $region39: #{_lambda_.33} parent=1 // pred_check_branch
      %100 = sbr.rel (0) target = $region41
    $region40: #{_lambda_.33} parent=1 // pred_region
      %101 = dma.done [#allocation6], 128
    $region41: #{_lambda_.33} parent=1 // pred_fallthru
      _
    // Predicated region
    $region42: #{_lambda_.33} parent=1 // pred_check
      _
    $region43: #{_lambda_.33} parent=1 // pred_check_branch
      %103 = sbr.rel (0) target = $region45
    $region44: #{_lambda_.33} parent=1 // pred_region
      %104 = dma.done [#allocation9], 256
    $region45: #{_lambda_.33} parent=1 // pred_fallthru
      _
    // Predicated region
    $region46: #{_lambda_.33} parent=1 // pred_check
      _
    $region47: #{_lambda_.33} parent=1 // pred_check_branch
      %106 = sbr.rel (0) target = $region49
    $region48: #{_lambda_.33} parent=1 // pred_region
      %107 = dma.done [#allocation9], 256
    $region49: #{_lambda_.33} parent=1 // pred_fallthru
      _
    // Predicated region
    $region50: #{_lambda_.33} parent=1 // pred_check
      _
    $region51: #{_lambda_.33} parent=1 // pred_check_branch
      %109 = sbr.rel (0) target = $region53
    $region52: #{_lambda_.33} parent=1 // pred_region
      %110 = dma.done [#allocation12], 256
    $region53: #{_lambda_.33} parent=1 // pred_fallthru
      _
    // Predicated region
    $region54: #{_lambda_.33} parent=1 // pred_check
      _
    $region55: #{_lambda_.33} parent=1 // pred_check_branch
      %112 = sbr.rel (0) target = $region57
    $region56: #{_lambda_.33} parent=1 // pred_region
      %113 = dma.done [#allocation12], 16
    $region57: #{_lambda_.33} parent=1 // pred_fallthru
      _
    %v115 = vld [vmem:[#allocation2] sm:$0xff]
    %v116 = vpack.c.bf16 %v115, %v115
    %v117 = vld [vmem:[#allocation8] sm:$0xf]
    %v118 = vld [vmem:[#allocation8 + $0x4] sm:$0xf]
    %v119 = vld [vmem:[#allocation8 + $0x8] sm:$0xf]
    %v120 = vld [vmem:[#allocation8 + $0xc] sm:$0xf]
    %v121 = vld [vmem:[#allocation5] sm:$0xff]
    %v122 = vpack.c.bf16 %v121, %v121
    %v123 = vld [vmem:[#allocation10] sm:$0xf]
    %v124 = vld [vmem:[#allocation10 + $0x4] sm:$0xf]
    %v125 = vld [vmem:[#allocation10 + $0x8] sm:$0xf]
    %v126 = vld [vmem:[#allocation10 + $0xc] sm:$0xf]
    %v131 = vunpack.c.l.b16 %v123
    %v132 = vunpack.c.l.b16 %v124
    %v133 = vunpack.c.l.b16 %v125
    %v134 = vunpack.c.l.b16 %v126
    %v135 = vpack.c.b16 %v132, %v131
    %v136 = vpack.c.b16 %v134, %v133
    %vm139 = vcmask 261120
    %v141 = vsel %vm139, %v122, 0
    %143 = vmatprep.subr.bf16.mxu0 0
    %144 = vmatpush1.bf16.msra.mxu0 %v135
    %145 = vmatprep.subr.bf16.mxu0 0
    %146 = vmatpush1.bf16.msra.mxu0 %v136
    %147 = vmatprep.subr.bf16.mxu0 0
    %148 = vmatpush1.bf16.msra.mxu0 0
    %149 = vmatprep.subr.bf16.mxu0 0
    %150 = vmatpush1.bf16.msra.mxu0 0
    %151 = vmatprep.subr.bf16.mxu0 0
    %152 = vmatpush1.bf16.msra.mxu0 0
    %153 = vmatprep.subr.bf16.mxu0 0
    %154 = vmatpush1.bf16.msra.mxu0 0
    %155 = vmatprep.subr.bf16.mxu0 0
    %156 = vmatpush1.bf16.msra.mxu0 0
    %157 = vmatprep.subr.bf16.mxu0 0
    %158 = vmatpush1.bf16.msra.mxu0 0
    %159 = vmatprep.subr.bf16.mxu0 0
    %160 = vmatpush1.bf16.msra.mxu0 0
    %161 = vmatprep.subr.bf16.mxu0 0
    %162 = vmatpush1.bf16.msra.mxu0 0
    %163 = vmatprep.subr.bf16.mxu0 0
    %164 = vmatpush1.bf16.msra.mxu0 0
    %165 = vmatprep.subr.bf16.mxu0 0
    %166 = vmatpush1.bf16.msra.mxu0 0
    %167 = vmatprep.subr.bf16.mxu0 0
    %168 = vmatpush1.bf16.msra.mxu0 0
    %169 = vmatprep.subr.bf16.mxu0 0
    %170 = vmatpush1.bf16.msra.mxu0 0
    %171 = vmatprep.subr.bf16.mxu0 0
    %172 = vmatpush1.bf16.msra.mxu0 0
    %173 = vmatprep.subr.bf16.mxu0 0
    %174 = vmatpush1.bf16.msra.mxu0 0
    %175 = vmatprep.mubr.bf16.mxu0 0
    %176 = vmatmul.mubr.bf16.gmra.mrb[0].mxu0 %v141
    %v177 = vpop.f32.mrb[0].mxu0
    %v178 = vadd.f32 0.0, %v177
    %v179 = vpop.f32.mrb[0].mxu0
    %v180 = vpop.f32.mrb[0].mxu0
    %v181 = vpop.f32.mrb[0].mxu0
    %182 = vdwg.mxu0
    %v187 = vunpack.c.l.b16 %v117
    %v188 = vunpack.c.l.b16 %v118
    %v189 = vunpack.c.l.b16 %v119
    %v190 = vunpack.c.l.b16 %v120
    %v191 = vpack.c.b16 %v188, %v187
    %v192 = vpack.c.b16 %v190, %v189
    %v196 = vsel %vm139, %v116, 0
    %198 = vmatprep.subr.bf16.mxu0 0
    %199 = vmatpush1.bf16.msra.mxu0 %v191
    %200 = vmatprep.subr.bf16.mxu0 0
    %201 = vmatpush1.bf16.msra.mxu0 %v192
    %202 = vmatprep.subr.bf16.mxu0 0
    %203 = vmatpush1.bf16.msra.mxu0 0
    %204 = vmatprep.subr.bf16.mxu0 0
    %205 = vmatpush1.bf16.msra.mxu0 0
    %206 = vmatprep.subr.bf16.mxu0 0
    %207 = vmatpush1.bf16.msra.mxu0 0
    %208 = vmatprep.subr.bf16.mxu0 0
    %209 = vmatpush1.bf16.msra.mxu0 0
    %210 = vmatprep.subr.bf16.mxu0 0
    %211 = vmatpush1.bf16.msra.mxu0 0
    %212 = vmatprep.subr.bf16.mxu0 0
    %213 = vmatpush1.bf16.msra.mxu0 0
    %214 = vmatprep.subr.bf16.mxu0 0
    %215 = vmatpush1.bf16.msra.mxu0 0
    %216 = vmatprep.subr.bf16.mxu0 0
    %217 = vmatpush1.bf16.msra.mxu0 0
    %218 = vmatprep.subr.bf16.mxu0 0
    %219 = vmatpush1.bf16.msra.mxu0 0
    %220 = vmatprep.subr.bf16.mxu0 0
    %221 = vmatpush1.bf16.msra.mxu0 0
    %222 = vmatprep.subr.bf16.mxu0 0
    %223 = vmatpush1.bf16.msra.mxu0 0
    %224 = vmatprep.subr.bf16.mxu0 0
    %225 = vmatpush1.bf16.msra.mxu0 0
    %226 = vmatprep.subr.bf16.mxu0 0
    %227 = vmatpush1.bf16.msra.mxu0 0
    %228 = vmatprep.subr.bf16.mxu0 0
    %229 = vmatpush1.bf16.msra.mxu0 0
    %230 = vmatprep.mubr.bf16.mxu0 0
    %231 = vmatmul.mubr.bf16.gmra.mrb[0].mxu0 %v196
    %v232 = vpop.f32.mrb[0].mxu0
    %v233 = vadd.f32 %v178, %v232
    %v234 = vpop.f32.mrb[0].mxu0
    %v235 = vpop.f32.mrb[0].mxu0
    %v236 = vpop.f32.mrb[0].mxu0
    %237 = vdwg.mxu0
    %v238 = vld [vmem:[#allocation7] sm:$0xff]
    %v239 = vpack.c.bf16 %v238, %v238
    %v240 = vld [vmem:[#allocation11] sm:$0xf]
    %v241 = vld [vmem:[#allocation11 + $0x4] sm:$0xf]
    %v242 = vld [vmem:[#allocation11 + $0x8] sm:$0xf]
    %v243 = vld [vmem:[#allocation11 + $0xc] sm:$0xf]
    %v248 = vunpack.c.l.b16 %v240
    %v249 = vunpack.c.l.b16 %v241
    %v250 = vunpack.c.l.b16 %v242
    %v251 = vunpack.c.l.b16 %v243
    %v252 = vpack.c.b16 %v249, %v248
    %v253 = vpack.c.b16 %v251, %v250
    %v257 = vsel %vm139, %v239, 0
    %259 = vmatprep.subr.bf16.mxu0 0
    %260 = vmatpush1.bf16.msra.mxu0 %v252
    %261 = vmatprep.subr.bf16.mxu0 0
    %262 = vmatpush1.bf16.msra.mxu0 %v253
    %263 = vmatprep.subr.bf16.mxu0 0
    %264 = vmatpush1.bf16.msra.mxu0 0
    %265 = vmatprep.subr.bf16.mxu0 0
    %266 = vmatpush1.bf16.msra.mxu0 0
    %267 = vmatprep.subr.bf16.mxu0 0
    %268 = vmatpush1.bf16.msra.mxu0 0
    %269 = vmatprep.subr.bf16.mxu0 0
    %270 = vmatpush1.bf16.msra.mxu0 0
    %271 = vmatprep.subr.bf16.mxu0 0
    %272 = vmatpush1.bf16.msra.mxu0 0
    %273 = vmatprep.subr.bf16.mxu0 0
    %274 = vmatpush1.bf16.msra.mxu0 0
    %275 = vmatprep.subr.bf16.mxu0 0
    %276 = vmatpush1.bf16.msra.mxu0 0
    %277 = vmatprep.subr.bf16.mxu0 0
    %278 = vmatpush1.bf16.msra.mxu0 0
    %279 = vmatprep.subr.bf16.mxu0 0
    %280 = vmatpush1.bf16.msra.mxu0 0
    %281 = vmatprep.subr.bf16.mxu0 0
    %282 = vmatpush1.bf16.msra.mxu0 0
    %283 = vmatprep.subr.bf16.mxu0 0
    %284 = vmatpush1.bf16.msra.mxu0 0
    %285 = vmatprep.subr.bf16.mxu0 0
    %286 = vmatpush1.bf16.msra.mxu0 0
    %287 = vmatprep.subr.bf16.mxu0 0
    %288 = vmatpush1.bf16.msra.mxu0 0
    %289 = vmatprep.subr.bf16.mxu0 0
    %290 = vmatpush1.bf16.msra.mxu0 0
    %291 = vmatprep.mubr.bf16.mxu0 0
    %292 = vmatmul.mubr.bf16.gmra.mrb[0].mxu0 %v257
    %v293 = vpop.f32.mrb[0].mxu0
    %v294 = vadd.f32 0.0, %v293
    %v295 = vpop.f32.mrb[0].mxu0
    %v296 = vpop.f32.mrb[0].mxu0
    %v297 = vpop.f32.mrb[0].mxu0
    %298 = vdwg.mxu0
    %v299 = vadd.f32 %v233, %v294
    %v300 = vld [vmem:[#allocation13] sm:$0x1]
    %v302 = vlaneseq
    %v303 = vshrl.u32 %v302, 7
    %v304 = vsub.s32 0, %v303
    %v305 = vrot.slane %v300, %v304
    %v307 = vadd.f32 %v299, %v305
    %308 = vst.msk [vmem:[#allocation14] sm:$0xff] %vm139, %v307
    // Predicated region
    $region58: #{_lambda_.33} parent=1 // pred_check
      _
    $region59: #{_lambda_.33} parent=1 // pred_check_branch
      %310 = sbr.rel (0) target = $region61
    $region60: #{_lambda_.33} parent=1 // pred_region
      %s312 = ssub.s32 128, 128
      %313 = vsyncadd [#allocation4], %s312
      %s315 = sshll.u32 [#allocation14], 4
      %s316 = int_to_ptr.vmem [resolvable:$true] %s315
      %318 = dma.vmem_to_hbm [thread:$0]  %s316, 128, %s7, [#allocation4]
    $region61: #{_lambda_.33} parent=1 // pred_fallthru
      _
    // Predicated region
    $region62: #{_lambda_.33} parent=1 // pred_check
      _
    $region63: #{_lambda_.33} parent=1 // pred_check_branch
      %320 = sbr.rel (0) target = $region65
    $region64: #{_lambda_.33} parent=1 // pred_region
      %321 = dma.done [#allocation4], 128
    $region65: #{_lambda_.33} parent=1 // pred_fallthru
      _
    %322 = vsyncpa [#allocation3], 1
    %323 = vsyncpa [#allocation6], 1
    %324 = vsyncpa [#allocation9], 1
    %325 = vsyncpa [#allocation12], 1
    %326 = vsyncpa [#allocation4], 1

</llo_original>
